<compile_context>
chip_gen: v6e
topology: v6e:2x2x1
jax: 0.10.0
libtpu: 0.0.40
codegen_flags: <defaults>
</compile_context>

<pallas_src>
import functools

import jax
import jax.numpy as jnp
import numpy as np
from jax.experimental import pallas as pl
from jax.experimental.pallas import tpu as pltpu


# ----------------------------------------------------------------------------
# Fused Pallas kernel: conv1+ReLU -> conv2+ReLU -> conv3, B images per step.
# ----------------------------------------------------------------------------
def _srcnn2_kernel(p1_ref, w1_ref, b1_ref, w2_ref, b2_ref, w3_ref, b3_ref,
                   o_ref, y2p_ref, p3_ref, *, B, H1, W1, Hf, Wf, K3, PAD3):
    # p1_ref : (B, H1*W1, 9*9*3) bf16  im2col patches of the padded input
    # w1_ref : (243, 128) bf16         b1_ref : (1, 128) f32
    # w2_ref : (128, 64)  bf16         b2_ref : (1, 64)  f32
    # w3_ref : (K3*K3*64, 3) bf16      b3_ref : (1, 3)   f32
    # o_ref  : (B, 3, Hf*Wf) f32       NCHW output, HW flattened (lane-dense)
    # y2p_ref: (B, H1+2P, W1+2P, 64) bf16 scratch  -- replicate-padded conv2 out
    # p3_ref : (B*Hf*Wf, K3*K3*64) bf16 scratch    -- conv3 im2col matrix
    C2 = 64
    Hp, Wp = H1 + 2 * PAD3, W1 + 2 * PAD3
    M1 = B * H1 * W1
    M3 = B * Hf * Wf
    HW = Hf * Wf

    # ---- conv1 + ReLU: one 243-deep MXU matmul over the packed batch -------
    p1 = p1_ref[...].reshape(M1, p1_ref.shape[-1])
    y1 = jnp.dot(p1, w1_ref[...], preferred_element_type=jnp.float32)
    y1 = jnp.maximum(y1 + b1_ref[...], 0.0)                 # (M1, 128) f32

    # ---- conv2 (1x1) + ReLU: commutes with replicate pad -> run at 12x12 ---
    y2 = jnp.dot(y1.astype(jnp.bfloat16), w2_ref[...],
                 preferred_element_type=jnp.float32)
    y2 = jnp.maximum(y2 + b2_ref[...], 0.0)                 # (M1, 64) f32
    y2 = y2.astype(jnp.bfloat16).reshape(B, H1, W1, C2)

    # ---- replicate pad by 4 (= conv2 pad-2 + conv3 pad-2) via scratch slabs.
    # One center store + left/right edge stores, then the top/bottom rows are
    # replicated from the already-complete first/last padded rows (this makes
    # the corners correct too).  No concatenates, no full-tensor copies.
    y2p_ref[:, PAD3:PAD3 + H1, PAD3:PAD3 + W1, :] = y2
    y2p_ref[:, PAD3:PAD3 + H1, 0:PAD3, :] = jnp.broadcast_to(
        y2[:, :, 0:1, :], (B, H1, PAD3, C2))
    y2p_ref[:, PAD3:PAD3 + H1, PAD3 + W1:Wp, :] = jnp.broadcast_to(
        y2[:, :, W1 - 1:W1, :], (B, H1, PAD3, C2))
    top = y2p_ref[:, PAD3:PAD3 + 1, :, :]                   # full padded row
    y2p_ref[:, 0:PAD3, :, :] = jnp.broadcast_to(top, (B, PAD3, Wp, C2))
    bot = y2p_ref[:, PAD3 + H1 - 1:PAD3 + H1, :, :]
    y2p_ref[:, PAD3 + H1:Hp, :, :] = jnp.broadcast_to(bot, (B, PAD3, Wp, C2))

    # ---- conv3: tap-wise im2col written straight into VMEM scratch ---------
    # (taps grouped by ky so each padded row-band is loaded once), then ONE
    # 1600-deep MXU matmul.
    for ky in range(K3):
        row = y2p_ref[:, ky:ky + Hf, :, :]                  # (B, Hf, Wp, 64)
        for kx in range(K3):
            t = ky * K3 + kx
            p3_ref[:, t * C2:(t + 1) * C2] = (
                row[:, :, kx:kx + Wf, :].reshape(M3, C2))
    y3 = jnp.dot(p3_ref[...], w3_ref[...],
                 preferred_element_type=jnp.float32)
    y3 = y3 + b3_ref[...]                                   # (M3, 3) f32

    # Lane-dense NCHW store: channels on sublanes, H*W (=256 here) on lanes.
    # (For H*W not a multiple of 128 this becomes a masked store -- still
    # correct, just slower.)
    for b in range(B):
        o_ref[b] = jnp.transpose(y3[b * HW:(b + 1) * HW, :])


# ----------------------------------------------------------------------------
# Wrapper glue (plain JAX): layout, replicate pad, conv1 im2col, packing.
# ----------------------------------------------------------------------------
def _im2col(xp, K, Ho, Wo):
    # xp: (N, Hp, Wp, C) -> (N, Ho*Wo, K*K*C); tap-major, channel-minor cols.
    N = xp.shape[0]
    C = xp.shape[-1]
    cols = [xp[:, ky:ky + Ho, kx:kx + Wo, :]
            for ky in range(K) for kx in range(K)]
    return jnp.stack(cols, axis=3).reshape(N, Ho * Wo, K * K * C)


def _pack_factor(n):
    # Pack B images per grid step so B*H1*W1 fills MXU M-tiles (B=8 -> 1152
    # rows, B=16 -> 2304) while keeping >= 2 grid steps for v7x's two
    # TensorCores, and requiring B | N so no batch padding is needed.
    for b in (16, 8, 4, 2):
        if n >= 2 * b and n % b == 0:
            return b
    return 1


@jax.jit
def srcnn2_forward(x_nchw, params):
    """SRCNN2 forward. x_nchw: (N, 3, H, W) f32 -> (N, 3, H, W) f32."""
    N, C, H, W = x_nchw.shape
    K1, K3, PAD3 = 9, 5, 4
    H1, W1 = H + 4 - K1 + 1, W + 4 - K1 + 1     # conv1 output spatial (12x12)
    Hf, Wf = H, W                               # final output spatial
    Hp, Wp = H1 + 2 * PAD3, W1 + 2 * PAD3
    B = _pack_factor(N)

    # Glue: NCHW -> NHWC, replicate pad by 2, im2col for the 9x9 conv.
    x = jnp.transpose(x_nchw, (0, 2, 3, 1))
    xp = jnp.pad(x, ((0, 0), (2, 2), (2, 2), (0, 0)), mode="edge")
    p1 = _im2col(xp, K1, H1, W1).astype(jnp.bfloat16)       # (N, 144, 243)

    # Weights as matmul matrices, tap-major / channel-minor rows (HWIO reshape;
    # NOTE: real PyTorch (Cout,Cin,K,K) weights must be permuted to (K,K,Cin,
    # Cout) first).  bf16 inputs, f32 accumulation in-kernel.
    w1 = params["w1"].reshape(K1 * K1 * C, 128).astype(jnp.bfloat16)
    w2 = params["w2"].reshape(128, 64).astype(jnp.bfloat16)
    w3 = params["w3"].reshape(K3 * K3 * 64, 3).astype(jnp.bfloat16)
    b1 = params["b1"].reshape(1, 128).astype(jnp.float32)
    b2 = params["b2"].reshape(1, 64).astype(jnp.float32)
    b3 = params["b3"].reshape(1, 3).astype(jnp.float32)

    flops = 2 * N * (H1 * W1 * (K1 * K1 * C) * 128
                     + H1 * W1 * 128 * 64
                     + Hf * Wf * (K3 * K3 * 64) * 3)
    bytes_accessed = (N * (H1 * W1 * K1 * K1 * C * 2 + 3 * Hf * Wf * 4)
                      + (w1.size + w2.size + w3.size) * 2
                      + (b1.size + b2.size + b3.size) * 4)

    kernel = functools.partial(_srcnn2_kernel, B=B, H1=H1, W1=W1, Hf=Hf,
                               Wf=Wf, K3=K3, PAD3=PAD3)
    out = pl.pallas_call(
        kernel,
        out_shape=jax.ShapeDtypeStruct((N, 3, Hf * Wf), jnp.float32),
        grid=(N // B,),
        in_specs=[
            pl.BlockSpec((B, H1 * W1, K1 * K1 * C), lambda n: (n, 0, 0)),
            pl.BlockSpec(w1.shape, lambda n: (0, 0)),
            pl.BlockSpec(b1.shape, lambda n: (0, 0)),
            pl.BlockSpec(w2.shape, lambda n: (0, 0)),
            pl.BlockSpec(b2.shape, lambda n: (0, 0)),
            pl.BlockSpec(w3.shape, lambda n: (0, 0)),
            pl.BlockSpec(b3.shape, lambda n: (0, 0)),
        ],
        out_specs=pl.BlockSpec((B, 3, Hf * Wf), lambda n: (n, 0, 0)),
        scratch_shapes=[
            pltpu.VMEM((B, Hp, Wp, 64), jnp.bfloat16),          # padded conv2
            pltpu.VMEM((B * Hf * Wf, K3 * K3 * 64), jnp.bfloat16),  # conv3 im2col
        ],
        compiler_params=pltpu.CompilerParams(
            dimension_semantics=("parallel",),
            vmem_limit_bytes=32 * 1024 * 1024),
        cost_estimate=pl.CostEstimate(flops=flops, transcendentals=0,
                                      bytes_accessed=bytes_accessed),
    )(p1, w1, b1, w2, b2, w3, b3)
    # Output is already channel-major (NCHW); this reshape is free.
    return out.reshape(N, 3, Hf, Wf)


# ----------------------------------------------------------------------------
# Params (PyTorch Conv2d default init, stored HWIO / tap-major).
# ----------------------------------------------------------------------------
def init_params(key):
    def conv_init(k, K, cin, cout):
        k_w, k_b = jax.random.split(k)
        bound = 1.0 / np.sqrt(cin * K * K)
        w = jax.random.uniform(k_w, (K, K, cin, cout), jnp.float32, -bound, bound)
        b = jax.random.uniform(k_b, (cout,), jnp.float32, -bound, bound)
        return w, b

    k1, k2, k3 = jax.random.split(key, 3)
    w1, b1 = conv_init(k1, 9, 3, 128)
    w2, b2 = conv_init(k2, 1, 128, 64)
    w3, b3 = conv_init(k3, 5, 64, 3)
    return {"w1": w1, "b1": b1, "w2": w2, "b2": b2, "w3": w3, "b3": b3}


# ----------------------------------------------------------------------------
# Reference (plain JAX) matching the kernel numerics: bf16 matmul inputs,
# f32 accumulation, f32 bias + ReLU.
# ----------------------------------------------------------------------------
def _ref_conv(x_nhwc, w_hwio, b, *, pad, relu):
    xp = jnp.pad(x_nhwc, ((0, 0), (pad, pad), (pad, pad), (0, 0)), mode="edge")
    y = jax.lax.conv_general_dilated(
        xp.astype(jnp.bfloat16), w_hwio.astype(jnp.bfloat16),
        window_strides=(1, 1), padding="VALID",
        dimension_numbers=("NHWC", "HWIO", "NHWC"),
        preferred_element_type=jnp.float32) + b
    return jnp.maximum(y, 0.0) if relu else y


def srcnn2_reference(x_nchw, params):
    x = jnp.transpose(x_nchw, (0, 2, 3, 1))
    x = _ref_conv(x, params["w1"], params["b1"], pad=2, relu=True)
    x = _ref_conv(x, params["w2"], params["b2"], pad=2, relu=True)
    x = _ref_conv(x, params["w3"], params["b3"], pad=2, relu=False)
    return jnp.transpose(x, (0, 3, 1, 2))


if __name__ == "__main__":
    key = jax.random.PRNGKey(0)
    k_param, k_x = jax.random.split(key)

    params = init_params(k_param)
    # Small NCHW input consistent with the module: (batch=2, channels=3, 16x16)
    x = jax.random.normal(k_x, (2, 3, 16, 16), jnp.float32)

    out = jax.block_until_ready(srcnn2_forward(x, params))
    ref = jax.block_until_ready(srcnn2_reference(x, params))

    assert out.shape == (2, 3, 16, 16), out.shape
    np.testing.assert_allclose(np.asarray(out), np.asarray(ref),
                               rtol=5e-3, atol=5e-3)
    print("KERNEL_OK")
</pallas_src>

<mosaic_0001>
module attributes {stable_mosaic.version = 11 : i64} {
  func.func @_srcnn2_kernel(%arg0: i32, %arg1: memref<1x144x243xbf16, #tpu.memory_space<vmem>>, %arg2: memref<243x128xbf16, #tpu.memory_space<vmem>>, %arg3: memref<1x128xf32, #tpu.memory_space<vmem>>, %arg4: memref<128x64xbf16, #tpu.memory_space<vmem>>, %arg5: memref<1x64xf32, #tpu.memory_space<vmem>>, %arg6: memref<1600x3xbf16, #tpu.memory_space<vmem>>, %arg7: memref<1x3xf32, #tpu.memory_space<vmem>>, %arg8: memref<1x3x256xf32, #tpu.memory_space<vmem>>, %arg9: memref<1x20x20x64xbf16, #tpu.memory_space<vmem>>, %arg10: memref<256x1600xbf16, #tpu.memory_space<vmem>>) attributes {dimension_semantics = [#tpu.dimension_semantics<parallel>], iteration_bounds = array<i64: 2>, scalar_prefetch = 0 : i64, scratch_operands = 2 : i64, tpu.core_type = #tpu.core_type<tc>, window_params = [{transform_indices = @transform_0, window_bounds = array<i64: 1, 144, 243>}, {pipeline_mode = #tpu.pipeline_mode<synchronous>, transform_indices = @transform_1, window_bounds = array<i64: 243, 128>}, {pipeline_mode = #tpu.pipeline_mode<synchronous>, transform_indices = @transform_2, window_bounds = array<i64: 1, 128>}, {pipeline_mode = #tpu.pipeline_mode<synchronous>, transform_indices = @transform_3, window_bounds = array<i64: 128, 64>}, {pipeline_mode = #tpu.pipeline_mode<synchronous>, transform_indices = @transform_4, window_bounds = array<i64: 1, 64>}, {pipeline_mode = #tpu.pipeline_mode<synchronous>, transform_indices = @transform_5, window_bounds = array<i64: 1600, 3>}, {pipeline_mode = #tpu.pipeline_mode<synchronous>, transform_indices = @transform_6, window_bounds = array<i64: 1, 3>}, {transform_indices = @transform_7, window_bounds = array<i64: 1, 3, 256>}]} {
    %c0 = arith.constant 0 : index
    %c0_0 = arith.constant 0 : index
    %c0_1 = arith.constant 0 : index
    %0 = vector.load %arg1[%c0, %c0_0, %c0_1] : memref<1x144x243xbf16, #tpu.memory_space<vmem>>, vector<1x144x243xbf16>
    %1 = vector.shape_cast %0 : vector<1x144x243xbf16> to vector<144x243xbf16>
    %c0_2 = arith.constant 0 : index
    %c0_3 = arith.constant 0 : index
    %2 = vector.load %arg2[%c0_2, %c0_3] : memref<243x128xbf16, #tpu.memory_space<vmem>>, vector<243x128xbf16>
    %cst = arith.constant dense<0.000000e+00> : vector<144x128xf32>
    %3 = tpu.matmul %1, %2, %cst {dimension_numbers = #tpu.dot_dimension_numbers<[1], [0], [0], [1], [0, 0, 1, 1], [], []>} : vector<144x243xbf16>, vector<243x128xbf16>, vector<144x128xf32> -> vector<144x128xf32>
    %c0_4 = arith.constant 0 : index
    %c0_5 = arith.constant 0 : index
    %4 = vector.load %arg3[%c0_4, %c0_5] : memref<1x128xf32, #tpu.memory_space<vmem>>, vector<1x128xf32>
    %5 = vector.broadcast %4 : vector<1x128xf32> to vector<144x128xf32>
    %6 = arith.addf %3, %5 : vector<144x128xf32>
    %cst_6 = arith.constant 0.000000e+00 : f32
    %7 = vector.broadcast %cst_6 : f32 to vector<144x128xf32>
    %8 = arith.maximumf %6, %7 : vector<144x128xf32>
    %9 = arith.truncf %8 : vector<144x128xf32> to vector<144x128xbf16>
    %c0_7 = arith.constant 0 : index
    %c0_8 = arith.constant 0 : index
    %10 = vector.load %arg4[%c0_7, %c0_8] : memref<128x64xbf16, #tpu.memory_space<vmem>>, vector<128x64xbf16>
    %cst_9 = arith.constant dense<0.000000e+00> : vector<144x64xf32>
    %11 = tpu.matmul %9, %10, %cst_9 {dimension_numbers = #tpu.dot_dimension_numbers<[1], [0], [0], [1], [0, 0, 1, 1], [], []>} : vector<144x128xbf16>, vector<128x64xbf16>, vector<144x64xf32> -> vector<144x64xf32>
    %c0_10 = arith.constant 0 : index
    %c0_11 = arith.constant 0 : index
    %12 = vector.load %arg5[%c0_10, %c0_11] : memref<1x64xf32, #tpu.memory_space<vmem>>, vector<1x64xf32>
    %13 = vector.broadcast %12 : vector<1x64xf32> to vector<144x64xf32>
    %14 = arith.addf %11, %13 : vector<144x64xf32>
    %cst_12 = arith.constant 0.000000e+00 : f32
    %15 = vector.broadcast %cst_12 : f32 to vector<144x64xf32>
    %16 = arith.maximumf %14, %15 : vector<144x64xf32>
    %17 = arith.truncf %16 : vector<144x64xf32> to vector<144x64xbf16>
    %18 = vector.shape_cast %17 : vector<144x64xbf16> to vector<1x12x12x64xbf16>
    %c0_13 = arith.constant 0 : index
    %c4 = arith.constant 4 : index
    %c4_14 = arith.constant 4 : index
    %c0_15 = arith.constant 0 : index
    %19 = vector.load %arg9[%c0_13, %c4, %c4_14, %c0_15] : memref<1x20x20x64xbf16, #tpu.memory_space<vmem>>, vector<1x12x12x64xbf16>
    tpu.vector_store %arg9[%c0_13, %c4, %c4_14, %c0_15], %18 {strides = array<i32>} : memref<1x20x20x64xbf16, #tpu.memory_space<vmem>>, vector<1x12x12x64xbf16>,
    %20 = vector.extract_strided_slice %18 {offsets = [0, 0, 0, 0], sizes = [1, 12, 1, 64], strides = [1, 1, 1, 1]} : vector<1x12x12x64xbf16> to vector<1x12x1x64xbf16>
    %21 = vector.shape_cast %20 : vector<1x12x1x64xbf16> to vector<1x12x1x64xbf16>
    %22 = vector.broadcast %21 : vector<1x12x1x64xbf16> to vector<1x12x4x64xbf16>
    %c0_16 = arith.constant 0 : index
    %c4_17 = arith.constant 4 : index
    %c0_18 = arith.constant 0 : index
    %c0_19 = arith.constant 0 : index
    %23 = vector.load %arg9[%c0_16, %c4_17, %c0_18, %c0_19] : memref<1x20x20x64xbf16, #tpu.memory_space<vmem>>, vector<1x12x4x64xbf16>
    tpu.vector_store %arg9[%c0_16, %c4_17, %c0_18, %c0_19], %22 {strides = array<i32>} : memref<1x20x20x64xbf16, #tpu.memory_space<vmem>>, vector<1x12x4x64xbf16>,
    %24 = vector.extract_strided_slice %18 {offsets = [0, 0, 11, 0], sizes = [1, 12, 1, 64], strides = [1, 1, 1, 1]} : vector<1x12x12x64xbf16> to vector<1x12x1x64xbf16>
    %25 = vector.shape_cast %24 : vector<1x12x1x64xbf16> to vector<1x12x1x64xbf16>
    %26 = vector.broadcast %25 : vector<1x12x1x64xbf16> to vector<1x12x4x64xbf16>
    %c0_20 = arith.constant 0 : index
    %c4_21 = arith.constant 4 : index
    %c16 = arith.constant 16 : index
    %c0_22 = arith.constant 0 : index
    %27 = vector.load %arg9[%c0_20, %c4_21, %c16, %c0_22] : memref<1x20x20x64xbf16, #tpu.memory_space<vmem>>, vector<1x12x4x64xbf16>
    tpu.vector_store %arg9[%c0_20, %c4_21, %c16, %c0_22], %26 {strides = array<i32>} : memref<1x20x20x64xbf16, #tpu.memory_space<vmem>>, vector<1x12x4x64xbf16>,
    %c0_23 = arith.constant 0 : index
    %c4_24 = arith.constant 4 : index
    %c0_25 = arith.constant 0 : index
    %c0_26 = arith.constant 0 : index
    %28 = vector.load %arg9[%c0_23, %c4_24, %c0_25, %c0_26] : memref<1x20x20x64xbf16, #tpu.memory_space<vmem>>, vector<1x1x20x64xbf16>
    %29 = vector.shape_cast %28 : vector<1x1x20x64xbf16> to vector<1x1x20x64xbf16>
    %30 = vector.broadcast %29 : vector<1x1x20x64xbf16> to vector<1x4x20x64xbf16>
    %c0_27 = arith.constant 0 : index
    %c0_28 = arith.constant 0 : index
    %c0_29 = arith.constant 0 : index
    %c0_30 = arith.constant 0 : index
    %31 = vector.load %arg9[%c0_27, %c0_28, %c0_29, %c0_30] : memref<1x20x20x64xbf16, #tpu.memory_space<vmem>>, vector<1x4x20x64xbf16>
    tpu.vector_store %arg9[%c0_27, %c0_28, %c0_29, %c0_30], %30 {strides = array<i32>} : memref<1x20x20x64xbf16, #tpu.memory_space<vmem>>, vector<1x4x20x64xbf16>,
    %c0_31 = arith.constant 0 : index
    %c15 = arith.constant 15 : index
    %c0_32 = arith.constant 0 : index
    %c0_33 = arith.constant 0 : index
    %32 = vector.load %arg9[%c0_31, %c15, %c0_32, %c0_33] : memref<1x20x20x64xbf16, #tpu.memory_space<vmem>>, vector<1x1x20x64xbf16>
    %33 = vector.shape_cast %32 : vector<1x1x20x64xbf16> to vector<1x1x20x64xbf16>
    %34 = vector.broadcast %33 : vector<1x1x20x64xbf16> to vector<1x4x20x64xbf16>
    %c0_34 = arith.constant 0 : index
    %c16_35 = arith.constant 16 : index
    %c0_36 = arith.constant 0 : index
    %c0_37 = arith.constant 0 : index
    %35 = vector.load %arg9[%c0_34, %c16_35, %c0_36, %c0_37] : memref<1x20x20x64xbf16, #tpu.memory_space<vmem>>, vector<1x4x20x64xbf16>
    tpu.vector_store %arg9[%c0_34, %c16_35, %c0_36, %c0_37], %34 {strides = array<i32>} : memref<1x20x20x64xbf16, #tpu.memory_space<vmem>>, vector<1x4x20x64xbf16>,
    %c0_38 = arith.constant 0 : index
    %c0_39 = arith.constant 0 : index
    %c0_40 = arith.constant 0 : index
    %c0_41 = arith.constant 0 : index
    %36 = vector.load %arg9[%c0_38, %c0_39, %c0_40, %c0_41] : memref<1x20x20x64xbf16, #tpu.memory_space<vmem>>, vector<1x16x20x64xbf16>
    %37 = vector.extract_strided_slice %36 {offsets = [0, 0, 0, 0], sizes = [1, 16, 16, 64], strides = [1, 1, 1, 1]} : vector<1x16x20x64xbf16> to vector<1x16x16x64xbf16>
    %38 = vector.shape_cast %37 : vector<1x16x16x64xbf16> to vector<256x64xbf16>
    %c0_42 = arith.constant 0 : index
    %c0_43 = arith.constant 0 : index
    %39 = vector.load %arg10[%c0_42, %c0_43] : memref<256x1600xbf16, #tpu.memory_space<vmem>>, vector<256x64xbf16>
    tpu.vector_store %arg10[%c0_42, %c0_43], %38 {strides = array<i32>} : memref<256x1600xbf16, #tpu.memory_space<vmem>>, vector<256x64xbf16>,
    %40 = vector.extract_strided_slice %36 {offsets = [0, 0, 1, 0], sizes = [1, 16, 16, 64], strides = [1, 1, 1, 1]} : vector<1x16x20x64xbf16> to vector<1x16x16x64xbf16>
    %41 = vector.shape_cast %40 : vector<1x16x16x64xbf16> to vector<256x64xbf16>
    %c0_44 = arith.constant 0 : index
    %c64 = arith.constant 64 : index
    %42 = vector.load %arg10[%c0_44, %c64] : memref<256x1600xbf16, #tpu.memory_space<vmem>>, vector<256x64xbf16>
    tpu.vector_store %arg10[%c0_44, %c64], %41 {strides = array<i32>} : memref<256x1600xbf16, #tpu.memory_space<vmem>>, vector<256x64xbf16>,
    %43 = vector.extract_strided_slice %36 {offsets = [0, 0, 2, 0], sizes = [1, 16, 16, 64], strides = [1, 1, 1, 1]} : vector<1x16x20x64xbf16> to vector<1x16x16x64xbf16>
    %44 = vector.shape_cast %43 : vector<1x16x16x64xbf16> to vector<256x64xbf16>
    %c0_45 = arith.constant 0 : index
    %c128 = arith.constant 128 : index
    %45 = vector.load %arg10[%c0_45, %c128] : memref<256x1600xbf16, #tpu.memory_space<vmem>>, vector<256x64xbf16>
    tpu.vector_store %arg10[%c0_45, %c128], %44 {strides = array<i32>} : memref<256x1600xbf16, #tpu.memory_space<vmem>>, vector<256x64xbf16>,
    %46 = vector.extract_strided_slice %36 {offsets = [0, 0, 3, 0], sizes = [1, 16, 16, 64], strides = [1, 1, 1, 1]} : vector<1x16x20x64xbf16> to vector<1x16x16x64xbf16>
    %47 = vector.shape_cast %46 : vector<1x16x16x64xbf16> to vector<256x64xbf16>
    %c0_46 = arith.constant 0 : index
    %c192 = arith.constant 192 : index
    %48 = vector.load %arg10[%c0_46, %c192] : memref<256x1600xbf16, #tpu.memory_space<vmem>>, vector<256x64xbf16>
    tpu.vector_store %arg10[%c0_46, %c192], %47 {strides = array<i32>} : memref<256x1600xbf16, #tpu.memory_space<vmem>>, vector<256x64xbf16>,
    %49 = vector.extract_strided_slice %36 {offsets = [0, 0, 4, 0], sizes = [1, 16, 16, 64], strides = [1, 1, 1, 1]} : vector<1x16x20x64xbf16> to vector<1x16x16x64xbf16>
    %50 = vector.shape_cast %49 : vector<1x16x16x64xbf16> to vector<256x64xbf16>
    %c0_47 = arith.constant 0 : index
    %c256 = arith.constant 256 : index
    %51 = vector.load %arg10[%c0_47, %c256] : memref<256x1600xbf16, #tpu.memory_space<vmem>>, vector<256x64xbf16>
    tpu.vector_store %arg10[%c0_47, %c256], %50 {strides = array<i32>} : memref<256x1600xbf16, #tpu.memory_space<vmem>>, vector<256x64xbf16>,
    %c0_48 = arith.constant 0 : index
    %c1 = arith.constant 1 : index
    %c0_49 = arith.constant 0 : index
    %c0_50 = arith.constant 0 : index
    %52 = vector.load %arg9[%c0_48, %c1, %c0_49, %c0_50] : memref<1x20x20x64xbf16, #tpu.memory_space<vmem>>, vector<1x16x20x64xbf16>
    %53 = vector.extract_strided_slice %52 {offsets = [0, 0, 0, 0], sizes = [1, 16, 16, 64], strides = [1, 1, 1, 1]} : vector<1x16x20x64xbf16> to vector<1x16x16x64xbf16>
    %54 = vector.shape_cast %53 : vector<1x16x16x64xbf16> to vector<256x64xbf16>
    %c0_51 = arith.constant 0 : index
    %c320 = arith.constant 320 : index
    %55 = vector.load %arg10[%c0_51, %c320] : memref<256x1600xbf16, #tpu.memory_space<vmem>>, vector<256x64xbf16>
    tpu.vector_store %arg10[%c0_51, %c320], %54 {strides = array<i32>} : memref<256x1600xbf16, #tpu.memory_space<vmem>>, vector<256x64xbf16>,
    %56 = vector.extract_strided_slice %52 {offsets = [0, 0, 1, 0], sizes = [1, 16, 16, 64], strides = [1, 1, 1, 1]} : vector<1x16x20x64xbf16> to vector<1x16x16x64xbf16>
    %57 = vector.shape_cast %56 : vector<1x16x16x64xbf16> to vector<256x64xbf16>
    %c0_52 = arith.constant 0 : index
    %c384 = arith.constant 384 : index
    %58 = vector.load %arg10[%c0_52, %c384] : memref<256x1600xbf16, #tpu.memory_space<vmem>>, vector<256x64xbf16>
    tpu.vector_store %arg10[%c0_52, %c384], %57 {strides = array<i32>} : memref<256x1600xbf16, #tpu.memory_space<vmem>>, vector<256x64xbf16>,
    %59 = vector.extract_strided_slice %52 {offsets = [0, 0, 2, 0], sizes = [1, 16, 16, 64], strides = [1, 1, 1, 1]} : vector<1x16x20x64xbf16> to vector<1x16x16x64xbf16>
    %60 = vector.shape_cast %59 : vector<1x16x16x64xbf16> to vector<256x64xbf16>
    %c0_53 = arith.constant 0 : index
    %c448 = arith.constant 448 : index
    %61 = vector.load %arg10[%c0_53, %c448] : memref<256x1600xbf16, #tpu.memory_space<vmem>>, vector<256x64xbf16>
    tpu.vector_store %arg10[%c0_53, %c448], %60 {strides = array<i32>} : memref<256x1600xbf16, #tpu.memory_space<vmem>>, vector<256x64xbf16>,
    %62 = vector.extract_strided_slice %52 {offsets = [0, 0, 3, 0], sizes = [1, 16, 16, 64], strides = [1, 1, 1, 1]} : vector<1x16x20x64xbf16> to vector<1x16x16x64xbf16>
    %63 = vector.shape_cast %62 : vector<1x16x16x64xbf16> to vector<256x64xbf16>
    %c0_54 = arith.constant 0 : index
    %c512 = arith.constant 512 : index
    %64 = vector.load %arg10[%c0_54, %c512] : memref<256x1600xbf16, #tpu.memory_space<vmem>>, vector<256x64xbf16>
    tpu.vector_store %arg10[%c0_54, %c512], %63 {strides = array<i32>} : memref<256x1600xbf16, #tpu.memory_space<vmem>>, vector<256x64xbf16>,
    %65 = vector.extract_strided_slice %52 {offsets = [0, 0, 4, 0], sizes = [1, 16, 16, 64], strides = [1, 1, 1, 1]} : vector<1x16x20x64xbf16> to vector<1x16x16x64xbf16>
    %66 = vector.shape_cast %65 : vector<1x16x16x64xbf16> to vector<256x64xbf16>
    %c0_55 = arith.constant 0 : index
    %c576 = arith.constant 576 : index
    %67 = vector.load %arg10[%c0_55, %c576] : memref<256x1600xbf16, #tpu.memory_space<vmem>>, vector<256x64xbf16>
    tpu.vector_store %arg10[%c0_55, %c576], %66 {strides = array<i32>} : memref<256x1600xbf16, #tpu.memory_space<vmem>>, vector<256x64xbf16>,
    %c0_56 = arith.constant 0 : index
    %c2 = arith.constant 2 : index
    %c0_57 = arith.constant 0 : index
    %c0_58 = arith.constant 0 : index
    %68 = vector.load %arg9[%c0_56, %c2, %c0_57, %c0_58] : memref<1x20x20x64xbf16, #tpu.memory_space<vmem>>, vector<1x16x20x64xbf16>
    %69 = vector.extract_strided_slice %68 {offsets = [0, 0, 0, 0], sizes = [1, 16, 16, 64], strides = [1, 1, 1, 1]} : vector<1x16x20x64xbf16> to vector<1x16x16x64xbf16>
    %70 = vector.shape_cast %69 : vector<1x16x16x64xbf16> to vector<256x64xbf16>
    %c0_59 = arith.constant 0 : index
    %c640 = arith.constant 640 : index
    %71 = vector.load %arg10[%c0_59, %c640] : memref<256x1600xbf16, #tpu.memory_space<vmem>>, vector<256x64xbf16>
    tpu.vector_store %arg10[%c0_59, %c640], %70 {strides = array<i32>} : memref<256x1600xbf16, #tpu.memory_space<vmem>>, vector<256x64xbf16>,
    %72 = vector.extract_strided_slice %68 {offsets = [0, 0, 1, 0], sizes = [1, 16, 16, 64], strides = [1, 1, 1, 1]} : vector<1x16x20x64xbf16> to vector<1x16x16x64xbf16>
    %73 = vector.shape_cast %72 : vector<1x16x16x64xbf16> to vector<256x64xbf16>
    %c0_60 = arith.constant 0 : index
    %c704 = arith.constant 704 : index
    %74 = vector.load %arg10[%c0_60, %c704] : memref<256x1600xbf16, #tpu.memory_space<vmem>>, vector<256x64xbf16>
    tpu.vector_store %arg10[%c0_60, %c704], %73 {strides = array<i32>} : memref<256x1600xbf16, #tpu.memory_space<vmem>>, vector<256x64xbf16>,
    %75 = vector.extract_strided_slice %68 {offsets = [0, 0, 2, 0], sizes = [1, 16, 16, 64], strides = [1, 1, 1, 1]} : vector<1x16x20x64xbf16> to vector<1x16x16x64xbf16>
    %76 = vector.shape_cast %75 : vector<1x16x16x64xbf16> to vector<256x64xbf16>
    %c0_61 = arith.constant 0 : index
    %c768 = arith.constant 768 : index
    %77 = vector.load %arg10[%c0_61, %c768] : memref<256x1600xbf16, #tpu.memory_space<vmem>>, vector<256x64xbf16>
    tpu.vector_store %arg10[%c0_61, %c768], %76 {strides = array<i32>} : memref<256x1600xbf16, #tpu.memory_space<vmem>>, vector<256x64xbf16>,
    %78 = vector.extract_strided_slice %68 {offsets = [0, 0, 3, 0], sizes = [1, 16, 16, 64], strides = [1, 1, 1, 1]} : vector<1x16x20x64xbf16> to vector<1x16x16x64xbf16>
    %79 = vector.shape_cast %78 : vector<1x16x16x64xbf16> to vector<256x64xbf16>
    %c0_62 = arith.constant 0 : index
    %c832 = arith.constant 832 : index
    %80 = vector.load %arg10[%c0_62, %c832] : memref<256x1600xbf16, #tpu.memory_space<vmem>>, vector<256x64xbf16>
    tpu.vector_store %arg10[%c0_62, %c832], %79 {strides = array<i32>} : memref<256x1600xbf16, #tpu.memory_space<vmem>>, vector<256x64xbf16>,
    %81 = vector.extract_strided_slice %68 {offsets = [0, 0, 4, 0], sizes = [1, 16, 16, 64], strides = [1, 1, 1, 1]} : vector<1x16x20x64xbf16> to vector<1x16x16x64xbf16>
    %82 = vector.shape_cast %81 : vector<1x16x16x64xbf16> to vector<256x64xbf16>
    %c0_63 = arith.constant 0 : index
    %c896 = arith.constant 896 : index
    %83 = vector.load %arg10[%c0_63, %c896] : memref<256x1600xbf16, #tpu.memory_space<vmem>>, vector<256x64xbf16>
    tpu.vector_store %arg10[%c0_63, %c896], %82 {strides = array<i32>} : memref<256x1600xbf16, #tpu.memory_space<vmem>>, vector<256x64xbf16>,
    %c0_64 = arith.constant 0 : index
    %c3 = arith.constant 3 : index
    %c0_65 = arith.constant 0 : index
    %c0_66 = arith.constant 0 : index
    %84 = vector.load %arg9[%c0_64, %c3, %c0_65, %c0_66] : memref<1x20x20x64xbf16, #tpu.memory_space<vmem>>, vector<1x16x20x64xbf16>
    %85 = vector.extract_strided_slice %84 {offsets = [0, 0, 0, 0], sizes = [1, 16, 16, 64], strides = [1, 1, 1, 1]} : vector<1x16x20x64xbf16> to vector<1x16x16x64xbf16>
    %86 = vector.shape_cast %85 : vector<1x16x16x64xbf16> to vector<256x64xbf16>
    %c0_67 = arith.constant 0 : index
    %c960 = arith.constant 960 : index
    %87 = vector.load %arg10[%c0_67, %c960] : memref<256x1600xbf16, #tpu.memory_space<vmem>>, vector<256x64xbf16>
    tpu.vector_store %arg10[%c0_67, %c960], %86 {strides = array<i32>} : memref<256x1600xbf16, #tpu.memory_space<vmem>>, vector<256x64xbf16>,
    %88 = vector.extract_strided_slice %84 {offsets = [0, 0, 1, 0], sizes = [1, 16, 16, 64], strides = [1, 1, 1, 1]} : vector<1x16x20x64xbf16> to vector<1x16x16x64xbf16>
    %89 = vector.shape_cast %88 : vector<1x16x16x64xbf16> to vector<256x64xbf16>
    %c0_68 = arith.constant 0 : index
    %c1024 = arith.constant 1024 : index
    %90 = vector.load %arg10[%c0_68, %c1024] : memref<256x1600xbf16, #tpu.memory_space<vmem>>, vector<256x64xbf16>
    tpu.vector_store %arg10[%c0_68, %c1024], %89 {strides = array<i32>} : memref<256x1600xbf16, #tpu.memory_space<vmem>>, vector<256x64xbf16>,
    %91 = vector.extract_strided_slice %84 {offsets = [0, 0, 2, 0], sizes = [1, 16, 16, 64], strides = [1, 1, 1, 1]} : vector<1x16x20x64xbf16> to vector<1x16x16x64xbf16>
    %92 = vector.shape_cast %91 : vector<1x16x16x64xbf16> to vector<256x64xbf16>
    %c0_69 = arith.constant 0 : index
    %c1088 = arith.constant 1088 : index
    %93 = vector.load %arg10[%c0_69, %c1088] : memref<256x1600xbf16, #tpu.memory_space<vmem>>, vector<256x64xbf16>
    tpu.vector_store %arg10[%c0_69, %c1088], %92 {strides = array<i32>} : memref<256x1600xbf16, #tpu.memory_space<vmem>>, vector<256x64xbf16>,
    %94 = vector.extract_strided_slice %84 {offsets = [0, 0, 3, 0], sizes = [1, 16, 16, 64], strides = [1, 1, 1, 1]} : vector<1x16x20x64xbf16> to vector<1x16x16x64xbf16>
    %95 = vector.shape_cast %94 : vector<1x16x16x64xbf16> to vector<256x64xbf16>
    %c0_70 = arith.constant 0 : index
    %c1152 = arith.constant 1152 : index
    %96 = vector.load %arg10[%c0_70, %c1152] : memref<256x1600xbf16, #tpu.memory_space<vmem>>, vector<256x64xbf16>
    tpu.vector_store %arg10[%c0_70, %c1152], %95 {strides = array<i32>} : memref<256x1600xbf16, #tpu.memory_space<vmem>>, vector<256x64xbf16>,
    %97 = vector.extract_strided_slice %84 {offsets = [0, 0, 4, 0], sizes = [1, 16, 16, 64], strides = [1, 1, 1, 1]} : vector<1x16x20x64xbf16> to vector<1x16x16x64xbf16>
    %98 = vector.shape_cast %97 : vector<1x16x16x64xbf16> to vector<256x64xbf16>
    %c0_71 = arith.constant 0 : index
    %c1216 = arith.constant 1216 : index
    %99 = vector.load %arg10[%c0_71, %c1216] : memref<256x1600xbf16, #tpu.memory_space<vmem>>, vector<256x64xbf16>
    tpu.vector_store %arg10[%c0_71, %c1216], %98 {strides = array<i32>} : memref<256x1600xbf16, #tpu.memory_space<vmem>>, vector<256x64xbf16>,
    %c0_72 = arith.constant 0 : index
    %c4_73 = arith.constant 4 : index
    %c0_74 = arith.constant 0 : index
    %c0_75 = arith.constant 0 : index
    %100 = vector.load %arg9[%c0_72, %c4_73, %c0_74, %c0_75] : memref<1x20x20x64xbf16, #tpu.memory_space<vmem>>, vector<1x16x20x64xbf16>
    %101 = vector.extract_strided_slice %100 {offsets = [0, 0, 0, 0], sizes = [1, 16, 16, 64], strides = [1, 1, 1, 1]} : vector<1x16x20x64xbf16> to vector<1x16x16x64xbf16>
    %102 = vector.shape_cast %101 : vector<1x16x16x64xbf16> to vector<256x64xbf16>
    %c0_76 = arith.constant 0 : index
    %c1280 = arith.constant 1280 : index
    %103 = vector.load %arg10[%c0_76, %c1280] : memref<256x1600xbf16, #tpu.memory_space<vmem>>, vector<256x64xbf16>
    tpu.vector_store %arg10[%c0_76, %c1280], %102 {strides = array<i32>} : memref<256x1600xbf16, #tpu.memory_space<vmem>>, vector<256x64xbf16>,
    %104 = vector.extract_strided_slice %100 {offsets = [0, 0, 1, 0], sizes = [1, 16, 16, 64], strides = [1, 1, 1, 1]} : vector<1x16x20x64xbf16> to vector<1x16x16x64xbf16>
    %105 = vector.shape_cast %104 : vector<1x16x16x64xbf16> to vector<256x64xbf16>
    %c0_77 = arith.constant 0 : index
    %c1344 = arith.constant 1344 : index
    %106 = vector.load %arg10[%c0_77, %c1344] : memref<256x1600xbf16, #tpu.memory_space<vmem>>, vector<256x64xbf16>
    tpu.vector_store %arg10[%c0_77, %c1344], %105 {strides = array<i32>} : memref<256x1600xbf16, #tpu.memory_space<vmem>>, vector<256x64xbf16>,
    %107 = vector.extract_strided_slice %100 {offsets = [0, 0, 2, 0], sizes = [1, 16, 16, 64], strides = [1, 1, 1, 1]} : vector<1x16x20x64xbf16> to vector<1x16x16x64xbf16>
    %108 = vector.shape_cast %107 : vector<1x16x16x64xbf16> to vector<256x64xbf16>
    %c0_78 = arith.constant 0 : index
    %c1408 = arith.constant 1408 : index
    %109 = vector.load %arg10[%c0_78, %c1408] : memref<256x1600xbf16, #tpu.memory_space<vmem>>, vector<256x64xbf16>
    tpu.vector_store %arg10[%c0_78, %c1408], %108 {strides = array<i32>} : memref<256x1600xbf16, #tpu.memory_space<vmem>>, vector<256x64xbf16>,
    %110 = vector.extract_strided_slice %100 {offsets = [0, 0, 3, 0], sizes = [1, 16, 16, 64], strides = [1, 1, 1, 1]} : vector<1x16x20x64xbf16> to vector<1x16x16x64xbf16>
    %111 = vector.shape_cast %110 : vector<1x16x16x64xbf16> to vector<256x64xbf16>
    %c0_79 = arith.constant 0 : index
    %c1472 = arith.constant 1472 : index
    %112 = vector.load %arg10[%c0_79, %c1472] : memref<256x1600xbf16, #tpu.memory_space<vmem>>, vector<256x64xbf16>
    tpu.vector_store %arg10[%c0_79, %c1472], %111 {strides = array<i32>} : memref<256x1600xbf16, #tpu.memory_space<vmem>>, vector<256x64xbf16>,
    %113 = vector.extract_strided_slice %100 {offsets = [0, 0, 4, 0], sizes = [1, 16, 16, 64], strides = [1, 1, 1, 1]} : vector<1x16x20x64xbf16> to vector<1x16x16x64xbf16>
    %114 = vector.shape_cast %113 : vector<1x16x16x64xbf16> to vector<256x64xbf16>
    %c0_80 = arith.constant 0 : index
    %c1536 = arith.constant 1536 : index
    %115 = vector.load %arg10[%c0_80, %c1536] : memref<256x1600xbf16, #tpu.memory_space<vmem>>, vector<256x64xbf16>
    tpu.vector_store %arg10[%c0_80, %c1536], %114 {strides = array<i32>} : memref<256x1600xbf16, #tpu.memory_space<vmem>>, vector<256x64xbf16>,
    %c0_81 = arith.constant 0 : index
    %c0_82 = arith.constant 0 : index
    %116 = vector.load %arg10[%c0_81, %c0_82] : memref<256x1600xbf16, #tpu.memory_space<vmem>>, vector<256x1600xbf16>
    %c0_83 = arith.constant 0 : index
    %c0_84 = arith.constant 0 : index
    %117 = vector.load %arg6[%c0_83, %c0_84] : memref<1600x3xbf16, #tpu.memory_space<vmem>>, vector<1600x3xbf16>
    %cst_85 = arith.constant dense<0.000000e+00> : vector<256x3xf32>
    %118 = tpu.matmul %116, %117, %cst_85 {dimension_numbers = #tpu.dot_dimension_numbers<[1], [0], [0], [1], [0, 0, 1, 1], [], []>} : vector<256x1600xbf16>, vector<1600x3xbf16>, vector<256x3xf32> -> vector<256x3xf32>
    %c0_86 = arith.constant 0 : index
    %c0_87 = arith.constant 0 : index
    %119 = vector.load %arg7[%c0_86, %c0_87] : memref<1x3xf32, #tpu.memory_space<vmem>>, vector<1x3xf32>
    %120 = vector.broadcast %119 : vector<1x3xf32> to vector<256x3xf32>
    %121 = arith.addf %118, %120 : vector<256x3xf32>
    %122 = tpu.transpose %121, [1, 0] : vector<256x3xf32> -> vector<3x256xf32>
    %c0_88 = arith.constant 0 : index
    %c0_89 = arith.constant 0 : index
    %c0_90 = arith.constant 0 : index
    %123 = vector.load %arg8[%c0_88, %c0_89, %c0_90] : memref<1x3x256xf32, #tpu.memory_space<vmem>>, vector<1x3x256xf32>
    %124 = vector.shape_cast %123 : vector<1x3x256xf32> to vector<3x256xf32>
    %125 = vector.shape_cast %122 : vector<3x256xf32> to vector<1x3x256xf32>
    tpu.vector_store %arg8[%c0_88, %c0_89, %c0_90], %125 {strides = array<i32>} : memref<1x3x256xf32, #tpu.memory_space<vmem>>, vector<1x3x256xf32>,
    return
  }
  func.func @transform_0(%arg0: i32) -> (i32, i32, i32) {
    %c0_i32 = arith.constant 0 : i32
    %c0_i32_0 = arith.constant 0 : i32
    %c0_i32_1 = arith.constant 0 : i32
    return %arg0, %c0_i32, %c0_i32_0 : i32, i32, i32
  }
  func.func @transform_1(%arg0: i32) -> (i32, i32) {
    %c0_i32 = arith.constant 0 : i32
    %c0_i32_0 = arith.constant 0 : i32
    %c0_i32_1 = arith.constant 0 : i32
    return %c0_i32, %c0_i32_0 : i32, i32
  }
  func.func @transform_2(%arg0: i32) -> (i32, i32) {
    %c0_i32 = arith.constant 0 : i32
    %c0_i32_0 = arith.constant 0 : i32
    %c0_i32_1 = arith.constant 0 : i32
    return %c0_i32, %c0_i32_0 : i32, i32
  }
  func.func @transform_3(%arg0: i32) -> (i32, i32) {
    %c0_i32 = arith.constant 0 : i32
    %c0_i32_0 = arith.constant 0 : i32
    %c0_i32_1 = arith.constant 0 : i32
    return %c0_i32, %c0_i32_0 : i32, i32
  }
  func.func @transform_4(%arg0: i32) -> (i32, i32) {
    %c0_i32 = arith.constant 0 : i32
    %c0_i32_0 = arith.constant 0 : i32
    %c0_i32_1 = arith.constant 0 : i32
    return %c0_i32, %c0_i32_0 : i32, i32
  }
  func.func @transform_5(%arg0: i32) -> (i32, i32) {
    %c0_i32 = arith.constant 0 : i32
    %c0_i32_0 = arith.constant 0 : i32
    %c0_i32_1 = arith.constant 0 : i32
    return %c0_i32, %c0_i32_0 : i32, i32
  }
  func.func @transform_6(%arg0: i32) -> (i32, i32) {
    %c0_i32 = arith.constant 0 : i32
    %c0_i32_0 = arith.constant 0 : i32
    %c0_i32_1 = arith.constant 0 : i32
    return %c0_i32, %c0_i32_0 : i32, i32
  }
  func.func @transform_7(%arg0: i32) -> (i32, i32, i32) {
    %c0_i32 = arith.constant 0 : i32
    %c0_i32_0 = arith.constant 0 : i32
    %c0_i32_1 = arith.constant 0 : i32
    return %arg0, %c0_i32, %c0_i32_0 : i32, i32, i32
  }
}

</mosaic_0001>

<llo_original>
// kernel: srcnn2_forward.1
$region0: #{srcnn2_forward.1}
  #allocation0 [shape = 'u32[]', space=smem, size = 0x4, offset = 0x4, fixed_abs, tag = 'smem constant byte address 0x4 - core index']
  #allocation1 [shape = 'u32[144,128]{1,0:T(1,128)}', space=vmem, size = 0x12000, scoped, tag = 'internal scratch']
  #allocation2 [shape = 'bf16[1,20,20,64]{3,2,1,0:T(8,128)(2,1)}', space=vmem, size = 0x1e000, scoped, tag = 'scratch operand']
  #allocation3 [shape = 'bf16[256,1600]{1,0:T(8,128)(2,1)}', space=vmem, size = 0xd0000, scoped, tag = 'scratch operand']
  %s0 = inlined_call_operand.vmem [shape: bf16[2,144,243], index: 0, kind: input, shape index: {}]
  %s1 = inlined_call_operand.vmem [shape: bf16[243,128], index: 1, kind: input, shape index: {}]
  %s2 = inlined_call_operand.vmem [shape: f32[1,128], index: 2, kind: input, shape index: {}]
  %s3 = inlined_call_operand.vmem [shape: bf16[128,64], index: 3, kind: input, shape index: {}]
  %s4 = inlined_call_operand.vmem [shape: f32[1,64], index: 4, kind: input, shape index: {}]
  %s5 = inlined_call_operand.vmem [shape: bf16[1600,3], index: 5, kind: input, shape index: {}]
  %s6 = inlined_call_operand.vmem [shape: f32[1,3], index: 6, kind: input, shape index: {}]
  %s7 = inlined_call_operand.vmem [shape: f32[2,3,256], index: 7, kind: output, shape index: {}]
  %s8 = sld [smem:[#allocation0]]
  $region61: #{srcnn2_forward.1} parent=0
    _
  %s10 = ssub.s32 1, %s8
  %s11 = scalar_select 0, %s10, %s8
  loop: start=0, step=1, limit=4
  $region2: #{srcnn2_forward.1} parent=0 // loop_pre_header
    _
  $region3: #{srcnn2_forward.1} parent=0 // loop_header
    %s13 = sphi 0, %s17
    %p14 = scmp.ge.s32.totalorder %s13, 4
    %s23 = sphi 0, %s25
    %s26 = sphi 0, %s23
    %s27 = sphi 0, %s26
    %s43 = sphi 0, %s27
    %s47 = sphi 0, %s47
    %s49 = sphi 0, %s47
    %s50 = sphi 0, %s49
    %s64 = sphi 0, %s50
    %s68 = sphi 0, %s68
    %s70 = sphi 0, %s68
    %s71 = sphi 0, %s70
    %s85 = sphi 0, %s71
    %s89 = sphi 0, %s89
    %s91 = sphi 0, %s89
    %s92 = sphi 0, %s91
    %s106 = sphi 0, %s92
    %s110 = sphi 0, %s110
    %s112 = sphi 0, %s110
    %s113 = sphi 0, %s112
    %s127 = sphi 0, %s113
    %s131 = sphi 0, %s131
    %s133 = sphi 0, %s131
    %s134 = sphi 0, %s133
    %s148 = sphi 0, %s134
    %s152 = sphi 0, %s152
    %s154 = sphi 0, %s152
    %s155 = sphi 0, %s154
    %s169 = sphi 0, %s155
    %s175 = sphi 0, %s177
    %s178 = sphi 0, %s175
    %s179 = sphi 0, %s178
    %s195 = sphi 0, %s179
  $region4: #{srcnn2_forward.1} parent=0 // loop_header_branch
    %16 = sbr.rel (%p14) target = $region8
  $region5: #{srcnn2_forward.1} parent=0 // loop_body
    %s18 = ssub.s32 %s13, 1
    %s19 = ssub.s32 %s13, 2
    %s20 = sadd.s32 %s13, 1
    %s21 = ssub.s32 %s13, %s20
    %p22 = scmp.eq.s32.totalorder %s21, 0
    %s24 = sadd.s32 %s23, 1
    %s25 = scalar_select %p22, %s23, %s24
    %p28 = pneg %p22
    %p29 = scmp.eq.s32.totalorder %s13, 1
    %p30 = por %p28, %p29
    %p31 = scmp.ne.s32.totalorder %s23, %s26
    %p32 = scmp.eq.s32.totalorder %s13, 0
    %p33 = por %p31, %p32
    %p34 = scmp.ne.s32.totalorder %s23, %s26
    %p35 = scmp.eq.s32.totalorder %s18, 1
    %p36 = por %p34, %p35
    %p37 = scmp.ne.s32.totalorder %s26, %s27
    %p38 = scmp.eq.s32.totalorder %s18, 0
    %p39 = por %p37, %p38
    %p40 = scmp.ne.s32.totalorder %s26, %s27
    %p41 = scmp.eq.s32.totalorder %s19, 1
    %p42 = por %p40, %p41
    %p44 = scmp.ne.s32.totalorder %s27, %s43
    %p45 = scmp.eq.s32.totalorder %s19, 0
    %p46 = por %p44, %p45
    %s48 = sadd.s32 %s47, 1
    %p51 = scmp.eq.s32.totalorder %s13, 1
    %p52 = scmp.ne.s32.totalorder %s47, %s49
    %p53 = scmp.eq.s32.totalorder %s13, 0
    %p54 = por %p52, %p53
    %p55 = scmp.ne.s32.totalorder %s47, %s49
    %p56 = scmp.eq.s32.totalorder %s18, 1
    %p57 = por %p55, %p56
    %p58 = scmp.ne.s32.totalorder %s49, %s50
    %p59 = scmp.eq.s32.totalorder %s18, 0
    %p60 = por %p58, %p59
    %p61 = scmp.ne.s32.totalorder %s49, %s50
    %p62 = scmp.eq.s32.totalorder %s19, 1
    %p63 = por %p61, %p62
    %p65 = scmp.ne.s32.totalorder %s50, %s64
    %p66 = scmp.eq.s32.totalorder %s19, 0
    %p67 = por %p65, %p66
    %s69 = sadd.s32 %s68, 1
    %p72 = scmp.eq.s32.totalorder %s13, 1
    %p73 = scmp.ne.s32.totalorder %s68, %s70
    %p74 = scmp.eq.s32.totalorder %s13, 0
    %p75 = por %p73, %p74
    %p76 = scmp.ne.s32.totalorder %s68, %s70
    %p77 = scmp.eq.s32.totalorder %s18, 1
    %p78 = por %p76, %p77
    %p79 = scmp.ne.s32.totalorder %s70, %s71
    %p80 = scmp.eq.s32.totalorder %s18, 0
    %p81 = por %p79, %p80
    %p82 = scmp.ne.s32.totalorder %s70, %s71
    %p83 = scmp.eq.s32.totalorder %s19, 1
    %p84 = por %p82, %p83
    %p86 = scmp.ne.s32.totalorder %s71, %s85
    %p87 = scmp.eq.s32.totalorder %s19, 0
    %p88 = por %p86, %p87
    %s90 = sadd.s32 %s89, 1
    %p93 = scmp.eq.s32.totalorder %s13, 1
    %p94 = scmp.ne.s32.totalorder %s89, %s91
    %p95 = scmp.eq.s32.totalorder %s13, 0
    %p96 = por %p94, %p95
    %p97 = scmp.ne.s32.totalorder %s89, %s91
    %p98 = scmp.eq.s32.totalorder %s18, 1
    %p99 = por %p97, %p98
    %p100 = scmp.ne.s32.totalorder %s91, %s92
    %p101 = scmp.eq.s32.totalorder %s18, 0
    %p102 = por %p100, %p101
    %p103 = scmp.ne.s32.totalorder %s91, %s92
    %p104 = scmp.eq.s32.totalorder %s19, 1
    %p105 = por %p103, %p104
    %p107 = scmp.ne.s32.totalorder %s92, %s106
    %p108 = scmp.eq.s32.totalorder %s19, 0
    %p109 = por %p107, %p108
    %s111 = sadd.s32 %s110, 1
    %p114 = scmp.eq.s32.totalorder %s13, 1
    %p115 = scmp.ne.s32.totalorder %s110, %s112
    %p116 = scmp.eq.s32.totalorder %s13, 0
    %p117 = por %p115, %p116
    %p118 = scmp.ne.s32.totalorder %s110, %s112
    %p119 = scmp.eq.s32.totalorder %s18, 1
    %p120 = por %p118, %p119
    %p121 = scmp.ne.s32.totalorder %s112, %s113
    %p122 = scmp.eq.s32.totalorder %s18, 0
    %p123 = por %p121, %p122
    %p124 = scmp.ne.s32.totalorder %s112, %s113
    %p125 = scmp.eq.s32.totalorder %s19, 1
    %p126 = por %p124, %p125
    %p128 = scmp.ne.s32.totalorder %s113, %s127
    %p129 = scmp.eq.s32.totalorder %s19, 0
    %p130 = por %p128, %p129
    %s132 = sadd.s32 %s131, 1
    %p135 = scmp.eq.s32.totalorder %s13, 1
    %p136 = scmp.ne.s32.totalorder %s131, %s133
    %p137 = scmp.eq.s32.totalorder %s13, 0
    %p138 = por %p136, %p137
    %p139 = scmp.ne.s32.totalorder %s131, %s133
    %p140 = scmp.eq.s32.totalorder %s18, 1
    %p141 = por %p139, %p140
    %p142 = scmp.ne.s32.totalorder %s133, %s134
    %p143 = scmp.eq.s32.totalorder %s18, 0
    %p144 = por %p142, %p143
    %p145 = scmp.ne.s32.totalorder %s133, %s134
    %p146 = scmp.eq.s32.totalorder %s19, 1
    %p147 = por %p145, %p146
    %p149 = scmp.ne.s32.totalorder %s134, %s148
    %p150 = scmp.eq.s32.totalorder %s19, 0
    %p151 = por %p149, %p150
    %s153 = sadd.s32 %s152, 1
    %p156 = scmp.eq.s32.totalorder %s13, 1
    %p157 = scmp.ne.s32.totalorder %s152, %s154
    %p158 = scmp.eq.s32.totalorder %s13, 0
    %p159 = por %p157, %p158
    %p160 = scmp.ne.s32.totalorder %s152, %s154
    %p161 = scmp.eq.s32.totalorder %s18, 1
    %p162 = por %p160, %p161
    %p163 = scmp.ne.s32.totalorder %s154, %s155
    %p164 = scmp.eq.s32.totalorder %s18, 0
    %p165 = por %p163, %p164
    %p166 = scmp.ne.s32.totalorder %s154, %s155
    %p167 = scmp.eq.s32.totalorder %s19, 1
    %p168 = por %p166, %p167
    %p170 = scmp.ne.s32.totalorder %s155, %s169
    %p171 = scmp.eq.s32.totalorder %s19, 0
    %p172 = por %p170, %p171
    %s173 = ssub.s32 %s13, %s20
    %p174 = scmp.eq.s32.totalorder %s173, 0
    %s176 = sadd.s32 %s175, 1
    %s177 = scalar_select %p174, %s175, %s176
    %p180 = pneg %p174
    %p181 = scmp.eq.s32.totalorder %s13, 1
    %p182 = por %p180, %p181
    %p183 = scmp.ne.s32.totalorder %s175, %s178
    %p184 = scmp.eq.s32.totalorder %s13, 0
    %p185 = por %p183, %p184
    %p186 = scmp.ne.s32.totalorder %s175, %s178
    %p187 = scmp.eq.s32.totalorder %s18, 1
    %p188 = por %p186, %p187
    %p189 = scmp.ne.s32.totalorder %s178, %s179
    %p190 = scmp.eq.s32.totalorder %s18, 0
    %p191 = por %p189, %p190
    %p192 = scmp.ne.s32.totalorder %s178, %s179
    %p193 = scmp.eq.s32.totalorder %s19, 1
    %p194 = por %p192, %p193
    %p196 = scmp.ne.s32.totalorder %s179, %s195
    %p197 = scmp.eq.s32.totalorder %s19, 0
    %p198 = por %p196, %p197
    %p199 = scmp.le.s32.totalorder 1, %s13
    %p200 = scmp.lt.s32.totalorder %s13, 3
    %p201 = pnand %p199, %p200
    %p202 = pneg %p201
    // Predicated region
    $region9: #{srcnn2_forward.1} parent=5 // pred_check
      _
    $region10: #{srcnn2_forward.1} parent=5 // pred_check_branch
      %204 = sbr.rel (%p201) target = $region12
    $region11: #{srcnn2_forward.1} parent=5 // pred_region
      %s205 = ssub.s32 %s13, 1
      // Predicated region
      $region13: #{srcnn2_forward.1} parent=11 // pred_check
        %p206 = pneg %p60
      $region14: #{srcnn2_forward.1} parent=11 // pred_check_branch
        %208 = sbr.rel (%p206) target = $region16
      $region15: #{srcnn2_forward.1} parent=11 // pred_region
        _
      $region16: #{srcnn2_forward.1} parent=11 // pred_fallthru
        _
      // Predicated region
      $region17: #{srcnn2_forward.1} parent=11 // pred_check
        %p209 = pneg %p81
      $region18: #{srcnn2_forward.1} parent=11 // pred_check_branch
        %211 = sbr.rel (%p209) target = $region20
      $region19: #{srcnn2_forward.1} parent=11 // pred_region
        _
      $region20: #{srcnn2_forward.1} parent=11 // pred_fallthru
        _
      // Predicated region
      $region21: #{srcnn2_forward.1} parent=11 // pred_check
        %p212 = pneg %p102
      $region22: #{srcnn2_forward.1} parent=11 // pred_check_branch
        %214 = sbr.rel (%p212) target = $region24
      $region23: #{srcnn2_forward.1} parent=11 // pred_region
        _
      $region24: #{srcnn2_forward.1} parent=11 // pred_fallthru
        _
      // Predicated region
      $region25: #{srcnn2_forward.1} parent=11 // pred_check
        %p215 = pneg %p123
      $region26: #{srcnn2_forward.1} parent=11 // pred_check_branch
        %217 = sbr.rel (%p215) target = $region28
      $region27: #{srcnn2_forward.1} parent=11 // pred_region
        _
      $region28: #{srcnn2_forward.1} parent=11 // pred_fallthru
        _
      // Predicated region
      $region29: #{srcnn2_forward.1} parent=11 // pred_check
        %p218 = pneg %p144
      $region30: #{srcnn2_forward.1} parent=11 // pred_check_branch
        %220 = sbr.rel (%p218) target = $region32
      $region31: #{srcnn2_forward.1} parent=11 // pred_region
        _
      $region32: #{srcnn2_forward.1} parent=11 // pred_fallthru
        _
      // Predicated region
      $region33: #{srcnn2_forward.1} parent=11 // pred_check
        %p221 = pneg %p165
      $region34: #{srcnn2_forward.1} parent=11 // pred_check_branch
        %223 = sbr.rel (%p221) target = $region36
      $region35: #{srcnn2_forward.1} parent=11 // pred_region
        _
      $region36: #{srcnn2_forward.1} parent=11 // pred_fallthru
        _
    $region12: #{srcnn2_forward.1} parent=5 // pred_fallthru
      _
    %p224 = scmp.lt.s32.totalorder %s13, 2
    // Predicated region
    $region37: #{srcnn2_forward.1} parent=5 // pred_check
      %p225 = pneg %p224
    $region38: #{srcnn2_forward.1} parent=5 // pred_check_branch
      %227 = sbr.rel (%p225) target = $region40
    $region39: #{srcnn2_forward.1} parent=5 // pred_region
      // Predicated region
      $region41: #{srcnn2_forward.1} parent=39 // pred_check
        %p228 = pneg %p33
      $region42: #{srcnn2_forward.1} parent=39 // pred_check_branch
        %230 = sbr.rel (%p228) target = $region44
      $region43: #{srcnn2_forward.1} parent=39 // pred_region
        %p231 = scmp.lt.s32.totalorder %s13, 1
        %s232 = scalar_select %p231, %s13, 1
        %s233 = smul.addr %s232, 36
        %s234 = smul.addr %s233, 4
        %s235 = scalar_lea.vmem %s0, %s234
      $region44: #{srcnn2_forward.1} parent=39 // pred_fallthru
        _
    $region40: #{srcnn2_forward.1} parent=5 // pred_fallthru
      _
    %p236 = scmp.le.s32.totalorder 1, %s13
    %p237 = scmp.lt.s32.totalorder %s13, 3
    %p238 = pnand %p236, %p237
    %p239 = pneg %p238
    // Predicated region
    $region45: #{srcnn2_forward.1} parent=5 // pred_check
      _
    $region46: #{srcnn2_forward.1} parent=5 // pred_check_branch
      %241 = sbr.rel (%p238) target = $region48
    $region47: #{srcnn2_forward.1} parent=5 // pred_region
      %s242 = ssub.s32 %s13, 1
      %p243 = scmp.lt.s32.totalorder %s18, 1
      %s244 = scalar_select %p243, %s18, 1
      %s245 = smul.addr %s244, 36
      %s246 = smul.addr %s245, 4
      %s247 = scalar_lea.vmem %s0, %s246
      %p248 = pneg %p39
      %p249 = pneg %p36
      %p250 = pneg %p60
      %p251 = pneg %p57
      %p252 = pneg %p81
      %p253 = pneg %p78
      %p254 = pneg %p102
      %p255 = pneg %p99
      %p256 = pneg %p123
      %p257 = pneg %p120
      %p258 = pneg %p144
      %p259 = pneg %p141
      %p260 = pneg %p165
      %p261 = pneg %p162
      %p262 = pneg %p191
      %p263 = pneg %p188
      %p264 = scmp.lt.s32.totalorder %s18, 1
      %s265 = scalar_select %p264, %s18, 1
      %s266 = smul.addr %s265, 2
      %s267 = smul.addr %s266, 4
      %s268 = scalar_lea.vmem %s7, %s267
      %p269 = scmp.lt.s32.totalorder %s18, 1
      %s270 = scalar_select %p269, %s18, 1
      %s271 = smul.addr %s270, 36
      %s272 = smul.addr %s271, 4
      %s273 = scalar_lea.vmem %s0, %s272
      %p274 = scmp.lt.s32.totalorder %s18, 1
      %s275 = scalar_select %p274, %s18, 1
      %s276 = smul.addr %s275, 2
      %s277 = smul.addr %s276, 4
      %s278 = scalar_lea.vmem %s7, %s277
      %v280 = vld [vmem:[%s273] sm:$0xff]
      %v281 = vld [vmem:[%s273 + $0x8] sm:$0xff]
      %v282 = vld [vmem:[%s273 + $0x10] sm:$0xff]
      %v283 = vld [vmem:[%s273 + $0x18] sm:$0xff]
      %v284 = vld [vmem:[%s273 + $0x20] sm:$0xff]
      %v285 = vld [vmem:[%s273 + $0x28] sm:$0xff]
      %v286 = vld [vmem:[%s273 + $0x30] sm:$0xff]
      %v287 = vld [vmem:[%s273 + $0x38] sm:$0xff]
      %v288 = vld [vmem:[%s273 + $0x40] sm:$0xff]
      %v289 = vld [vmem:[%s273 + $0x48] sm:$0xff]
      %v290 = vld [vmem:[%s273 + $0x50] sm:$0xff]
      %v291 = vld [vmem:[%s273 + $0x58] sm:$0xff]
      %v292 = vld [vmem:[%s273 + $0x60] sm:$0xff]
      %v293 = vld [vmem:[%s273 + $0x68] sm:$0xff]
      %v294 = vld [vmem:[%s273 + $0x70] sm:$0xff]
      %v295 = vld [vmem:[%s273 + $0x78] sm:$0xff]
      %v296 = vld [vmem:[%s273 + $0x80] sm:$0xff]
      %v297 = vld [vmem:[%s273 + $0x88] sm:$0xff]
      %v298 = vld [vmem:[%s1] sm:$0xf]
      %v299 = vld [vmem:[%s1 + $0x4] sm:$0xf]
      %v300 = vld [vmem:[%s1 + $0x8] sm:$0xf]
      %v301 = vld [vmem:[%s1 + $0xc] sm:$0xf]
      %v302 = vld [vmem:[%s1 + $0x10] sm:$0xf]
      %v303 = vld [vmem:[%s1 + $0x14] sm:$0xf]
      %v304 = vld [vmem:[%s1 + $0x18] sm:$0xf]
      %v305 = vld [vmem:[%s1 + $0x1c] sm:$0xf]
      %v306 = vld [vmem:[%s1 + $0x20] sm:$0xf]
      %v307 = vld [vmem:[%s1 + $0x24] sm:$0xf]
      %v308 = vld [vmem:[%s1 + $0x28] sm:$0xf]
      %v309 = vld [vmem:[%s1 + $0x2c] sm:$0xf]
      %v310 = vld [vmem:[%s1 + $0x30] sm:$0xf]
      %v311 = vld [vmem:[%s1 + $0x34] sm:$0xf]
      %v312 = vld [vmem:[%s1 + $0x38] sm:$0xf]
      %v313 = vld [vmem:[%s1 + $0x3c] sm:$0xf]
      %v314 = vld [vmem:[%s1 + $0x40] sm:$0xf]
      %v315 = vld [vmem:[%s1 + $0x44] sm:$0xf]
      %v316 = vld [vmem:[%s1 + $0x48] sm:$0xf]
      %v317 = vld [vmem:[%s1 + $0x4c] sm:$0xf]
      %v318 = vld [vmem:[%s1 + $0x50] sm:$0xf]
      %v319 = vld [vmem:[%s1 + $0x54] sm:$0xf]
      %v320 = vld [vmem:[%s1 + $0x58] sm:$0xf]
      %v321 = vld [vmem:[%s1 + $0x5c] sm:$0xf]
      %v322 = vld [vmem:[%s1 + $0x60] sm:$0xf]
      %v323 = vld [vmem:[%s1 + $0x64] sm:$0xf]
      %v324 = vld [vmem:[%s1 + $0x68] sm:$0xf]
      %v325 = vld [vmem:[%s1 + $0x6c] sm:$0xf]
      %v326 = vld [vmem:[%s1 + $0x70] sm:$0xf]
      %v327 = vld [vmem:[%s1 + $0x74] sm:$0xf]
      %v328 = vld [vmem:[%s1 + $0x78] sm:$0x3]
      %v329 = vld [vmem:[%s2] sm:$0x1]
      %v331 = vlaneseq
      %v332 = vshrl.u32 %v331, 7
      %v333 = vsub.s32 0, %v332
      %v334 = vrot.slane %v329, %v333
      %v354 = vunpack.c.l.b16 %v280
      %v355 = vunpack.c.h.b16 %v280
      %v356 = vunpack.c.l.b16 %v281
      %v357 = vunpack.c.h.b16 %v281
      %v358 = vunpack.c.l.b16 %v282
      %v359 = vunpack.c.h.b16 %v282
      %v360 = vunpack.c.l.b16 %v283
      %v361 = vunpack.c.h.b16 %v283
      %v362 = vunpack.c.l.b16 %v284
      %v363 = vunpack.c.h.b16 %v284
      %v364 = vunpack.c.l.b16 %v285
      %v365 = vunpack.c.h.b16 %v285
      %v366 = vunpack.c.l.b16 %v286
      %v367 = vunpack.c.h.b16 %v286
      %v368 = vunpack.c.l.b16 %v287
      %v369 = vunpack.c.h.b16 %v287
      %v370 = vunpack.c.l.b16 %v288
      %v371 = vunpack.c.h.b16 %v288
      %v372 = vunpack.c.l.b16 %v289
      %v373 = vunpack.c.h.b16 %v289
      %v374 = vunpack.c.l.b16 %v290
      %v375 = vunpack.c.h.b16 %v290
      %v376 = vunpack.c.l.b16 %v291
      %v377 = vunpack.c.h.b16 %v291
      %v378 = vunpack.c.l.b16 %v292
      %v379 = vunpack.c.h.b16 %v292
      %v380 = vunpack.c.l.b16 %v293
      %v381 = vunpack.c.h.b16 %v293
      %v382 = vunpack.c.l.b16 %v294
      %v383 = vunpack.c.h.b16 %v294
      %v384 = vunpack.c.l.b16 %v295
      %v385 = vunpack.c.h.b16 %v295
      %v386 = vunpack.c.l.b16 %v296
      %v387 = vunpack.c.h.b16 %v296
      %v388 = vunpack.c.l.b16 %v297
      %v389 = vunpack.c.h.b16 %v297
      %v390 = vpack.c.b16 %v356, %v354
      %v391 = vpack.c.b16 %v357, %v355
      %v392 = vpack.c.b16 %v360, %v358
      %v393 = vpack.c.b16 %v361, %v359
      %v394 = vpack.c.b16 %v364, %v362
      %v395 = vpack.c.b16 %v365, %v363
      %v396 = vpack.c.b16 %v368, %v366
      %v397 = vpack.c.b16 %v369, %v367
      %v398 = vpack.c.b16 %v372, %v370
      %v399 = vpack.c.b16 %v373, %v371
      %v400 = vpack.c.b16 %v376, %v374
      %v401 = vpack.c.b16 %v377, %v375
      %v402 = vpack.c.b16 %v380, %v378
      %v403 = vpack.c.b16 %v381, %v379
      %v404 = vpack.c.b16 %v384, %v382
      %v405 = vpack.c.b16 %v385, %v383
      %v406 = vpack.c.b16 %v388, %v386
      %v407 = vpack.c.b16 %v389, %v387
      %v448 = vunpack.c.l.b16 %v298
      %v449 = vunpack.c.l.b16 %v299
      %v450 = vunpack.c.l.b16 %v300
      %v451 = vunpack.c.l.b16 %v301
      %v452 = vunpack.c.l.b16 %v302
      %v453 = vunpack.c.l.b16 %v303
      %v454 = vunpack.c.l.b16 %v304
      %v455 = vunpack.c.l.b16 %v305
      %v456 = vunpack.c.l.b16 %v306
      %v457 = vunpack.c.l.b16 %v307
      %v458 = vunpack.c.l.b16 %v308
      %v459 = vunpack.c.l.b16 %v309
      %v460 = vunpack.c.l.b16 %v310
      %v461 = vunpack.c.l.b16 %v311
      %v462 = vunpack.c.l.b16 %v312
      %v463 = vunpack.c.l.b16 %v313
      %v464 = vunpack.c.l.b16 %v314
      %v465 = vunpack.c.l.b16 %v315
      %v466 = vunpack.c.l.b16 %v316
      %v467 = vunpack.c.l.b16 %v317
      %v468 = vunpack.c.l.b16 %v318
      %v469 = vunpack.c.l.b16 %v319
      %v470 = vunpack.c.l.b16 %v320
      %v471 = vunpack.c.l.b16 %v321
      %v472 = vunpack.c.l.b16 %v322
      %v473 = vunpack.c.l.b16 %v323
      %v474 = vunpack.c.l.b16 %v324
      %v475 = vunpack.c.l.b16 %v325
      %v476 = vunpack.c.l.b16 %v326
      %v477 = vunpack.c.l.b16 %v327
      %v478 = vunpack.c.l.b16 %v328
      %v479 = vpack.c.b16 %v449, %v448
      %v480 = vpack.c.b16 %v451, %v450
      %v481 = vpack.c.b16 %v453, %v452
      %v482 = vpack.c.b16 %v455, %v454
      %v483 = vpack.c.b16 %v457, %v456
      %v484 = vpack.c.b16 %v459, %v458
      %v485 = vpack.c.b16 %v461, %v460
      %v486 = vpack.c.b16 %v463, %v462
      %v487 = vpack.c.b16 %v465, %v464
      %v488 = vpack.c.b16 %v467, %v466
      %v489 = vpack.c.b16 %v469, %v468
      %v490 = vpack.c.b16 %v471, %v470
      %v491 = vpack.c.b16 %v473, %v472
      %v492 = vpack.c.b16 %v475, %v474
      %v493 = vpack.c.b16 %v477, %v476
      %v494 = vpack.c.b16 %v478, %v478
      %vm510 = vcmask 941056
      %v512 = vsel %vm510, %v391, 0
      %v515 = vsel %vm510, %v393, 0
      %v518 = vsel %vm510, %v395, 0
      %v521 = vsel %vm510, %v397, 0
      %v524 = vsel %vm510, %v399, 0
      %v527 = vsel %vm510, %v401, 0
      %v530 = vsel %vm510, %v403, 0
      %v533 = vsel %vm510, %v405, 0
      %v536 = vsel %vm510, %v407, 0
      %vm538 = vcmask 1040384
      %vm539 = vcmask 1041408
      %v540 = vsel %vm538, 4294967295, 65535
      %v541 = vsel %vm539, %v540, 0
      %v543 = vand.u32 %v494, %v541
      %545 = vmatprep.subr.bf16.mxu0 0
      %546 = vmatpush1.bf16.msra.mxu0 %v486
      %547 = vmatprep.subr.bf16.mxu0 0
      %548 = vmatpush1.bf16.msra.mxu0 %v485
      %549 = vmatprep.subr.bf16.mxu0 0
      %550 = vmatpush1.bf16.msra.mxu0 %v484
      %551 = vmatprep.subr.bf16.mxu0 0
      %552 = vmatpush1.bf16.msra.mxu0 %v483
      %553 = vmatprep.subr.bf16.mxu0 0
      %554 = vmatpush1.bf16.msra.mxu0 %v482
      %555 = vmatprep.subr.bf16.mxu0 0
      %556 = vmatpush1.bf16.msra.mxu0 %v481
      %557 = vmatprep.subr.bf16.mxu0 0
      %558 = vmatpush1.bf16.msra.mxu0 %v480
      %559 = vmatprep.subr.bf16.mxu0 0
      %560 = vmatpush1.bf16.msra.mxu0 %v479
      %561 = vmatprep.subr.bf16.mxu0 0
      %562 = vmatpush2.bf16.msra.mxu0 %v543
      %563 = vmatprep.subr.bf16.mxu0 0
      %564 = vmatpush2.bf16.msra.mxu0 %v493
      %565 = vmatprep.subr.bf16.mxu0 0
      %566 = vmatpush2.bf16.msra.mxu0 %v492
      %567 = vmatprep.subr.bf16.mxu0 0
      %568 = vmatpush2.bf16.msra.mxu0 %v491
      %569 = vmatprep.subr.bf16.mxu0 0
      %570 = vmatpush2.bf16.msra.mxu0 %v490
      %571 = vmatprep.subr.bf16.mxu0 0
      %572 = vmatpush2.bf16.msra.mxu0 %v489
      %573 = vmatprep.subr.bf16.mxu0 0
      %574 = vmatpush2.bf16.msra.mxu0 %v488
      %575 = vmatprep.subr.bf16.mxu0 0
      %576 = vmatpush2.bf16.msra.mxu0 %v487
      %577 = vmatprep.mubr.bf16.mxu0 %v512
      %578 = vmatmul.mubr.bf16.gmra.mxu0 %v390
      %v579 = vpop.f32.mrf.mxu0
      %v580 = vadd.f32 %v334, %v579
      %v581 = vpop.f32.mrf.mxu0
      %v582 = vpop.f32.mrf.mxu0
      %v583 = vadd.f32 %v334, %v582
      %v584 = vpop.f32.mrf.mxu0
      %585 = vmatprep.mubr.bf16.mxu0 %v515
      %586 = vmatmul.mubr.bf16.gmra.mxu0 %v392
      %v587 = vpop.f32.mrf.mxu0
      %v588 = vadd.f32 %v334, %v587
      %v589 = vpop.f32.mrf.mxu0
      %v590 = vpop.f32.mrf.mxu0
      %v591 = vadd.f32 %v334, %v590
      %v592 = vpop.f32.mrf.mxu0
      %593 = vmatprep.mubr.bf16.mxu0 %v518
      %594 = vmatmul.mubr.bf16.gmra.mxu0 %v394
      %v595 = vpop.f32.mrf.mxu0
      %v596 = vadd.f32 %v334, %v595
      %v597 = vpop.f32.mrf.mxu0
      %v598 = vpop.f32.mrf.mxu0
      %v599 = vadd.f32 %v334, %v598
      %v600 = vpop.f32.mrf.mxu0
      %601 = vmatprep.mubr.bf16.mxu0 %v521
      %602 = vmatmul.mubr.bf16.gmra.mxu0 %v396
      %v603 = vpop.f32.mrf.mxu0
      %v604 = vadd.f32 %v334, %v603
      %v605 = vpop.f32.mrf.mxu0
      %v606 = vpop.f32.mrf.mxu0
      %v607 = vadd.f32 %v334, %v606
      %v608 = vpop.f32.mrf.mxu0
      %609 = vmatprep.mubr.bf16.mxu0 %v524
      %610 = vmatmul.mubr.bf16.gmra.mxu0 %v398
      %v611 = vpop.f32.mrf.mxu0
      %v612 = vadd.f32 %v334, %v611
      %v613 = vpop.f32.mrf.mxu0
      %v614 = vpop.f32.mrf.mxu0
      %v615 = vadd.f32 %v334, %v614
      %v616 = vpop.f32.mrf.mxu0
      %617 = vmatprep.mubr.bf16.mxu0 %v527
      %618 = vmatmul.mubr.bf16.gmra.mxu0 %v400
      %v619 = vpop.f32.mrf.mxu0
      %v620 = vadd.f32 %v334, %v619
      %v621 = vpop.f32.mrf.mxu0
      %v622 = vpop.f32.mrf.mxu0
      %v623 = vadd.f32 %v334, %v622
      %v624 = vpop.f32.mrf.mxu0
      %625 = vmatprep.mubr.bf16.mxu0 %v530
      %626 = vmatmul.mubr.bf16.gmra.mxu0 %v402
      %v627 = vpop.f32.mrf.mxu0
      %v628 = vadd.f32 %v334, %v627
      %v629 = vpop.f32.mrf.mxu0
      %v630 = vpop.f32.mrf.mxu0
      %v631 = vadd.f32 %v334, %v630
      %v632 = vpop.f32.mrf.mxu0
      %633 = vmatprep.mubr.bf16.mxu0 %v533
      %634 = vmatmul.mubr.bf16.gmra.mxu0 %v404
      %v635 = vpop.f32.mrf.mxu0
      %v636 = vadd.f32 %v334, %v635
      %v637 = vpop.f32.mrf.mxu0
      %v638 = vpop.f32.mrf.mxu0
      %v639 = vadd.f32 %v334, %v638
      %v640 = vpop.f32.mrf.mxu0
      %641 = vmatprep.mubr.bf16.mxu0 %v536
      %642 = vmatmul.mubr.bf16.gmra.mxu0 %v406
      %v643 = vpop.f32.mrf.mxu0
      %v644 = vadd.f32 %v334, %v643
      %v645 = vpop.f32.mrf.mxu0
      %v646 = vpop.f32.mrf.mxu0
      %v647 = vadd.f32 %v334, %v646
      %v648 = vpop.f32.mrf.mxu0
      %649 = vdwg.mxu0
      %v650 = vmax.f32 %v580, 0.0
      %v651 = vmax.f32 %v583, 0.0
      %v652 = vmax.f32 %v588, 0.0
      %v653 = vmax.f32 %v591, 0.0
      %v654 = vmax.f32 %v596, 0.0
      %v655 = vmax.f32 %v599, 0.0
      %v656 = vmax.f32 %v604, 0.0
      %v657 = vmax.f32 %v607, 0.0
      %v658 = vmax.f32 %v612, 0.0
      %v659 = vmax.f32 %v615, 0.0
      %v660 = vmax.f32 %v620, 0.0
      %v661 = vmax.f32 %v623, 0.0
      %v662 = vmax.f32 %v628, 0.0
      %v663 = vmax.f32 %v631, 0.0
      %v664 = vmax.f32 %v636, 0.0
      %v665 = vmax.f32 %v639, 0.0
      %v666 = vmax.f32 %v644, 0.0
      %v667 = vmax.f32 %v647, 0.0
      %v668 = vpack.c.bf16 %v651, %v650
      %v669 = vpack.c.bf16 %v653, %v652
      %v670 = vpack.c.bf16 %v655, %v654
      %v671 = vpack.c.bf16 %v657, %v656
      %v672 = vpack.c.bf16 %v659, %v658
      %v673 = vpack.c.bf16 %v661, %v660
      %v674 = vpack.c.bf16 %v663, %v662
      %v675 = vpack.c.bf16 %v665, %v664
      %v676 = vpack.c.bf16 %v667, %v666
      %v677 = vld [vmem:[%s3] sm:$0xf]
      %v678 = vld [vmem:[%s3 + $0x4] sm:$0xf]
      %v679 = vld [vmem:[%s3 + $0x8] sm:$0xf]
      %v680 = vld [vmem:[%s3 + $0xc] sm:$0xf]
      %v681 = vld [vmem:[%s3 + $0x10] sm:$0xf]
      %v682 = vld [vmem:[%s3 + $0x14] sm:$0xf]
      %v683 = vld [vmem:[%s3 + $0x18] sm:$0xf]
      %v684 = vld [vmem:[%s3 + $0x1c] sm:$0xf]
      %v685 = vld [vmem:[%s3 + $0x20] sm:$0xf]
      %v686 = vld [vmem:[%s3 + $0x24] sm:$0xf]
      %v687 = vld [vmem:[%s3 + $0x28] sm:$0xf]
      %v688 = vld [vmem:[%s3 + $0x2c] sm:$0xf]
      %v689 = vld [vmem:[%s3 + $0x30] sm:$0xf]
      %v690 = vld [vmem:[%s3 + $0x34] sm:$0xf]
      %v691 = vld [vmem:[%s3 + $0x38] sm:$0xf]
      %v692 = vld [vmem:[%s3 + $0x3c] sm:$0xf]
      %v693 = vld [vmem:[%s4] sm:$0x1]
      %v695 = vlaneseq
      %v696 = vshrl.u32 %v695, 7
      %v697 = vsub.s32 0, %v696
      %v698 = vrot.slane %v693, %v697
      %v716 = vunpack.c.l.b16 %v677
      %v717 = vunpack.c.l.b16 %v678
      %v718 = vunpack.c.l.b16 %v679
      %v719 = vunpack.c.l.b16 %v680
      %v720 = vunpack.c.l.b16 %v681
      %v721 = vunpack.c.l.b16 %v682
      %v722 = vunpack.c.l.b16 %v683
      %v723 = vunpack.c.l.b16 %v684
      %v724 = vunpack.c.l.b16 %v685
      %v725 = vunpack.c.l.b16 %v686
      %v726 = vunpack.c.l.b16 %v687
      %v727 = vunpack.c.l.b16 %v688
      %v728 = vunpack.c.l.b16 %v689
      %v729 = vunpack.c.l.b16 %v690
      %v730 = vunpack.c.l.b16 %v691
      %v731 = vunpack.c.l.b16 %v692
      %v732 = vpack.c.b16 %v717, %v716
      %v733 = vpack.c.b16 %v719, %v718
      %v734 = vpack.c.b16 %v721, %v720
      %v735 = vpack.c.b16 %v723, %v722
      %v736 = vpack.c.b16 %v725, %v724
      %v737 = vpack.c.b16 %v727, %v726
      %v738 = vpack.c.b16 %v729, %v728
      %v739 = vpack.c.b16 %v731, %v730
      %748 = vmatprep.subr.bf16.mxu0 0
      %749 = vmatpush1.bf16.msra.mxu0 %v739
      %750 = vmatprep.subr.bf16.mxu0 0
      %751 = vmatpush1.bf16.msra.mxu0 %v738
      %752 = vmatprep.subr.bf16.mxu0 0
      %753 = vmatpush1.bf16.msra.mxu0 %v737
      %754 = vmatprep.subr.bf16.mxu0 0
      %755 = vmatpush1.bf16.msra.mxu0 %v736
      %756 = vmatprep.subr.bf16.mxu0 0
      %757 = vmatpush1.bf16.msra.mxu0 %v735
      %758 = vmatprep.subr.bf16.mxu0 0
      %759 = vmatpush1.bf16.msra.mxu0 %v734
      %760 = vmatprep.subr.bf16.mxu0 0
      %761 = vmatpush1.bf16.msra.mxu0 %v733
      %762 = vmatprep.subr.bf16.mxu0 0
      %763 = vmatpush1.bf16.msra.mxu0 %v732
      %764 = vmatprep.subr.bf16.mxu0 0
      %765 = vmatpush2.bf16.msra.mxu0 0
      %766 = vmatprep.subr.bf16.mxu0 0
      %767 = vmatpush2.bf16.msra.mxu0 0
      %768 = vmatprep.subr.bf16.mxu0 0
      %769 = vmatpush2.bf16.msra.mxu0 0
      %770 = vmatprep.subr.bf16.mxu0 0
      %771 = vmatpush2.bf16.msra.mxu0 0
      %772 = vmatprep.subr.bf16.mxu0 0
      %773 = vmatpush2.bf16.msra.mxu0 0
      %774 = vmatprep.subr.bf16.mxu0 0
      %775 = vmatpush2.bf16.msra.mxu0 0
      %776 = vmatprep.subr.bf16.mxu0 0
      %777 = vmatpush2.bf16.msra.mxu0 0
      %778 = vmatprep.subr.bf16.mxu0 0
      %779 = vmatpush2.bf16.msra.mxu0 0
      %780 = vmatprep.mubr.bf16.mxu0 0
      %781 = vmatmul.mubr.bf16.gmra.mxu0 %v668
      %v782 = vpop.f32.mrf.mxu0
      %v783 = vadd.f32 %v698, %v782
      %v784 = vpop.f32.mrf.mxu0
      %v785 = vpop.f32.mrf.mxu0
      %v786 = vadd.f32 %v698, %v785
      %v787 = vpop.f32.mrf.mxu0
      %788 = vmatprep.mubr.bf16.mxu0 0
      %789 = vmatmul.mubr.bf16.gmra.mxu0 %v669
      %v790 = vpop.f32.mrf.mxu0
      %v791 = vadd.f32 %v698, %v790
      %v792 = vpop.f32.mrf.mxu0
      %v793 = vpop.f32.mrf.mxu0
      %v794 = vadd.f32 %v698, %v793
      %v795 = vpop.f32.mrf.mxu0
      %796 = vmatprep.mubr.bf16.mxu0 0
      %797 = vmatmul.mubr.bf16.gmra.mxu0 %v670
      %v798 = vpop.f32.mrf.mxu0
      %v799 = vadd.f32 %v698, %v798
      %v800 = vpop.f32.mrf.mxu0
      %v801 = vpop.f32.mrf.mxu0
      %v802 = vadd.f32 %v698, %v801
      %v803 = vpop.f32.mrf.mxu0
      %804 = vmatprep.mubr.bf16.mxu0 0
      %805 = vmatmul.mubr.bf16.gmra.mxu0 %v671
      %v806 = vpop.f32.mrf.mxu0
      %v807 = vadd.f32 %v698, %v806
      %v808 = vpop.f32.mrf.mxu0
      %v809 = vpop.f32.mrf.mxu0
      %v810 = vadd.f32 %v698, %v809
      %v811 = vpop.f32.mrf.mxu0
      %812 = vmatprep.mubr.bf16.mxu0 0
      %813 = vmatmul.mubr.bf16.gmra.mxu0 %v672
      %v814 = vpop.f32.mrf.mxu0
      %v815 = vadd.f32 %v698, %v814
      %v816 = vpop.f32.mrf.mxu0
      %v817 = vpop.f32.mrf.mxu0
      %v818 = vadd.f32 %v698, %v817
      %v819 = vpop.f32.mrf.mxu0
      %820 = vmatprep.mubr.bf16.mxu0 0
      %821 = vmatmul.mubr.bf16.gmra.mxu0 %v673
      %v822 = vpop.f32.mrf.mxu0
      %v823 = vadd.f32 %v698, %v822
      %v824 = vpop.f32.mrf.mxu0
      %v825 = vpop.f32.mrf.mxu0
      %v826 = vadd.f32 %v698, %v825
      %v827 = vpop.f32.mrf.mxu0
      %828 = vmatprep.mubr.bf16.mxu0 0
      %829 = vmatmul.mubr.bf16.gmra.mxu0 %v674
      %v830 = vpop.f32.mrf.mxu0
      %v831 = vadd.f32 %v698, %v830
      %v832 = vpop.f32.mrf.mxu0
      %v833 = vpop.f32.mrf.mxu0
      %v834 = vadd.f32 %v698, %v833
      %v835 = vpop.f32.mrf.mxu0
      %836 = vmatprep.mubr.bf16.mxu0 0
      %837 = vmatmul.mubr.bf16.gmra.mxu0 %v675
      %v838 = vpop.f32.mrf.mxu0
      %v839 = vadd.f32 %v698, %v838
      %v840 = vpop.f32.mrf.mxu0
      %v841 = vpop.f32.mrf.mxu0
      %v842 = vadd.f32 %v698, %v841
      %v843 = vpop.f32.mrf.mxu0
      %844 = vmatprep.mubr.bf16.mxu0 0
      %845 = vmatmul.mubr.bf16.gmra.mxu0 %v676
      %v846 = vpop.f32.mrf.mxu0
      %v847 = vadd.f32 %v698, %v846
      %v848 = vpop.f32.mrf.mxu0
      %v849 = vpop.f32.mrf.mxu0
      %v850 = vadd.f32 %v698, %v849
      %v851 = vpop.f32.mrf.mxu0
      %852 = vdwg.mxu0
      %v853 = vmax.f32 %v783, 0.0
      %v854 = vmax.f32 %v786, 0.0
      %v855 = vmax.f32 %v791, 0.0
      %v856 = vmax.f32 %v794, 0.0
      %v857 = vmax.f32 %v799, 0.0
      %v858 = vmax.f32 %v802, 0.0
      %v859 = vmax.f32 %v807, 0.0
      %v860 = vmax.f32 %v810, 0.0
      %v861 = vmax.f32 %v815, 0.0
      %v862 = vmax.f32 %v818, 0.0
      %v863 = vmax.f32 %v823, 0.0
      %v864 = vmax.f32 %v826, 0.0
      %v865 = vmax.f32 %v831, 0.0
      %v866 = vmax.f32 %v834, 0.0
      %v867 = vmax.f32 %v839, 0.0
      %v868 = vmax.f32 %v842, 0.0
      %v869 = vmax.f32 %v847, 0.0
      %v870 = vmax.f32 %v850, 0.0
      %v871 = vpack.c.bf16 %v854, %v853
      %v872 = vpack.c.bf16 %v856, %v855
      %v873 = vpack.c.bf16 %v858, %v857
      %v874 = vpack.c.bf16 %v860, %v859
      %v875 = vpack.c.bf16 %v862, %v861
      %v876 = vpack.c.bf16 %v864, %v863
      %v877 = vpack.c.bf16 %v866, %v865
      %v878 = vpack.c.bf16 %v868, %v867
      %v879 = vpack.c.bf16 %v870, %v869
      %v889 = vcombine.high %v871, %v871
      %v891 = vunpack.c.l.s4 1983009808
      %v892 = vunpack.c.0.s8 %v891
      %v893 = vlaneseq
      %v894 = vshrl.u32 %v893, 7
      %v895 = vsub.s32 %v892, %v894
      %v896 = vrot.slane %v871, %v895
      %v898 = vunpack.c.l.s4 1983009808
      %v899 = vunpack.c.0.s8 %v898
      %v900 = vlaneseq
      %v901 = vshrl.u32 %v900, 7
      %v902 = vsub.s32 %v899, %v901
      %v903 = vrot.slane %v889, %v902
      %v904 = vcombine.high %v896, %v896
      %v905 = vcombine.high %v903, %v903
      %v906 = vcombine.high %v872, %v872
      %v908 = vunpack.c.l.s4 1983009808
      %v909 = vunpack.c.0.s8 %v908
      %v910 = vlaneseq
      %v911 = vshrl.u32 %v910, 7
      %v912 = vsub.s32 %v909, %v911
      %v913 = vrot.slane %v872, %v912
      %v915 = vunpack.c.l.s4 1983009808
      %v916 = vunpack.c.0.s8 %v915
      %v917 = vlaneseq
      %v918 = vshrl.u32 %v917, 7
      %v919 = vsub.s32 %v916, %v918
      %v920 = vrot.slane %v906, %v919
      %v921 = vcombine.high %v913, %v913
      %v922 = vcombine.high %v920, %v920
      %v923 = vcombine.high %v873, %v873
      %v925 = vunpack.c.l.s4 1983009808
      %v926 = vunpack.c.0.s8 %v925
      %v927 = vlaneseq
      %v928 = vshrl.u32 %v927, 7
      %v929 = vsub.s32 %v926, %v928
      %v930 = vrot.slane %v873, %v929
      %v932 = vunpack.c.l.s4 1983009808
      %v933 = vunpack.c.0.s8 %v932
      %v934 = vlaneseq
      %v935 = vshrl.u32 %v934, 7
      %v936 = vsub.s32 %v933, %v935
      %v937 = vrot.slane %v923, %v936
      %v938 = vcombine.high %v930, %v930
      %v939 = vcombine.high %v937, %v937
      %v940 = vcombine.high %v874, %v874
      %v942 = vunpack.c.l.s4 1983009808
      %v943 = vunpack.c.0.s8 %v942
      %v944 = vlaneseq
      %v945 = vshrl.u32 %v944, 7
      %v946 = vsub.s32 %v943, %v945
      %v947 = vrot.slane %v874, %v946
      %v949 = vunpack.c.l.s4 1983009808
      %v950 = vunpack.c.0.s8 %v949
      %v951 = vlaneseq
      %v952 = vshrl.u32 %v951, 7
      %v953 = vsub.s32 %v950, %v952
      %v954 = vrot.slane %v940, %v953
      %v955 = vcombine.high %v947, %v947
      %v956 = vcombine.high %v954, %v954
      %v957 = vcombine.high %v875, %v875
      %v959 = vunpack.c.l.s4 1983009808
      %v960 = vunpack.c.0.s8 %v959
      %v961 = vlaneseq
      %v962 = vshrl.u32 %v961, 7
      %v963 = vsub.s32 %v960, %v962
      %v964 = vrot.slane %v875, %v963
      %v966 = vunpack.c.l.s4 1983009808
      %v967 = vunpack.c.0.s8 %v966
      %v968 = vlaneseq
      %v969 = vshrl.u32 %v968, 7
      %v970 = vsub.s32 %v967, %v969
      %v971 = vrot.slane %v957, %v970
      %v972 = vcombine.high %v964, %v964
      %v973 = vcombine.high %v971, %v971
      %v974 = vcombine.high %v876, %v876
      %v976 = vunpack.c.l.s4 1983009808
      %v977 = vunpack.c.0.s8 %v976
      %v978 = vlaneseq
      %v979 = vshrl.u32 %v978, 7
      %v980 = vsub.s32 %v977, %v979
      %v981 = vrot.slane %v876, %v980
      %v983 = vunpack.c.l.s4 1983009808
      %v984 = vunpack.c.0.s8 %v983
      %v985 = vlaneseq
      %v986 = vshrl.u32 %v985, 7
      %v987 = vsub.s32 %v984, %v986
      %v988 = vrot.slane %v974, %v987
      %v989 = vcombine.high %v981, %v981
      %v990 = vcombine.high %v988, %v988
      %v991 = vcombine.high %v877, %v877
      %v993 = vunpack.c.l.s4 1983009808
      %v994 = vunpack.c.0.s8 %v993
      %v995 = vlaneseq
      %v996 = vshrl.u32 %v995, 7
      %v997 = vsub.s32 %v994, %v996
      %v998 = vrot.slane %v877, %v997
      %v1000 = vunpack.c.l.s4 1983009808
      %v1001 = vunpack.c.0.s8 %v1000
      %v1002 = vlaneseq
      %v1003 = vshrl.u32 %v1002, 7
      %v1004 = vsub.s32 %v1001, %v1003
      %v1005 = vrot.slane %v991, %v1004
      %v1006 = vcombine.high %v998, %v998
      %v1007 = vcombine.high %v1005, %v1005
      %v1008 = vcombine.high %v878, %v878
      %v1010 = vunpack.c.l.s4 1983009808
      %v1011 = vunpack.c.0.s8 %v1010
      %v1012 = vlaneseq
      %v1013 = vshrl.u32 %v1012, 7
      %v1014 = vsub.s32 %v1011, %v1013
      %v1015 = vrot.slane %v878, %v1014
      %v1017 = vunpack.c.l.s4 1983009808
      %v1018 = vunpack.c.0.s8 %v1017
      %v1019 = vlaneseq
      %v1020 = vshrl.u32 %v1019, 7
      %v1021 = vsub.s32 %v1018, %v1020
      %v1022 = vrot.slane %v1008, %v1021
      %v1023 = vcombine.high %v1015, %v1015
      %v1024 = vcombine.high %v1022, %v1022
      %v1025 = vcombine.high %v879, %v879
      %v1027 = vunpack.c.l.s4 1983009808
      %v1028 = vunpack.c.0.s8 %v1027
      %v1029 = vlaneseq
      %v1030 = vshrl.u32 %v1029, 7
      %v1031 = vsub.s32 %v1028, %v1030
      %v1032 = vrot.slane %v879, %v1031
      %v1034 = vunpack.c.l.s4 1983009808
      %v1035 = vunpack.c.0.s8 %v1034
      %v1036 = vlaneseq
      %v1037 = vshrl.u32 %v1036, 7
      %v1038 = vsub.s32 %v1035, %v1037
      %v1039 = vrot.slane %v1025, %v1038
      %v1040 = vcombine.high %v1032, %v1032
      %v1041 = vcombine.high %v1039, %v1039
      %v1042 = vcombine.low %v896, %v896
      %v1044 = vunpack.c.l.s4 1983009808
      %v1045 = vunpack.c.0.s8 %v1044
      %v1046 = vlaneseq
      %v1047 = vshrl.u32 %v1046, 7
      %v1048 = vsub.s32 %v1045, %v1047
      %v1049 = vrot.slane %v1042, %v1048
      %v1050 = vcombine.low %v904, %v903
      %v1052 = vunpack.c.l.s4 1983009808
      %v1053 = vunpack.c.0.s8 %v1052
      %v1054 = vlaneseq
      %v1055 = vshrl.u32 %v1054, 7
      %v1056 = vsub.s32 %v1053, %v1055
      %v1057 = vrot.slane %v1050, %v1056
      %v1058 = vcombine.low %v905, %v905
      %v1060 = vunpack.c.l.s4 1983009808
      %v1061 = vunpack.c.0.s8 %v1060
      %v1062 = vlaneseq
      %v1063 = vshrl.u32 %v1062, 7
      %v1064 = vsub.s32 %v1061, %v1063
      %v1065 = vrot.slane %v1058, %v1064
      %v1066 = vcombine.low %v913, %v921
      %v1068 = vunpack.c.l.s4 1983009808
      %v1069 = vunpack.c.0.s8 %v1068
      %v1070 = vlaneseq
      %v1071 = vshrl.u32 %v1070, 7
      %v1072 = vsub.s32 %v1069, %v1071
      %v1073 = vrot.slane %v1066, %v1072
      %v1074 = vcombine.low %v920, %v920
      %v1076 = vunpack.c.l.s4 1983009808
      %v1077 = vunpack.c.0.s8 %v1076
      %v1078 = vlaneseq
      %v1079 = vshrl.u32 %v1078, 7
      %v1080 = vsub.s32 %v1077, %v1079
      %v1081 = vrot.slane %v1074, %v1080
      %v1082 = vcombine.low %v922, %v930
      %v1084 = vunpack.c.l.s4 1983009808
      %v1085 = vunpack.c.0.s8 %v1084
      %v1086 = vlaneseq
      %v1087 = vshrl.u32 %v1086, 7
      %v1088 = vsub.s32 %v1085, %v1087
      %v1089 = vrot.slane %v1082, %v1088
      %v1090 = vcombine.low %v938, %v938
      %v1092 = vunpack.c.l.s4 1983009808
      %v1093 = vunpack.c.0.s8 %v1092
      %v1094 = vlaneseq
      %v1095 = vshrl.u32 %v1094, 7
      %v1096 = vsub.s32 %v1093, %v1095
      %v1097 = vrot.slane %v1090, %v1096
      %v1098 = vcombine.low %v937, %v939
      %v1100 = vunpack.c.l.s4 1983009808
      %v1101 = vunpack.c.0.s8 %v1100
      %v1102 = vlaneseq
      %v1103 = vshrl.u32 %v1102, 7
      %v1104 = vsub.s32 %v1101, %v1103
      %v1105 = vrot.slane %v1098, %v1104
      %v1106 = vcombine.low %v947, %v947
      %v1108 = vunpack.c.l.s4 1983009808
      %v1109 = vunpack.c.0.s8 %v1108
      %v1110 = vlaneseq
      %v1111 = vshrl.u32 %v1110, 7
      %v1112 = vsub.s32 %v1109, %v1111
      %v1113 = vrot.slane %v1106, %v1112
      %v1114 = vcombine.low %v955, %v954
      %v1116 = vunpack.c.l.s4 1983009808
      %v1117 = vunpack.c.0.s8 %v1116
      %v1118 = vlaneseq
      %v1119 = vshrl.u32 %v1118, 7
      %v1120 = vsub.s32 %v1117, %v1119
      %v1121 = vrot.slane %v1114, %v1120
      %v1122 = vcombine.low %v956, %v956
      %v1124 = vunpack.c.l.s4 1983009808
      %v1125 = vunpack.c.0.s8 %v1124
      %v1126 = vlaneseq
      %v1127 = vshrl.u32 %v1126, 7
      %v1128 = vsub.s32 %v1125, %v1127
      %v1129 = vrot.slane %v1122, %v1128
      %v1130 = vcombine.low %v964, %v972
      %v1132 = vunpack.c.l.s4 1983009808
      %v1133 = vunpack.c.0.s8 %v1132
      %v1134 = vlaneseq
      %v1135 = vshrl.u32 %v1134, 7
      %v1136 = vsub.s32 %v1133, %v1135
      %v1137 = vrot.slane %v1130, %v1136
      %v1138 = vcombine.low %v971, %v971
      %v1140 = vunpack.c.l.s4 1983009808
      %v1141 = vunpack.c.0.s8 %v1140
      %v1142 = vlaneseq
      %v1143 = vshrl.u32 %v1142, 7
      %v1144 = vsub.s32 %v1141, %v1143
      %v1145 = vrot.slane %v1138, %v1144
      %v1146 = vcombine.low %v973, %v981
      %v1148 = vunpack.c.l.s4 1983009808
      %v1149 = vunpack.c.0.s8 %v1148
      %v1150 = vlaneseq
      %v1151 = vshrl.u32 %v1150, 7
      %v1152 = vsub.s32 %v1149, %v1151
      %v1153 = vrot.slane %v1146, %v1152
      %v1154 = vcombine.low %v989, %v989
      %v1156 = vunpack.c.l.s4 1983009808
      %v1157 = vunpack.c.0.s8 %v1156
      %v1158 = vlaneseq
      %v1159 = vshrl.u32 %v1158, 7
      %v1160 = vsub.s32 %v1157, %v1159
      %v1161 = vrot.slane %v1154, %v1160
      %v1162 = vcombine.low %v988, %v990
      %v1164 = vunpack.c.l.s4 1983009808
      %v1165 = vunpack.c.0.s8 %v1164
      %v1166 = vlaneseq
      %v1167 = vshrl.u32 %v1166, 7
      %v1168 = vsub.s32 %v1165, %v1167
      %v1169 = vrot.slane %v1162, %v1168
      %v1170 = vcombine.low %v998, %v998
      %v1172 = vunpack.c.l.s4 1983009808
      %v1173 = vunpack.c.0.s8 %v1172
      %v1174 = vlaneseq
      %v1175 = vshrl.u32 %v1174, 7
      %v1176 = vsub.s32 %v1173, %v1175
      %v1177 = vrot.slane %v1170, %v1176
      %v1178 = vcombine.low %v1006, %v1005
      %v1180 = vunpack.c.l.s4 1983009808
      %v1181 = vunpack.c.0.s8 %v1180
      %v1182 = vlaneseq
      %v1183 = vshrl.u32 %v1182, 7
      %v1184 = vsub.s32 %v1181, %v1183
      %v1185 = vrot.slane %v1178, %v1184
      %v1186 = vcombine.low %v1007, %v1007
      %v1188 = vunpack.c.l.s4 1983009808
      %v1189 = vunpack.c.0.s8 %v1188
      %v1190 = vlaneseq
      %v1191 = vshrl.u32 %v1190, 7
      %v1192 = vsub.s32 %v1189, %v1191
      %v1193 = vrot.slane %v1186, %v1192
      %v1194 = vcombine.low %v1015, %v1023
      %v1196 = vunpack.c.l.s4 1983009808
      %v1197 = vunpack.c.0.s8 %v1196
      %v1198 = vlaneseq
      %v1199 = vshrl.u32 %v1198, 7
      %v1200 = vsub.s32 %v1197, %v1199
      %v1201 = vrot.slane %v1194, %v1200
      %v1202 = vcombine.low %v1022, %v1022
      %v1204 = vunpack.c.l.s4 1983009808
      %v1205 = vunpack.c.0.s8 %v1204
      %v1206 = vlaneseq
      %v1207 = vshrl.u32 %v1206, 7
      %v1208 = vsub.s32 %v1205, %v1207
      %v1209 = vrot.slane %v1202, %v1208
      %v1210 = vcombine.low %v1024, %v1032
      %v1212 = vunpack.c.l.s4 1983009808
      %v1213 = vunpack.c.0.s8 %v1212
      %v1214 = vlaneseq
      %v1215 = vshrl.u32 %v1214, 7
      %v1216 = vsub.s32 %v1213, %v1215
      %v1217 = vrot.slane %v1210, %v1216
      %v1218 = vcombine.low %v1040, %v1040
      %v1220 = vunpack.c.l.s4 1983009808
      %v1221 = vunpack.c.0.s8 %v1220
      %v1222 = vlaneseq
      %v1223 = vshrl.u32 %v1222, 7
      %v1224 = vsub.s32 %v1221, %v1223
      %v1225 = vrot.slane %v1218, %v1224
      %v1226 = vcombine.low %v1039, %v1041
      %v1228 = vunpack.c.l.s4 1983009808
      %v1229 = vunpack.c.0.s8 %v1228
      %v1230 = vlaneseq
      %v1231 = vshrl.u32 %v1230, 7
      %v1232 = vsub.s32 %v1229, %v1231
      %v1233 = vrot.slane %v1226, %v1232
      %s1258 = scalar_lea.vmem [#allocation2], 48
      %vm1259 = vcmask 519170
      %1260 = vst.msk [vmem:[%s1258] sm:$0xc] %vm1259, %v1049
      %vm1261 = vcmask 519168
      %1262 = vst.msk [vmem:[%s1258 + $0x4] sm:$0xf] %vm1261, %v1057
      %1263 = vst.msk [vmem:[%s1258 + $0xc] sm:$0xc] %vm1259, %v1065
      %1264 = vst.msk [vmem:[%s1258 + $0x10] sm:$0xf] %vm1261, %v1073
      %1265 = vst.msk [vmem:[%s1258 + $0x18] sm:$0xc] %vm1259, %v1081
      %1266 = vst.msk [vmem:[%s1258 + $0x1c] sm:$0xf] %vm1261, %v1089
      %1267 = vst.msk [vmem:[%s1258 + $0x24] sm:$0xc] %vm1259, %v1097
      %1268 = vst.msk [vmem:[%s1258 + $0x28] sm:$0xf] %vm1261, %v1105
      %1269 = vst.msk [vmem:[%s1258 + $0x30] sm:$0xc] %vm1259, %v1113
      %1270 = vst.msk [vmem:[%s1258 + $0x34] sm:$0xf] %vm1261, %v1121
      %1271 = vst.msk [vmem:[%s1258 + $0x3c] sm:$0xc] %vm1259, %v1129
      %1272 = vst.msk [vmem:[%s1258 + $0x40] sm:$0xf] %vm1261, %v1137
      %1273 = vst.msk [vmem:[%s1258 + $0x48] sm:$0xc] %vm1259, %v1145
      %1274 = vst.msk [vmem:[%s1258 + $0x4c] sm:$0xf] %vm1261, %v1153
      %1275 = vst.msk [vmem:[%s1258 + $0x54] sm:$0xc] %vm1259, %v1161
      %1276 = vst.msk [vmem:[%s1258 + $0x58] sm:$0xf] %vm1261, %v1169
      %1277 = vst.msk [vmem:[%s1258 + $0x60] sm:$0xc] %vm1259, %v1177
      %1278 = vst.msk [vmem:[%s1258 + $0x64] sm:$0xf] %vm1261, %v1185
      %1279 = vst.msk [vmem:[%s1258 + $0x6c] sm:$0xc] %vm1259, %v1193
      %1280 = vst.msk [vmem:[%s1258 + $0x70] sm:$0xf] %vm1261, %v1201
      %1281 = vst.msk [vmem:[%s1258 + $0x78] sm:$0xc] %vm1259, %v1209
      %1282 = vst.msk [vmem:[%s1258 + $0x7c] sm:$0xf] %vm1261, %v1217
      %1283 = vst.msk [vmem:[%s1258 + $0x84] sm:$0xc] %vm1259, %v1225
      %1284 = vst.msk [vmem:[%s1258 + $0x88] sm:$0xf] %vm1261, %v1233
      %v1286 = vpack.i.b16 %v896, %v896
      %v1288 = vlaneseq
      %v1289 = vshrl.u32 %v1288, 7
      %v1290 = vsub.s32 0, %v1289
      %v1291 = vrot.slane %v1286, %v1290
      %v1293 = vpack.i.b16 %v905, %v905
      %v1295 = vlaneseq
      %v1296 = vshrl.u32 %v1295, 7
      %v1297 = vsub.s32 0, %v1296
      %v1298 = vrot.slane %v1293, %v1297
      %v1300 = vpack.i.b16 %v920, %v920
      %v1302 = vlaneseq
      %v1303 = vshrl.u32 %v1302, 7
      %v1304 = vsub.s32 0, %v1303
      %v1305 = vrot.slane %v1300, %v1304
      %v1307 = vpack.i.b16 %v938, %v938
      %v1309 = vlaneseq
      %v1310 = vshrl.u32 %v1309, 7
      %v1311 = vsub.s32 0, %v1310
      %v1312 = vrot.slane %v1307, %v1311
      %v1314 = vpack.i.b16 %v947, %v947
      %v1316 = vlaneseq
      %v1317 = vshrl.u32 %v1316, 7
      %v1318 = vsub.s32 0, %v1317
      %v1319 = vrot.slane %v1314, %v1318
      %v1321 = vpack.i.b16 %v956, %v956
      %v1323 = vlaneseq
      %v1324 = vshrl.u32 %v1323, 7
      %v1325 = vsub.s32 0, %v1324
      %v1326 = vrot.slane %v1321, %v1325
      %v1328 = vpack.i.b16 %v971, %v971
      %v1330 = vlaneseq
      %v1331 = vshrl.u32 %v1330, 7
      %v1332 = vsub.s32 0, %v1331
      %v1333 = vrot.slane %v1328, %v1332
      %v1335 = vpack.i.b16 %v989, %v989
      %v1337 = vlaneseq
      %v1338 = vshrl.u32 %v1337, 7
      %v1339 = vsub.s32 0, %v1338
      %v1340 = vrot.slane %v1335, %v1339
      %v1342 = vpack.i.b16 %v998, %v998
      %v1344 = vlaneseq
      %v1345 = vshrl.u32 %v1344, 7
      %v1346 = vsub.s32 0, %v1345
      %v1347 = vrot.slane %v1342, %v1346
      %v1349 = vpack.i.b16 %v1007, %v1007
      %v1351 = vlaneseq
      %v1352 = vshrl.u32 %v1351, 7
      %v1353 = vsub.s32 0, %v1352
      %v1354 = vrot.slane %v1349, %v1353
      %v1356 = vpack.i.b16 %v1022, %v1022
      %v1358 = vlaneseq
      %v1359 = vshrl.u32 %v1358, 7
      %v1360 = vsub.s32 0, %v1359
      %v1361 = vrot.slane %v1356, %v1360
      %v1363 = vpack.i.b16 %v1040, %v1040
      %v1365 = vlaneseq
      %v1366 = vshrl.u32 %v1365, 7
      %v1367 = vsub.s32 0, %v1366
      %v1368 = vrot.slane %v1363, %v1367
      %vm1369 = vcmask 517120
      %1370 = vst.msk [vmem:[%s1258] sm:$0x3] %vm1369, %v1291
      %1371 = vst.msk [vmem:[%s1258 + $0xc] sm:$0x3] %vm1369, %v1298
      %1372 = vst.msk [vmem:[%s1258 + $0x18] sm:$0x3] %vm1369, %v1305
      %1373 = vst.msk [vmem:[%s1258 + $0x24] sm:$0x3] %vm1369, %v1312
      %1374 = vst.msk [vmem:[%s1258 + $0x30] sm:$0x3] %vm1369, %v1319
      %1375 = vst.msk [vmem:[%s1258 + $0x3c] sm:$0x3] %vm1369, %v1326
      %1376 = vst.msk [vmem:[%s1258 + $0x48] sm:$0x3] %vm1369, %v1333
      %1377 = vst.msk [vmem:[%s1258 + $0x54] sm:$0x3] %vm1369, %v1340
      %1378 = vst.msk [vmem:[%s1258 + $0x60] sm:$0x3] %vm1369, %v1347
      %1379 = vst.msk [vmem:[%s1258 + $0x6c] sm:$0x3] %vm1369, %v1354
      %1380 = vst.msk [vmem:[%s1258 + $0x78] sm:$0x3] %vm1369, %v1361
      %1381 = vst.msk [vmem:[%s1258 + $0x84] sm:$0x3] %vm1369, %v1368
      %v1383 = vshrl.u32 %v903, 16
      %v1384 = vpack.i.b16 %v1383, %v1383
      %v1386 = vlaneseq
      %v1387 = vshrl.u32 %v1386, 7
      %v1388 = vsub.s32 1, %v1387
      %v1389 = vrot.slane %v1384, %v1388
      %v1391 = vshrl.u32 %v921, 16
      %v1392 = vpack.i.b16 %v1391, %v1391
      %v1394 = vlaneseq
      %v1395 = vshrl.u32 %v1394, 7
      %v1396 = vsub.s32 1, %v1395
      %v1397 = vrot.slane %v1392, %v1396
      %v1399 = vshrl.u32 %v930, 16
      %v1400 = vpack.i.b16 %v1399, %v1399
      %v1402 = vlaneseq
      %v1403 = vshrl.u32 %v1402, 7
      %v1404 = vsub.s32 1, %v1403
      %v1405 = vrot.slane %v1400, %v1404
      %v1407 = vshrl.u32 %v939, 16
      %v1408 = vpack.i.b16 %v1407, %v1407
      %v1410 = vlaneseq
      %v1411 = vshrl.u32 %v1410, 7
      %v1412 = vsub.s32 1, %v1411
      %v1413 = vrot.slane %v1408, %v1412
      %v1415 = vshrl.u32 %v954, 16
      %v1416 = vpack.i.b16 %v1415, %v1415
      %v1418 = vlaneseq
      %v1419 = vshrl.u32 %v1418, 7
      %v1420 = vsub.s32 1, %v1419
      %v1421 = vrot.slane %v1416, %v1420
      %v1423 = vshrl.u32 %v972, 16
      %v1424 = vpack.i.b16 %v1423, %v1423
      %v1426 = vlaneseq
      %v1427 = vshrl.u32 %v1426, 7
      %v1428 = vsub.s32 1, %v1427
      %v1429 = vrot.slane %v1424, %v1428
      %v1431 = vshrl.u32 %v981, 16
      %v1432 = vpack.i.b16 %v1431, %v1431
      %v1434 = vlaneseq
      %v1435 = vshrl.u32 %v1434, 7
      %v1436 = vsub.s32 1, %v1435
      %v1437 = vrot.slane %v1432, %v1436
      %v1439 = vshrl.u32 %v990, 16
      %v1440 = vpack.i.b16 %v1439, %v1439
      %v1442 = vlaneseq
      %v1443 = vshrl.u32 %v1442, 7
      %v1444 = vsub.s32 1, %v1443
      %v1445 = vrot.slane %v1440, %v1444
      %v1447 = vshrl.u32 %v1005, 16
      %v1448 = vpack.i.b16 %v1447, %v1447
      %v1450 = vlaneseq
      %v1451 = vshrl.u32 %v1450, 7
      %v1452 = vsub.s32 1, %v1451
      %v1453 = vrot.slane %v1448, %v1452
      %v1455 = vshrl.u32 %v1023, 16
      %v1456 = vpack.i.b16 %v1455, %v1455
      %v1458 = vlaneseq
      %v1459 = vshrl.u32 %v1458, 7
      %v1460 = vsub.s32 1, %v1459
      %v1461 = vrot.slane %v1456, %v1460
      %v1463 = vshrl.u32 %v1032, 16
      %v1464 = vpack.i.b16 %v1463, %v1463
      %v1466 = vlaneseq
      %v1467 = vshrl.u32 %v1466, 7
      %v1468 = vsub.s32 1, %v1467
      %v1469 = vrot.slane %v1464, %v1468
      %v1471 = vshrl.u32 %v1041, 16
      %v1472 = vpack.i.b16 %v1471, %v1471
      %v1474 = vlaneseq
      %v1475 = vshrl.u32 %v1474, 7
      %v1476 = vsub.s32 1, %v1475
      %v1477 = vrot.slane %v1472, %v1476
      %1478 = vst.msk [vmem:[%s1258 + $0x8] sm:$0x3] %vm1369, %v1389
      %1479 = vst.msk [vmem:[%s1258 + $0x14] sm:$0x3] %vm1369, %v1397
      %1480 = vst.msk [vmem:[%s1258 + $0x20] sm:$0x3] %vm1369, %v1405
      %1481 = vst.msk [vmem:[%s1258 + $0x2c] sm:$0x3] %vm1369, %v1413
      %1482 = vst.msk [vmem:[%s1258 + $0x38] sm:$0x3] %vm1369, %v1421
      %1483 = vst.msk [vmem:[%s1258 + $0x44] sm:$0x3] %vm1369, %v1429
      %1484 = vst.msk [vmem:[%s1258 + $0x50] sm:$0x3] %vm1369, %v1437
      %1485 = vst.msk [vmem:[%s1258 + $0x5c] sm:$0x3] %vm1369, %v1445
      %1486 = vst.msk [vmem:[%s1258 + $0x68] sm:$0x3] %vm1369, %v1453
      %1487 = vst.msk [vmem:[%s1258 + $0x74] sm:$0x3] %vm1369, %v1461
      %1488 = vst.msk [vmem:[%s1258 + $0x80] sm:$0x3] %vm1369, %v1469
      %1489 = vst.msk [vmem:[%s1258 + $0x8c] sm:$0x3] %vm1369, %v1477
      %v1490 = vld [vmem:[%s1258] sm:$0xf]
      %v1491 = vld [vmem:[%s1258 + $0x4] sm:$0xf]
      %v1492 = vld [vmem:[%s1258 + $0x8] sm:$0x3]
      %1493 = vst.msk [vmem:[#allocation2] sm:$0xf] %vm1261, %v1490
      %1494 = vst.msk [vmem:[#allocation2 + $0x4] sm:$0xf] %vm1261, %v1491
      %1495 = vst.msk [vmem:[#allocation2 + $0x8] sm:$0x3] %vm1369, %v1492
      %1496 = vst.msk [vmem:[#allocation2 + $0xc] sm:$0xf] %vm1261, %v1490
      %1497 = vst.msk [vmem:[#allocation2 + $0x10] sm:$0xf] %vm1261, %v1491
      %1498 = vst.msk [vmem:[#allocation2 + $0x14] sm:$0x3] %vm1369, %v1492
      %1499 = vst.msk [vmem:[#allocation2 + $0x18] sm:$0xf] %vm1261, %v1490
      %1500 = vst.msk [vmem:[#allocation2 + $0x1c] sm:$0xf] %vm1261, %v1491
      %1501 = vst.msk [vmem:[#allocation2 + $0x20] sm:$0x3] %vm1369, %v1492
      %1502 = vst.msk [vmem:[#allocation2 + $0x24] sm:$0xf] %vm1261, %v1490
      %1503 = vst.msk [vmem:[#allocation2 + $0x28] sm:$0xf] %vm1261, %v1491
      %1504 = vst.msk [vmem:[#allocation2 + $0x2c] sm:$0x3] %vm1369, %v1492
      %s1505 = scalar_lea.vmem [#allocation2], 180
      %v1506 = vld [vmem:[%s1505] sm:$0xf]
      %v1507 = vld [vmem:[%s1505 + $0x4] sm:$0xf]
      %v1508 = vld [vmem:[%s1505 + $0x8] sm:$0x3]
      %s1509 = scalar_lea.vmem [#allocation2], 192
      %1510 = vst.msk [vmem:[%s1509] sm:$0xf] %vm1261, %v1506
      %1511 = vst.msk [vmem:[%s1509 + $0x4] sm:$0xf] %vm1261, %v1507
      %1512 = vst.msk [vmem:[%s1509 + $0x8] sm:$0x3] %vm1369, %v1508
      %1513 = vst.msk [vmem:[%s1509 + $0xc] sm:$0xf] %vm1261, %v1506
      %1514 = vst.msk [vmem:[%s1509 + $0x10] sm:$0xf] %vm1261, %v1507
      %1515 = vst.msk [vmem:[%s1509 + $0x14] sm:$0x3] %vm1369, %v1508
      %1516 = vst.msk [vmem:[%s1509 + $0x18] sm:$0xf] %vm1261, %v1506
      %1517 = vst.msk [vmem:[%s1509 + $0x1c] sm:$0xf] %vm1261, %v1507
      %1518 = vst.msk [vmem:[%s1509 + $0x20] sm:$0x3] %vm1369, %v1508
      %1519 = vst.msk [vmem:[%s1509 + $0x24] sm:$0xf] %vm1261, %v1506
      %1520 = vst.msk [vmem:[%s1509 + $0x28] sm:$0xf] %vm1261, %v1507
      %1521 = vst.msk [vmem:[%s1509 + $0x2c] sm:$0x3] %vm1369, %v1508
      %v1522 = vld [vmem:[#allocation2] sm:$0xf]
      %v1523 = vld [vmem:[#allocation2 + $0x4] sm:$0xf]
      %v1524 = vld [vmem:[#allocation2 + $0x8] sm:$0x3]
      %v1525 = vld [vmem:[#allocation2 + $0xc] sm:$0xf]
      %v1526 = vld [vmem:[#allocation2 + $0x10] sm:$0xf]
      %v1527 = vld [vmem:[#allocation2 + $0x14] sm:$0x3]
      %v1528 = vld [vmem:[#allocation2 + $0x18] sm:$0xf]
      %v1529 = vld [vmem:[#allocation2 + $0x1c] sm:$0xf]
      %v1530 = vld [vmem:[#allocation2 + $0x20] sm:$0x3]
      %v1531 = vld [vmem:[#allocation2 + $0x24] sm:$0xf]
      %v1532 = vld [vmem:[#allocation2 + $0x28] sm:$0xf]
      %v1533 = vld [vmem:[#allocation2 + $0x2c] sm:$0x3]
      %v1534 = vld [vmem:[#allocation2 + $0x30] sm:$0xf]
      %v1535 = vld [vmem:[#allocation2 + $0x34] sm:$0xf]
      %v1536 = vld [vmem:[#allocation2 + $0x38] sm:$0x3]
      %v1537 = vld [vmem:[#allocation2 + $0x3c] sm:$0xf]
      %v1538 = vld [vmem:[#allocation2 + $0x40] sm:$0xf]
      %v1539 = vld [vmem:[#allocation2 + $0x44] sm:$0x3]
      %v1540 = vld [vmem:[#allocation2 + $0x48] sm:$0xf]
      %v1541 = vld [vmem:[#allocation2 + $0x4c] sm:$0xf]
      %v1542 = vld [vmem:[#allocation2 + $0x50] sm:$0x3]
      %v1543 = vld [vmem:[#allocation2 + $0x54] sm:$0xf]
      %v1544 = vld [vmem:[#allocation2 + $0x58] sm:$0xf]
      %v1545 = vld [vmem:[#allocation2 + $0x5c] sm:$0x3]
      %v1546 = vld [vmem:[#allocation2 + $0x60] sm:$0xf]
      %v1547 = vld [vmem:[#allocation2 + $0x64] sm:$0xf]
      %v1548 = vld [vmem:[#allocation2 + $0x68] sm:$0x3]
      %v1549 = vld [vmem:[#allocation2 + $0x6c] sm:$0xf]
      %v1550 = vld [vmem:[#allocation2 + $0x70] sm:$0xf]
      %v1551 = vld [vmem:[#allocation2 + $0x74] sm:$0x3]
      %v1552 = vld [vmem:[#allocation2 + $0x78] sm:$0xf]
      %v1553 = vld [vmem:[#allocation2 + $0x7c] sm:$0xf]
      %v1554 = vld [vmem:[#allocation2 + $0x80] sm:$0x3]
      %v1555 = vld [vmem:[#allocation2 + $0x84] sm:$0xf]
      %v1556 = vld [vmem:[#allocation2 + $0x88] sm:$0xf]
      %v1557 = vld [vmem:[#allocation2 + $0x8c] sm:$0x3]
      %v1558 = vld [vmem:[#allocation2 + $0x90] sm:$0xf]
      %v1559 = vld [vmem:[#allocation2 + $0x94] sm:$0xf]
      %v1560 = vld [vmem:[#allocation2 + $0x98] sm:$0x3]
      %v1561 = vld [vmem:[#allocation2 + $0x9c] sm:$0xf]
      %v1562 = vld [vmem:[#allocation2 + $0xa0] sm:$0xf]
      %v1563 = vld [vmem:[#allocation2 + $0xa4] sm:$0x3]
      %v1564 = vld [vmem:[#allocation2 + $0xa8] sm:$0xf]
      %v1565 = vld [vmem:[#allocation2 + $0xac] sm:$0xf]
      %v1566 = vld [vmem:[#allocation2 + $0xb0] sm:$0x3]
      %v1567 = vld [vmem:[#allocation2 + $0xb4] sm:$0xf]
      %v1568 = vld [vmem:[#allocation2 + $0xb8] sm:$0xf]
      %v1569 = vld [vmem:[#allocation2 + $0xbc] sm:$0x3]
      %1570 = vst.msk [vmem:[#allocation3] sm:$0xf] %vm1261, %v1522
      %1571 = vst.msk [vmem:[#allocation3 + $0x34] sm:$0xf] %vm1261, %v1523
      %1572 = vst.msk [vmem:[#allocation3 + $0x68] sm:$0xf] %vm1261, %v1525
      %1573 = vst.msk [vmem:[#allocation3 + $0x9c] sm:$0xf] %vm1261, %v1526
      %1574 = vst.msk [vmem:[#allocation3 + $0xd0] sm:$0xf] %vm1261, %v1528
      %1575 = vst.msk [vmem:[#allocation3 + $0x104] sm:$0xf] %vm1261, %v1529
      %1576 = vst.msk [vmem:[#allocation3 + $0x138] sm:$0xf] %vm1261, %v1531
      %1577 = vst.msk [vmem:[#allocation3 + $0x16c] sm:$0xf] %vm1261, %v1532
      %1578 = vst.msk [vmem:[#allocation3 + $0x1a0] sm:$0xf] %vm1261, %v1534
      %1579 = vst.msk [vmem:[#allocation3 + $0x1d4] sm:$0xf] %vm1261, %v1535
      %1580 = vst.msk [vmem:[#allocation3 + $0x208] sm:$0xf] %vm1261, %v1537
      %1581 = vst.msk [vmem:[#allocation3 + $0x23c] sm:$0xf] %vm1261, %v1538
      %1582 = vst.msk [vmem:[#allocation3 + $0x270] sm:$0xf] %vm1261, %v1540
      %1583 = vst.msk [vmem:[#allocation3 + $0x2a4] sm:$0xf] %vm1261, %v1541
      %1584 = vst.msk [vmem:[#allocation3 + $0x2d8] sm:$0xf] %vm1261, %v1543
      %1585 = vst.msk [vmem:[#allocation3 + $0x30c] sm:$0xf] %vm1261, %v1544
      %1586 = vst.msk [vmem:[#allocation3 + $0x340] sm:$0xf] %vm1261, %v1546
      %1587 = vst.msk [vmem:[#allocation3 + $0x374] sm:$0xf] %vm1261, %v1547
      %1588 = vst.msk [vmem:[#allocation3 + $0x3a8] sm:$0xf] %vm1261, %v1549
      %1589 = vst.msk [vmem:[#allocation3 + $0x3dc] sm:$0xf] %vm1261, %v1550
      %1590 = vst.msk [vmem:[#allocation3 + $0x410] sm:$0xf] %vm1261, %v1552
      %1591 = vst.msk [vmem:[#allocation3 + $0x444] sm:$0xf] %vm1261, %v1553
      %1592 = vst.msk [vmem:[#allocation3 + $0x478] sm:$0xf] %vm1261, %v1555
      %1593 = vst.msk [vmem:[#allocation3 + $0x4ac] sm:$0xf] %vm1261, %v1556
      %1594 = vst.msk [vmem:[#allocation3 + $0x4e0] sm:$0xf] %vm1261, %v1558
      %1595 = vst.msk [vmem:[#allocation3 + $0x514] sm:$0xf] %vm1261, %v1559
      %1596 = vst.msk [vmem:[#allocation3 + $0x548] sm:$0xf] %vm1261, %v1561
      %1597 = vst.msk [vmem:[#allocation3 + $0x57c] sm:$0xf] %vm1261, %v1562
      %1598 = vst.msk [vmem:[#allocation3 + $0x5b0] sm:$0xf] %vm1261, %v1564
      %1599 = vst.msk [vmem:[#allocation3 + $0x5e4] sm:$0xf] %vm1261, %v1565
      %1600 = vst.msk [vmem:[#allocation3 + $0x618] sm:$0xf] %vm1261, %v1567
      %1601 = vst.msk [vmem:[#allocation3 + $0x64c] sm:$0xf] %vm1261, %v1568
      %vm1602 = vsmask.f32 3328
      %vm1603 = vsmask.f32 7440
      %vm1604 = vmor %vm1602, %vm1603
      %v1606 = vshrl.u32 %v1522, 16
      %v1608 = vrot.slane %v1606, 4
      %v1609 = vshll.u32 %v1522, 16
      %v1611 = vrot.slane %v1609, 5
      %v1612 = vor.u32 %v1608, %v1611
      %v1613 = vrot.slane %v1612, 4
      %v1615 = vshll.u32 %v1523, 16
      %v1617 = vrot.slane %v1615, 5
      %v1618 = vsel %vm1604, %v1613, %v1617
      %v1619 = vshrl.u32 %v1523, 16
      %v1621 = vrot.slane %v1619, 4
      %v1622 = vor.u32 %v1621, %v1617
      %v1623 = vrot.slane %v1622, 4
      %v1625 = vshll.u32 %v1524, 16
      %v1627 = vrot.slane %v1625, 5
      %v1628 = vsel %vm1604, %v1623, %v1627
      %v1630 = vshrl.u32 %v1525, 16
      %v1632 = vrot.slane %v1630, 4
      %v1633 = vshll.u32 %v1525, 16
      %v1635 = vrot.slane %v1633, 5
      %v1636 = vor.u32 %v1632, %v1635
      %v1637 = vrot.slane %v1636, 4
      %v1639 = vshll.u32 %v1526, 16
      %v1641 = vrot.slane %v1639, 5
      %v1642 = vsel %vm1604, %v1637, %v1641
      %v1643 = vshrl.u32 %v1526, 16
      %v1645 = vrot.slane %v1643, 4
      %v1646 = vor.u32 %v1645, %v1641
      %v1647 = vrot.slane %v1646, 4
      %v1649 = vshll.u32 %v1527, 16
      %v1651 = vrot.slane %v1649, 5
      %v1652 = vsel %vm1604, %v1647, %v1651
      %v1654 = vshrl.u32 %v1528, 16
      %v1656 = vrot.slane %v1654, 4
      %v1657 = vshll.u32 %v1528, 16
      %v1659 = vrot.slane %v1657, 5
      %v1660 = vor.u32 %v1656, %v1659
      %v1661 = vrot.slane %v1660, 4
      %v1663 = vshll.u32 %v1529, 16
      %v1665 = vrot.slane %v1663, 5
      %v1666 = vsel %vm1604, %v1661, %v1665
      %v1667 = vshrl.u32 %v1529, 16
      %v1669 = vrot.slane %v1667, 4
      %v1670 = vor.u32 %v1669, %v1665
      %v1671 = vrot.slane %v1670, 4
      %v1673 = vshll.u32 %v1530, 16
      %v1675 = vrot.slane %v1673, 5
      %v1676 = vsel %vm1604, %v1671, %v1675
      %v1678 = vshrl.u32 %v1531, 16
      %v1680 = vrot.slane %v1678, 4
      %v1681 = vshll.u32 %v1531, 16
      %v1683 = vrot.slane %v1681, 5
      %v1684 = vor.u32 %v1680, %v1683
      %v1685 = vrot.slane %v1684, 4
      %v1687 = vshll.u32 %v1532, 16
      %v1689 = vrot.slane %v1687, 5
      %v1690 = vsel %vm1604, %v1685, %v1689
      %v1691 = vshrl.u32 %v1532, 16
      %v1693 = vrot.slane %v1691, 4
      %v1694 = vor.u32 %v1693, %v1689
      %v1695 = vrot.slane %v1694, 4
      %v1697 = vshll.u32 %v1533, 16
      %v1699 = vrot.slane %v1697, 5
      %v1700 = vsel %vm1604, %v1695, %v1699
      %v1702 = vshrl.u32 %v1534, 16
      %v1704 = vrot.slane %v1702, 4
      %v1705 = vshll.u32 %v1534, 16
      %v1707 = vrot.slane %v1705, 5
      %v1708 = vor.u32 %v1704, %v1707
      %v1709 = vrot.slane %v1708, 4
      %v1711 = vshll.u32 %v1535, 16
      %v1713 = vrot.slane %v1711, 5
      %v1714 = vsel %vm1604, %v1709, %v1713
      %v1715 = vshrl.u32 %v1535, 16
      %v1717 = vrot.slane %v1715, 4
      %v1718 = vor.u32 %v1717, %v1713
      %v1719 = vrot.slane %v1718, 4
      %v1721 = vshll.u32 %v1536, 16
      %v1723 = vrot.slane %v1721, 5
      %v1724 = vsel %vm1604, %v1719, %v1723
      %v1726 = vshrl.u32 %v1537, 16
      %v1728 = vrot.slane %v1726, 4
      %v1729 = vshll.u32 %v1537, 16
      %v1731 = vrot.slane %v1729, 5
      %v1732 = vor.u32 %v1728, %v1731
      %v1733 = vrot.slane %v1732, 4
      %v1735 = vshll.u32 %v1538, 16
      %v1737 = vrot.slane %v1735, 5
      %v1738 = vsel %vm1604, %v1733, %v1737
      %v1739 = vshrl.u32 %v1538, 16
      %v1741 = vrot.slane %v1739, 4
      %v1742 = vor.u32 %v1741, %v1737
      %v1743 = vrot.slane %v1742, 4
      %v1745 = vshll.u32 %v1539, 16
      %v1747 = vrot.slane %v1745, 5
      %v1748 = vsel %vm1604, %v1743, %v1747
      %v1750 = vshrl.u32 %v1540, 16
      %v1752 = vrot.slane %v1750, 4
      %v1753 = vshll.u32 %v1540, 16
      %v1755 = vrot.slane %v1753, 5
      %v1756 = vor.u32 %v1752, %v1755
      %v1757 = vrot.slane %v1756, 4
      %v1759 = vshll.u32 %v1541, 16
      %v1761 = vrot.slane %v1759, 5
      %v1762 = vsel %vm1604, %v1757, %v1761
      %v1763 = vshrl.u32 %v1541, 16
      %v1765 = vrot.slane %v1763, 4
      %v1766 = vor.u32 %v1765, %v1761
      %v1767 = vrot.slane %v1766, 4
      %v1769 = vshll.u32 %v1542, 16
      %v1771 = vrot.slane %v1769, 5
      %v1772 = vsel %vm1604, %v1767, %v1771
      %v1774 = vshrl.u32 %v1543, 16
      %v1776 = vrot.slane %v1774, 4
      %v1777 = vshll.u32 %v1543, 16
      %v1779 = vrot.slane %v1777, 5
      %v1780 = vor.u32 %v1776, %v1779
      %v1781 = vrot.slane %v1780, 4
      %v1783 = vshll.u32 %v1544, 16
      %v1785 = vrot.slane %v1783, 5
      %v1786 = vsel %vm1604, %v1781, %v1785
      %v1787 = vshrl.u32 %v1544, 16
      %v1789 = vrot.slane %v1787, 4
      %v1790 = vor.u32 %v1789, %v1785
      %v1791 = vrot.slane %v1790, 4
      %v1793 = vshll.u32 %v1545, 16
      %v1795 = vrot.slane %v1793, 5
      %v1796 = vsel %vm1604, %v1791, %v1795
      %v1798 = vshrl.u32 %v1546, 16
      %v1800 = vrot.slane %v1798, 4
      %v1801 = vshll.u32 %v1546, 16
      %v1803 = vrot.slane %v1801, 5
      %v1804 = vor.u32 %v1800, %v1803
      %v1805 = vrot.slane %v1804, 4
      %v1807 = vshll.u32 %v1547, 16
      %v1809 = vrot.slane %v1807, 5
      %v1810 = vsel %vm1604, %v1805, %v1809
      %v1811 = vshrl.u32 %v1547, 16
      %v1813 = vrot.slane %v1811, 4
      %v1814 = vor.u32 %v1813, %v1809
      %v1815 = vrot.slane %v1814, 4
      %v1817 = vshll.u32 %v1548, 16
      %v1819 = vrot.slane %v1817, 5
      %v1820 = vsel %vm1604, %v1815, %v1819
      %v1822 = vshrl.u32 %v1549, 16
      %v1824 = vrot.slane %v1822, 4
      %v1825 = vshll.u32 %v1549, 16
      %v1827 = vrot.slane %v1825, 5
      %v1828 = vor.u32 %v1824, %v1827
      %v1829 = vrot.slane %v1828, 4
      %v1831 = vshll.u32 %v1550, 16
      %v1833 = vrot.slane %v1831, 5
      %v1834 = vsel %vm1604, %v1829, %v1833
      %v1835 = vshrl.u32 %v1550, 16
      %v1837 = vrot.slane %v1835, 4
      %v1838 = vor.u32 %v1837, %v1833
      %v1839 = vrot.slane %v1838, 4
      %v1841 = vshll.u32 %v1551, 16
      %v1843 = vrot.slane %v1841, 5
      %v1844 = vsel %vm1604, %v1839, %v1843
      %v1846 = vshrl.u32 %v1552, 16
      %v1848 = vrot.slane %v1846, 4
      %v1849 = vshll.u32 %v1552, 16
      %v1851 = vrot.slane %v1849, 5
      %v1852 = vor.u32 %v1848, %v1851
      %v1853 = vrot.slane %v1852, 4
      %v1855 = vshll.u32 %v1553, 16
      %v1857 = vrot.slane %v1855, 5
      %v1858 = vsel %vm1604, %v1853, %v1857
      %v1859 = vshrl.u32 %v1553, 16
      %v1861 = vrot.slane %v1859, 4
      %v1862 = vor.u32 %v1861, %v1857
      %v1863 = vrot.slane %v1862, 4
      %v1865 = vshll.u32 %v1554, 16
      %v1867 = vrot.slane %v1865, 5
      %v1868 = vsel %vm1604, %v1863, %v1867
      %v1870 = vshrl.u32 %v1555, 16
      %v1872 = vrot.slane %v1870, 4
      %v1873 = vshll.u32 %v1555, 16
      %v1875 = vrot.slane %v1873, 5
      %v1876 = vor.u32 %v1872, %v1875
      %v1877 = vrot.slane %v1876, 4
      %v1879 = vshll.u32 %v1556, 16
      %v1881 = vrot.slane %v1879, 5
      %v1882 = vsel %vm1604, %v1877, %v1881
      %v1883 = vshrl.u32 %v1556, 16
      %v1885 = vrot.slane %v1883, 4
      %v1886 = vor.u32 %v1885, %v1881
      %v1887 = vrot.slane %v1886, 4
      %v1889 = vshll.u32 %v1557, 16
      %v1891 = vrot.slane %v1889, 5
      %v1892 = vsel %vm1604, %v1887, %v1891
      %v1894 = vshrl.u32 %v1558, 16
      %v1896 = vrot.slane %v1894, 4
      %v1897 = vshll.u32 %v1558, 16
      %v1899 = vrot.slane %v1897, 5
      %v1900 = vor.u32 %v1896, %v1899
      %v1901 = vrot.slane %v1900, 4
      %v1903 = vshll.u32 %v1559, 16
      %v1905 = vrot.slane %v1903, 5
      %v1906 = vsel %vm1604, %v1901, %v1905
      %v1907 = vshrl.u32 %v1559, 16
      %v1909 = vrot.slane %v1907, 4
      %v1910 = vor.u32 %v1909, %v1905
      %v1911 = vrot.slane %v1910, 4
      %v1913 = vshll.u32 %v1560, 16
      %v1915 = vrot.slane %v1913, 5
      %v1916 = vsel %vm1604, %v1911, %v1915
      %v1918 = vshrl.u32 %v1561, 16
      %v1920 = vrot.slane %v1918, 4
      %v1921 = vshll.u32 %v1561, 16
      %v1923 = vrot.slane %v1921, 5
      %v1924 = vor.u32 %v1920, %v1923
      %v1925 = vrot.slane %v1924, 4
      %v1927 = vshll.u32 %v1562, 16
      %v1929 = vrot.slane %v1927, 5
      %v1930 = vsel %vm1604, %v1925, %v1929
      %v1931 = vshrl.u32 %v1562, 16
      %v1933 = vrot.slane %v1931, 4
      %v1934 = vor.u32 %v1933, %v1929
      %v1935 = vrot.slane %v1934, 4
      %v1937 = vshll.u32 %v1563, 16
      %v1939 = vrot.slane %v1937, 5
      %v1940 = vsel %vm1604, %v1935, %v1939
      %v1942 = vshrl.u32 %v1564, 16
      %v1944 = vrot.slane %v1942, 4
      %v1945 = vshll.u32 %v1564, 16
      %v1947 = vrot.slane %v1945, 5
      %v1948 = vor.u32 %v1944, %v1947
      %v1949 = vrot.slane %v1948, 4
      %v1951 = vshll.u32 %v1565, 16
      %v1953 = vrot.slane %v1951, 5
      %v1954 = vsel %vm1604, %v1949, %v1953
      %v1955 = vshrl.u32 %v1565, 16
      %v1957 = vrot.slane %v1955, 4
      %v1958 = vor.u32 %v1957, %v1953
      %v1959 = vrot.slane %v1958, 4
      %v1961 = vshll.u32 %v1566, 16
      %v1963 = vrot.slane %v1961, 5
      %v1964 = vsel %vm1604, %v1959, %v1963
      %v1966 = vshrl.u32 %v1567, 16
      %v1968 = vrot.slane %v1966, 4
      %v1969 = vshll.u32 %v1567, 16
      %v1971 = vrot.slane %v1969, 5
      %v1972 = vor.u32 %v1968, %v1971
      %v1973 = vrot.slane %v1972, 4
      %v1975 = vshll.u32 %v1568, 16
      %v1977 = vrot.slane %v1975, 5
      %v1978 = vsel %vm1604, %v1973, %v1977
      %v1979 = vshrl.u32 %v1568, 16
      %v1981 = vrot.slane %v1979, 4
      %v1982 = vor.u32 %v1981, %v1977
      %v1983 = vrot.slane %v1982, 4
      %v1985 = vshll.u32 %v1569, 16
      %v1987 = vrot.slane %v1985, 5
      %v1988 = vsel %vm1604, %v1983, %v1987
      %1989 = vrot.lane.b32.xlu0 %v1618, 64
      %v1990 = vpop.permute.xlu0 %1989
      %1991 = vrot.lane.b32.xlu0 %v1628, 64
      %v1992 = vpop.permute.xlu0 %1991
      %1993 = vrot.lane.b32.xlu0 %v1642, 64
      %v1994 = vpop.permute.xlu0 %1993
      %1995 = vrot.lane.b32.xlu0 %v1652, 64
      %v1996 = vpop.permute.xlu0 %1995
      %1997 = vrot.lane.b32.xlu0 %v1666, 64
      %v1998 = vpop.permute.xlu0 %1997
      %1999 = vrot.lane.b32.xlu0 %v1676, 64
      %v2000 = vpop.permute.xlu0 %1999
      %2001 = vrot.lane.b32.xlu0 %v1690, 64
      %v2002 = vpop.permute.xlu0 %2001
      %2003 = vrot.lane.b32.xlu0 %v1700, 64
      %v2004 = vpop.permute.xlu0 %2003
      %2005 = vrot.lane.b32.xlu0 %v1714, 64
      %v2006 = vpop.permute.xlu0 %2005
      %2007 = vrot.lane.b32.xlu0 %v1724, 64
      %v2008 = vpop.permute.xlu0 %2007
      %2009 = vrot.lane.b32.xlu0 %v1738, 64
      %v2010 = vpop.permute.xlu0 %2009
      %2011 = vrot.lane.b32.xlu0 %v1748, 64
      %v2012 = vpop.permute.xlu0 %2011
      %2013 = vrot.lane.b32.xlu0 %v1762, 64
      %v2014 = vpop.permute.xlu0 %2013
      %2015 = vrot.lane.b32.xlu0 %v1772, 64
      %v2016 = vpop.permute.xlu0 %2015
      %2017 = vrot.lane.b32.xlu0 %v1786, 64
      %v2018 = vpop.permute.xlu0 %2017
      %2019 = vrot.lane.b32.xlu0 %v1796, 64
      %v2020 = vpop.permute.xlu0 %2019
      %2021 = vrot.lane.b32.xlu0 %v1810, 64
      %v2022 = vpop.permute.xlu0 %2021
      %2023 = vrot.lane.b32.xlu0 %v1820, 64
      %v2024 = vpop.permute.xlu0 %2023
      %2025 = vrot.lane.b32.xlu0 %v1834, 64
      %v2026 = vpop.permute.xlu0 %2025
      %2027 = vrot.lane.b32.xlu0 %v1844, 64
      %v2028 = vpop.permute.xlu0 %2027
      %2029 = vrot.lane.b32.xlu0 %v1858, 64
      %v2030 = vpop.permute.xlu0 %2029
      %2031 = vrot.lane.b32.xlu0 %v1868, 64
      %v2032 = vpop.permute.xlu0 %2031
      %2033 = vrot.lane.b32.xlu0 %v1882, 64
      %v2034 = vpop.permute.xlu0 %2033
      %2035 = vrot.lane.b32.xlu0 %v1892, 64
      %v2036 = vpop.permute.xlu0 %2035
      %2037 = vrot.lane.b32.xlu0 %v1906, 64
      %v2038 = vpop.permute.xlu0 %2037
      %2039 = vrot.lane.b32.xlu0 %v1916, 64
      %v2040 = vpop.permute.xlu0 %2039
      %2041 = vrot.lane.b32.xlu0 %v1930, 64
      %v2042 = vpop.permute.xlu0 %2041
      %2043 = vrot.lane.b32.xlu0 %v1940, 64
      %v2044 = vpop.permute.xlu0 %2043
      %2045 = vrot.lane.b32.xlu0 %v1954, 64
      %v2046 = vpop.permute.xlu0 %2045
      %2047 = vrot.lane.b32.xlu0 %v1964, 64
      %v2048 = vpop.permute.xlu0 %2047
      %2049 = vrot.lane.b32.xlu0 %v1978, 64
      %v2050 = vpop.permute.xlu0 %2049
      %2051 = vrot.lane.b32.xlu0 %v1988, 64
      %v2052 = vpop.permute.xlu0 %2051
      %vm2085 = vcmask 1043968
      %2086 = vst.msk [vmem:[#allocation3] sm:$0xf] %vm2085, %v1990
      %2087 = vst.msk [vmem:[#allocation3 + $0x34] sm:$0xf] %vm2085, %v1992
      %2088 = vst.msk [vmem:[#allocation3 + $0x68] sm:$0xf] %vm2085, %v1994
      %2089 = vst.msk [vmem:[#allocation3 + $0x9c] sm:$0xf] %vm2085, %v1996
      %2090 = vst.msk [vmem:[#allocation3 + $0xd0] sm:$0xf] %vm2085, %v1998
      %2091 = vst.msk [vmem:[#allocation3 + $0x104] sm:$0xf] %vm2085, %v2000
      %2092 = vst.msk [vmem:[#allocation3 + $0x138] sm:$0xf] %vm2085, %v2002
      %2093 = vst.msk [vmem:[#allocation3 + $0x16c] sm:$0xf] %vm2085, %v2004
      %2094 = vst.msk [vmem:[#allocation3 + $0x1a0] sm:$0xf] %vm2085, %v2006
      %2095 = vst.msk [vmem:[#allocation3 + $0x1d4] sm:$0xf] %vm2085, %v2008
      %2096 = vst.msk [vmem:[#allocation3 + $0x208] sm:$0xf] %vm2085, %v2010
      %2097 = vst.msk [vmem:[#allocation3 + $0x23c] sm:$0xf] %vm2085, %v2012
      %2098 = vst.msk [vmem:[#allocation3 + $0x270] sm:$0xf] %vm2085, %v2014
      %2099 = vst.msk [vmem:[#allocation3 + $0x2a4] sm:$0xf] %vm2085, %v2016
      %2100 = vst.msk [vmem:[#allocation3 + $0x2d8] sm:$0xf] %vm2085, %v2018
      %2101 = vst.msk [vmem:[#allocation3 + $0x30c] sm:$0xf] %vm2085, %v2020
      %2102 = vst.msk [vmem:[#allocation3 + $0x340] sm:$0xf] %vm2085, %v2022
      %2103 = vst.msk [vmem:[#allocation3 + $0x374] sm:$0xf] %vm2085, %v2024
      %2104 = vst.msk [vmem:[#allocation3 + $0x3a8] sm:$0xf] %vm2085, %v2026
      %2105 = vst.msk [vmem:[#allocation3 + $0x3dc] sm:$0xf] %vm2085, %v2028
      %2106 = vst.msk [vmem:[#allocation3 + $0x410] sm:$0xf] %vm2085, %v2030
      %2107 = vst.msk [vmem:[#allocation3 + $0x444] sm:$0xf] %vm2085, %v2032
      %2108 = vst.msk [vmem:[#allocation3 + $0x478] sm:$0xf] %vm2085, %v2034
      %2109 = vst.msk [vmem:[#allocation3 + $0x4ac] sm:$0xf] %vm2085, %v2036
      %2110 = vst.msk [vmem:[#allocation3 + $0x4e0] sm:$0xf] %vm2085, %v2038
      %2111 = vst.msk [vmem:[#allocation3 + $0x514] sm:$0xf] %vm2085, %v2040
      %2112 = vst.msk [vmem:[#allocation3 + $0x548] sm:$0xf] %vm2085, %v2042
      %2113 = vst.msk [vmem:[#allocation3 + $0x57c] sm:$0xf] %vm2085, %v2044
      %2114 = vst.msk [vmem:[#allocation3 + $0x5b0] sm:$0xf] %vm2085, %v2046
      %2115 = vst.msk [vmem:[#allocation3 + $0x5e4] sm:$0xf] %vm2085, %v2048
      %2116 = vst.msk [vmem:[#allocation3 + $0x618] sm:$0xf] %vm2085, %v2050
      %2117 = vst.msk [vmem:[#allocation3 + $0x64c] sm:$0xf] %vm2085, %v2052
      %vm2166 = vcmask 1042432
      %vm2167 = vcmask 1046532
      %vm2168 = vmor %vm2166, %vm2167
      %v2169 = vrot.slane %v1522, 5
      %v2170 = vrot.slane %v2169, 4
      %v2171 = vrot.slane %v1523, 5
      %v2172 = vsel %vm2168, %v2170, %v2171
      %v2173 = vrot.slane %v2171, 4
      %v2174 = vrot.slane %v1524, 5
      %v2175 = vsel %vm2168, %v2173, %v2174
      %v2176 = vrot.slane %v1525, 5
      %v2177 = vrot.slane %v2176, 4
      %v2178 = vrot.slane %v1526, 5
      %v2179 = vsel %vm2168, %v2177, %v2178
      %v2180 = vrot.slane %v2178, 4
      %v2181 = vrot.slane %v1527, 5
      %v2182 = vsel %vm2168, %v2180, %v2181
      %v2183 = vrot.slane %v1528, 5
      %v2184 = vrot.slane %v2183, 4
      %v2185 = vrot.slane %v1529, 5
      %v2186 = vsel %vm2168, %v2184, %v2185
      %v2187 = vrot.slane %v2185, 4
      %v2188 = vrot.slane %v1530, 5
      %v2189 = vsel %vm2168, %v2187, %v2188
      %v2190 = vrot.slane %v1531, 5
      %v2191 = vrot.slane %v2190, 4
      %v2192 = vrot.slane %v1532, 5
      %v2193 = vsel %vm2168, %v2191, %v2192
      %v2194 = vrot.slane %v2192, 4
      %v2195 = vrot.slane %v1533, 5
      %v2196 = vsel %vm2168, %v2194, %v2195
      %v2197 = vrot.slane %v1534, 5
      %v2198 = vrot.slane %v2197, 4
      %v2199 = vrot.slane %v1535, 5
      %v2200 = vsel %vm2168, %v2198, %v2199
      %v2201 = vrot.slane %v2199, 4
      %v2202 = vrot.slane %v1536, 5
      %v2203 = vsel %vm2168, %v2201, %v2202
      %v2204 = vrot.slane %v1537, 5
      %v2205 = vrot.slane %v2204, 4
      %v2206 = vrot.slane %v1538, 5
      %v2207 = vsel %vm2168, %v2205, %v2206
      %v2208 = vrot.slane %v2206, 4
      %v2209 = vrot.slane %v1539, 5
      %v2210 = vsel %vm2168, %v2208, %v2209
      %v2211 = vrot.slane %v1540, 5
      %v2212 = vrot.slane %v2211, 4
      %v2213 = vrot.slane %v1541, 5
      %v2214 = vsel %vm2168, %v2212, %v2213
      %v2215 = vrot.slane %v2213, 4
      %v2216 = vrot.slane %v1542, 5
      %v2217 = vsel %vm2168, %v2215, %v2216
      %v2218 = vrot.slane %v1543, 5
      %v2219 = vrot.slane %v2218, 4
      %v2220 = vrot.slane %v1544, 5
      %v2221 = vsel %vm2168, %v2219, %v2220
      %v2222 = vrot.slane %v2220, 4
      %v2223 = vrot.slane %v1545, 5
      %v2224 = vsel %vm2168, %v2222, %v2223
      %v2225 = vrot.slane %v1546, 5
      %v2226 = vrot.slane %v2225, 4
      %v2227 = vrot.slane %v1547, 5
      %v2228 = vsel %vm2168, %v2226, %v2227
      %v2229 = vrot.slane %v2227, 4
      %v2230 = vrot.slane %v1548, 5
      %v2231 = vsel %vm2168, %v2229, %v2230
      %v2232 = vrot.slane %v1549, 5
      %v2233 = vrot.slane %v2232, 4
      %v2234 = vrot.slane %v1550, 5
      %v2235 = vsel %vm2168, %v2233, %v2234
      %v2236 = vrot.slane %v2234, 4
      %v2237 = vrot.slane %v1551, 5
      %v2238 = vsel %vm2168, %v2236, %v2237
      %v2239 = vrot.slane %v1552, 5
      %v2240 = vrot.slane %v2239, 4
      %v2241 = vrot.slane %v1553, 5
      %v2242 = vsel %vm2168, %v2240, %v2241
      %v2243 = vrot.slane %v2241, 4
      %v2244 = vrot.slane %v1554, 5
      %v2245 = vsel %vm2168, %v2243, %v2244
      %v2246 = vrot.slane %v1555, 5
      %v2247 = vrot.slane %v2246, 4
      %v2248 = vrot.slane %v1556, 5
      %v2249 = vsel %vm2168, %v2247, %v2248
      %v2250 = vrot.slane %v2248, 4
      %v2251 = vrot.slane %v1557, 5
      %v2252 = vsel %vm2168, %v2250, %v2251
      %v2253 = vrot.slane %v1558, 5
      %v2254 = vrot.slane %v2253, 4
      %v2255 = vrot.slane %v1559, 5
      %v2256 = vsel %vm2168, %v2254, %v2255
      %v2257 = vrot.slane %v2255, 4
      %v2258 = vrot.slane %v1560, 5
      %v2259 = vsel %vm2168, %v2257, %v2258
      %v2260 = vrot.slane %v1561, 5
      %v2261 = vrot.slane %v2260, 4
      %v2262 = vrot.slane %v1562, 5
      %v2263 = vsel %vm2168, %v2261, %v2262
      %v2264 = vrot.slane %v2262, 4
      %v2265 = vrot.slane %v1563, 5
      %v2266 = vsel %vm2168, %v2264, %v2265
      %v2267 = vrot.slane %v1564, 5
      %v2268 = vrot.slane %v2267, 4
      %v2269 = vrot.slane %v1565, 5
      %v2270 = vsel %vm2168, %v2268, %v2269
      %v2271 = vrot.slane %v2269, 4
      %v2272 = vrot.slane %v1566, 5
      %v2273 = vsel %vm2168, %v2271, %v2272
      %v2274 = vrot.slane %v1567, 5
      %v2275 = vrot.slane %v2274, 4
      %v2276 = vrot.slane %v1568, 5
      %v2277 = vsel %vm2168, %v2275, %v2276
      %v2278 = vrot.slane %v2276, 4
      %v2279 = vrot.slane %v1569, 5
      %v2280 = vsel %vm2168, %v2278, %v2279
      %2313 = vst.msk [vmem:[#allocation3 + $0x4] sm:$0xf] %vm1261, %v2172
      %2314 = vst.msk [vmem:[#allocation3 + $0x38] sm:$0xf] %vm1261, %v2175
      %2315 = vst.msk [vmem:[#allocation3 + $0x6c] sm:$0xf] %vm1261, %v2179
      %2316 = vst.msk [vmem:[#allocation3 + $0xa0] sm:$0xf] %vm1261, %v2182
      %2317 = vst.msk [vmem:[#allocation3 + $0xd4] sm:$0xf] %vm1261, %v2186
      %2318 = vst.msk [vmem:[#allocation3 + $0x108] sm:$0xf] %vm1261, %v2189
      %2319 = vst.msk [vmem:[#allocation3 + $0x13c] sm:$0xf] %vm1261, %v2193
      %2320 = vst.msk [vmem:[#allocation3 + $0x170] sm:$0xf] %vm1261, %v2196
      %2321 = vst.msk [vmem:[#allocation3 + $0x1a4] sm:$0xf] %vm1261, %v2200
      %2322 = vst.msk [vmem:[#allocation3 + $0x1d8] sm:$0xf] %vm1261, %v2203
      %2323 = vst.msk [vmem:[#allocation3 + $0x20c] sm:$0xf] %vm1261, %v2207
      %2324 = vst.msk [vmem:[#allocation3 + $0x240] sm:$0xf] %vm1261, %v2210
      %2325 = vst.msk [vmem:[#allocation3 + $0x274] sm:$0xf] %vm1261, %v2214
      %2326 = vst.msk [vmem:[#allocation3 + $0x2a8] sm:$0xf] %vm1261, %v2217
      %2327 = vst.msk [vmem:[#allocation3 + $0x2dc] sm:$0xf] %vm1261, %v2221
      %2328 = vst.msk [vmem:[#allocation3 + $0x310] sm:$0xf] %vm1261, %v2224
      %2329 = vst.msk [vmem:[#allocation3 + $0x344] sm:$0xf] %vm1261, %v2228
      %2330 = vst.msk [vmem:[#allocation3 + $0x378] sm:$0xf] %vm1261, %v2231
      %2331 = vst.msk [vmem:[#allocation3 + $0x3ac] sm:$0xf] %vm1261, %v2235
      %2332 = vst.msk [vmem:[#allocation3 + $0x3e0] sm:$0xf] %vm1261, %v2238
      %2333 = vst.msk [vmem:[#allocation3 + $0x414] sm:$0xf] %vm1261, %v2242
      %2334 = vst.msk [vmem:[#allocation3 + $0x448] sm:$0xf] %vm1261, %v2245
      %2335 = vst.msk [vmem:[#allocation3 + $0x47c] sm:$0xf] %vm1261, %v2249
      %2336 = vst.msk [vmem:[#allocation3 + $0x4b0] sm:$0xf] %vm1261, %v2252
      %2337 = vst.msk [vmem:[#allocation3 + $0x4e4] sm:$0xf] %vm1261, %v2256
      %2338 = vst.msk [vmem:[#allocation3 + $0x518] sm:$0xf] %vm1261, %v2259
      %2339 = vst.msk [vmem:[#allocation3 + $0x54c] sm:$0xf] %vm1261, %v2263
      %2340 = vst.msk [vmem:[#allocation3 + $0x580] sm:$0xf] %vm1261, %v2266
      %2341 = vst.msk [vmem:[#allocation3 + $0x5b4] sm:$0xf] %vm1261, %v2270
      %2342 = vst.msk [vmem:[#allocation3 + $0x5e8] sm:$0xf] %vm1261, %v2273
      %2343 = vst.msk [vmem:[#allocation3 + $0x61c] sm:$0xf] %vm1261, %v2277
      %2344 = vst.msk [vmem:[#allocation3 + $0x650] sm:$0xf] %vm1261, %v2280
      %vm2345 = vsmask.f32 2304
      %vm2346 = vsmask.f32 6416
      %vm2347 = vmor %vm2345, %vm2346
      %v2348 = vrot.slane %v1606, 5
      %v2349 = vrot.slane %v1609, 6
      %v2350 = vor.u32 %v2348, %v2349
      %v2351 = vrot.slane %v2350, 4
      %v2352 = vrot.slane %v1619, 5
      %v2353 = vrot.slane %v1615, 6
      %v2354 = vor.u32 %v2352, %v2353
      %v2355 = vsel %vm2347, %v2351, %v2354
      %v2356 = vrot.slane %v2354, 4
      %v2357 = vshrl.u32 %v1524, 16
      %v2359 = vrot.slane %v2357, 5
      %v2360 = vrot.slane %v1625, 6
      %v2361 = vor.u32 %v2359, %v2360
      %v2362 = vsel %vm2347, %v2356, %v2361
      %v2363 = vrot.slane %v1630, 5
      %v2364 = vrot.slane %v1633, 6
      %v2365 = vor.u32 %v2363, %v2364
      %v2366 = vrot.slane %v2365, 4
      %v2367 = vrot.slane %v1643, 5
      %v2368 = vrot.slane %v1639, 6
      %v2369 = vor.u32 %v2367, %v2368
      %v2370 = vsel %vm2347, %v2366, %v2369
      %v2371 = vrot.slane %v2369, 4
      %v2372 = vshrl.u32 %v1527, 16
      %v2374 = vrot.slane %v2372, 5
      %v2375 = vrot.slane %v1649, 6
      %v2376 = vor.u32 %v2374, %v2375
      %v2377 = vsel %vm2347, %v2371, %v2376
      %v2378 = vrot.slane %v1654, 5
      %v2379 = vrot.slane %v1657, 6
      %v2380 = vor.u32 %v2378, %v2379
      %v2381 = vrot.slane %v2380, 4
      %v2382 = vrot.slane %v1667, 5
      %v2383 = vrot.slane %v1663, 6
      %v2384 = vor.u32 %v2382, %v2383
      %v2385 = vsel %vm2347, %v2381, %v2384
      %v2386 = vrot.slane %v2384, 4
      %v2387 = vshrl.u32 %v1530, 16
      %v2389 = vrot.slane %v2387, 5
      %v2390 = vrot.slane %v1673, 6
      %v2391 = vor.u32 %v2389, %v2390
      %v2392 = vsel %vm2347, %v2386, %v2391
      %v2393 = vrot.slane %v1678, 5
      %v2394 = vrot.slane %v1681, 6
      %v2395 = vor.u32 %v2393, %v2394
      %v2396 = vrot.slane %v2395, 4
      %v2397 = vrot.slane %v1691, 5
      %v2398 = vrot.slane %v1687, 6
      %v2399 = vor.u32 %v2397, %v2398
      %v2400 = vsel %vm2347, %v2396, %v2399
      %v2401 = vrot.slane %v2399, 4
      %v2402 = vshrl.u32 %v1533, 16
      %v2404 = vrot.slane %v2402, 5
      %v2405 = vrot.slane %v1697, 6
      %v2406 = vor.u32 %v2404, %v2405
      %v2407 = vsel %vm2347, %v2401, %v2406
      %v2408 = vrot.slane %v1702, 5
      %v2409 = vrot.slane %v1705, 6
      %v2410 = vor.u32 %v2408, %v2409
      %v2411 = vrot.slane %v2410, 4
      %v2412 = vrot.slane %v1715, 5
      %v2413 = vrot.slane %v1711, 6
      %v2414 = vor.u32 %v2412, %v2413
      %v2415 = vsel %vm2347, %v2411, %v2414
      %v2416 = vrot.slane %v2414, 4
      %v2417 = vshrl.u32 %v1536, 16
      %v2419 = vrot.slane %v2417, 5
      %v2420 = vrot.slane %v1721, 6
      %v2421 = vor.u32 %v2419, %v2420
      %v2422 = vsel %vm2347, %v2416, %v2421
      %v2423 = vrot.slane %v1726, 5
      %v2424 = vrot.slane %v1729, 6
      %v2425 = vor.u32 %v2423, %v2424
      %v2426 = vrot.slane %v2425, 4
      %v2427 = vrot.slane %v1739, 5
      %v2428 = vrot.slane %v1735, 6
      %v2429 = vor.u32 %v2427, %v2428
      %v2430 = vsel %vm2347, %v2426, %v2429
      %v2431 = vrot.slane %v2429, 4
      %v2432 = vshrl.u32 %v1539, 16
      %v2434 = vrot.slane %v2432, 5
      %v2435 = vrot.slane %v1745, 6
      %v2436 = vor.u32 %v2434, %v2435
      %v2437 = vsel %vm2347, %v2431, %v2436
      %v2438 = vrot.slane %v1750, 5
      %v2439 = vrot.slane %v1753, 6
      %v2440 = vor.u32 %v2438, %v2439
      %v2441 = vrot.slane %v2440, 4
      %v2442 = vrot.slane %v1763, 5
      %v2443 = vrot.slane %v1759, 6
      %v2444 = vor.u32 %v2442, %v2443
      %v2445 = vsel %vm2347, %v2441, %v2444
      %v2446 = vrot.slane %v2444, 4
      %v2447 = vshrl.u32 %v1542, 16
      %v2449 = vrot.slane %v2447, 5
      %v2450 = vrot.slane %v1769, 6
      %v2451 = vor.u32 %v2449, %v2450
      %v2452 = vsel %vm2347, %v2446, %v2451
      %v2453 = vrot.slane %v1774, 5
      %v2454 = vrot.slane %v1777, 6
      %v2455 = vor.u32 %v2453, %v2454
      %v2456 = vrot.slane %v2455, 4
      %v2457 = vrot.slane %v1787, 5
      %v2458 = vrot.slane %v1783, 6
      %v2459 = vor.u32 %v2457, %v2458
      %v2460 = vsel %vm2347, %v2456, %v2459
      %v2461 = vrot.slane %v2459, 4
      %v2462 = vshrl.u32 %v1545, 16
      %v2464 = vrot.slane %v2462, 5
      %v2465 = vrot.slane %v1793, 6
      %v2466 = vor.u32 %v2464, %v2465
      %v2467 = vsel %vm2347, %v2461, %v2466
      %v2468 = vrot.slane %v1798, 5
      %v2469 = vrot.slane %v1801, 6
      %v2470 = vor.u32 %v2468, %v2469
      %v2471 = vrot.slane %v2470, 4
      %v2472 = vrot.slane %v1811, 5
      %v2473 = vrot.slane %v1807, 6
      %v2474 = vor.u32 %v2472, %v2473
      %v2475 = vsel %vm2347, %v2471, %v2474
      %v2476 = vrot.slane %v2474, 4
      %v2477 = vshrl.u32 %v1548, 16
      %v2479 = vrot.slane %v2477, 5
      %v2480 = vrot.slane %v1817, 6
      %v2481 = vor.u32 %v2479, %v2480
      %v2482 = vsel %vm2347, %v2476, %v2481
      %v2483 = vrot.slane %v1822, 5
      %v2484 = vrot.slane %v1825, 6
      %v2485 = vor.u32 %v2483, %v2484
      %v2486 = vrot.slane %v2485, 4
      %v2487 = vrot.slane %v1835, 5
      %v2488 = vrot.slane %v1831, 6
      %v2489 = vor.u32 %v2487, %v2488
      %v2490 = vsel %vm2347, %v2486, %v2489
      %v2491 = vrot.slane %v2489, 4
      %v2492 = vshrl.u32 %v1551, 16
      %v2494 = vrot.slane %v2492, 5
      %v2495 = vrot.slane %v1841, 6
      %v2496 = vor.u32 %v2494, %v2495
      %v2497 = vsel %vm2347, %v2491, %v2496
      %v2498 = vrot.slane %v1846, 5
      %v2499 = vrot.slane %v1849, 6
      %v2500 = vor.u32 %v2498, %v2499
      %v2501 = vrot.slane %v2500, 4
      %v2502 = vrot.slane %v1859, 5
      %v2503 = vrot.slane %v1855, 6
      %v2504 = vor.u32 %v2502, %v2503
      %v2505 = vsel %vm2347, %v2501, %v2504
      %v2506 = vrot.slane %v2504, 4
      %v2507 = vshrl.u32 %v1554, 16
      %v2509 = vrot.slane %v2507, 5
      %v2510 = vrot.slane %v1865, 6
      %v2511 = vor.u32 %v2509, %v2510
      %v2512 = vsel %vm2347, %v2506, %v2511
      %v2513 = vrot.slane %v1870, 5
      %v2514 = vrot.slane %v1873, 6
      %v2515 = vor.u32 %v2513, %v2514
      %v2516 = vrot.slane %v2515, 4
      %v2517 = vrot.slane %v1883, 5
      %v2518 = vrot.slane %v1879, 6
      %v2519 = vor.u32 %v2517, %v2518
      %v2520 = vsel %vm2347, %v2516, %v2519
      %v2521 = vrot.slane %v2519, 4
      %v2522 = vshrl.u32 %v1557, 16
      %v2524 = vrot.slane %v2522, 5
      %v2525 = vrot.slane %v1889, 6
      %v2526 = vor.u32 %v2524, %v2525
      %v2527 = vsel %vm2347, %v2521, %v2526
      %v2528 = vrot.slane %v1894, 5
      %v2529 = vrot.slane %v1897, 6
      %v2530 = vor.u32 %v2528, %v2529
      %v2531 = vrot.slane %v2530, 4
      %v2532 = vrot.slane %v1907, 5
      %v2533 = vrot.slane %v1903, 6
      %v2534 = vor.u32 %v2532, %v2533
      %v2535 = vsel %vm2347, %v2531, %v2534
      %v2536 = vrot.slane %v2534, 4
      %v2537 = vshrl.u32 %v1560, 16
      %v2539 = vrot.slane %v2537, 5
      %v2540 = vrot.slane %v1913, 6
      %v2541 = vor.u32 %v2539, %v2540
      %v2542 = vsel %vm2347, %v2536, %v2541
      %v2543 = vrot.slane %v1918, 5
      %v2544 = vrot.slane %v1921, 6
      %v2545 = vor.u32 %v2543, %v2544
      %v2546 = vrot.slane %v2545, 4
      %v2547 = vrot.slane %v1931, 5
      %v2548 = vrot.slane %v1927, 6
      %v2549 = vor.u32 %v2547, %v2548
      %v2550 = vsel %vm2347, %v2546, %v2549
      %v2551 = vrot.slane %v2549, 4
      %v2552 = vshrl.u32 %v1563, 16
      %v2554 = vrot.slane %v2552, 5
      %v2555 = vrot.slane %v1937, 6
      %v2556 = vor.u32 %v2554, %v2555
      %v2557 = vsel %vm2347, %v2551, %v2556
      %v2558 = vrot.slane %v1942, 5
      %v2559 = vrot.slane %v1945, 6
      %v2560 = vor.u32 %v2558, %v2559
      %v2561 = vrot.slane %v2560, 4
      %v2562 = vrot.slane %v1955, 5
      %v2563 = vrot.slane %v1951, 6
      %v2564 = vor.u32 %v2562, %v2563
      %v2565 = vsel %vm2347, %v2561, %v2564
      %v2566 = vrot.slane %v2564, 4
      %v2567 = vshrl.u32 %v1566, 16
      %v2569 = vrot.slane %v2567, 5
      %v2570 = vrot.slane %v1961, 6
      %v2571 = vor.u32 %v2569, %v2570
      %v2572 = vsel %vm2347, %v2566, %v2571
      %v2573 = vrot.slane %v1966, 5
      %v2574 = vrot.slane %v1969, 6
      %v2575 = vor.u32 %v2573, %v2574
      %v2576 = vrot.slane %v2575, 4
      %v2577 = vrot.slane %v1979, 5
      %v2578 = vrot.slane %v1975, 6
      %v2579 = vor.u32 %v2577, %v2578
      %v2580 = vsel %vm2347, %v2576, %v2579
      %v2581 = vrot.slane %v2579, 4
      %v2582 = vshrl.u32 %v1569, 16
      %v2584 = vrot.slane %v2582, 5
      %v2585 = vrot.slane %v1985, 6
      %v2586 = vor.u32 %v2584, %v2585
      %v2587 = vsel %vm2347, %v2581, %v2586
      %2588 = vrot.lane.b32.xlu0 %v2355, 64
      %v2589 = vpop.permute.xlu0 %2588
      %2590 = vrot.lane.b32.xlu0 %v2362, 64
      %v2591 = vpop.permute.xlu0 %2590
      %2592 = vrot.lane.b32.xlu0 %v2370, 64
      %v2593 = vpop.permute.xlu0 %2592
      %2594 = vrot.lane.b32.xlu0 %v2377, 64
      %v2595 = vpop.permute.xlu0 %2594
      %2596 = vrot.lane.b32.xlu0 %v2385, 64
      %v2597 = vpop.permute.xlu0 %2596
      %2598 = vrot.lane.b32.xlu0 %v2392, 64
      %v2599 = vpop.permute.xlu0 %2598
      %2600 = vrot.lane.b32.xlu0 %v2400, 64
      %v2601 = vpop.permute.xlu0 %2600
      %2602 = vrot.lane.b32.xlu0 %v2407, 64
      %v2603 = vpop.permute.xlu0 %2602
      %2604 = vrot.lane.b32.xlu0 %v2415, 64
      %v2605 = vpop.permute.xlu0 %2604
      %2606 = vrot.lane.b32.xlu0 %v2422, 64
      %v2607 = vpop.permute.xlu0 %2606
      %2608 = vrot.lane.b32.xlu0 %v2430, 64
      %v2609 = vpop.permute.xlu0 %2608
      %2610 = vrot.lane.b32.xlu0 %v2437, 64
      %v2611 = vpop.permute.xlu0 %2610
      %2612 = vrot.lane.b32.xlu0 %v2445, 64
      %v2613 = vpop.permute.xlu0 %2612
      %2614 = vrot.lane.b32.xlu0 %v2452, 64
      %v2615 = vpop.permute.xlu0 %2614
      %2616 = vrot.lane.b32.xlu0 %v2460, 64
      %v2617 = vpop.permute.xlu0 %2616
      %2618 = vrot.lane.b32.xlu0 %v2467, 64
      %v2619 = vpop.permute.xlu0 %2618
      %2620 = vrot.lane.b32.xlu0 %v2475, 64
      %v2621 = vpop.permute.xlu0 %2620
      %2622 = vrot.lane.b32.xlu0 %v2482, 64
      %v2623 = vpop.permute.xlu0 %2622
      %2624 = vrot.lane.b32.xlu0 %v2490, 64
      %v2625 = vpop.permute.xlu0 %2624
      %2626 = vrot.lane.b32.xlu0 %v2497, 64
      %v2627 = vpop.permute.xlu0 %2626
      %2628 = vrot.lane.b32.xlu0 %v2505, 64
      %v2629 = vpop.permute.xlu0 %2628
      %2630 = vrot.lane.b32.xlu0 %v2512, 64
      %v2631 = vpop.permute.xlu0 %2630
      %2632 = vrot.lane.b32.xlu0 %v2520, 64
      %v2633 = vpop.permute.xlu0 %2632
      %2634 = vrot.lane.b32.xlu0 %v2527, 64
      %v2635 = vpop.permute.xlu0 %2634
      %2636 = vrot.lane.b32.xlu0 %v2535, 64
      %v2637 = vpop.permute.xlu0 %2636
      %2638 = vrot.lane.b32.xlu0 %v2542, 64
      %v2639 = vpop.permute.xlu0 %2638
      %2640 = vrot.lane.b32.xlu0 %v2550, 64
      %v2641 = vpop.permute.xlu0 %2640
      %2642 = vrot.lane.b32.xlu0 %v2557, 64
      %v2643 = vpop.permute.xlu0 %2642
      %2644 = vrot.lane.b32.xlu0 %v2565, 64
      %v2645 = vpop.permute.xlu0 %2644
      %2646 = vrot.lane.b32.xlu0 %v2572, 64
      %v2647 = vpop.permute.xlu0 %2646
      %2648 = vrot.lane.b32.xlu0 %v2580, 64
      %v2649 = vpop.permute.xlu0 %2648
      %2650 = vrot.lane.b32.xlu0 %v2587, 64
      %v2651 = vpop.permute.xlu0 %2650
      %2684 = vst.msk [vmem:[#allocation3 + $0x4] sm:$0xf] %vm2085, %v2589
      %2685 = vst.msk [vmem:[#allocation3 + $0x38] sm:$0xf] %vm2085, %v2591
      %2686 = vst.msk [vmem:[#allocation3 + $0x6c] sm:$0xf] %vm2085, %v2593
      %2687 = vst.msk [vmem:[#allocation3 + $0xa0] sm:$0xf] %vm2085, %v2595
      %2688 = vst.msk [vmem:[#allocation3 + $0xd4] sm:$0xf] %vm2085, %v2597
      %2689 = vst.msk [vmem:[#allocation3 + $0x108] sm:$0xf] %vm2085, %v2599
      %2690 = vst.msk [vmem:[#allocation3 + $0x13c] sm:$0xf] %vm2085, %v2601
      %2691 = vst.msk [vmem:[#allocation3 + $0x170] sm:$0xf] %vm2085, %v2603
      %2692 = vst.msk [vmem:[#allocation3 + $0x1a4] sm:$0xf] %vm2085, %v2605
      %2693 = vst.msk [vmem:[#allocation3 + $0x1d8] sm:$0xf] %vm2085, %v2607
      %2694 = vst.msk [vmem:[#allocation3 + $0x20c] sm:$0xf] %vm2085, %v2609
      %2695 = vst.msk [vmem:[#allocation3 + $0x240] sm:$0xf] %vm2085, %v2611
      %2696 = vst.msk [vmem:[#allocation3 + $0x274] sm:$0xf] %vm2085, %v2613
      %2697 = vst.msk [vmem:[#allocation3 + $0x2a8] sm:$0xf] %vm2085, %v2615
      %2698 = vst.msk [vmem:[#allocation3 + $0x2dc] sm:$0xf] %vm2085, %v2617
      %2699 = vst.msk [vmem:[#allocation3 + $0x310] sm:$0xf] %vm2085, %v2619
      %2700 = vst.msk [vmem:[#allocation3 + $0x344] sm:$0xf] %vm2085, %v2621
      %2701 = vst.msk [vmem:[#allocation3 + $0x378] sm:$0xf] %vm2085, %v2623
      %2702 = vst.msk [vmem:[#allocation3 + $0x3ac] sm:$0xf] %vm2085, %v2625
      %2703 = vst.msk [vmem:[#allocation3 + $0x3e0] sm:$0xf] %vm2085, %v2627
      %2704 = vst.msk [vmem:[#allocation3 + $0x414] sm:$0xf] %vm2085, %v2629
      %2705 = vst.msk [vmem:[#allocation3 + $0x448] sm:$0xf] %vm2085, %v2631
      %2706 = vst.msk [vmem:[#allocation3 + $0x47c] sm:$0xf] %vm2085, %v2633
      %2707 = vst.msk [vmem:[#allocation3 + $0x4b0] sm:$0xf] %vm2085, %v2635
      %2708 = vst.msk [vmem:[#allocation3 + $0x4e4] sm:$0xf] %vm2085, %v2637
      %2709 = vst.msk [vmem:[#allocation3 + $0x518] sm:$0xf] %vm2085, %v2639
      %2710 = vst.msk [vmem:[#allocation3 + $0x54c] sm:$0xf] %vm2085, %v2641
      %2711 = vst.msk [vmem:[#allocation3 + $0x580] sm:$0xf] %vm2085, %v2643
      %2712 = vst.msk [vmem:[#allocation3 + $0x5b4] sm:$0xf] %vm2085, %v2645
      %2713 = vst.msk [vmem:[#allocation3 + $0x5e8] sm:$0xf] %vm2085, %v2647
      %2714 = vst.msk [vmem:[#allocation3 + $0x61c] sm:$0xf] %vm2085, %v2649
      %2715 = vst.msk [vmem:[#allocation3 + $0x650] sm:$0xf] %vm2085, %v2651
      %vm2716 = vcmask 1041408
      %vm2717 = vcmask 1045508
      %vm2718 = vmor %vm2716, %vm2717
      %v2719 = vrot.slane %v1522, 6
      %v2720 = vrot.slane %v2719, 4
      %v2721 = vrot.slane %v1523, 6
      %v2722 = vsel %vm2718, %v2720, %v2721
      %v2723 = vrot.slane %v2721, 4
      %v2724 = vrot.slane %v1524, 6
      %v2725 = vsel %vm2718, %v2723, %v2724
      %v2726 = vrot.slane %v1525, 6
      %v2727 = vrot.slane %v2726, 4
      %v2728 = vrot.slane %v1526, 6
      %v2729 = vsel %vm2718, %v2727, %v2728
      %v2730 = vrot.slane %v2728, 4
      %v2731 = vrot.slane %v1527, 6
      %v2732 = vsel %vm2718, %v2730, %v2731
      %v2733 = vrot.slane %v1528, 6
      %v2734 = vrot.slane %v2733, 4
      %v2735 = vrot.slane %v1529, 6
      %v2736 = vsel %vm2718, %v2734, %v2735
      %v2737 = vrot.slane %v2735, 4
      %v2738 = vrot.slane %v1530, 6
      %v2739 = vsel %vm2718, %v2737, %v2738
      %v2740 = vrot.slane %v1531, 6
      %v2741 = vrot.slane %v2740, 4
      %v2742 = vrot.slane %v1532, 6
      %v2743 = vsel %vm2718, %v2741, %v2742
      %v2744 = vrot.slane %v2742, 4
      %v2745 = vrot.slane %v1533, 6
      %v2746 = vsel %vm2718, %v2744, %v2745
      %v2747 = vrot.slane %v1534, 6
      %v2748 = vrot.slane %v2747, 4
      %v2749 = vrot.slane %v1535, 6
      %v2750 = vsel %vm2718, %v2748, %v2749
      %v2751 = vrot.slane %v2749, 4
      %v2752 = vrot.slane %v1536, 6
      %v2753 = vsel %vm2718, %v2751, %v2752
      %v2754 = vrot.slane %v1537, 6
      %v2755 = vrot.slane %v2754, 4
      %v2756 = vrot.slane %v1538, 6
      %v2757 = vsel %vm2718, %v2755, %v2756
      %v2758 = vrot.slane %v2756, 4
      %v2759 = vrot.slane %v1539, 6
      %v2760 = vsel %vm2718, %v2758, %v2759
      %v2761 = vrot.slane %v1540, 6
      %v2762 = vrot.slane %v2761, 4
      %v2763 = vrot.slane %v1541, 6
      %v2764 = vsel %vm2718, %v2762, %v2763
      %v2765 = vrot.slane %v2763, 4
      %v2766 = vrot.slane %v1542, 6
      %v2767 = vsel %vm2718, %v2765, %v2766
      %v2768 = vrot.slane %v1543, 6
      %v2769 = vrot.slane %v2768, 4
      %v2770 = vrot.slane %v1544, 6
      %v2771 = vsel %vm2718, %v2769, %v2770
      %v2772 = vrot.slane %v2770, 4
      %v2773 = vrot.slane %v1545, 6
      %v2774 = vsel %vm2718, %v2772, %v2773
      %v2775 = vrot.slane %v1546, 6
      %v2776 = vrot.slane %v2775, 4
      %v2777 = vrot.slane %v1547, 6
      %v2778 = vsel %vm2718, %v2776, %v2777
      %v2779 = vrot.slane %v2777, 4
      %v2780 = vrot.slane %v1548, 6
      %v2781 = vsel %vm2718, %v2779, %v2780
      %v2782 = vrot.slane %v1549, 6
      %v2783 = vrot.slane %v2782, 4
      %v2784 = vrot.slane %v1550, 6
      %v2785 = vsel %vm2718, %v2783, %v2784
      %v2786 = vrot.slane %v2784, 4
      %v2787 = vrot.slane %v1551, 6
      %v2788 = vsel %vm2718, %v2786, %v2787
      %v2789 = vrot.slane %v1552, 6
      %v2790 = vrot.slane %v2789, 4
      %v2791 = vrot.slane %v1553, 6
      %v2792 = vsel %vm2718, %v2790, %v2791
      %v2793 = vrot.slane %v2791, 4
      %v2794 = vrot.slane %v1554, 6
      %v2795 = vsel %vm2718, %v2793, %v2794
      %v2796 = vrot.slane %v1555, 6
      %v2797 = vrot.slane %v2796, 4
      %v2798 = vrot.slane %v1556, 6
      %v2799 = vsel %vm2718, %v2797, %v2798
      %v2800 = vrot.slane %v2798, 4
      %v2801 = vrot.slane %v1557, 6
      %v2802 = vsel %vm2718, %v2800, %v2801
      %v2803 = vrot.slane %v1558, 6
      %v2804 = vrot.slane %v2803, 4
      %v2805 = vrot.slane %v1559, 6
      %v2806 = vsel %vm2718, %v2804, %v2805
      %v2807 = vrot.slane %v2805, 4
      %v2808 = vrot.slane %v1560, 6
      %v2809 = vsel %vm2718, %v2807, %v2808
      %v2810 = vrot.slane %v1561, 6
      %v2811 = vrot.slane %v2810, 4
      %v2812 = vrot.slane %v1562, 6
      %v2813 = vsel %vm2718, %v2811, %v2812
      %v2814 = vrot.slane %v2812, 4
      %v2815 = vrot.slane %v1563, 6
      %v2816 = vsel %vm2718, %v2814, %v2815
      %v2817 = vrot.slane %v1564, 6
      %v2818 = vrot.slane %v2817, 4
      %v2819 = vrot.slane %v1565, 6
      %v2820 = vsel %vm2718, %v2818, %v2819
      %v2821 = vrot.slane %v2819, 4
      %v2822 = vrot.slane %v1566, 6
      %v2823 = vsel %vm2718, %v2821, %v2822
      %v2824 = vrot.slane %v1567, 6
      %v2825 = vrot.slane %v2824, 4
      %v2826 = vrot.slane %v1568, 6
      %v2827 = vsel %vm2718, %v2825, %v2826
      %v2828 = vrot.slane %v2826, 4
      %v2829 = vrot.slane %v1569, 6
      %v2830 = vsel %vm2718, %v2828, %v2829
      %2863 = vst.msk [vmem:[#allocation3 + $0x8] sm:$0xf] %vm1261, %v2722
      %2864 = vst.msk [vmem:[#allocation3 + $0x3c] sm:$0xf] %vm1261, %v2725
      %2865 = vst.msk [vmem:[#allocation3 + $0x70] sm:$0xf] %vm1261, %v2729
      %2866 = vst.msk [vmem:[#allocation3 + $0xa4] sm:$0xf] %vm1261, %v2732
      %2867 = vst.msk [vmem:[#allocation3 + $0xd8] sm:$0xf] %vm1261, %v2736
      %2868 = vst.msk [vmem:[#allocation3 + $0x10c] sm:$0xf] %vm1261, %v2739
      %2869 = vst.msk [vmem:[#allocation3 + $0x140] sm:$0xf] %vm1261, %v2743
      %2870 = vst.msk [vmem:[#allocation3 + $0x174] sm:$0xf] %vm1261, %v2746
      %2871 = vst.msk [vmem:[#allocation3 + $0x1a8] sm:$0xf] %vm1261, %v2750
      %2872 = vst.msk [vmem:[#allocation3 + $0x1dc] sm:$0xf] %vm1261, %v2753
      %2873 = vst.msk [vmem:[#allocation3 + $0x210] sm:$0xf] %vm1261, %v2757
      %2874 = vst.msk [vmem:[#allocation3 + $0x244] sm:$0xf] %vm1261, %v2760
      %2875 = vst.msk [vmem:[#allocation3 + $0x278] sm:$0xf] %vm1261, %v2764
      %2876 = vst.msk [vmem:[#allocation3 + $0x2ac] sm:$0xf] %vm1261, %v2767
      %2877 = vst.msk [vmem:[#allocation3 + $0x2e0] sm:$0xf] %vm1261, %v2771
      %2878 = vst.msk [vmem:[#allocation3 + $0x314] sm:$0xf] %vm1261, %v2774
      %2879 = vst.msk [vmem:[#allocation3 + $0x348] sm:$0xf] %vm1261, %v2778
      %2880 = vst.msk [vmem:[#allocation3 + $0x37c] sm:$0xf] %vm1261, %v2781
      %2881 = vst.msk [vmem:[#allocation3 + $0x3b0] sm:$0xf] %vm1261, %v2785
      %2882 = vst.msk [vmem:[#allocation3 + $0x3e4] sm:$0xf] %vm1261, %v2788
      %2883 = vst.msk [vmem:[#allocation3 + $0x418] sm:$0xf] %vm1261, %v2792
      %2884 = vst.msk [vmem:[#allocation3 + $0x44c] sm:$0xf] %vm1261, %v2795
      %2885 = vst.msk [vmem:[#allocation3 + $0x480] sm:$0xf] %vm1261, %v2799
      %2886 = vst.msk [vmem:[#allocation3 + $0x4b4] sm:$0xf] %vm1261, %v2802
      %2887 = vst.msk [vmem:[#allocation3 + $0x4e8] sm:$0xf] %vm1261, %v2806
      %2888 = vst.msk [vmem:[#allocation3 + $0x51c] sm:$0xf] %vm1261, %v2809
      %2889 = vst.msk [vmem:[#allocation3 + $0x550] sm:$0xf] %vm1261, %v2813
      %2890 = vst.msk [vmem:[#allocation3 + $0x584] sm:$0xf] %vm1261, %v2816
      %2891 = vst.msk [vmem:[#allocation3 + $0x5b8] sm:$0xf] %vm1261, %v2820
      %2892 = vst.msk [vmem:[#allocation3 + $0x5ec] sm:$0xf] %vm1261, %v2823
      %2893 = vst.msk [vmem:[#allocation3 + $0x620] sm:$0xf] %vm1261, %v2827
      %2894 = vst.msk [vmem:[#allocation3 + $0x654] sm:$0xf] %vm1261, %v2830
      %s2895 = scalar_lea.vmem [#allocation2], 12
      %v2896 = vld [vmem:[%s2895] sm:$0xf]
      %v2897 = vld [vmem:[%s2895 + $0x4] sm:$0xf]
      %v2898 = vld [vmem:[%s2895 + $0x8] sm:$0x3]
      %v2899 = vld [vmem:[%s2895 + $0xc] sm:$0xf]
      %v2900 = vld [vmem:[%s2895 + $0x10] sm:$0xf]
      %v2901 = vld [vmem:[%s2895 + $0x14] sm:$0x3]
      %v2902 = vld [vmem:[%s2895 + $0x18] sm:$0xf]
      %v2903 = vld [vmem:[%s2895 + $0x1c] sm:$0xf]
      %v2904 = vld [vmem:[%s2895 + $0x20] sm:$0x3]
      %v2905 = vld [vmem:[%s2895 + $0x24] sm:$0xf]
      %v2906 = vld [vmem:[%s2895 + $0x28] sm:$0xf]
      %v2907 = vld [vmem:[%s2895 + $0x2c] sm:$0x3]
      %v2908 = vld [vmem:[%s2895 + $0x30] sm:$0xf]
      %v2909 = vld [vmem:[%s2895 + $0x34] sm:$0xf]
      %v2910 = vld [vmem:[%s2895 + $0x38] sm:$0x3]
      %v2911 = vld [vmem:[%s2895 + $0x3c] sm:$0xf]
      %v2912 = vld [vmem:[%s2895 + $0x40] sm:$0xf]
      %v2913 = vld [vmem:[%s2895 + $0x44] sm:$0x3]
      %v2914 = vld [vmem:[%s2895 + $0x48] sm:$0xf]
      %v2915 = vld [vmem:[%s2895 + $0x4c] sm:$0xf]
      %v2916 = vld [vmem:[%s2895 + $0x50] sm:$0x3]
      %v2917 = vld [vmem:[%s2895 + $0x54] sm:$0xf]
      %v2918 = vld [vmem:[%s2895 + $0x58] sm:$0xf]
      %v2919 = vld [vmem:[%s2895 + $0x5c] sm:$0x3]
      %v2920 = vld [vmem:[%s2895 + $0x60] sm:$0xf]
      %v2921 = vld [vmem:[%s2895 + $0x64] sm:$0xf]
      %v2922 = vld [vmem:[%s2895 + $0x68] sm:$0x3]
      %v2923 = vld [vmem:[%s2895 + $0x6c] sm:$0xf]
      %v2924 = vld [vmem:[%s2895 + $0x70] sm:$0xf]
      %v2925 = vld [vmem:[%s2895 + $0x74] sm:$0x3]
      %v2926 = vld [vmem:[%s2895 + $0x78] sm:$0xf]
      %v2927 = vld [vmem:[%s2895 + $0x7c] sm:$0xf]
      %v2928 = vld [vmem:[%s2895 + $0x80] sm:$0x3]
      %v2929 = vld [vmem:[%s2895 + $0x84] sm:$0xf]
      %v2930 = vld [vmem:[%s2895 + $0x88] sm:$0xf]
      %v2931 = vld [vmem:[%s2895 + $0x8c] sm:$0x3]
      %v2932 = vld [vmem:[%s2895 + $0x90] sm:$0xf]
      %v2933 = vld [vmem:[%s2895 + $0x94] sm:$0xf]
      %v2934 = vld [vmem:[%s2895 + $0x98] sm:$0x3]
      %v2935 = vld [vmem:[%s2895 + $0x9c] sm:$0xf]
      %v2936 = vld [vmem:[%s2895 + $0xa0] sm:$0xf]
      %v2937 = vld [vmem:[%s2895 + $0xa4] sm:$0x3]
      %v2938 = vld [vmem:[%s2895 + $0xa8] sm:$0xf]
      %v2939 = vld [vmem:[%s2895 + $0xac] sm:$0xf]
      %v2940 = vld [vmem:[%s2895 + $0xb0] sm:$0x3]
      %v2941 = vld [vmem:[%s2895 + $0xb4] sm:$0xf]
      %v2942 = vld [vmem:[%s2895 + $0xb8] sm:$0xf]
      %v2943 = vld [vmem:[%s2895 + $0xbc] sm:$0x3]
      %2976 = vrot.lane.b32.xlu0 %v2896, 64
      %v2977 = vpop.permute.xlu0 %2976
      %2978 = vrot.lane.b32.xlu0 %v2897, 64
      %v2979 = vpop.permute.xlu0 %2978
      %2980 = vrot.lane.b32.xlu0 %v2899, 64
      %v2981 = vpop.permute.xlu0 %2980
      %2982 = vrot.lane.b32.xlu0 %v2900, 64
      %v2983 = vpop.permute.xlu0 %2982
      %2984 = vrot.lane.b32.xlu0 %v2902, 64
      %v2985 = vpop.permute.xlu0 %2984
      %2986 = vrot.lane.b32.xlu0 %v2903, 64
      %v2987 = vpop.permute.xlu0 %2986
      %2988 = vrot.lane.b32.xlu0 %v2905, 64
      %v2989 = vpop.permute.xlu0 %2988
      %2990 = vrot.lane.b32.xlu0 %v2906, 64
      %v2991 = vpop.permute.xlu0 %2990
      %2992 = vrot.lane.b32.xlu0 %v2908, 64
      %v2993 = vpop.permute.xlu0 %2992
      %2994 = vrot.lane.b32.xlu0 %v2909, 64
      %v2995 = vpop.permute.xlu0 %2994
      %2996 = vrot.lane.b32.xlu0 %v2911, 64
      %v2997 = vpop.permute.xlu0 %2996
      %2998 = vrot.lane.b32.xlu0 %v2912, 64
      %v2999 = vpop.permute.xlu0 %2998
      %3000 = vrot.lane.b32.xlu0 %v2914, 64
      %v3001 = vpop.permute.xlu0 %3000
      %3002 = vrot.lane.b32.xlu0 %v2915, 64
      %v3003 = vpop.permute.xlu0 %3002
      %3004 = vrot.lane.b32.xlu0 %v2917, 64
      %v3005 = vpop.permute.xlu0 %3004
      %3006 = vrot.lane.b32.xlu0 %v2918, 64
      %v3007 = vpop.permute.xlu0 %3006
      %3008 = vrot.lane.b32.xlu0 %v2920, 64
      %v3009 = vpop.permute.xlu0 %3008
      %3010 = vrot.lane.b32.xlu0 %v2921, 64
      %v3011 = vpop.permute.xlu0 %3010
      %3012 = vrot.lane.b32.xlu0 %v2923, 64
      %v3013 = vpop.permute.xlu0 %3012
      %3014 = vrot.lane.b32.xlu0 %v2924, 64
      %v3015 = vpop.permute.xlu0 %3014
      %3016 = vrot.lane.b32.xlu0 %v2926, 64
      %v3017 = vpop.permute.xlu0 %3016
      %3018 = vrot.lane.b32.xlu0 %v2927, 64
      %v3019 = vpop.permute.xlu0 %3018
      %3020 = vrot.lane.b32.xlu0 %v2929, 64
      %v3021 = vpop.permute.xlu0 %3020
      %3022 = vrot.lane.b32.xlu0 %v2930, 64
      %v3023 = vpop.permute.xlu0 %3022
      %3024 = vrot.lane.b32.xlu0 %v2932, 64
      %v3025 = vpop.permute.xlu0 %3024
      %3026 = vrot.lane.b32.xlu0 %v2933, 64
      %v3027 = vpop.permute.xlu0 %3026
      %3028 = vrot.lane.b32.xlu0 %v2935, 64
      %v3029 = vpop.permute.xlu0 %3028
      %3030 = vrot.lane.b32.xlu0 %v2936, 64
      %v3031 = vpop.permute.xlu0 %3030
      %3032 = vrot.lane.b32.xlu0 %v2938, 64
      %v3033 = vpop.permute.xlu0 %3032
      %3034 = vrot.lane.b32.xlu0 %v2939, 64
      %v3035 = vpop.permute.xlu0 %3034
      %3036 = vrot.lane.b32.xlu0 %v2941, 64
      %v3037 = vpop.permute.xlu0 %3036
      %3038 = vrot.lane.b32.xlu0 %v2942, 64
      %v3039 = vpop.permute.xlu0 %3038
      %3072 = vst.msk [vmem:[#allocation3 + $0x8] sm:$0xf] %vm2085, %v2977
      %3073 = vst.msk [vmem:[#allocation3 + $0x3c] sm:$0xf] %vm2085, %v2979
      %3074 = vst.msk [vmem:[#allocation3 + $0x70] sm:$0xf] %vm2085, %v2981
      %3075 = vst.msk [vmem:[#allocation3 + $0xa4] sm:$0xf] %vm2085, %v2983
      %3076 = vst.msk [vmem:[#allocation3 + $0xd8] sm:$0xf] %vm2085, %v2985
      %3077 = vst.msk [vmem:[#allocation3 + $0x10c] sm:$0xf] %vm2085, %v2987
      %3078 = vst.msk [vmem:[#allocation3 + $0x140] sm:$0xf] %vm2085, %v2989
      %3079 = vst.msk [vmem:[#allocation3 + $0x174] sm:$0xf] %vm2085, %v2991
      %3080 = vst.msk [vmem:[#allocation3 + $0x1a8] sm:$0xf] %vm2085, %v2993
      %3081 = vst.msk [vmem:[#allocation3 + $0x1dc] sm:$0xf] %vm2085, %v2995
      %3082 = vst.msk [vmem:[#allocation3 + $0x210] sm:$0xf] %vm2085, %v2997
      %3083 = vst.msk [vmem:[#allocation3 + $0x244] sm:$0xf] %vm2085, %v2999
      %3084 = vst.msk [vmem:[#allocation3 + $0x278] sm:$0xf] %vm2085, %v3001
      %3085 = vst.msk [vmem:[#allocation3 + $0x2ac] sm:$0xf] %vm2085, %v3003
      %3086 = vst.msk [vmem:[#allocation3 + $0x2e0] sm:$0xf] %vm2085, %v3005
      %3087 = vst.msk [vmem:[#allocation3 + $0x314] sm:$0xf] %vm2085, %v3007
      %3088 = vst.msk [vmem:[#allocation3 + $0x348] sm:$0xf] %vm2085, %v3009
      %3089 = vst.msk [vmem:[#allocation3 + $0x37c] sm:$0xf] %vm2085, %v3011
      %3090 = vst.msk [vmem:[#allocation3 + $0x3b0] sm:$0xf] %vm2085, %v3013
      %3091 = vst.msk [vmem:[#allocation3 + $0x3e4] sm:$0xf] %vm2085, %v3015
      %3092 = vst.msk [vmem:[#allocation3 + $0x418] sm:$0xf] %vm2085, %v3017
      %3093 = vst.msk [vmem:[#allocation3 + $0x44c] sm:$0xf] %vm2085, %v3019
      %3094 = vst.msk [vmem:[#allocation3 + $0x480] sm:$0xf] %vm2085, %v3021
      %3095 = vst.msk [vmem:[#allocation3 + $0x4b4] sm:$0xf] %vm2085, %v3023
      %3096 = vst.msk [vmem:[#allocation3 + $0x4e8] sm:$0xf] %vm2085, %v3025
      %3097 = vst.msk [vmem:[#allocation3 + $0x51c] sm:$0xf] %vm2085, %v3027
      %3098 = vst.msk [vmem:[#allocation3 + $0x550] sm:$0xf] %vm2085, %v3029
      %3099 = vst.msk [vmem:[#allocation3 + $0x584] sm:$0xf] %vm2085, %v3031
      %3100 = vst.msk [vmem:[#allocation3 + $0x5b8] sm:$0xf] %vm2085, %v3033
      %3101 = vst.msk [vmem:[#allocation3 + $0x5ec] sm:$0xf] %vm2085, %v3035
      %3102 = vst.msk [vmem:[#allocation3 + $0x620] sm:$0xf] %vm2085, %v3037
      %3103 = vst.msk [vmem:[#allocation3 + $0x654] sm:$0xf] %vm2085, %v3039
      %v3105 = vshrl.u32 %v2896, 16
      %v3107 = vrot.slane %v3105, 4
      %v3108 = vshll.u32 %v2896, 16
      %v3110 = vrot.slane %v3108, 5
      %v3111 = vor.u32 %v3107, %v3110
      %v3112 = vrot.slane %v3111, 4
      %v3114 = vshll.u32 %v2897, 16
      %v3116 = vrot.slane %v3114, 5
      %v3117 = vsel %vm1604, %v3112, %v3116
      %v3118 = vshrl.u32 %v2897, 16
      %v3120 = vrot.slane %v3118, 4
      %v3121 = vor.u32 %v3120, %v3116
      %v3122 = vrot.slane %v3121, 4
      %v3124 = vshll.u32 %v2898, 16
      %v3126 = vrot.slane %v3124, 5
      %v3127 = vsel %vm1604, %v3122, %v3126
      %v3129 = vshrl.u32 %v2899, 16
      %v3131 = vrot.slane %v3129, 4
      %v3132 = vshll.u32 %v2899, 16
      %v3134 = vrot.slane %v3132, 5
      %v3135 = vor.u32 %v3131, %v3134
      %v3136 = vrot.slane %v3135, 4
      %v3138 = vshll.u32 %v2900, 16
      %v3140 = vrot.slane %v3138, 5
      %v3141 = vsel %vm1604, %v3136, %v3140
      %v3142 = vshrl.u32 %v2900, 16
      %v3144 = vrot.slane %v3142, 4
      %v3145 = vor.u32 %v3144, %v3140
      %v3146 = vrot.slane %v3145, 4
      %v3148 = vshll.u32 %v2901, 16
      %v3150 = vrot.slane %v3148, 5
      %v3151 = vsel %vm1604, %v3146, %v3150
      %v3153 = vshrl.u32 %v2902, 16
      %v3155 = vrot.slane %v3153, 4
      %v3156 = vshll.u32 %v2902, 16
      %v3158 = vrot.slane %v3156, 5
      %v3159 = vor.u32 %v3155, %v3158
      %v3160 = vrot.slane %v3159, 4
      %v3162 = vshll.u32 %v2903, 16
      %v3164 = vrot.slane %v3162, 5
      %v3165 = vsel %vm1604, %v3160, %v3164
      %v3166 = vshrl.u32 %v2903, 16
      %v3168 = vrot.slane %v3166, 4
      %v3169 = vor.u32 %v3168, %v3164
      %v3170 = vrot.slane %v3169, 4
      %v3172 = vshll.u32 %v2904, 16
      %v3174 = vrot.slane %v3172, 5
      %v3175 = vsel %vm1604, %v3170, %v3174
      %v3177 = vshrl.u32 %v2905, 16
      %v3179 = vrot.slane %v3177, 4
      %v3180 = vshll.u32 %v2905, 16
      %v3182 = vrot.slane %v3180, 5
      %v3183 = vor.u32 %v3179, %v3182
      %v3184 = vrot.slane %v3183, 4
      %v3186 = vshll.u32 %v2906, 16
      %v3188 = vrot.slane %v3186, 5
      %v3189 = vsel %vm1604, %v3184, %v3188
      %v3190 = vshrl.u32 %v2906, 16
      %v3192 = vrot.slane %v3190, 4
      %v3193 = vor.u32 %v3192, %v3188
      %v3194 = vrot.slane %v3193, 4
      %v3196 = vshll.u32 %v2907, 16
      %v3198 = vrot.slane %v3196, 5
      %v3199 = vsel %vm1604, %v3194, %v3198
      %v3201 = vshrl.u32 %v2908, 16
      %v3203 = vrot.slane %v3201, 4
      %v3204 = vshll.u32 %v2908, 16
      %v3206 = vrot.slane %v3204, 5
      %v3207 = vor.u32 %v3203, %v3206
      %v3208 = vrot.slane %v3207, 4
      %v3210 = vshll.u32 %v2909, 16
      %v3212 = vrot.slane %v3210, 5
      %v3213 = vsel %vm1604, %v3208, %v3212
      %v3214 = vshrl.u32 %v2909, 16
      %v3216 = vrot.slane %v3214, 4
      %v3217 = vor.u32 %v3216, %v3212
      %v3218 = vrot.slane %v3217, 4
      %v3220 = vshll.u32 %v2910, 16
      %v3222 = vrot.slane %v3220, 5
      %v3223 = vsel %vm1604, %v3218, %v3222
      %v3225 = vshrl.u32 %v2911, 16
      %v3227 = vrot.slane %v3225, 4
      %v3228 = vshll.u32 %v2911, 16
      %v3230 = vrot.slane %v3228, 5
      %v3231 = vor.u32 %v3227, %v3230
      %v3232 = vrot.slane %v3231, 4
      %v3234 = vshll.u32 %v2912, 16
      %v3236 = vrot.slane %v3234, 5
      %v3237 = vsel %vm1604, %v3232, %v3236
      %v3238 = vshrl.u32 %v2912, 16
      %v3240 = vrot.slane %v3238, 4
      %v3241 = vor.u32 %v3240, %v3236
      %v3242 = vrot.slane %v3241, 4
      %v3244 = vshll.u32 %v2913, 16
      %v3246 = vrot.slane %v3244, 5
      %v3247 = vsel %vm1604, %v3242, %v3246
      %v3249 = vshrl.u32 %v2914, 16
      %v3251 = vrot.slane %v3249, 4
      %v3252 = vshll.u32 %v2914, 16
      %v3254 = vrot.slane %v3252, 5
      %v3255 = vor.u32 %v3251, %v3254
      %v3256 = vrot.slane %v3255, 4
      %v3258 = vshll.u32 %v2915, 16
      %v3260 = vrot.slane %v3258, 5
      %v3261 = vsel %vm1604, %v3256, %v3260
      %v3262 = vshrl.u32 %v2915, 16
      %v3264 = vrot.slane %v3262, 4
      %v3265 = vor.u32 %v3264, %v3260
      %v3266 = vrot.slane %v3265, 4
      %v3268 = vshll.u32 %v2916, 16
      %v3270 = vrot.slane %v3268, 5
      %v3271 = vsel %vm1604, %v3266, %v3270
      %v3273 = vshrl.u32 %v2917, 16
      %v3275 = vrot.slane %v3273, 4
      %v3276 = vshll.u32 %v2917, 16
      %v3278 = vrot.slane %v3276, 5
      %v3279 = vor.u32 %v3275, %v3278
      %v3280 = vrot.slane %v3279, 4
      %v3282 = vshll.u32 %v2918, 16
      %v3284 = vrot.slane %v3282, 5
      %v3285 = vsel %vm1604, %v3280, %v3284
      %v3286 = vshrl.u32 %v2918, 16
      %v3288 = vrot.slane %v3286, 4
      %v3289 = vor.u32 %v3288, %v3284
      %v3290 = vrot.slane %v3289, 4
      %v3292 = vshll.u32 %v2919, 16
      %v3294 = vrot.slane %v3292, 5
      %v3295 = vsel %vm1604, %v3290, %v3294
      %v3297 = vshrl.u32 %v2920, 16
      %v3299 = vrot.slane %v3297, 4
      %v3300 = vshll.u32 %v2920, 16
      %v3302 = vrot.slane %v3300, 5
      %v3303 = vor.u32 %v3299, %v3302
      %v3304 = vrot.slane %v3303, 4
      %v3306 = vshll.u32 %v2921, 16
      %v3308 = vrot.slane %v3306, 5
      %v3309 = vsel %vm1604, %v3304, %v3308
      %v3310 = vshrl.u32 %v2921, 16
      %v3312 = vrot.slane %v3310, 4
      %v3313 = vor.u32 %v3312, %v3308
      %v3314 = vrot.slane %v3313, 4
      %v3316 = vshll.u32 %v2922, 16
      %v3318 = vrot.slane %v3316, 5
      %v3319 = vsel %vm1604, %v3314, %v3318
      %v3321 = vshrl.u32 %v2923, 16
      %v3323 = vrot.slane %v3321, 4
      %v3324 = vshll.u32 %v2923, 16
      %v3326 = vrot.slane %v3324, 5
      %v3327 = vor.u32 %v3323, %v3326
      %v3328 = vrot.slane %v3327, 4
      %v3330 = vshll.u32 %v2924, 16
      %v3332 = vrot.slane %v3330, 5
      %v3333 = vsel %vm1604, %v3328, %v3332
      %v3334 = vshrl.u32 %v2924, 16
      %v3336 = vrot.slane %v3334, 4
      %v3337 = vor.u32 %v3336, %v3332
      %v3338 = vrot.slane %v3337, 4
      %v3340 = vshll.u32 %v2925, 16
      %v3342 = vrot.slane %v3340, 5
      %v3343 = vsel %vm1604, %v3338, %v3342
      %v3345 = vshrl.u32 %v2926, 16
      %v3347 = vrot.slane %v3345, 4
      %v3348 = vshll.u32 %v2926, 16
      %v3350 = vrot.slane %v3348, 5
      %v3351 = vor.u32 %v3347, %v3350
      %v3352 = vrot.slane %v3351, 4
      %v3354 = vshll.u32 %v2927, 16
      %v3356 = vrot.slane %v3354, 5
      %v3357 = vsel %vm1604, %v3352, %v3356
      %v3358 = vshrl.u32 %v2927, 16
      %v3360 = vrot.slane %v3358, 4
      %v3361 = vor.u32 %v3360, %v3356
      %v3362 = vrot.slane %v3361, 4
      %v3364 = vshll.u32 %v2928, 16
      %v3366 = vrot.slane %v3364, 5
      %v3367 = vsel %vm1604, %v3362, %v3366
      %v3369 = vshrl.u32 %v2929, 16
      %v3371 = vrot.slane %v3369, 4
      %v3372 = vshll.u32 %v2929, 16
      %v3374 = vrot.slane %v3372, 5
      %v3375 = vor.u32 %v3371, %v3374
      %v3376 = vrot.slane %v3375, 4
      %v3378 = vshll.u32 %v2930, 16
      %v3380 = vrot.slane %v3378, 5
      %v3381 = vsel %vm1604, %v3376, %v3380
      %v3382 = vshrl.u32 %v2930, 16
      %v3384 = vrot.slane %v3382, 4
      %v3385 = vor.u32 %v3384, %v3380
      %v3386 = vrot.slane %v3385, 4
      %v3388 = vshll.u32 %v2931, 16
      %v3390 = vrot.slane %v3388, 5
      %v3391 = vsel %vm1604, %v3386, %v3390
      %v3393 = vshrl.u32 %v2932, 16
      %v3395 = vrot.slane %v3393, 4
      %v3396 = vshll.u32 %v2932, 16
      %v3398 = vrot.slane %v3396, 5
      %v3399 = vor.u32 %v3395, %v3398
      %v3400 = vrot.slane %v3399, 4
      %v3402 = vshll.u32 %v2933, 16
      %v3404 = vrot.slane %v3402, 5
      %v3405 = vsel %vm1604, %v3400, %v3404
      %v3406 = vshrl.u32 %v2933, 16
      %v3408 = vrot.slane %v3406, 4
      %v3409 = vor.u32 %v3408, %v3404
      %v3410 = vrot.slane %v3409, 4
      %v3412 = vshll.u32 %v2934, 16
      %v3414 = vrot.slane %v3412, 5
      %v3415 = vsel %vm1604, %v3410, %v3414
      %v3417 = vshrl.u32 %v2935, 16
      %v3419 = vrot.slane %v3417, 4
      %v3420 = vshll.u32 %v2935, 16
      %v3422 = vrot.slane %v3420, 5
      %v3423 = vor.u32 %v3419, %v3422
      %v3424 = vrot.slane %v3423, 4
      %v3426 = vshll.u32 %v2936, 16
      %v3428 = vrot.slane %v3426, 5
      %v3429 = vsel %vm1604, %v3424, %v3428
      %v3430 = vshrl.u32 %v2936, 16
      %v3432 = vrot.slane %v3430, 4
      %v3433 = vor.u32 %v3432, %v3428
      %v3434 = vrot.slane %v3433, 4
      %v3436 = vshll.u32 %v2937, 16
      %v3438 = vrot.slane %v3436, 5
      %v3439 = vsel %vm1604, %v3434, %v3438
      %v3441 = vshrl.u32 %v2938, 16
      %v3443 = vrot.slane %v3441, 4
      %v3444 = vshll.u32 %v2938, 16
      %v3446 = vrot.slane %v3444, 5
      %v3447 = vor.u32 %v3443, %v3446
      %v3448 = vrot.slane %v3447, 4
      %v3450 = vshll.u32 %v2939, 16
      %v3452 = vrot.slane %v3450, 5
      %v3453 = vsel %vm1604, %v3448, %v3452
      %v3454 = vshrl.u32 %v2939, 16
      %v3456 = vrot.slane %v3454, 4
      %v3457 = vor.u32 %v3456, %v3452
      %v3458 = vrot.slane %v3457, 4
      %v3460 = vshll.u32 %v2940, 16
      %v3462 = vrot.slane %v3460, 5
      %v3463 = vsel %vm1604, %v3458, %v3462
      %v3465 = vshrl.u32 %v2941, 16
      %v3467 = vrot.slane %v3465, 4
      %v3468 = vshll.u32 %v2941, 16
      %v3470 = vrot.slane %v3468, 5
      %v3471 = vor.u32 %v3467, %v3470
      %v3472 = vrot.slane %v3471, 4
      %v3474 = vshll.u32 %v2942, 16
      %v3476 = vrot.slane %v3474, 5
      %v3477 = vsel %vm1604, %v3472, %v3476
      %v3478 = vshrl.u32 %v2942, 16
      %v3480 = vrot.slane %v3478, 4
      %v3481 = vor.u32 %v3480, %v3476
      %v3482 = vrot.slane %v3481, 4
      %v3484 = vshll.u32 %v2943, 16
      %v3486 = vrot.slane %v3484, 5
      %v3487 = vsel %vm1604, %v3482, %v3486
      %3520 = vst.msk [vmem:[#allocation3 + $0xc] sm:$0xf] %vm1261, %v3117
      %3521 = vst.msk [vmem:[#allocation3 + $0x40] sm:$0xf] %vm1261, %v3127
      %3522 = vst.msk [vmem:[#allocation3 + $0x74] sm:$0xf] %vm1261, %v3141
      %3523 = vst.msk [vmem:[#allocation3 + $0xa8] sm:$0xf] %vm1261, %v3151
      %3524 = vst.msk [vmem:[#allocation3 + $0xdc] sm:$0xf] %vm1261, %v3165
      %3525 = vst.msk [vmem:[#allocation3 + $0x110] sm:$0xf] %vm1261, %v3175
      %3526 = vst.msk [vmem:[#allocation3 + $0x144] sm:$0xf] %vm1261, %v3189
      %3527 = vst.msk [vmem:[#allocation3 + $0x178] sm:$0xf] %vm1261, %v3199
      %3528 = vst.msk [vmem:[#allocation3 + $0x1ac] sm:$0xf] %vm1261, %v3213
      %3529 = vst.msk [vmem:[#allocation3 + $0x1e0] sm:$0xf] %vm1261, %v3223
      %3530 = vst.msk [vmem:[#allocation3 + $0x214] sm:$0xf] %vm1261, %v3237
      %3531 = vst.msk [vmem:[#allocation3 + $0x248] sm:$0xf] %vm1261, %v3247
      %3532 = vst.msk [vmem:[#allocation3 + $0x27c] sm:$0xf] %vm1261, %v3261
      %3533 = vst.msk [vmem:[#allocation3 + $0x2b0] sm:$0xf] %vm1261, %v3271
      %3534 = vst.msk [vmem:[#allocation3 + $0x2e4] sm:$0xf] %vm1261, %v3285
      %3535 = vst.msk [vmem:[#allocation3 + $0x318] sm:$0xf] %vm1261, %v3295
      %3536 = vst.msk [vmem:[#allocation3 + $0x34c] sm:$0xf] %vm1261, %v3309
      %3537 = vst.msk [vmem:[#allocation3 + $0x380] sm:$0xf] %vm1261, %v3319
      %3538 = vst.msk [vmem:[#allocation3 + $0x3b4] sm:$0xf] %vm1261, %v3333
      %3539 = vst.msk [vmem:[#allocation3 + $0x3e8] sm:$0xf] %vm1261, %v3343
      %3540 = vst.msk [vmem:[#allocation3 + $0x41c] sm:$0xf] %vm1261, %v3357
      %3541 = vst.msk [vmem:[#allocation3 + $0x450] sm:$0xf] %vm1261, %v3367
      %3542 = vst.msk [vmem:[#allocation3 + $0x484] sm:$0xf] %vm1261, %v3381
      %3543 = vst.msk [vmem:[#allocation3 + $0x4b8] sm:$0xf] %vm1261, %v3391
      %3544 = vst.msk [vmem:[#allocation3 + $0x4ec] sm:$0xf] %vm1261, %v3405
      %3545 = vst.msk [vmem:[#allocation3 + $0x520] sm:$0xf] %vm1261, %v3415
      %3546 = vst.msk [vmem:[#allocation3 + $0x554] sm:$0xf] %vm1261, %v3429
      %3547 = vst.msk [vmem:[#allocation3 + $0x588] sm:$0xf] %vm1261, %v3439
      %3548 = vst.msk [vmem:[#allocation3 + $0x5bc] sm:$0xf] %vm1261, %v3453
      %3549 = vst.msk [vmem:[#allocation3 + $0x5f0] sm:$0xf] %vm1261, %v3463
      %3550 = vst.msk [vmem:[#allocation3 + $0x624] sm:$0xf] %vm1261, %v3477
      %3551 = vst.msk [vmem:[#allocation3 + $0x658] sm:$0xf] %vm1261, %v3487
      %v3568 = vrot.slane %v2896, 5
      %v3569 = vrot.slane %v3568, 4
      %v3570 = vrot.slane %v2897, 5
      %v3571 = vsel %vm2168, %v3569, %v3570
      %v3572 = vrot.slane %v3570, 4
      %v3573 = vrot.slane %v2898, 5
      %v3574 = vsel %vm2168, %v3572, %v3573
      %v3575 = vrot.slane %v2899, 5
      %v3576 = vrot.slane %v3575, 4
      %v3577 = vrot.slane %v2900, 5
      %v3578 = vsel %vm2168, %v3576, %v3577
      %v3579 = vrot.slane %v3577, 4
      %v3580 = vrot.slane %v2901, 5
      %v3581 = vsel %vm2168, %v3579, %v3580
      %v3582 = vrot.slane %v2902, 5
      %v3583 = vrot.slane %v3582, 4
      %v3584 = vrot.slane %v2903, 5
      %v3585 = vsel %vm2168, %v3583, %v3584
      %v3586 = vrot.slane %v3584, 4
      %v3587 = vrot.slane %v2904, 5
      %v3588 = vsel %vm2168, %v3586, %v3587
      %v3589 = vrot.slane %v2905, 5
      %v3590 = vrot.slane %v3589, 4
      %v3591 = vrot.slane %v2906, 5
      %v3592 = vsel %vm2168, %v3590, %v3591
      %v3593 = vrot.slane %v3591, 4
      %v3594 = vrot.slane %v2907, 5
      %v3595 = vsel %vm2168, %v3593, %v3594
      %v3596 = vrot.slane %v2908, 5
      %v3597 = vrot.slane %v3596, 4
      %v3598 = vrot.slane %v2909, 5
      %v3599 = vsel %vm2168, %v3597, %v3598
      %v3600 = vrot.slane %v3598, 4
      %v3601 = vrot.slane %v2910, 5
      %v3602 = vsel %vm2168, %v3600, %v3601
      %v3603 = vrot.slane %v2911, 5
      %v3604 = vrot.slane %v3603, 4
      %v3605 = vrot.slane %v2912, 5
      %v3606 = vsel %vm2168, %v3604, %v3605
      %v3607 = vrot.slane %v3605, 4
      %v3608 = vrot.slane %v2913, 5
      %v3609 = vsel %vm2168, %v3607, %v3608
      %v3610 = vrot.slane %v2914, 5
      %v3611 = vrot.slane %v3610, 4
      %v3612 = vrot.slane %v2915, 5
      %v3613 = vsel %vm2168, %v3611, %v3612
      %v3614 = vrot.slane %v3612, 4
      %v3615 = vrot.slane %v2916, 5
      %v3616 = vsel %vm2168, %v3614, %v3615
      %v3617 = vrot.slane %v2917, 5
      %v3618 = vrot.slane %v3617, 4
      %v3619 = vrot.slane %v2918, 5
      %v3620 = vsel %vm2168, %v3618, %v3619
      %v3621 = vrot.slane %v3619, 4
      %v3622 = vrot.slane %v2919, 5
      %v3623 = vsel %vm2168, %v3621, %v3622
      %v3624 = vrot.slane %v2920, 5
      %v3625 = vrot.slane %v3624, 4
      %v3626 = vrot.slane %v2921, 5
      %v3627 = vsel %vm2168, %v3625, %v3626
      %v3628 = vrot.slane %v3626, 4
      %v3629 = vrot.slane %v2922, 5
      %v3630 = vsel %vm2168, %v3628, %v3629
      %v3631 = vrot.slane %v2923, 5
      %v3632 = vrot.slane %v3631, 4
      %v3633 = vrot.slane %v2924, 5
      %v3634 = vsel %vm2168, %v3632, %v3633
      %v3635 = vrot.slane %v3633, 4
      %v3636 = vrot.slane %v2925, 5
      %v3637 = vsel %vm2168, %v3635, %v3636
      %v3638 = vrot.slane %v2926, 5
      %v3639 = vrot.slane %v3638, 4
      %v3640 = vrot.slane %v2927, 5
      %v3641 = vsel %vm2168, %v3639, %v3640
      %v3642 = vrot.slane %v3640, 4
      %v3643 = vrot.slane %v2928, 5
      %v3644 = vsel %vm2168, %v3642, %v3643
      %v3645 = vrot.slane %v2929, 5
      %v3646 = vrot.slane %v3645, 4
      %v3647 = vrot.slane %v2930, 5
      %v3648 = vsel %vm2168, %v3646, %v3647
      %v3649 = vrot.slane %v3647, 4
      %v3650 = vrot.slane %v2931, 5
      %v3651 = vsel %vm2168, %v3649, %v3650
      %v3652 = vrot.slane %v2932, 5
      %v3653 = vrot.slane %v3652, 4
      %v3654 = vrot.slane %v2933, 5
      %v3655 = vsel %vm2168, %v3653, %v3654
      %v3656 = vrot.slane %v3654, 4
      %v3657 = vrot.slane %v2934, 5
      %v3658 = vsel %vm2168, %v3656, %v3657
      %v3659 = vrot.slane %v2935, 5
      %v3660 = vrot.slane %v3659, 4
      %v3661 = vrot.slane %v2936, 5
      %v3662 = vsel %vm2168, %v3660, %v3661
      %v3663 = vrot.slane %v3661, 4
      %v3664 = vrot.slane %v2937, 5
      %v3665 = vsel %vm2168, %v3663, %v3664
      %v3666 = vrot.slane %v2938, 5
      %v3667 = vrot.slane %v3666, 4
      %v3668 = vrot.slane %v2939, 5
      %v3669 = vsel %vm2168, %v3667, %v3668
      %v3670 = vrot.slane %v3668, 4
      %v3671 = vrot.slane %v2940, 5
      %v3672 = vsel %vm2168, %v3670, %v3671
      %v3673 = vrot.slane %v2941, 5
      %v3674 = vrot.slane %v3673, 4
      %v3675 = vrot.slane %v2942, 5
      %v3676 = vsel %vm2168, %v3674, %v3675
      %v3677 = vrot.slane %v3675, 4
      %v3678 = vrot.slane %v2943, 5
      %v3679 = vsel %vm2168, %v3677, %v3678
      %3680 = vrot.lane.b32.xlu0 %v3571, 64
      %v3681 = vpop.permute.xlu0 %3680
      %3682 = vrot.lane.b32.xlu0 %v3574, 64
      %v3683 = vpop.permute.xlu0 %3682
      %3684 = vrot.lane.b32.xlu0 %v3578, 64
      %v3685 = vpop.permute.xlu0 %3684
      %3686 = vrot.lane.b32.xlu0 %v3581, 64
      %v3687 = vpop.permute.xlu0 %3686
      %3688 = vrot.lane.b32.xlu0 %v3585, 64
      %v3689 = vpop.permute.xlu0 %3688
      %3690 = vrot.lane.b32.xlu0 %v3588, 64
      %v3691 = vpop.permute.xlu0 %3690
      %3692 = vrot.lane.b32.xlu0 %v3592, 64
      %v3693 = vpop.permute.xlu0 %3692
      %3694 = vrot.lane.b32.xlu0 %v3595, 64
      %v3695 = vpop.permute.xlu0 %3694
      %3696 = vrot.lane.b32.xlu0 %v3599, 64
      %v3697 = vpop.permute.xlu0 %3696
      %3698 = vrot.lane.b32.xlu0 %v3602, 64
      %v3699 = vpop.permute.xlu0 %3698
      %3700 = vrot.lane.b32.xlu0 %v3606, 64
      %v3701 = vpop.permute.xlu0 %3700
      %3702 = vrot.lane.b32.xlu0 %v3609, 64
      %v3703 = vpop.permute.xlu0 %3702
      %3704 = vrot.lane.b32.xlu0 %v3613, 64
      %v3705 = vpop.permute.xlu0 %3704
      %3706 = vrot.lane.b32.xlu0 %v3616, 64
      %v3707 = vpop.permute.xlu0 %3706
      %3708 = vrot.lane.b32.xlu0 %v3620, 64
      %v3709 = vpop.permute.xlu0 %3708
      %3710 = vrot.lane.b32.xlu0 %v3623, 64
      %v3711 = vpop.permute.xlu0 %3710
      %3712 = vrot.lane.b32.xlu0 %v3627, 64
      %v3713 = vpop.permute.xlu0 %3712
      %3714 = vrot.lane.b32.xlu0 %v3630, 64
      %v3715 = vpop.permute.xlu0 %3714
      %3716 = vrot.lane.b32.xlu0 %v3634, 64
      %v3717 = vpop.permute.xlu0 %3716
      %3718 = vrot.lane.b32.xlu0 %v3637, 64
      %v3719 = vpop.permute.xlu0 %3718
      %3720 = vrot.lane.b32.xlu0 %v3641, 64
      %v3721 = vpop.permute.xlu0 %3720
      %3722 = vrot.lane.b32.xlu0 %v3644, 64
      %v3723 = vpop.permute.xlu0 %3722
      %3724 = vrot.lane.b32.xlu0 %v3648, 64
      %v3725 = vpop.permute.xlu0 %3724
      %3726 = vrot.lane.b32.xlu0 %v3651, 64
      %v3727 = vpop.permute.xlu0 %3726
      %3728 = vrot.lane.b32.xlu0 %v3655, 64
      %v3729 = vpop.permute.xlu0 %3728
      %3730 = vrot.lane.b32.xlu0 %v3658, 64
      %v3731 = vpop.permute.xlu0 %3730
      %3732 = vrot.lane.b32.xlu0 %v3662, 64
      %v3733 = vpop.permute.xlu0 %3732
      %3734 = vrot.lane.b32.xlu0 %v3665, 64
      %v3735 = vpop.permute.xlu0 %3734
      %3736 = vrot.lane.b32.xlu0 %v3669, 64
      %v3737 = vpop.permute.xlu0 %3736
      %3738 = vrot.lane.b32.xlu0 %v3672, 64
      %v3739 = vpop.permute.xlu0 %3738
      %3740 = vrot.lane.b32.xlu0 %v3676, 64
      %v3741 = vpop.permute.xlu0 %3740
      %3742 = vrot.lane.b32.xlu0 %v3679, 64
      %v3743 = vpop.permute.xlu0 %3742
      %3776 = vst.msk [vmem:[#allocation3 + $0xc] sm:$0xf] %vm2085, %v3681
      %3777 = vst.msk [vmem:[#allocation3 + $0x40] sm:$0xf] %vm2085, %v3683
      %3778 = vst.msk [vmem:[#allocation3 + $0x74] sm:$0xf] %vm2085, %v3685
      %3779 = vst.msk [vmem:[#allocation3 + $0xa8] sm:$0xf] %vm2085, %v3687
      %3780 = vst.msk [vmem:[#allocation3 + $0xdc] sm:$0xf] %vm2085, %v3689
      %3781 = vst.msk [vmem:[#allocation3 + $0x110] sm:$0xf] %vm2085, %v3691
      %3782 = vst.msk [vmem:[#allocation3 + $0x144] sm:$0xf] %vm2085, %v3693
      %3783 = vst.msk [vmem:[#allocation3 + $0x178] sm:$0xf] %vm2085, %v3695
      %3784 = vst.msk [vmem:[#allocation3 + $0x1ac] sm:$0xf] %vm2085, %v3697
      %3785 = vst.msk [vmem:[#allocation3 + $0x1e0] sm:$0xf] %vm2085, %v3699
      %3786 = vst.msk [vmem:[#allocation3 + $0x214] sm:$0xf] %vm2085, %v3701
      %3787 = vst.msk [vmem:[#allocation3 + $0x248] sm:$0xf] %vm2085, %v3703
      %3788 = vst.msk [vmem:[#allocation3 + $0x27c] sm:$0xf] %vm2085, %v3705
      %3789 = vst.msk [vmem:[#allocation3 + $0x2b0] sm:$0xf] %vm2085, %v3707
      %3790 = vst.msk [vmem:[#allocation3 + $0x2e4] sm:$0xf] %vm2085, %v3709
      %3791 = vst.msk [vmem:[#allocation3 + $0x318] sm:$0xf] %vm2085, %v3711
      %3792 = vst.msk [vmem:[#allocation3 + $0x34c] sm:$0xf] %vm2085, %v3713
      %3793 = vst.msk [vmem:[#allocation3 + $0x380] sm:$0xf] %vm2085, %v3715
      %3794 = vst.msk [vmem:[#allocation3 + $0x3b4] sm:$0xf] %vm2085, %v3717
      %3795 = vst.msk [vmem:[#allocation3 + $0x3e8] sm:$0xf] %vm2085, %v3719
      %3796 = vst.msk [vmem:[#allocation3 + $0x41c] sm:$0xf] %vm2085, %v3721
      %3797 = vst.msk [vmem:[#allocation3 + $0x450] sm:$0xf] %vm2085, %v3723
      %3798 = vst.msk [vmem:[#allocation3 + $0x484] sm:$0xf] %vm2085, %v3725
      %3799 = vst.msk [vmem:[#allocation3 + $0x4b8] sm:$0xf] %vm2085, %v3727
      %3800 = vst.msk [vmem:[#allocation3 + $0x4ec] sm:$0xf] %vm2085, %v3729
      %3801 = vst.msk [vmem:[#allocation3 + $0x520] sm:$0xf] %vm2085, %v3731
      %3802 = vst.msk [vmem:[#allocation3 + $0x554] sm:$0xf] %vm2085, %v3733
      %3803 = vst.msk [vmem:[#allocation3 + $0x588] sm:$0xf] %vm2085, %v3735
      %3804 = vst.msk [vmem:[#allocation3 + $0x5bc] sm:$0xf] %vm2085, %v3737
      %3805 = vst.msk [vmem:[#allocation3 + $0x5f0] sm:$0xf] %vm2085, %v3739
      %3806 = vst.msk [vmem:[#allocation3 + $0x624] sm:$0xf] %vm2085, %v3741
      %3807 = vst.msk [vmem:[#allocation3 + $0x658] sm:$0xf] %vm2085, %v3743
      %v3808 = vrot.slane %v3105, 5
      %v3809 = vrot.slane %v3108, 6
      %v3810 = vor.u32 %v3808, %v3809
      %v3811 = vrot.slane %v3810, 4
      %v3812 = vrot.slane %v3118, 5
      %v3813 = vrot.slane %v3114, 6
      %v3814 = vor.u32 %v3812, %v3813
      %v3815 = vsel %vm2347, %v3811, %v3814
      %v3816 = vrot.slane %v3814, 4
      %v3817 = vshrl.u32 %v2898, 16
      %v3819 = vrot.slane %v3817, 5
      %v3820 = vrot.slane %v3124, 6
      %v3821 = vor.u32 %v3819, %v3820
      %v3822 = vsel %vm2347, %v3816, %v3821
      %v3823 = vrot.slane %v3129, 5
      %v3824 = vrot.slane %v3132, 6
      %v3825 = vor.u32 %v3823, %v3824
      %v3826 = vrot.slane %v3825, 4
      %v3827 = vrot.slane %v3142, 5
      %v3828 = vrot.slane %v3138, 6
      %v3829 = vor.u32 %v3827, %v3828
      %v3830 = vsel %vm2347, %v3826, %v3829
      %v3831 = vrot.slane %v3829, 4
      %v3832 = vshrl.u32 %v2901, 16
      %v3834 = vrot.slane %v3832, 5
      %v3835 = vrot.slane %v3148, 6
      %v3836 = vor.u32 %v3834, %v3835
      %v3837 = vsel %vm2347, %v3831, %v3836
      %v3838 = vrot.slane %v3153, 5
      %v3839 = vrot.slane %v3156, 6
      %v3840 = vor.u32 %v3838, %v3839
      %v3841 = vrot.slane %v3840, 4
      %v3842 = vrot.slane %v3166, 5
      %v3843 = vrot.slane %v3162, 6
      %v3844 = vor.u32 %v3842, %v3843
      %v3845 = vsel %vm2347, %v3841, %v3844
      %v3846 = vrot.slane %v3844, 4
      %v3847 = vshrl.u32 %v2904, 16
      %v3849 = vrot.slane %v3847, 5
      %v3850 = vrot.slane %v3172, 6
      %v3851 = vor.u32 %v3849, %v3850
      %v3852 = vsel %vm2347, %v3846, %v3851
      %v3853 = vrot.slane %v3177, 5
      %v3854 = vrot.slane %v3180, 6
      %v3855 = vor.u32 %v3853, %v3854
      %v3856 = vrot.slane %v3855, 4
      %v3857 = vrot.slane %v3190, 5
      %v3858 = vrot.slane %v3186, 6
      %v3859 = vor.u32 %v3857, %v3858
      %v3860 = vsel %vm2347, %v3856, %v3859
      %v3861 = vrot.slane %v3859, 4
      %v3862 = vshrl.u32 %v2907, 16
      %v3864 = vrot.slane %v3862, 5
      %v3865 = vrot.slane %v3196, 6
      %v3866 = vor.u32 %v3864, %v3865
      %v3867 = vsel %vm2347, %v3861, %v3866
      %v3868 = vrot.slane %v3201, 5
      %v3869 = vrot.slane %v3204, 6
      %v3870 = vor.u32 %v3868, %v3869
      %v3871 = vrot.slane %v3870, 4
      %v3872 = vrot.slane %v3214, 5
      %v3873 = vrot.slane %v3210, 6
      %v3874 = vor.u32 %v3872, %v3873
      %v3875 = vsel %vm2347, %v3871, %v3874
      %v3876 = vrot.slane %v3874, 4
      %v3877 = vshrl.u32 %v2910, 16
      %v3879 = vrot.slane %v3877, 5
      %v3880 = vrot.slane %v3220, 6
      %v3881 = vor.u32 %v3879, %v3880
      %v3882 = vsel %vm2347, %v3876, %v3881
      %v3883 = vrot.slane %v3225, 5
      %v3884 = vrot.slane %v3228, 6
      %v3885 = vor.u32 %v3883, %v3884
      %v3886 = vrot.slane %v3885, 4
      %v3887 = vrot.slane %v3238, 5
      %v3888 = vrot.slane %v3234, 6
      %v3889 = vor.u32 %v3887, %v3888
      %v3890 = vsel %vm2347, %v3886, %v3889
      %v3891 = vrot.slane %v3889, 4
      %v3892 = vshrl.u32 %v2913, 16
      %v3894 = vrot.slane %v3892, 5
      %v3895 = vrot.slane %v3244, 6
      %v3896 = vor.u32 %v3894, %v3895
      %v3897 = vsel %vm2347, %v3891, %v3896
      %v3898 = vrot.slane %v3249, 5
      %v3899 = vrot.slane %v3252, 6
      %v3900 = vor.u32 %v3898, %v3899
      %v3901 = vrot.slane %v3900, 4
      %v3902 = vrot.slane %v3262, 5
      %v3903 = vrot.slane %v3258, 6
      %v3904 = vor.u32 %v3902, %v3903
      %v3905 = vsel %vm2347, %v3901, %v3904
      %v3906 = vrot.slane %v3904, 4
      %v3907 = vshrl.u32 %v2916, 16
      %v3909 = vrot.slane %v3907, 5
      %v3910 = vrot.slane %v3268, 6
      %v3911 = vor.u32 %v3909, %v3910
      %v3912 = vsel %vm2347, %v3906, %v3911
      %v3913 = vrot.slane %v3273, 5
      %v3914 = vrot.slane %v3276, 6
      %v3915 = vor.u32 %v3913, %v3914
      %v3916 = vrot.slane %v3915, 4
      %v3917 = vrot.slane %v3286, 5
      %v3918 = vrot.slane %v3282, 6
      %v3919 = vor.u32 %v3917, %v3918
      %v3920 = vsel %vm2347, %v3916, %v3919
      %v3921 = vrot.slane %v3919, 4
      %v3922 = vshrl.u32 %v2919, 16
      %v3924 = vrot.slane %v3922, 5
      %v3925 = vrot.slane %v3292, 6
      %v3926 = vor.u32 %v3924, %v3925
      %v3927 = vsel %vm2347, %v3921, %v3926
      %v3928 = vrot.slane %v3297, 5
      %v3929 = vrot.slane %v3300, 6
      %v3930 = vor.u32 %v3928, %v3929
      %v3931 = vrot.slane %v3930, 4
      %v3932 = vrot.slane %v3310, 5
      %v3933 = vrot.slane %v3306, 6
      %v3934 = vor.u32 %v3932, %v3933
      %v3935 = vsel %vm2347, %v3931, %v3934
      %v3936 = vrot.slane %v3934, 4
      %v3937 = vshrl.u32 %v2922, 16
      %v3939 = vrot.slane %v3937, 5
      %v3940 = vrot.slane %v3316, 6
      %v3941 = vor.u32 %v3939, %v3940
      %v3942 = vsel %vm2347, %v3936, %v3941
      %v3943 = vrot.slane %v3321, 5
      %v3944 = vrot.slane %v3324, 6
      %v3945 = vor.u32 %v3943, %v3944
      %v3946 = vrot.slane %v3945, 4
      %v3947 = vrot.slane %v3334, 5
      %v3948 = vrot.slane %v3330, 6
      %v3949 = vor.u32 %v3947, %v3948
      %v3950 = vsel %vm2347, %v3946, %v3949
      %v3951 = vrot.slane %v3949, 4
      %v3952 = vshrl.u32 %v2925, 16
      %v3954 = vrot.slane %v3952, 5
      %v3955 = vrot.slane %v3340, 6
      %v3956 = vor.u32 %v3954, %v3955
      %v3957 = vsel %vm2347, %v3951, %v3956
      %v3958 = vrot.slane %v3345, 5
      %v3959 = vrot.slane %v3348, 6
      %v3960 = vor.u32 %v3958, %v3959
      %v3961 = vrot.slane %v3960, 4
      %v3962 = vrot.slane %v3358, 5
      %v3963 = vrot.slane %v3354, 6
      %v3964 = vor.u32 %v3962, %v3963
      %v3965 = vsel %vm2347, %v3961, %v3964
      %v3966 = vrot.slane %v3964, 4
      %v3967 = vshrl.u32 %v2928, 16
      %v3969 = vrot.slane %v3967, 5
      %v3970 = vrot.slane %v3364, 6
      %v3971 = vor.u32 %v3969, %v3970
      %v3972 = vsel %vm2347, %v3966, %v3971
      %v3973 = vrot.slane %v3369, 5
      %v3974 = vrot.slane %v3372, 6
      %v3975 = vor.u32 %v3973, %v3974
      %v3976 = vrot.slane %v3975, 4
      %v3977 = vrot.slane %v3382, 5
      %v3978 = vrot.slane %v3378, 6
      %v3979 = vor.u32 %v3977, %v3978
      %v3980 = vsel %vm2347, %v3976, %v3979
      %v3981 = vrot.slane %v3979, 4
      %v3982 = vshrl.u32 %v2931, 16
      %v3984 = vrot.slane %v3982, 5
      %v3985 = vrot.slane %v3388, 6
      %v3986 = vor.u32 %v3984, %v3985
      %v3987 = vsel %vm2347, %v3981, %v3986
      %v3988 = vrot.slane %v3393, 5
      %v3989 = vrot.slane %v3396, 6
      %v3990 = vor.u32 %v3988, %v3989
      %v3991 = vrot.slane %v3990, 4
      %v3992 = vrot.slane %v3406, 5
      %v3993 = vrot.slane %v3402, 6
      %v3994 = vor.u32 %v3992, %v3993
      %v3995 = vsel %vm2347, %v3991, %v3994
      %v3996 = vrot.slane %v3994, 4
      %v3997 = vshrl.u32 %v2934, 16
      %v3999 = vrot.slane %v3997, 5
      %v4000 = vrot.slane %v3412, 6
      %v4001 = vor.u32 %v3999, %v4000
      %v4002 = vsel %vm2347, %v3996, %v4001
      %v4003 = vrot.slane %v3417, 5
      %v4004 = vrot.slane %v3420, 6
      %v4005 = vor.u32 %v4003, %v4004
      %v4006 = vrot.slane %v4005, 4
      %v4007 = vrot.slane %v3430, 5
      %v4008 = vrot.slane %v3426, 6
      %v4009 = vor.u32 %v4007, %v4008
      %v4010 = vsel %vm2347, %v4006, %v4009
      %v4011 = vrot.slane %v4009, 4
      %v4012 = vshrl.u32 %v2937, 16
      %v4014 = vrot.slane %v4012, 5
      %v4015 = vrot.slane %v3436, 6
      %v4016 = vor.u32 %v4014, %v4015
      %v4017 = vsel %vm2347, %v4011, %v4016
      %v4018 = vrot.slane %v3441, 5
      %v4019 = vrot.slane %v3444, 6
      %v4020 = vor.u32 %v4018, %v4019
      %v4021 = vrot.slane %v4020, 4
      %v4022 = vrot.slane %v3454, 5
      %v4023 = vrot.slane %v3450, 6
      %v4024 = vor.u32 %v4022, %v4023
      %v4025 = vsel %vm2347, %v4021, %v4024
      %v4026 = vrot.slane %v4024, 4
      %v4027 = vshrl.u32 %v2940, 16
      %v4029 = vrot.slane %v4027, 5
      %v4030 = vrot.slane %v3460, 6
      %v4031 = vor.u32 %v4029, %v4030
      %v4032 = vsel %vm2347, %v4026, %v4031
      %v4033 = vrot.slane %v3465, 5
      %v4034 = vrot.slane %v3468, 6
      %v4035 = vor.u32 %v4033, %v4034
      %v4036 = vrot.slane %v4035, 4
      %v4037 = vrot.slane %v3478, 5
      %v4038 = vrot.slane %v3474, 6
      %v4039 = vor.u32 %v4037, %v4038
      %v4040 = vsel %vm2347, %v4036, %v4039
      %v4041 = vrot.slane %v4039, 4
      %v4042 = vshrl.u32 %v2943, 16
      %v4044 = vrot.slane %v4042, 5
      %v4045 = vrot.slane %v3484, 6
      %v4046 = vor.u32 %v4044, %v4045
      %v4047 = vsel %vm2347, %v4041, %v4046
      %4080 = vst.msk [vmem:[#allocation3 + $0x10] sm:$0xf] %vm1261, %v3815
      %4081 = vst.msk [vmem:[#allocation3 + $0x44] sm:$0xf] %vm1261, %v3822
      %4082 = vst.msk [vmem:[#allocation3 + $0x78] sm:$0xf] %vm1261, %v3830
      %4083 = vst.msk [vmem:[#allocation3 + $0xac] sm:$0xf] %vm1261, %v3837
      %4084 = vst.msk [vmem:[#allocation3 + $0xe0] sm:$0xf] %vm1261, %v3845
      %4085 = vst.msk [vmem:[#allocation3 + $0x114] sm:$0xf] %vm1261, %v3852
      %4086 = vst.msk [vmem:[#allocation3 + $0x148] sm:$0xf] %vm1261, %v3860
      %4087 = vst.msk [vmem:[#allocation3 + $0x17c] sm:$0xf] %vm1261, %v3867
      %4088 = vst.msk [vmem:[#allocation3 + $0x1b0] sm:$0xf] %vm1261, %v3875
      %4089 = vst.msk [vmem:[#allocation3 + $0x1e4] sm:$0xf] %vm1261, %v3882
      %4090 = vst.msk [vmem:[#allocation3 + $0x218] sm:$0xf] %vm1261, %v3890
      %4091 = vst.msk [vmem:[#allocation3 + $0x24c] sm:$0xf] %vm1261, %v3897
      %4092 = vst.msk [vmem:[#allocation3 + $0x280] sm:$0xf] %vm1261, %v3905
      %4093 = vst.msk [vmem:[#allocation3 + $0x2b4] sm:$0xf] %vm1261, %v3912
      %4094 = vst.msk [vmem:[#allocation3 + $0x2e8] sm:$0xf] %vm1261, %v3920
      %4095 = vst.msk [vmem:[#allocation3 + $0x31c] sm:$0xf] %vm1261, %v3927
      %4096 = vst.msk [vmem:[#allocation3 + $0x350] sm:$0xf] %vm1261, %v3935
      %4097 = vst.msk [vmem:[#allocation3 + $0x384] sm:$0xf] %vm1261, %v3942
      %4098 = vst.msk [vmem:[#allocation3 + $0x3b8] sm:$0xf] %vm1261, %v3950
      %4099 = vst.msk [vmem:[#allocation3 + $0x3ec] sm:$0xf] %vm1261, %v3957
      %4100 = vst.msk [vmem:[#allocation3 + $0x420] sm:$0xf] %vm1261, %v3965
      %4101 = vst.msk [vmem:[#allocation3 + $0x454] sm:$0xf] %vm1261, %v3972
      %4102 = vst.msk [vmem:[#allocation3 + $0x488] sm:$0xf] %vm1261, %v3980
      %4103 = vst.msk [vmem:[#allocation3 + $0x4bc] sm:$0xf] %vm1261, %v3987
      %4104 = vst.msk [vmem:[#allocation3 + $0x4f0] sm:$0xf] %vm1261, %v3995
      %4105 = vst.msk [vmem:[#allocation3 + $0x524] sm:$0xf] %vm1261, %v4002
      %4106 = vst.msk [vmem:[#allocation3 + $0x558] sm:$0xf] %vm1261, %v4010
      %4107 = vst.msk [vmem:[#allocation3 + $0x58c] sm:$0xf] %vm1261, %v4017
      %4108 = vst.msk [vmem:[#allocation3 + $0x5c0] sm:$0xf] %vm1261, %v4025
      %4109 = vst.msk [vmem:[#allocation3 + $0x5f4] sm:$0xf] %vm1261, %v4032
      %4110 = vst.msk [vmem:[#allocation3 + $0x628] sm:$0xf] %vm1261, %v4040
      %4111 = vst.msk [vmem:[#allocation3 + $0x65c] sm:$0xf] %vm1261, %v4047
      %v4112 = vrot.slane %v2896, 6
      %v4113 = vrot.slane %v4112, 4
      %v4114 = vrot.slane %v2897, 6
      %v4115 = vsel %vm2718, %v4113, %v4114
      %v4116 = vrot.slane %v4114, 4
      %v4117 = vrot.slane %v2898, 6
      %v4118 = vsel %vm2718, %v4116, %v4117
      %v4119 = vrot.slane %v2899, 6
      %v4120 = vrot.slane %v4119, 4
      %v4121 = vrot.slane %v2900, 6
      %v4122 = vsel %vm2718, %v4120, %v4121
      %v4123 = vrot.slane %v4121, 4
      %v4124 = vrot.slane %v2901, 6
      %v4125 = vsel %vm2718, %v4123, %v4124
      %v4126 = vrot.slane %v2902, 6
      %v4127 = vrot.slane %v4126, 4
      %v4128 = vrot.slane %v2903, 6
      %v4129 = vsel %vm2718, %v4127, %v4128
      %v4130 = vrot.slane %v4128, 4
      %v4131 = vrot.slane %v2904, 6
      %v4132 = vsel %vm2718, %v4130, %v4131
      %v4133 = vrot.slane %v2905, 6
      %v4134 = vrot.slane %v4133, 4
      %v4135 = vrot.slane %v2906, 6
      %v4136 = vsel %vm2718, %v4134, %v4135
      %v4137 = vrot.slane %v4135, 4
      %v4138 = vrot.slane %v2907, 6
      %v4139 = vsel %vm2718, %v4137, %v4138
      %v4140 = vrot.slane %v2908, 6
      %v4141 = vrot.slane %v4140, 4
      %v4142 = vrot.slane %v2909, 6
      %v4143 = vsel %vm2718, %v4141, %v4142
      %v4144 = vrot.slane %v4142, 4
      %v4145 = vrot.slane %v2910, 6
      %v4146 = vsel %vm2718, %v4144, %v4145
      %v4147 = vrot.slane %v2911, 6
      %v4148 = vrot.slane %v4147, 4
      %v4149 = vrot.slane %v2912, 6
      %v4150 = vsel %vm2718, %v4148, %v4149
      %v4151 = vrot.slane %v4149, 4
      %v4152 = vrot.slane %v2913, 6
      %v4153 = vsel %vm2718, %v4151, %v4152
      %v4154 = vrot.slane %v2914, 6
      %v4155 = vrot.slane %v4154, 4
      %v4156 = vrot.slane %v2915, 6
      %v4157 = vsel %vm2718, %v4155, %v4156
      %v4158 = vrot.slane %v4156, 4
      %v4159 = vrot.slane %v2916, 6
      %v4160 = vsel %vm2718, %v4158, %v4159
      %v4161 = vrot.slane %v2917, 6
      %v4162 = vrot.slane %v4161, 4
      %v4163 = vrot.slane %v2918, 6
      %v4164 = vsel %vm2718, %v4162, %v4163
      %v4165 = vrot.slane %v4163, 4
      %v4166 = vrot.slane %v2919, 6
      %v4167 = vsel %vm2718, %v4165, %v4166
      %v4168 = vrot.slane %v2920, 6
      %v4169 = vrot.slane %v4168, 4
      %v4170 = vrot.slane %v2921, 6
      %v4171 = vsel %vm2718, %v4169, %v4170
      %v4172 = vrot.slane %v4170, 4
      %v4173 = vrot.slane %v2922, 6
      %v4174 = vsel %vm2718, %v4172, %v4173
      %v4175 = vrot.slane %v2923, 6
      %v4176 = vrot.slane %v4175, 4
      %v4177 = vrot.slane %v2924, 6
      %v4178 = vsel %vm2718, %v4176, %v4177
      %v4179 = vrot.slane %v4177, 4
      %v4180 = vrot.slane %v2925, 6
      %v4181 = vsel %vm2718, %v4179, %v4180
      %v4182 = vrot.slane %v2926, 6
      %v4183 = vrot.slane %v4182, 4
      %v4184 = vrot.slane %v2927, 6
      %v4185 = vsel %vm2718, %v4183, %v4184
      %v4186 = vrot.slane %v4184, 4
      %v4187 = vrot.slane %v2928, 6
      %v4188 = vsel %vm2718, %v4186, %v4187
      %v4189 = vrot.slane %v2929, 6
      %v4190 = vrot.slane %v4189, 4
      %v4191 = vrot.slane %v2930, 6
      %v4192 = vsel %vm2718, %v4190, %v4191
      %v4193 = vrot.slane %v4191, 4
      %v4194 = vrot.slane %v2931, 6
      %v4195 = vsel %vm2718, %v4193, %v4194
      %v4196 = vrot.slane %v2932, 6
      %v4197 = vrot.slane %v4196, 4
      %v4198 = vrot.slane %v2933, 6
      %v4199 = vsel %vm2718, %v4197, %v4198
      %v4200 = vrot.slane %v4198, 4
      %v4201 = vrot.slane %v2934, 6
      %v4202 = vsel %vm2718, %v4200, %v4201
      %v4203 = vrot.slane %v2935, 6
      %v4204 = vrot.slane %v4203, 4
      %v4205 = vrot.slane %v2936, 6
      %v4206 = vsel %vm2718, %v4204, %v4205
      %v4207 = vrot.slane %v4205, 4
      %v4208 = vrot.slane %v2937, 6
      %v4209 = vsel %vm2718, %v4207, %v4208
      %v4210 = vrot.slane %v2938, 6
      %v4211 = vrot.slane %v4210, 4
      %v4212 = vrot.slane %v2939, 6
      %v4213 = vsel %vm2718, %v4211, %v4212
      %v4214 = vrot.slane %v4212, 4
      %v4215 = vrot.slane %v2940, 6
      %v4216 = vsel %vm2718, %v4214, %v4215
      %v4217 = vrot.slane %v2941, 6
      %v4218 = vrot.slane %v4217, 4
      %v4219 = vrot.slane %v2942, 6
      %v4220 = vsel %vm2718, %v4218, %v4219
      %v4221 = vrot.slane %v4219, 4
      %v4222 = vrot.slane %v2943, 6
      %v4223 = vsel %vm2718, %v4221, %v4222
      %4224 = vrot.lane.b32.xlu0 %v4115, 64
      %v4225 = vpop.permute.xlu0 %4224
      %4226 = vrot.lane.b32.xlu0 %v4118, 64
      %v4227 = vpop.permute.xlu0 %4226
      %4228 = vrot.lane.b32.xlu0 %v4122, 64
      %v4229 = vpop.permute.xlu0 %4228
      %4230 = vrot.lane.b32.xlu0 %v4125, 64
      %v4231 = vpop.permute.xlu0 %4230
      %4232 = vrot.lane.b32.xlu0 %v4129, 64
      %v4233 = vpop.permute.xlu0 %4232
      %4234 = vrot.lane.b32.xlu0 %v4132, 64
      %v4235 = vpop.permute.xlu0 %4234
      %4236 = vrot.lane.b32.xlu0 %v4136, 64
      %v4237 = vpop.permute.xlu0 %4236
      %4238 = vrot.lane.b32.xlu0 %v4139, 64
      %v4239 = vpop.permute.xlu0 %4238
      %4240 = vrot.lane.b32.xlu0 %v4143, 64
      %v4241 = vpop.permute.xlu0 %4240
      %4242 = vrot.lane.b32.xlu0 %v4146, 64
      %v4243 = vpop.permute.xlu0 %4242
      %4244 = vrot.lane.b32.xlu0 %v4150, 64
      %v4245 = vpop.permute.xlu0 %4244
      %4246 = vrot.lane.b32.xlu0 %v4153, 64
      %v4247 = vpop.permute.xlu0 %4246
      %4248 = vrot.lane.b32.xlu0 %v4157, 64
      %v4249 = vpop.permute.xlu0 %4248
      %4250 = vrot.lane.b32.xlu0 %v4160, 64
      %v4251 = vpop.permute.xlu0 %4250
      %4252 = vrot.lane.b32.xlu0 %v4164, 64
      %v4253 = vpop.permute.xlu0 %4252
      %4254 = vrot.lane.b32.xlu0 %v4167, 64
      %v4255 = vpop.permute.xlu0 %4254
      %4256 = vrot.lane.b32.xlu0 %v4171, 64
      %v4257 = vpop.permute.xlu0 %4256
      %4258 = vrot.lane.b32.xlu0 %v4174, 64
      %v4259 = vpop.permute.xlu0 %4258
      %4260 = vrot.lane.b32.xlu0 %v4178, 64
      %v4261 = vpop.permute.xlu0 %4260
      %4262 = vrot.lane.b32.xlu0 %v4181, 64
      %v4263 = vpop.permute.xlu0 %4262
      %4264 = vrot.lane.b32.xlu0 %v4185, 64
      %v4265 = vpop.permute.xlu0 %4264
      %4266 = vrot.lane.b32.xlu0 %v4188, 64
      %v4267 = vpop.permute.xlu0 %4266
      %4268 = vrot.lane.b32.xlu0 %v4192, 64
      %v4269 = vpop.permute.xlu0 %4268
      %4270 = vrot.lane.b32.xlu0 %v4195, 64
      %v4271 = vpop.permute.xlu0 %4270
      %4272 = vrot.lane.b32.xlu0 %v4199, 64
      %v4273 = vpop.permute.xlu0 %4272
      %4274 = vrot.lane.b32.xlu0 %v4202, 64
      %v4275 = vpop.permute.xlu0 %4274
      %4276 = vrot.lane.b32.xlu0 %v4206, 64
      %v4277 = vpop.permute.xlu0 %4276
      %4278 = vrot.lane.b32.xlu0 %v4209, 64
      %v4279 = vpop.permute.xlu0 %4278
      %4280 = vrot.lane.b32.xlu0 %v4213, 64
      %v4281 = vpop.permute.xlu0 %4280
      %4282 = vrot.lane.b32.xlu0 %v4216, 64
      %v4283 = vpop.permute.xlu0 %4282
      %4284 = vrot.lane.b32.xlu0 %v4220, 64
      %v4285 = vpop.permute.xlu0 %4284
      %4286 = vrot.lane.b32.xlu0 %v4223, 64
      %v4287 = vpop.permute.xlu0 %4286
      %4320 = vst.msk [vmem:[#allocation3 + $0x10] sm:$0xf] %vm2085, %v4225
      %4321 = vst.msk [vmem:[#allocation3 + $0x44] sm:$0xf] %vm2085, %v4227
      %4322 = vst.msk [vmem:[#allocation3 + $0x78] sm:$0xf] %vm2085, %v4229
      %4323 = vst.msk [vmem:[#allocation3 + $0xac] sm:$0xf] %vm2085, %v4231
      %4324 = vst.msk [vmem:[#allocation3 + $0xe0] sm:$0xf] %vm2085, %v4233
      %4325 = vst.msk [vmem:[#allocation3 + $0x114] sm:$0xf] %vm2085, %v4235
      %4326 = vst.msk [vmem:[#allocation3 + $0x148] sm:$0xf] %vm2085, %v4237
      %4327 = vst.msk [vmem:[#allocation3 + $0x17c] sm:$0xf] %vm2085, %v4239
      %4328 = vst.msk [vmem:[#allocation3 + $0x1b0] sm:$0xf] %vm2085, %v4241
      %4329 = vst.msk [vmem:[#allocation3 + $0x1e4] sm:$0xf] %vm2085, %v4243
      %4330 = vst.msk [vmem:[#allocation3 + $0x218] sm:$0xf] %vm2085, %v4245
      %4331 = vst.msk [vmem:[#allocation3 + $0x24c] sm:$0xf] %vm2085, %v4247
      %4332 = vst.msk [vmem:[#allocation3 + $0x280] sm:$0xf] %vm2085, %v4249
      %4333 = vst.msk [vmem:[#allocation3 + $0x2b4] sm:$0xf] %vm2085, %v4251
      %4334 = vst.msk [vmem:[#allocation3 + $0x2e8] sm:$0xf] %vm2085, %v4253
      %4335 = vst.msk [vmem:[#allocation3 + $0x31c] sm:$0xf] %vm2085, %v4255
      %4336 = vst.msk [vmem:[#allocation3 + $0x350] sm:$0xf] %vm2085, %v4257
      %4337 = vst.msk [vmem:[#allocation3 + $0x384] sm:$0xf] %vm2085, %v4259
      %4338 = vst.msk [vmem:[#allocation3 + $0x3b8] sm:$0xf] %vm2085, %v4261
      %4339 = vst.msk [vmem:[#allocation3 + $0x3ec] sm:$0xf] %vm2085, %v4263
      %4340 = vst.msk [vmem:[#allocation3 + $0x420] sm:$0xf] %vm2085, %v4265
      %4341 = vst.msk [vmem:[#allocation3 + $0x454] sm:$0xf] %vm2085, %v4267
      %4342 = vst.msk [vmem:[#allocation3 + $0x488] sm:$0xf] %vm2085, %v4269
      %4343 = vst.msk [vmem:[#allocation3 + $0x4bc] sm:$0xf] %vm2085, %v4271
      %4344 = vst.msk [vmem:[#allocation3 + $0x4f0] sm:$0xf] %vm2085, %v4273
      %4345 = vst.msk [vmem:[#allocation3 + $0x524] sm:$0xf] %vm2085, %v4275
      %4346 = vst.msk [vmem:[#allocation3 + $0x558] sm:$0xf] %vm2085, %v4277
      %4347 = vst.msk [vmem:[#allocation3 + $0x58c] sm:$0xf] %vm2085, %v4279
      %4348 = vst.msk [vmem:[#allocation3 + $0x5c0] sm:$0xf] %vm2085, %v4281
      %4349 = vst.msk [vmem:[#allocation3 + $0x5f4] sm:$0xf] %vm2085, %v4283
      %4350 = vst.msk [vmem:[#allocation3 + $0x628] sm:$0xf] %vm2085, %v4285
      %4351 = vst.msk [vmem:[#allocation3 + $0x65c] sm:$0xf] %vm2085, %v4287
      %s4352 = scalar_lea.vmem [#allocation2], 24
      %v4353 = vld [vmem:[%s4352] sm:$0xf]
      %v4354 = vld [vmem:[%s4352 + $0x4] sm:$0xf]
      %v4355 = vld [vmem:[%s4352 + $0x8] sm:$0x3]
      %v4356 = vld [vmem:[%s4352 + $0xc] sm:$0xf]
      %v4357 = vld [vmem:[%s4352 + $0x10] sm:$0xf]
      %v4358 = vld [vmem:[%s4352 + $0x14] sm:$0x3]
      %v4359 = vld [vmem:[%s4352 + $0x18] sm:$0xf]
      %v4360 = vld [vmem:[%s4352 + $0x1c] sm:$0xf]
      %v4361 = vld [vmem:[%s4352 + $0x20] sm:$0x3]
      %v4362 = vld [vmem:[%s4352 + $0x24] sm:$0xf]
      %v4363 = vld [vmem:[%s4352 + $0x28] sm:$0xf]
      %v4364 = vld [vmem:[%s4352 + $0x2c] sm:$0x3]
      %v4365 = vld [vmem:[%s4352 + $0x30] sm:$0xf]
      %v4366 = vld [vmem:[%s4352 + $0x34] sm:$0xf]
      %v4367 = vld [vmem:[%s4352 + $0x38] sm:$0x3]
      %v4368 = vld [vmem:[%s4352 + $0x3c] sm:$0xf]
      %v4369 = vld [vmem:[%s4352 + $0x40] sm:$0xf]
      %v4370 = vld [vmem:[%s4352 + $0x44] sm:$0x3]
      %v4371 = vld [vmem:[%s4352 + $0x48] sm:$0xf]
      %v4372 = vld [vmem:[%s4352 + $0x4c] sm:$0xf]
      %v4373 = vld [vmem:[%s4352 + $0x50] sm:$0x3]
      %v4374 = vld [vmem:[%s4352 + $0x54] sm:$0xf]
      %v4375 = vld [vmem:[%s4352 + $0x58] sm:$0xf]
      %v4376 = vld [vmem:[%s4352 + $0x5c] sm:$0x3]
      %v4377 = vld [vmem:[%s4352 + $0x60] sm:$0xf]
      %v4378 = vld [vmem:[%s4352 + $0x64] sm:$0xf]
      %v4379 = vld [vmem:[%s4352 + $0x68] sm:$0x3]
      %v4380 = vld [vmem:[%s4352 + $0x6c] sm:$0xf]
      %v4381 = vld [vmem:[%s4352 + $0x70] sm:$0xf]
      %v4382 = vld [vmem:[%s4352 + $0x74] sm:$0x3]
      %v4383 = vld [vmem:[%s4352 + $0x78] sm:$0xf]
      %v4384 = vld [vmem:[%s4352 + $0x7c] sm:$0xf]
      %v4385 = vld [vmem:[%s4352 + $0x80] sm:$0x3]
      %v4386 = vld [vmem:[%s4352 + $0x84] sm:$0xf]
      %v4387 = vld [vmem:[%s4352 + $0x88] sm:$0xf]
      %v4388 = vld [vmem:[%s4352 + $0x8c] sm:$0x3]
      %v4389 = vld [vmem:[%s4352 + $0x90] sm:$0xf]
      %v4390 = vld [vmem:[%s4352 + $0x94] sm:$0xf]
      %v4391 = vld [vmem:[%s4352 + $0x98] sm:$0x3]
      %v4392 = vld [vmem:[%s4352 + $0x9c] sm:$0xf]
      %v4393 = vld [vmem:[%s4352 + $0xa0] sm:$0xf]
      %v4394 = vld [vmem:[%s4352 + $0xa4] sm:$0x3]
      %v4395 = vld [vmem:[%s4352 + $0xa8] sm:$0xf]
      %v4396 = vld [vmem:[%s4352 + $0xac] sm:$0xf]
      %v4397 = vld [vmem:[%s4352 + $0xb0] sm:$0x3]
      %v4398 = vld [vmem:[%s4352 + $0xb4] sm:$0xf]
      %v4399 = vld [vmem:[%s4352 + $0xb8] sm:$0xf]
      %v4400 = vld [vmem:[%s4352 + $0xbc] sm:$0x3]
      %4401 = vst.msk [vmem:[#allocation3 + $0x14] sm:$0xf] %vm1261, %v4353
      %4402 = vst.msk [vmem:[#allocation3 + $0x48] sm:$0xf] %vm1261, %v4354
      %4403 = vst.msk [vmem:[#allocation3 + $0x7c] sm:$0xf] %vm1261, %v4356
      %4404 = vst.msk [vmem:[#allocation3 + $0xb0] sm:$0xf] %vm1261, %v4357
      %4405 = vst.msk [vmem:[#allocation3 + $0xe4] sm:$0xf] %vm1261, %v4359
      %4406 = vst.msk [vmem:[#allocation3 + $0x118] sm:$0xf] %vm1261, %v4360
      %4407 = vst.msk [vmem:[#allocation3 + $0x14c] sm:$0xf] %vm1261, %v4362
      %4408 = vst.msk [vmem:[#allocation3 + $0x180] sm:$0xf] %vm1261, %v4363
      %4409 = vst.msk [vmem:[#allocation3 + $0x1b4] sm:$0xf] %vm1261, %v4365
      %4410 = vst.msk [vmem:[#allocation3 + $0x1e8] sm:$0xf] %vm1261, %v4366
      %4411 = vst.msk [vmem:[#allocation3 + $0x21c] sm:$0xf] %vm1261, %v4368
      %4412 = vst.msk [vmem:[#allocation3 + $0x250] sm:$0xf] %vm1261, %v4369
      %4413 = vst.msk [vmem:[#allocation3 + $0x284] sm:$0xf] %vm1261, %v4371
      %4414 = vst.msk [vmem:[#allocation3 + $0x2b8] sm:$0xf] %vm1261, %v4372
      %4415 = vst.msk [vmem:[#allocation3 + $0x2ec] sm:$0xf] %vm1261, %v4374
      %4416 = vst.msk [vmem:[#allocation3 + $0x320] sm:$0xf] %vm1261, %v4375
      %4417 = vst.msk [vmem:[#allocation3 + $0x354] sm:$0xf] %vm1261, %v4377
      %4418 = vst.msk [vmem:[#allocation3 + $0x388] sm:$0xf] %vm1261, %v4378
      %4419 = vst.msk [vmem:[#allocation3 + $0x3bc] sm:$0xf] %vm1261, %v4380
      %4420 = vst.msk [vmem:[#allocation3 + $0x3f0] sm:$0xf] %vm1261, %v4381
      %4421 = vst.msk [vmem:[#allocation3 + $0x424] sm:$0xf] %vm1261, %v4383
      %4422 = vst.msk [vmem:[#allocation3 + $0x458] sm:$0xf] %vm1261, %v4384
      %4423 = vst.msk [vmem:[#allocation3 + $0x48c] sm:$0xf] %vm1261, %v4386
      %4424 = vst.msk [vmem:[#allocation3 + $0x4c0] sm:$0xf] %vm1261, %v4387
      %4425 = vst.msk [vmem:[#allocation3 + $0x4f4] sm:$0xf] %vm1261, %v4389
      %4426 = vst.msk [vmem:[#allocation3 + $0x528] sm:$0xf] %vm1261, %v4390
      %4427 = vst.msk [vmem:[#allocation3 + $0x55c] sm:$0xf] %vm1261, %v4392
      %4428 = vst.msk [vmem:[#allocation3 + $0x590] sm:$0xf] %vm1261, %v4393
      %4429 = vst.msk [vmem:[#allocation3 + $0x5c4] sm:$0xf] %vm1261, %v4395
      %4430 = vst.msk [vmem:[#allocation3 + $0x5f8] sm:$0xf] %vm1261, %v4396
      %4431 = vst.msk [vmem:[#allocation3 + $0x62c] sm:$0xf] %vm1261, %v4398
      %4432 = vst.msk [vmem:[#allocation3 + $0x660] sm:$0xf] %vm1261, %v4399
      %v4434 = vshrl.u32 %v4353, 16
      %v4436 = vrot.slane %v4434, 4
      %v4437 = vshll.u32 %v4353, 16
      %v4439 = vrot.slane %v4437, 5
      %v4440 = vor.u32 %v4436, %v4439
      %v4441 = vrot.slane %v4440, 4
      %v4443 = vshll.u32 %v4354, 16
      %v4445 = vrot.slane %v4443, 5
      %v4446 = vsel %vm1604, %v4441, %v4445
      %v4447 = vshrl.u32 %v4354, 16
      %v4449 = vrot.slane %v4447, 4
      %v4450 = vor.u32 %v4449, %v4445
      %v4451 = vrot.slane %v4450, 4
      %v4453 = vshll.u32 %v4355, 16
      %v4455 = vrot.slane %v4453, 5
      %v4456 = vsel %vm1604, %v4451, %v4455
      %v4458 = vshrl.u32 %v4356, 16
      %v4460 = vrot.slane %v4458, 4
      %v4461 = vshll.u32 %v4356, 16
      %v4463 = vrot.slane %v4461, 5
      %v4464 = vor.u32 %v4460, %v4463
      %v4465 = vrot.slane %v4464, 4
      %v4467 = vshll.u32 %v4357, 16
      %v4469 = vrot.slane %v4467, 5
      %v4470 = vsel %vm1604, %v4465, %v4469
      %v4471 = vshrl.u32 %v4357, 16
      %v4473 = vrot.slane %v4471, 4
      %v4474 = vor.u32 %v4473, %v4469
      %v4475 = vrot.slane %v4474, 4
      %v4477 = vshll.u32 %v4358, 16
      %v4479 = vrot.slane %v4477, 5
      %v4480 = vsel %vm1604, %v4475, %v4479
      %v4482 = vshrl.u32 %v4359, 16
      %v4484 = vrot.slane %v4482, 4
      %v4485 = vshll.u32 %v4359, 16
      %v4487 = vrot.slane %v4485, 5
      %v4488 = vor.u32 %v4484, %v4487
      %v4489 = vrot.slane %v4488, 4
      %v4491 = vshll.u32 %v4360, 16
      %v4493 = vrot.slane %v4491, 5
      %v4494 = vsel %vm1604, %v4489, %v4493
      %v4495 = vshrl.u32 %v4360, 16
      %v4497 = vrot.slane %v4495, 4
      %v4498 = vor.u32 %v4497, %v4493
      %v4499 = vrot.slane %v4498, 4
      %v4501 = vshll.u32 %v4361, 16
      %v4503 = vrot.slane %v4501, 5
      %v4504 = vsel %vm1604, %v4499, %v4503
      %v4506 = vshrl.u32 %v4362, 16
      %v4508 = vrot.slane %v4506, 4
      %v4509 = vshll.u32 %v4362, 16
      %v4511 = vrot.slane %v4509, 5
      %v4512 = vor.u32 %v4508, %v4511
      %v4513 = vrot.slane %v4512, 4
      %v4515 = vshll.u32 %v4363, 16
      %v4517 = vrot.slane %v4515, 5
      %v4518 = vsel %vm1604, %v4513, %v4517
      %v4519 = vshrl.u32 %v4363, 16
      %v4521 = vrot.slane %v4519, 4
      %v4522 = vor.u32 %v4521, %v4517
      %v4523 = vrot.slane %v4522, 4
      %v4525 = vshll.u32 %v4364, 16
      %v4527 = vrot.slane %v4525, 5
      %v4528 = vsel %vm1604, %v4523, %v4527
      %v4530 = vshrl.u32 %v4365, 16
      %v4532 = vrot.slane %v4530, 4
      %v4533 = vshll.u32 %v4365, 16
      %v4535 = vrot.slane %v4533, 5
      %v4536 = vor.u32 %v4532, %v4535
      %v4537 = vrot.slane %v4536, 4
      %v4539 = vshll.u32 %v4366, 16
      %v4541 = vrot.slane %v4539, 5
      %v4542 = vsel %vm1604, %v4537, %v4541
      %v4543 = vshrl.u32 %v4366, 16
      %v4545 = vrot.slane %v4543, 4
      %v4546 = vor.u32 %v4545, %v4541
      %v4547 = vrot.slane %v4546, 4
      %v4549 = vshll.u32 %v4367, 16
      %v4551 = vrot.slane %v4549, 5
      %v4552 = vsel %vm1604, %v4547, %v4551
      %v4554 = vshrl.u32 %v4368, 16
      %v4556 = vrot.slane %v4554, 4
      %v4557 = vshll.u32 %v4368, 16
      %v4559 = vrot.slane %v4557, 5
      %v4560 = vor.u32 %v4556, %v4559
      %v4561 = vrot.slane %v4560, 4
      %v4563 = vshll.u32 %v4369, 16
      %v4565 = vrot.slane %v4563, 5
      %v4566 = vsel %vm1604, %v4561, %v4565
      %v4567 = vshrl.u32 %v4369, 16
      %v4569 = vrot.slane %v4567, 4
      %v4570 = vor.u32 %v4569, %v4565
      %v4571 = vrot.slane %v4570, 4
      %v4573 = vshll.u32 %v4370, 16
      %v4575 = vrot.slane %v4573, 5
      %v4576 = vsel %vm1604, %v4571, %v4575
      %v4578 = vshrl.u32 %v4371, 16
      %v4580 = vrot.slane %v4578, 4
      %v4581 = vshll.u32 %v4371, 16
      %v4583 = vrot.slane %v4581, 5
      %v4584 = vor.u32 %v4580, %v4583
      %v4585 = vrot.slane %v4584, 4
      %v4587 = vshll.u32 %v4372, 16
      %v4589 = vrot.slane %v4587, 5
      %v4590 = vsel %vm1604, %v4585, %v4589
      %v4591 = vshrl.u32 %v4372, 16
      %v4593 = vrot.slane %v4591, 4
      %v4594 = vor.u32 %v4593, %v4589
      %v4595 = vrot.slane %v4594, 4
      %v4597 = vshll.u32 %v4373, 16
      %v4599 = vrot.slane %v4597, 5
      %v4600 = vsel %vm1604, %v4595, %v4599
      %v4602 = vshrl.u32 %v4374, 16
      %v4604 = vrot.slane %v4602, 4
      %v4605 = vshll.u32 %v4374, 16
      %v4607 = vrot.slane %v4605, 5
      %v4608 = vor.u32 %v4604, %v4607
      %v4609 = vrot.slane %v4608, 4
      %v4611 = vshll.u32 %v4375, 16
      %v4613 = vrot.slane %v4611, 5
      %v4614 = vsel %vm1604, %v4609, %v4613
      %v4615 = vshrl.u32 %v4375, 16
      %v4617 = vrot.slane %v4615, 4
      %v4618 = vor.u32 %v4617, %v4613
      %v4619 = vrot.slane %v4618, 4
      %v4621 = vshll.u32 %v4376, 16
      %v4623 = vrot.slane %v4621, 5
      %v4624 = vsel %vm1604, %v4619, %v4623
      %v4626 = vshrl.u32 %v4377, 16
      %v4628 = vrot.slane %v4626, 4
      %v4629 = vshll.u32 %v4377, 16
      %v4631 = vrot.slane %v4629, 5
      %v4632 = vor.u32 %v4628, %v4631
      %v4633 = vrot.slane %v4632, 4
      %v4635 = vshll.u32 %v4378, 16
      %v4637 = vrot.slane %v4635, 5
      %v4638 = vsel %vm1604, %v4633, %v4637
      %v4639 = vshrl.u32 %v4378, 16
      %v4641 = vrot.slane %v4639, 4
      %v4642 = vor.u32 %v4641, %v4637
      %v4643 = vrot.slane %v4642, 4
      %v4645 = vshll.u32 %v4379, 16
      %v4647 = vrot.slane %v4645, 5
      %v4648 = vsel %vm1604, %v4643, %v4647
      %v4650 = vshrl.u32 %v4380, 16
      %v4652 = vrot.slane %v4650, 4
      %v4653 = vshll.u32 %v4380, 16
      %v4655 = vrot.slane %v4653, 5
      %v4656 = vor.u32 %v4652, %v4655
      %v4657 = vrot.slane %v4656, 4
      %v4659 = vshll.u32 %v4381, 16
      %v4661 = vrot.slane %v4659, 5
      %v4662 = vsel %vm1604, %v4657, %v4661
      %v4663 = vshrl.u32 %v4381, 16
      %v4665 = vrot.slane %v4663, 4
      %v4666 = vor.u32 %v4665, %v4661
      %v4667 = vrot.slane %v4666, 4
      %v4669 = vshll.u32 %v4382, 16
      %v4671 = vrot.slane %v4669, 5
      %v4672 = vsel %vm1604, %v4667, %v4671
      %v4674 = vshrl.u32 %v4383, 16
      %v4676 = vrot.slane %v4674, 4
      %v4677 = vshll.u32 %v4383, 16
      %v4679 = vrot.slane %v4677, 5
      %v4680 = vor.u32 %v4676, %v4679
      %v4681 = vrot.slane %v4680, 4
      %v4683 = vshll.u32 %v4384, 16
      %v4685 = vrot.slane %v4683, 5
      %v4686 = vsel %vm1604, %v4681, %v4685
      %v4687 = vshrl.u32 %v4384, 16
      %v4689 = vrot.slane %v4687, 4
      %v4690 = vor.u32 %v4689, %v4685
      %v4691 = vrot.slane %v4690, 4
      %v4693 = vshll.u32 %v4385, 16
      %v4695 = vrot.slane %v4693, 5
      %v4696 = vsel %vm1604, %v4691, %v4695
      %v4698 = vshrl.u32 %v4386, 16
      %v4700 = vrot.slane %v4698, 4
      %v4701 = vshll.u32 %v4386, 16
      %v4703 = vrot.slane %v4701, 5
      %v4704 = vor.u32 %v4700, %v4703
      %v4705 = vrot.slane %v4704, 4
      %v4707 = vshll.u32 %v4387, 16
      %v4709 = vrot.slane %v4707, 5
      %v4710 = vsel %vm1604, %v4705, %v4709
      %v4711 = vshrl.u32 %v4387, 16
      %v4713 = vrot.slane %v4711, 4
      %v4714 = vor.u32 %v4713, %v4709
      %v4715 = vrot.slane %v4714, 4
      %v4717 = vshll.u32 %v4388, 16
      %v4719 = vrot.slane %v4717, 5
      %v4720 = vsel %vm1604, %v4715, %v4719
      %v4722 = vshrl.u32 %v4389, 16
      %v4724 = vrot.slane %v4722, 4
      %v4725 = vshll.u32 %v4389, 16
      %v4727 = vrot.slane %v4725, 5
      %v4728 = vor.u32 %v4724, %v4727
      %v4729 = vrot.slane %v4728, 4
      %v4731 = vshll.u32 %v4390, 16
      %v4733 = vrot.slane %v4731, 5
      %v4734 = vsel %vm1604, %v4729, %v4733
      %v4735 = vshrl.u32 %v4390, 16
      %v4737 = vrot.slane %v4735, 4
      %v4738 = vor.u32 %v4737, %v4733
      %v4739 = vrot.slane %v4738, 4
      %v4741 = vshll.u32 %v4391, 16
      %v4743 = vrot.slane %v4741, 5
      %v4744 = vsel %vm1604, %v4739, %v4743
      %v4746 = vshrl.u32 %v4392, 16
      %v4748 = vrot.slane %v4746, 4
      %v4749 = vshll.u32 %v4392, 16
      %v4751 = vrot.slane %v4749, 5
      %v4752 = vor.u32 %v4748, %v4751
      %v4753 = vrot.slane %v4752, 4
      %v4755 = vshll.u32 %v4393, 16
      %v4757 = vrot.slane %v4755, 5
      %v4758 = vsel %vm1604, %v4753, %v4757
      %v4759 = vshrl.u32 %v4393, 16
      %v4761 = vrot.slane %v4759, 4
      %v4762 = vor.u32 %v4761, %v4757
      %v4763 = vrot.slane %v4762, 4
      %v4765 = vshll.u32 %v4394, 16
      %v4767 = vrot.slane %v4765, 5
      %v4768 = vsel %vm1604, %v4763, %v4767
      %v4770 = vshrl.u32 %v4395, 16
      %v4772 = vrot.slane %v4770, 4
      %v4773 = vshll.u32 %v4395, 16
      %v4775 = vrot.slane %v4773, 5
      %v4776 = vor.u32 %v4772, %v4775
      %v4777 = vrot.slane %v4776, 4
      %v4779 = vshll.u32 %v4396, 16
      %v4781 = vrot.slane %v4779, 5
      %v4782 = vsel %vm1604, %v4777, %v4781
      %v4783 = vshrl.u32 %v4396, 16
      %v4785 = vrot.slane %v4783, 4
      %v4786 = vor.u32 %v4785, %v4781
      %v4787 = vrot.slane %v4786, 4
      %v4789 = vshll.u32 %v4397, 16
      %v4791 = vrot.slane %v4789, 5
      %v4792 = vsel %vm1604, %v4787, %v4791
      %v4794 = vshrl.u32 %v4398, 16
      %v4796 = vrot.slane %v4794, 4
      %v4797 = vshll.u32 %v4398, 16
      %v4799 = vrot.slane %v4797, 5
      %v4800 = vor.u32 %v4796, %v4799
      %v4801 = vrot.slane %v4800, 4
      %v4803 = vshll.u32 %v4399, 16
      %v4805 = vrot.slane %v4803, 5
      %v4806 = vsel %vm1604, %v4801, %v4805
      %v4807 = vshrl.u32 %v4399, 16
      %v4809 = vrot.slane %v4807, 4
      %v4810 = vor.u32 %v4809, %v4805
      %v4811 = vrot.slane %v4810, 4
      %v4813 = vshll.u32 %v4400, 16
      %v4815 = vrot.slane %v4813, 5
      %v4816 = vsel %vm1604, %v4811, %v4815
      %4817 = vrot.lane.b32.xlu0 %v4446, 64
      %v4818 = vpop.permute.xlu0 %4817
      %4819 = vrot.lane.b32.xlu0 %v4456, 64
      %v4820 = vpop.permute.xlu0 %4819
      %4821 = vrot.lane.b32.xlu0 %v4470, 64
      %v4822 = vpop.permute.xlu0 %4821
      %4823 = vrot.lane.b32.xlu0 %v4480, 64
      %v4824 = vpop.permute.xlu0 %4823
      %4825 = vrot.lane.b32.xlu0 %v4494, 64
      %v4826 = vpop.permute.xlu0 %4825
      %4827 = vrot.lane.b32.xlu0 %v4504, 64
      %v4828 = vpop.permute.xlu0 %4827
      %4829 = vrot.lane.b32.xlu0 %v4518, 64
      %v4830 = vpop.permute.xlu0 %4829
      %4831 = vrot.lane.b32.xlu0 %v4528, 64
      %v4832 = vpop.permute.xlu0 %4831
      %4833 = vrot.lane.b32.xlu0 %v4542, 64
      %v4834 = vpop.permute.xlu0 %4833
      %4835 = vrot.lane.b32.xlu0 %v4552, 64
      %v4836 = vpop.permute.xlu0 %4835
      %4837 = vrot.lane.b32.xlu0 %v4566, 64
      %v4838 = vpop.permute.xlu0 %4837
      %4839 = vrot.lane.b32.xlu0 %v4576, 64
      %v4840 = vpop.permute.xlu0 %4839
      %4841 = vrot.lane.b32.xlu0 %v4590, 64
      %v4842 = vpop.permute.xlu0 %4841
      %4843 = vrot.lane.b32.xlu0 %v4600, 64
      %v4844 = vpop.permute.xlu0 %4843
      %4845 = vrot.lane.b32.xlu0 %v4614, 64
      %v4846 = vpop.permute.xlu0 %4845
      %4847 = vrot.lane.b32.xlu0 %v4624, 64
      %v4848 = vpop.permute.xlu0 %4847
      %4849 = vrot.lane.b32.xlu0 %v4638, 64
      %v4850 = vpop.permute.xlu0 %4849
      %4851 = vrot.lane.b32.xlu0 %v4648, 64
      %v4852 = vpop.permute.xlu0 %4851
      %4853 = vrot.lane.b32.xlu0 %v4662, 64
      %v4854 = vpop.permute.xlu0 %4853
      %4855 = vrot.lane.b32.xlu0 %v4672, 64
      %v4856 = vpop.permute.xlu0 %4855
      %4857 = vrot.lane.b32.xlu0 %v4686, 64
      %v4858 = vpop.permute.xlu0 %4857
      %4859 = vrot.lane.b32.xlu0 %v4696, 64
      %v4860 = vpop.permute.xlu0 %4859
      %4861 = vrot.lane.b32.xlu0 %v4710, 64
      %v4862 = vpop.permute.xlu0 %4861
      %4863 = vrot.lane.b32.xlu0 %v4720, 64
      %v4864 = vpop.permute.xlu0 %4863
      %4865 = vrot.lane.b32.xlu0 %v4734, 64
      %v4866 = vpop.permute.xlu0 %4865
      %4867 = vrot.lane.b32.xlu0 %v4744, 64
      %v4868 = vpop.permute.xlu0 %4867
      %4869 = vrot.lane.b32.xlu0 %v4758, 64
      %v4870 = vpop.permute.xlu0 %4869
      %4871 = vrot.lane.b32.xlu0 %v4768, 64
      %v4872 = vpop.permute.xlu0 %4871
      %4873 = vrot.lane.b32.xlu0 %v4782, 64
      %v4874 = vpop.permute.xlu0 %4873
      %4875 = vrot.lane.b32.xlu0 %v4792, 64
      %v4876 = vpop.permute.xlu0 %4875
      %4877 = vrot.lane.b32.xlu0 %v4806, 64
      %v4878 = vpop.permute.xlu0 %4877
      %4879 = vrot.lane.b32.xlu0 %v4816, 64
      %v4880 = vpop.permute.xlu0 %4879
      %4913 = vst.msk [vmem:[#allocation3 + $0x14] sm:$0xf] %vm2085, %v4818
      %4914 = vst.msk [vmem:[#allocation3 + $0x48] sm:$0xf] %vm2085, %v4820
      %4915 = vst.msk [vmem:[#allocation3 + $0x7c] sm:$0xf] %vm2085, %v4822
      %4916 = vst.msk [vmem:[#allocation3 + $0xb0] sm:$0xf] %vm2085, %v4824
      %4917 = vst.msk [vmem:[#allocation3 + $0xe4] sm:$0xf] %vm2085, %v4826
      %4918 = vst.msk [vmem:[#allocation3 + $0x118] sm:$0xf] %vm2085, %v4828
      %4919 = vst.msk [vmem:[#allocation3 + $0x14c] sm:$0xf] %vm2085, %v4830
      %4920 = vst.msk [vmem:[#allocation3 + $0x180] sm:$0xf] %vm2085, %v4832
      %4921 = vst.msk [vmem:[#allocation3 + $0x1b4] sm:$0xf] %vm2085, %v4834
      %4922 = vst.msk [vmem:[#allocation3 + $0x1e8] sm:$0xf] %vm2085, %v4836
      %4923 = vst.msk [vmem:[#allocation3 + $0x21c] sm:$0xf] %vm2085, %v4838
      %4924 = vst.msk [vmem:[#allocation3 + $0x250] sm:$0xf] %vm2085, %v4840
      %4925 = vst.msk [vmem:[#allocation3 + $0x284] sm:$0xf] %vm2085, %v4842
      %4926 = vst.msk [vmem:[#allocation3 + $0x2b8] sm:$0xf] %vm2085, %v4844
      %4927 = vst.msk [vmem:[#allocation3 + $0x2ec] sm:$0xf] %vm2085, %v4846
      %4928 = vst.msk [vmem:[#allocation3 + $0x320] sm:$0xf] %vm2085, %v4848
      %4929 = vst.msk [vmem:[#allocation3 + $0x354] sm:$0xf] %vm2085, %v4850
      %4930 = vst.msk [vmem:[#allocation3 + $0x388] sm:$0xf] %vm2085, %v4852
      %4931 = vst.msk [vmem:[#allocation3 + $0x3bc] sm:$0xf] %vm2085, %v4854
      %4932 = vst.msk [vmem:[#allocation3 + $0x3f0] sm:$0xf] %vm2085, %v4856
      %4933 = vst.msk [vmem:[#allocation3 + $0x424] sm:$0xf] %vm2085, %v4858
      %4934 = vst.msk [vmem:[#allocation3 + $0x458] sm:$0xf] %vm2085, %v4860
      %4935 = vst.msk [vmem:[#allocation3 + $0x48c] sm:$0xf] %vm2085, %v4862
      %4936 = vst.msk [vmem:[#allocation3 + $0x4c0] sm:$0xf] %vm2085, %v4864
      %4937 = vst.msk [vmem:[#allocation3 + $0x4f4] sm:$0xf] %vm2085, %v4866
      %4938 = vst.msk [vmem:[#allocation3 + $0x528] sm:$0xf] %vm2085, %v4868
      %4939 = vst.msk [vmem:[#allocation3 + $0x55c] sm:$0xf] %vm2085, %v4870
      %4940 = vst.msk [vmem:[#allocation3 + $0x590] sm:$0xf] %vm2085, %v4872
      %4941 = vst.msk [vmem:[#allocation3 + $0x5c4] sm:$0xf] %vm2085, %v4874
      %4942 = vst.msk [vmem:[#allocation3 + $0x5f8] sm:$0xf] %vm2085, %v4876
      %4943 = vst.msk [vmem:[#allocation3 + $0x62c] sm:$0xf] %vm2085, %v4878
      %4944 = vst.msk [vmem:[#allocation3 + $0x660] sm:$0xf] %vm2085, %v4880
      %v4993 = vrot.slane %v4353, 5
      %v4994 = vrot.slane %v4993, 4
      %v4995 = vrot.slane %v4354, 5
      %v4996 = vsel %vm2168, %v4994, %v4995
      %v4997 = vrot.slane %v4995, 4
      %v4998 = vrot.slane %v4355, 5
      %v4999 = vsel %vm2168, %v4997, %v4998
      %v5000 = vrot.slane %v4356, 5
      %v5001 = vrot.slane %v5000, 4
      %v5002 = vrot.slane %v4357, 5
      %v5003 = vsel %vm2168, %v5001, %v5002
      %v5004 = vrot.slane %v5002, 4
      %v5005 = vrot.slane %v4358, 5
      %v5006 = vsel %vm2168, %v5004, %v5005
      %v5007 = vrot.slane %v4359, 5
      %v5008 = vrot.slane %v5007, 4
      %v5009 = vrot.slane %v4360, 5
      %v5010 = vsel %vm2168, %v5008, %v5009
      %v5011 = vrot.slane %v5009, 4
      %v5012 = vrot.slane %v4361, 5
      %v5013 = vsel %vm2168, %v5011, %v5012
      %v5014 = vrot.slane %v4362, 5
      %v5015 = vrot.slane %v5014, 4
      %v5016 = vrot.slane %v4363, 5
      %v5017 = vsel %vm2168, %v5015, %v5016
      %v5018 = vrot.slane %v5016, 4
      %v5019 = vrot.slane %v4364, 5
      %v5020 = vsel %vm2168, %v5018, %v5019
      %v5021 = vrot.slane %v4365, 5
      %v5022 = vrot.slane %v5021, 4
      %v5023 = vrot.slane %v4366, 5
      %v5024 = vsel %vm2168, %v5022, %v5023
      %v5025 = vrot.slane %v5023, 4
      %v5026 = vrot.slane %v4367, 5
      %v5027 = vsel %vm2168, %v5025, %v5026
      %v5028 = vrot.slane %v4368, 5
      %v5029 = vrot.slane %v5028, 4
      %v5030 = vrot.slane %v4369, 5
      %v5031 = vsel %vm2168, %v5029, %v5030
      %v5032 = vrot.slane %v5030, 4
      %v5033 = vrot.slane %v4370, 5
      %v5034 = vsel %vm2168, %v5032, %v5033
      %v5035 = vrot.slane %v4371, 5
      %v5036 = vrot.slane %v5035, 4
      %v5037 = vrot.slane %v4372, 5
      %v5038 = vsel %vm2168, %v5036, %v5037
      %v5039 = vrot.slane %v5037, 4
      %v5040 = vrot.slane %v4373, 5
      %v5041 = vsel %vm2168, %v5039, %v5040
      %v5042 = vrot.slane %v4374, 5
      %v5043 = vrot.slane %v5042, 4
      %v5044 = vrot.slane %v4375, 5
      %v5045 = vsel %vm2168, %v5043, %v5044
      %v5046 = vrot.slane %v5044, 4
      %v5047 = vrot.slane %v4376, 5
      %v5048 = vsel %vm2168, %v5046, %v5047
      %v5049 = vrot.slane %v4377, 5
      %v5050 = vrot.slane %v5049, 4
      %v5051 = vrot.slane %v4378, 5
      %v5052 = vsel %vm2168, %v5050, %v5051
      %v5053 = vrot.slane %v5051, 4
      %v5054 = vrot.slane %v4379, 5
      %v5055 = vsel %vm2168, %v5053, %v5054
      %v5056 = vrot.slane %v4380, 5
      %v5057 = vrot.slane %v5056, 4
      %v5058 = vrot.slane %v4381, 5
      %v5059 = vsel %vm2168, %v5057, %v5058
      %v5060 = vrot.slane %v5058, 4
      %v5061 = vrot.slane %v4382, 5
      %v5062 = vsel %vm2168, %v5060, %v5061
      %v5063 = vrot.slane %v4383, 5
      %v5064 = vrot.slane %v5063, 4
      %v5065 = vrot.slane %v4384, 5
      %v5066 = vsel %vm2168, %v5064, %v5065
      %v5067 = vrot.slane %v5065, 4
      %v5068 = vrot.slane %v4385, 5
      %v5069 = vsel %vm2168, %v5067, %v5068
      %v5070 = vrot.slane %v4386, 5
      %v5071 = vrot.slane %v5070, 4
      %v5072 = vrot.slane %v4387, 5
      %v5073 = vsel %vm2168, %v5071, %v5072
      %v5074 = vrot.slane %v5072, 4
      %v5075 = vrot.slane %v4388, 5
      %v5076 = vsel %vm2168, %v5074, %v5075
      %v5077 = vrot.slane %v4389, 5
      %v5078 = vrot.slane %v5077, 4
      %v5079 = vrot.slane %v4390, 5
      %v5080 = vsel %vm2168, %v5078, %v5079
      %v5081 = vrot.slane %v5079, 4
      %v5082 = vrot.slane %v4391, 5
      %v5083 = vsel %vm2168, %v5081, %v5082
      %v5084 = vrot.slane %v4392, 5
      %v5085 = vrot.slane %v5084, 4
      %v5086 = vrot.slane %v4393, 5
      %v5087 = vsel %vm2168, %v5085, %v5086
      %v5088 = vrot.slane %v5086, 4
      %v5089 = vrot.slane %v4394, 5
      %v5090 = vsel %vm2168, %v5088, %v5089
      %v5091 = vrot.slane %v4395, 5
      %v5092 = vrot.slane %v5091, 4
      %v5093 = vrot.slane %v4396, 5
      %v5094 = vsel %vm2168, %v5092, %v5093
      %v5095 = vrot.slane %v5093, 4
      %v5096 = vrot.slane %v4397, 5
      %v5097 = vsel %vm2168, %v5095, %v5096
      %v5098 = vrot.slane %v4398, 5
      %v5099 = vrot.slane %v5098, 4
      %v5100 = vrot.slane %v4399, 5
      %v5101 = vsel %vm2168, %v5099, %v5100
      %v5102 = vrot.slane %v5100, 4
      %v5103 = vrot.slane %v4400, 5
      %v5104 = vsel %vm2168, %v5102, %v5103
      %5137 = vst.msk [vmem:[#allocation3 + $0x18] sm:$0xf] %vm1261, %v4996
      %5138 = vst.msk [vmem:[#allocation3 + $0x4c] sm:$0xf] %vm1261, %v4999
      %5139 = vst.msk [vmem:[#allocation3 + $0x80] sm:$0xf] %vm1261, %v5003
      %5140 = vst.msk [vmem:[#allocation3 + $0xb4] sm:$0xf] %vm1261, %v5006
      %5141 = vst.msk [vmem:[#allocation3 + $0xe8] sm:$0xf] %vm1261, %v5010
      %5142 = vst.msk [vmem:[#allocation3 + $0x11c] sm:$0xf] %vm1261, %v5013
      %5143 = vst.msk [vmem:[#allocation3 + $0x150] sm:$0xf] %vm1261, %v5017
      %5144 = vst.msk [vmem:[#allocation3 + $0x184] sm:$0xf] %vm1261, %v5020
      %5145 = vst.msk [vmem:[#allocation3 + $0x1b8] sm:$0xf] %vm1261, %v5024
      %5146 = vst.msk [vmem:[#allocation3 + $0x1ec] sm:$0xf] %vm1261, %v5027
      %5147 = vst.msk [vmem:[#allocation3 + $0x220] sm:$0xf] %vm1261, %v5031
      %5148 = vst.msk [vmem:[#allocation3 + $0x254] sm:$0xf] %vm1261, %v5034
      %5149 = vst.msk [vmem:[#allocation3 + $0x288] sm:$0xf] %vm1261, %v5038
      %5150 = vst.msk [vmem:[#allocation3 + $0x2bc] sm:$0xf] %vm1261, %v5041
      %5151 = vst.msk [vmem:[#allocation3 + $0x2f0] sm:$0xf] %vm1261, %v5045
      %5152 = vst.msk [vmem:[#allocation3 + $0x324] sm:$0xf] %vm1261, %v5048
      %5153 = vst.msk [vmem:[#allocation3 + $0x358] sm:$0xf] %vm1261, %v5052
      %5154 = vst.msk [vmem:[#allocation3 + $0x38c] sm:$0xf] %vm1261, %v5055
      %5155 = vst.msk [vmem:[#allocation3 + $0x3c0] sm:$0xf] %vm1261, %v5059
      %5156 = vst.msk [vmem:[#allocation3 + $0x3f4] sm:$0xf] %vm1261, %v5062
      %5157 = vst.msk [vmem:[#allocation3 + $0x428] sm:$0xf] %vm1261, %v5066
      %5158 = vst.msk [vmem:[#allocation3 + $0x45c] sm:$0xf] %vm1261, %v5069
      %5159 = vst.msk [vmem:[#allocation3 + $0x490] sm:$0xf] %vm1261, %v5073
      %5160 = vst.msk [vmem:[#allocation3 + $0x4c4] sm:$0xf] %vm1261, %v5076
      %5161 = vst.msk [vmem:[#allocation3 + $0x4f8] sm:$0xf] %vm1261, %v5080
      %5162 = vst.msk [vmem:[#allocation3 + $0x52c] sm:$0xf] %vm1261, %v5083
      %5163 = vst.msk [vmem:[#allocation3 + $0x560] sm:$0xf] %vm1261, %v5087
      %5164 = vst.msk [vmem:[#allocation3 + $0x594] sm:$0xf] %vm1261, %v5090
      %5165 = vst.msk [vmem:[#allocation3 + $0x5c8] sm:$0xf] %vm1261, %v5094
      %5166 = vst.msk [vmem:[#allocation3 + $0x5fc] sm:$0xf] %vm1261, %v5097
      %5167 = vst.msk [vmem:[#allocation3 + $0x630] sm:$0xf] %vm1261, %v5101
      %5168 = vst.msk [vmem:[#allocation3 + $0x664] sm:$0xf] %vm1261, %v5104
      %v5169 = vrot.slane %v4434, 5
      %v5170 = vrot.slane %v4437, 6
      %v5171 = vor.u32 %v5169, %v5170
      %v5172 = vrot.slane %v5171, 4
      %v5173 = vrot.slane %v4447, 5
      %v5174 = vrot.slane %v4443, 6
      %v5175 = vor.u32 %v5173, %v5174
      %v5176 = vsel %vm2347, %v5172, %v5175
      %v5177 = vrot.slane %v5175, 4
      %v5178 = vshrl.u32 %v4355, 16
      %v5180 = vrot.slane %v5178, 5
      %v5181 = vrot.slane %v4453, 6
      %v5182 = vor.u32 %v5180, %v5181
      %v5183 = vsel %vm2347, %v5177, %v5182
      %v5184 = vrot.slane %v4458, 5
      %v5185 = vrot.slane %v4461, 6
      %v5186 = vor.u32 %v5184, %v5185
      %v5187 = vrot.slane %v5186, 4
      %v5188 = vrot.slane %v4471, 5
      %v5189 = vrot.slane %v4467, 6
      %v5190 = vor.u32 %v5188, %v5189
      %v5191 = vsel %vm2347, %v5187, %v5190
      %v5192 = vrot.slane %v5190, 4
      %v5193 = vshrl.u32 %v4358, 16
      %v5195 = vrot.slane %v5193, 5
      %v5196 = vrot.slane %v4477, 6
      %v5197 = vor.u32 %v5195, %v5196
      %v5198 = vsel %vm2347, %v5192, %v5197
      %v5199 = vrot.slane %v4482, 5
      %v5200 = vrot.slane %v4485, 6
      %v5201 = vor.u32 %v5199, %v5200
      %v5202 = vrot.slane %v5201, 4
      %v5203 = vrot.slane %v4495, 5
      %v5204 = vrot.slane %v4491, 6
      %v5205 = vor.u32 %v5203, %v5204
      %v5206 = vsel %vm2347, %v5202, %v5205
      %v5207 = vrot.slane %v5205, 4
      %v5208 = vshrl.u32 %v4361, 16
      %v5210 = vrot.slane %v5208, 5
      %v5211 = vrot.slane %v4501, 6
      %v5212 = vor.u32 %v5210, %v5211
      %v5213 = vsel %vm2347, %v5207, %v5212
      %v5214 = vrot.slane %v4506, 5
      %v5215 = vrot.slane %v4509, 6
      %v5216 = vor.u32 %v5214, %v5215
      %v5217 = vrot.slane %v5216, 4
      %v5218 = vrot.slane %v4519, 5
      %v5219 = vrot.slane %v4515, 6
      %v5220 = vor.u32 %v5218, %v5219
      %v5221 = vsel %vm2347, %v5217, %v5220
      %v5222 = vrot.slane %v5220, 4
      %v5223 = vshrl.u32 %v4364, 16
      %v5225 = vrot.slane %v5223, 5
      %v5226 = vrot.slane %v4525, 6
      %v5227 = vor.u32 %v5225, %v5226
      %v5228 = vsel %vm2347, %v5222, %v5227
      %v5229 = vrot.slane %v4530, 5
      %v5230 = vrot.slane %v4533, 6
      %v5231 = vor.u32 %v5229, %v5230
      %v5232 = vrot.slane %v5231, 4
      %v5233 = vrot.slane %v4543, 5
      %v5234 = vrot.slane %v4539, 6
      %v5235 = vor.u32 %v5233, %v5234
      %v5236 = vsel %vm2347, %v5232, %v5235
      %v5237 = vrot.slane %v5235, 4
      %v5238 = vshrl.u32 %v4367, 16
      %v5240 = vrot.slane %v5238, 5
      %v5241 = vrot.slane %v4549, 6
      %v5242 = vor.u32 %v5240, %v5241
      %v5243 = vsel %vm2347, %v5237, %v5242
      %v5244 = vrot.slane %v4554, 5
      %v5245 = vrot.slane %v4557, 6
      %v5246 = vor.u32 %v5244, %v5245
      %v5247 = vrot.slane %v5246, 4
      %v5248 = vrot.slane %v4567, 5
      %v5249 = vrot.slane %v4563, 6
      %v5250 = vor.u32 %v5248, %v5249
      %v5251 = vsel %vm2347, %v5247, %v5250
      %v5252 = vrot.slane %v5250, 4
      %v5253 = vshrl.u32 %v4370, 16
      %v5255 = vrot.slane %v5253, 5
      %v5256 = vrot.slane %v4573, 6
      %v5257 = vor.u32 %v5255, %v5256
      %v5258 = vsel %vm2347, %v5252, %v5257
      %v5259 = vrot.slane %v4578, 5
      %v5260 = vrot.slane %v4581, 6
      %v5261 = vor.u32 %v5259, %v5260
      %v5262 = vrot.slane %v5261, 4
      %v5263 = vrot.slane %v4591, 5
      %v5264 = vrot.slane %v4587, 6
      %v5265 = vor.u32 %v5263, %v5264
      %v5266 = vsel %vm2347, %v5262, %v5265
      %v5267 = vrot.slane %v5265, 4
      %v5268 = vshrl.u32 %v4373, 16
      %v5270 = vrot.slane %v5268, 5
      %v5271 = vrot.slane %v4597, 6
      %v5272 = vor.u32 %v5270, %v5271
      %v5273 = vsel %vm2347, %v5267, %v5272
      %v5274 = vrot.slane %v4602, 5
      %v5275 = vrot.slane %v4605, 6
      %v5276 = vor.u32 %v5274, %v5275
      %v5277 = vrot.slane %v5276, 4
      %v5278 = vrot.slane %v4615, 5
      %v5279 = vrot.slane %v4611, 6
      %v5280 = vor.u32 %v5278, %v5279
      %v5281 = vsel %vm2347, %v5277, %v5280
      %v5282 = vrot.slane %v5280, 4
      %v5283 = vshrl.u32 %v4376, 16
      %v5285 = vrot.slane %v5283, 5
      %v5286 = vrot.slane %v4621, 6
      %v5287 = vor.u32 %v5285, %v5286
      %v5288 = vsel %vm2347, %v5282, %v5287
      %v5289 = vrot.slane %v4626, 5
      %v5290 = vrot.slane %v4629, 6
      %v5291 = vor.u32 %v5289, %v5290
      %v5292 = vrot.slane %v5291, 4
      %v5293 = vrot.slane %v4639, 5
      %v5294 = vrot.slane %v4635, 6
      %v5295 = vor.u32 %v5293, %v5294
      %v5296 = vsel %vm2347, %v5292, %v5295
      %v5297 = vrot.slane %v5295, 4
      %v5298 = vshrl.u32 %v4379, 16
      %v5300 = vrot.slane %v5298, 5
      %v5301 = vrot.slane %v4645, 6
      %v5302 = vor.u32 %v5300, %v5301
      %v5303 = vsel %vm2347, %v5297, %v5302
      %v5304 = vrot.slane %v4650, 5
      %v5305 = vrot.slane %v4653, 6
      %v5306 = vor.u32 %v5304, %v5305
      %v5307 = vrot.slane %v5306, 4
      %v5308 = vrot.slane %v4663, 5
      %v5309 = vrot.slane %v4659, 6
      %v5310 = vor.u32 %v5308, %v5309
      %v5311 = vsel %vm2347, %v5307, %v5310
      %v5312 = vrot.slane %v5310, 4
      %v5313 = vshrl.u32 %v4382, 16
      %v5315 = vrot.slane %v5313, 5
      %v5316 = vrot.slane %v4669, 6
      %v5317 = vor.u32 %v5315, %v5316
      %v5318 = vsel %vm2347, %v5312, %v5317
      %v5319 = vrot.slane %v4674, 5
      %v5320 = vrot.slane %v4677, 6
      %v5321 = vor.u32 %v5319, %v5320
      %v5322 = vrot.slane %v5321, 4
      %v5323 = vrot.slane %v4687, 5
      %v5324 = vrot.slane %v4683, 6
      %v5325 = vor.u32 %v5323, %v5324
      %v5326 = vsel %vm2347, %v5322, %v5325
      %v5327 = vrot.slane %v5325, 4
      %v5328 = vshrl.u32 %v4385, 16
      %v5330 = vrot.slane %v5328, 5
      %v5331 = vrot.slane %v4693, 6
      %v5332 = vor.u32 %v5330, %v5331
      %v5333 = vsel %vm2347, %v5327, %v5332
      %v5334 = vrot.slane %v4698, 5
      %v5335 = vrot.slane %v4701, 6
      %v5336 = vor.u32 %v5334, %v5335
      %v5337 = vrot.slane %v5336, 4
      %v5338 = vrot.slane %v4711, 5
      %v5339 = vrot.slane %v4707, 6
      %v5340 = vor.u32 %v5338, %v5339
      %v5341 = vsel %vm2347, %v5337, %v5340
      %v5342 = vrot.slane %v5340, 4
      %v5343 = vshrl.u32 %v4388, 16
      %v5345 = vrot.slane %v5343, 5
      %v5346 = vrot.slane %v4717, 6
      %v5347 = vor.u32 %v5345, %v5346
      %v5348 = vsel %vm2347, %v5342, %v5347
      %v5349 = vrot.slane %v4722, 5
      %v5350 = vrot.slane %v4725, 6
      %v5351 = vor.u32 %v5349, %v5350
      %v5352 = vrot.slane %v5351, 4
      %v5353 = vrot.slane %v4735, 5
      %v5354 = vrot.slane %v4731, 6
      %v5355 = vor.u32 %v5353, %v5354
      %v5356 = vsel %vm2347, %v5352, %v5355
      %v5357 = vrot.slane %v5355, 4
      %v5358 = vshrl.u32 %v4391, 16
      %v5360 = vrot.slane %v5358, 5
      %v5361 = vrot.slane %v4741, 6
      %v5362 = vor.u32 %v5360, %v5361
      %v5363 = vsel %vm2347, %v5357, %v5362
      %v5364 = vrot.slane %v4746, 5
      %v5365 = vrot.slane %v4749, 6
      %v5366 = vor.u32 %v5364, %v5365
      %v5367 = vrot.slane %v5366, 4
      %v5368 = vrot.slane %v4759, 5
      %v5369 = vrot.slane %v4755, 6
      %v5370 = vor.u32 %v5368, %v5369
      %v5371 = vsel %vm2347, %v5367, %v5370
      %v5372 = vrot.slane %v5370, 4
      %v5373 = vshrl.u32 %v4394, 16
      %v5375 = vrot.slane %v5373, 5
      %v5376 = vrot.slane %v4765, 6
      %v5377 = vor.u32 %v5375, %v5376
      %v5378 = vsel %vm2347, %v5372, %v5377
      %v5379 = vrot.slane %v4770, 5
      %v5380 = vrot.slane %v4773, 6
      %v5381 = vor.u32 %v5379, %v5380
      %v5382 = vrot.slane %v5381, 4
      %v5383 = vrot.slane %v4783, 5
      %v5384 = vrot.slane %v4779, 6
      %v5385 = vor.u32 %v5383, %v5384
      %v5386 = vsel %vm2347, %v5382, %v5385
      %v5387 = vrot.slane %v5385, 4
      %v5388 = vshrl.u32 %v4397, 16
      %v5390 = vrot.slane %v5388, 5
      %v5391 = vrot.slane %v4789, 6
      %v5392 = vor.u32 %v5390, %v5391
      %v5393 = vsel %vm2347, %v5387, %v5392
      %v5394 = vrot.slane %v4794, 5
      %v5395 = vrot.slane %v4797, 6
      %v5396 = vor.u32 %v5394, %v5395
      %v5397 = vrot.slane %v5396, 4
      %v5398 = vrot.slane %v4807, 5
      %v5399 = vrot.slane %v4803, 6
      %v5400 = vor.u32 %v5398, %v5399
      %v5401 = vsel %vm2347, %v5397, %v5400
      %v5402 = vrot.slane %v5400, 4
      %v5403 = vshrl.u32 %v4400, 16
      %v5405 = vrot.slane %v5403, 5
      %v5406 = vrot.slane %v4813, 6
      %v5407 = vor.u32 %v5405, %v5406
      %v5408 = vsel %vm2347, %v5402, %v5407
      %5409 = vrot.lane.b32.xlu0 %v5176, 64
      %v5410 = vpop.permute.xlu0 %5409
      %5411 = vrot.lane.b32.xlu0 %v5183, 64
      %v5412 = vpop.permute.xlu0 %5411
      %5413 = vrot.lane.b32.xlu0 %v5191, 64
      %v5414 = vpop.permute.xlu0 %5413
      %5415 = vrot.lane.b32.xlu0 %v5198, 64
      %v5416 = vpop.permute.xlu0 %5415
      %5417 = vrot.lane.b32.xlu0 %v5206, 64
      %v5418 = vpop.permute.xlu0 %5417
      %5419 = vrot.lane.b32.xlu0 %v5213, 64
      %v5420 = vpop.permute.xlu0 %5419
      %5421 = vrot.lane.b32.xlu0 %v5221, 64
      %v5422 = vpop.permute.xlu0 %5421
      %5423 = vrot.lane.b32.xlu0 %v5228, 64
      %v5424 = vpop.permute.xlu0 %5423
      %5425 = vrot.lane.b32.xlu0 %v5236, 64
      %v5426 = vpop.permute.xlu0 %5425
      %5427 = vrot.lane.b32.xlu0 %v5243, 64
      %v5428 = vpop.permute.xlu0 %5427
      %5429 = vrot.lane.b32.xlu0 %v5251, 64
      %v5430 = vpop.permute.xlu0 %5429
      %5431 = vrot.lane.b32.xlu0 %v5258, 64
      %v5432 = vpop.permute.xlu0 %5431
      %5433 = vrot.lane.b32.xlu0 %v5266, 64
      %v5434 = vpop.permute.xlu0 %5433
      %5435 = vrot.lane.b32.xlu0 %v5273, 64
      %v5436 = vpop.permute.xlu0 %5435
      %5437 = vrot.lane.b32.xlu0 %v5281, 64
      %v5438 = vpop.permute.xlu0 %5437
      %5439 = vrot.lane.b32.xlu0 %v5288, 64
      %v5440 = vpop.permute.xlu0 %5439
      %5441 = vrot.lane.b32.xlu0 %v5296, 64
      %v5442 = vpop.permute.xlu0 %5441
      %5443 = vrot.lane.b32.xlu0 %v5303, 64
      %v5444 = vpop.permute.xlu0 %5443
      %5445 = vrot.lane.b32.xlu0 %v5311, 64
      %v5446 = vpop.permute.xlu0 %5445
      %5447 = vrot.lane.b32.xlu0 %v5318, 64
      %v5448 = vpop.permute.xlu0 %5447
      %5449 = vrot.lane.b32.xlu0 %v5326, 64
      %v5450 = vpop.permute.xlu0 %5449
      %5451 = vrot.lane.b32.xlu0 %v5333, 64
      %v5452 = vpop.permute.xlu0 %5451
      %5453 = vrot.lane.b32.xlu0 %v5341, 64
      %v5454 = vpop.permute.xlu0 %5453
      %5455 = vrot.lane.b32.xlu0 %v5348, 64
      %v5456 = vpop.permute.xlu0 %5455
      %5457 = vrot.lane.b32.xlu0 %v5356, 64
      %v5458 = vpop.permute.xlu0 %5457
      %5459 = vrot.lane.b32.xlu0 %v5363, 64
      %v5460 = vpop.permute.xlu0 %5459
      %5461 = vrot.lane.b32.xlu0 %v5371, 64
      %v5462 = vpop.permute.xlu0 %5461
      %5463 = vrot.lane.b32.xlu0 %v5378, 64
      %v5464 = vpop.permute.xlu0 %5463
      %5465 = vrot.lane.b32.xlu0 %v5386, 64
      %v5466 = vpop.permute.xlu0 %5465
      %5467 = vrot.lane.b32.xlu0 %v5393, 64
      %v5468 = vpop.permute.xlu0 %5467
      %5469 = vrot.lane.b32.xlu0 %v5401, 64
      %v5470 = vpop.permute.xlu0 %5469
      %5471 = vrot.lane.b32.xlu0 %v5408, 64
      %v5472 = vpop.permute.xlu0 %5471
      %5505 = vst.msk [vmem:[#allocation3 + $0x18] sm:$0xf] %vm2085, %v5410
      %5506 = vst.msk [vmem:[#allocation3 + $0x4c] sm:$0xf] %vm2085, %v5412
      %5507 = vst.msk [vmem:[#allocation3 + $0x80] sm:$0xf] %vm2085, %v5414
      %5508 = vst.msk [vmem:[#allocation3 + $0xb4] sm:$0xf] %vm2085, %v5416
      %5509 = vst.msk [vmem:[#allocation3 + $0xe8] sm:$0xf] %vm2085, %v5418
      %5510 = vst.msk [vmem:[#allocation3 + $0x11c] sm:$0xf] %vm2085, %v5420
      %5511 = vst.msk [vmem:[#allocation3 + $0x150] sm:$0xf] %vm2085, %v5422
      %5512 = vst.msk [vmem:[#allocation3 + $0x184] sm:$0xf] %vm2085, %v5424
      %5513 = vst.msk [vmem:[#allocation3 + $0x1b8] sm:$0xf] %vm2085, %v5426
      %5514 = vst.msk [vmem:[#allocation3 + $0x1ec] sm:$0xf] %vm2085, %v5428
      %5515 = vst.msk [vmem:[#allocation3 + $0x220] sm:$0xf] %vm2085, %v5430
      %5516 = vst.msk [vmem:[#allocation3 + $0x254] sm:$0xf] %vm2085, %v5432
      %5517 = vst.msk [vmem:[#allocation3 + $0x288] sm:$0xf] %vm2085, %v5434
      %5518 = vst.msk [vmem:[#allocation3 + $0x2bc] sm:$0xf] %vm2085, %v5436
      %5519 = vst.msk [vmem:[#allocation3 + $0x2f0] sm:$0xf] %vm2085, %v5438
      %5520 = vst.msk [vmem:[#allocation3 + $0x324] sm:$0xf] %vm2085, %v5440
      %5521 = vst.msk [vmem:[#allocation3 + $0x358] sm:$0xf] %vm2085, %v5442
      %5522 = vst.msk [vmem:[#allocation3 + $0x38c] sm:$0xf] %vm2085, %v5444
      %5523 = vst.msk [vmem:[#allocation3 + $0x3c0] sm:$0xf] %vm2085, %v5446
      %5524 = vst.msk [vmem:[#allocation3 + $0x3f4] sm:$0xf] %vm2085, %v5448
      %5525 = vst.msk [vmem:[#allocation3 + $0x428] sm:$0xf] %vm2085, %v5450
      %5526 = vst.msk [vmem:[#allocation3 + $0x45c] sm:$0xf] %vm2085, %v5452
      %5527 = vst.msk [vmem:[#allocation3 + $0x490] sm:$0xf] %vm2085, %v5454
      %5528 = vst.msk [vmem:[#allocation3 + $0x4c4] sm:$0xf] %vm2085, %v5456
      %5529 = vst.msk [vmem:[#allocation3 + $0x4f8] sm:$0xf] %vm2085, %v5458
      %5530 = vst.msk [vmem:[#allocation3 + $0x52c] sm:$0xf] %vm2085, %v5460
      %5531 = vst.msk [vmem:[#allocation3 + $0x560] sm:$0xf] %vm2085, %v5462
      %5532 = vst.msk [vmem:[#allocation3 + $0x594] sm:$0xf] %vm2085, %v5464
      %5533 = vst.msk [vmem:[#allocation3 + $0x5c8] sm:$0xf] %vm2085, %v5466
      %5534 = vst.msk [vmem:[#allocation3 + $0x5fc] sm:$0xf] %vm2085, %v5468
      %5535 = vst.msk [vmem:[#allocation3 + $0x630] sm:$0xf] %vm2085, %v5470
      %5536 = vst.msk [vmem:[#allocation3 + $0x664] sm:$0xf] %vm2085, %v5472
      %v5537 = vrot.slane %v4353, 6
      %v5538 = vrot.slane %v5537, 4
      %v5539 = vrot.slane %v4354, 6
      %v5540 = vsel %vm2718, %v5538, %v5539
      %v5541 = vrot.slane %v5539, 4
      %v5542 = vrot.slane %v4355, 6
      %v5543 = vsel %vm2718, %v5541, %v5542
      %v5544 = vrot.slane %v4356, 6
      %v5545 = vrot.slane %v5544, 4
      %v5546 = vrot.slane %v4357, 6
      %v5547 = vsel %vm2718, %v5545, %v5546
      %v5548 = vrot.slane %v5546, 4
      %v5549 = vrot.slane %v4358, 6
      %v5550 = vsel %vm2718, %v5548, %v5549
      %v5551 = vrot.slane %v4359, 6
      %v5552 = vrot.slane %v5551, 4
      %v5553 = vrot.slane %v4360, 6
      %v5554 = vsel %vm2718, %v5552, %v5553
      %v5555 = vrot.slane %v5553, 4
      %v5556 = vrot.slane %v4361, 6
      %v5557 = vsel %vm2718, %v5555, %v5556
      %v5558 = vrot.slane %v4362, 6
      %v5559 = vrot.slane %v5558, 4
      %v5560 = vrot.slane %v4363, 6
      %v5561 = vsel %vm2718, %v5559, %v5560
      %v5562 = vrot.slane %v5560, 4
      %v5563 = vrot.slane %v4364, 6
      %v5564 = vsel %vm2718, %v5562, %v5563
      %v5565 = vrot.slane %v4365, 6
      %v5566 = vrot.slane %v5565, 4
      %v5567 = vrot.slane %v4366, 6
      %v5568 = vsel %vm2718, %v5566, %v5567
      %v5569 = vrot.slane %v5567, 4
      %v5570 = vrot.slane %v4367, 6
      %v5571 = vsel %vm2718, %v5569, %v5570
      %v5572 = vrot.slane %v4368, 6
      %v5573 = vrot.slane %v5572, 4
      %v5574 = vrot.slane %v4369, 6
      %v5575 = vsel %vm2718, %v5573, %v5574
      %v5576 = vrot.slane %v5574, 4
      %v5577 = vrot.slane %v4370, 6
      %v5578 = vsel %vm2718, %v5576, %v5577
      %v5579 = vrot.slane %v4371, 6
      %v5580 = vrot.slane %v5579, 4
      %v5581 = vrot.slane %v4372, 6
      %v5582 = vsel %vm2718, %v5580, %v5581
      %v5583 = vrot.slane %v5581, 4
      %v5584 = vrot.slane %v4373, 6
      %v5585 = vsel %vm2718, %v5583, %v5584
      %v5586 = vrot.slane %v4374, 6
      %v5587 = vrot.slane %v5586, 4
      %v5588 = vrot.slane %v4375, 6
      %v5589 = vsel %vm2718, %v5587, %v5588
      %v5590 = vrot.slane %v5588, 4
      %v5591 = vrot.slane %v4376, 6
      %v5592 = vsel %vm2718, %v5590, %v5591
      %v5593 = vrot.slane %v4377, 6
      %v5594 = vrot.slane %v5593, 4
      %v5595 = vrot.slane %v4378, 6
      %v5596 = vsel %vm2718, %v5594, %v5595
      %v5597 = vrot.slane %v5595, 4
      %v5598 = vrot.slane %v4379, 6
      %v5599 = vsel %vm2718, %v5597, %v5598
      %v5600 = vrot.slane %v4380, 6
      %v5601 = vrot.slane %v5600, 4
      %v5602 = vrot.slane %v4381, 6
      %v5603 = vsel %vm2718, %v5601, %v5602
      %v5604 = vrot.slane %v5602, 4
      %v5605 = vrot.slane %v4382, 6
      %v5606 = vsel %vm2718, %v5604, %v5605
      %v5607 = vrot.slane %v4383, 6
      %v5608 = vrot.slane %v5607, 4
      %v5609 = vrot.slane %v4384, 6
      %v5610 = vsel %vm2718, %v5608, %v5609
      %v5611 = vrot.slane %v5609, 4
      %v5612 = vrot.slane %v4385, 6
      %v5613 = vsel %vm2718, %v5611, %v5612
      %v5614 = vrot.slane %v4386, 6
      %v5615 = vrot.slane %v5614, 4
      %v5616 = vrot.slane %v4387, 6
      %v5617 = vsel %vm2718, %v5615, %v5616
      %v5618 = vrot.slane %v5616, 4
      %v5619 = vrot.slane %v4388, 6
      %v5620 = vsel %vm2718, %v5618, %v5619
      %v5621 = vrot.slane %v4389, 6
      %v5622 = vrot.slane %v5621, 4
      %v5623 = vrot.slane %v4390, 6
      %v5624 = vsel %vm2718, %v5622, %v5623
      %v5625 = vrot.slane %v5623, 4
      %v5626 = vrot.slane %v4391, 6
      %v5627 = vsel %vm2718, %v5625, %v5626
      %v5628 = vrot.slane %v4392, 6
      %v5629 = vrot.slane %v5628, 4
      %v5630 = vrot.slane %v4393, 6
      %v5631 = vsel %vm2718, %v5629, %v5630
      %v5632 = vrot.slane %v5630, 4
      %v5633 = vrot.slane %v4394, 6
      %v5634 = vsel %vm2718, %v5632, %v5633
      %v5635 = vrot.slane %v4395, 6
      %v5636 = vrot.slane %v5635, 4
      %v5637 = vrot.slane %v4396, 6
      %v5638 = vsel %vm2718, %v5636, %v5637
      %v5639 = vrot.slane %v5637, 4
      %v5640 = vrot.slane %v4397, 6
      %v5641 = vsel %vm2718, %v5639, %v5640
      %v5642 = vrot.slane %v4398, 6
      %v5643 = vrot.slane %v5642, 4
      %v5644 = vrot.slane %v4399, 6
      %v5645 = vsel %vm2718, %v5643, %v5644
      %v5646 = vrot.slane %v5644, 4
      %v5647 = vrot.slane %v4400, 6
      %v5648 = vsel %vm2718, %v5646, %v5647
      %5681 = vst.msk [vmem:[#allocation3 + $0x1c] sm:$0xf] %vm1261, %v5540
      %5682 = vst.msk [vmem:[#allocation3 + $0x50] sm:$0xf] %vm1261, %v5543
      %5683 = vst.msk [vmem:[#allocation3 + $0x84] sm:$0xf] %vm1261, %v5547
      %5684 = vst.msk [vmem:[#allocation3 + $0xb8] sm:$0xf] %vm1261, %v5550
      %5685 = vst.msk [vmem:[#allocation3 + $0xec] sm:$0xf] %vm1261, %v5554
      %5686 = vst.msk [vmem:[#allocation3 + $0x120] sm:$0xf] %vm1261, %v5557
      %5687 = vst.msk [vmem:[#allocation3 + $0x154] sm:$0xf] %vm1261, %v5561
      %5688 = vst.msk [vmem:[#allocation3 + $0x188] sm:$0xf] %vm1261, %v5564
      %5689 = vst.msk [vmem:[#allocation3 + $0x1bc] sm:$0xf] %vm1261, %v5568
      %5690 = vst.msk [vmem:[#allocation3 + $0x1f0] sm:$0xf] %vm1261, %v5571
      %5691 = vst.msk [vmem:[#allocation3 + $0x224] sm:$0xf] %vm1261, %v5575
      %5692 = vst.msk [vmem:[#allocation3 + $0x258] sm:$0xf] %vm1261, %v5578
      %5693 = vst.msk [vmem:[#allocation3 + $0x28c] sm:$0xf] %vm1261, %v5582
      %5694 = vst.msk [vmem:[#allocation3 + $0x2c0] sm:$0xf] %vm1261, %v5585
      %5695 = vst.msk [vmem:[#allocation3 + $0x2f4] sm:$0xf] %vm1261, %v5589
      %5696 = vst.msk [vmem:[#allocation3 + $0x328] sm:$0xf] %vm1261, %v5592
      %5697 = vst.msk [vmem:[#allocation3 + $0x35c] sm:$0xf] %vm1261, %v5596
      %5698 = vst.msk [vmem:[#allocation3 + $0x390] sm:$0xf] %vm1261, %v5599
      %5699 = vst.msk [vmem:[#allocation3 + $0x3c4] sm:$0xf] %vm1261, %v5603
      %5700 = vst.msk [vmem:[#allocation3 + $0x3f8] sm:$0xf] %vm1261, %v5606
      %5701 = vst.msk [vmem:[#allocation3 + $0x42c] sm:$0xf] %vm1261, %v5610
      %5702 = vst.msk [vmem:[#allocation3 + $0x460] sm:$0xf] %vm1261, %v5613
      %5703 = vst.msk [vmem:[#allocation3 + $0x494] sm:$0xf] %vm1261, %v5617
      %5704 = vst.msk [vmem:[#allocation3 + $0x4c8] sm:$0xf] %vm1261, %v5620
      %5705 = vst.msk [vmem:[#allocation3 + $0x4fc] sm:$0xf] %vm1261, %v5624
      %5706 = vst.msk [vmem:[#allocation3 + $0x530] sm:$0xf] %vm1261, %v5627
      %5707 = vst.msk [vmem:[#allocation3 + $0x564] sm:$0xf] %vm1261, %v5631
      %5708 = vst.msk [vmem:[#allocation3 + $0x598] sm:$0xf] %vm1261, %v5634
      %5709 = vst.msk [vmem:[#allocation3 + $0x5cc] sm:$0xf] %vm1261, %v5638
      %5710 = vst.msk [vmem:[#allocation3 + $0x600] sm:$0xf] %vm1261, %v5641
      %5711 = vst.msk [vmem:[#allocation3 + $0x634] sm:$0xf] %vm1261, %v5645
      %5712 = vst.msk [vmem:[#allocation3 + $0x668] sm:$0xf] %vm1261, %v5648
      %s5713 = scalar_lea.vmem [#allocation2], 36
      %v5714 = vld [vmem:[%s5713] sm:$0xf]
      %v5715 = vld [vmem:[%s5713 + $0x4] sm:$0xf]
      %v5716 = vld [vmem:[%s5713 + $0x8] sm:$0x3]
      %v5717 = vld [vmem:[%s5713 + $0xc] sm:$0xf]
      %v5718 = vld [vmem:[%s5713 + $0x10] sm:$0xf]
      %v5719 = vld [vmem:[%s5713 + $0x14] sm:$0x3]
      %v5720 = vld [vmem:[%s5713 + $0x18] sm:$0xf]
      %v5721 = vld [vmem:[%s5713 + $0x1c] sm:$0xf]
      %v5722 = vld [vmem:[%s5713 + $0x20] sm:$0x3]
      %v5723 = vld [vmem:[%s5713 + $0x24] sm:$0xf]
      %v5724 = vld [vmem:[%s5713 + $0x28] sm:$0xf]
      %v5725 = vld [vmem:[%s5713 + $0x2c] sm:$0x3]
      %v5726 = vld [vmem:[%s5713 + $0x30] sm:$0xf]
      %v5727 = vld [vmem:[%s5713 + $0x34] sm:$0xf]
      %v5728 = vld [vmem:[%s5713 + $0x38] sm:$0x3]
      %v5729 = vld [vmem:[%s5713 + $0x3c] sm:$0xf]
      %v5730 = vld [vmem:[%s5713 + $0x40] sm:$0xf]
      %v5731 = vld [vmem:[%s5713 + $0x44] sm:$0x3]
      %v5732 = vld [vmem:[%s5713 + $0x48] sm:$0xf]
      %v5733 = vld [vmem:[%s5713 + $0x4c] sm:$0xf]
      %v5734 = vld [vmem:[%s5713 + $0x50] sm:$0x3]
      %v5735 = vld [vmem:[%s5713 + $0x54] sm:$0xf]
      %v5736 = vld [vmem:[%s5713 + $0x58] sm:$0xf]
      %v5737 = vld [vmem:[%s5713 + $0x5c] sm:$0x3]
      %v5738 = vld [vmem:[%s5713 + $0x60] sm:$0xf]
      %v5739 = vld [vmem:[%s5713 + $0x64] sm:$0xf]
      %v5740 = vld [vmem:[%s5713 + $0x68] sm:$0x3]
      %v5741 = vld [vmem:[%s5713 + $0x6c] sm:$0xf]
      %v5742 = vld [vmem:[%s5713 + $0x70] sm:$0xf]
      %v5743 = vld [vmem:[%s5713 + $0x74] sm:$0x3]
      %v5744 = vld [vmem:[%s5713 + $0x78] sm:$0xf]
      %v5745 = vld [vmem:[%s5713 + $0x7c] sm:$0xf]
      %v5746 = vld [vmem:[%s5713 + $0x80] sm:$0x3]
      %v5747 = vld [vmem:[%s5713 + $0x84] sm:$0xf]
      %v5748 = vld [vmem:[%s5713 + $0x88] sm:$0xf]
      %v5749 = vld [vmem:[%s5713 + $0x8c] sm:$0x3]
      %v5750 = vld [vmem:[%s5713 + $0x90] sm:$0xf]
      %v5751 = vld [vmem:[%s5713 + $0x94] sm:$0xf]
      %v5752 = vld [vmem:[%s5713 + $0x98] sm:$0x3]
      %v5753 = vld [vmem:[%s5713 + $0x9c] sm:$0xf]
      %v5754 = vld [vmem:[%s5713 + $0xa0] sm:$0xf]
      %v5755 = vld [vmem:[%s5713 + $0xa4] sm:$0x3]
      %v5756 = vld [vmem:[%s5713 + $0xa8] sm:$0xf]
      %v5757 = vld [vmem:[%s5713 + $0xac] sm:$0xf]
      %v5758 = vld [vmem:[%s5713 + $0xb0] sm:$0x3]
      %v5759 = vld [vmem:[%s5713 + $0xb4] sm:$0xf]
      %v5760 = vld [vmem:[%s5713 + $0xb8] sm:$0xf]
      %v5761 = vld [vmem:[%s5713 + $0xbc] sm:$0x3]
      %5794 = vrot.lane.b32.xlu0 %v5714, 64
      %v5795 = vpop.permute.xlu0 %5794
      %5796 = vrot.lane.b32.xlu0 %v5715, 64
      %v5797 = vpop.permute.xlu0 %5796
      %5798 = vrot.lane.b32.xlu0 %v5717, 64
      %v5799 = vpop.permute.xlu0 %5798
      %5800 = vrot.lane.b32.xlu0 %v5718, 64
      %v5801 = vpop.permute.xlu0 %5800
      %5802 = vrot.lane.b32.xlu0 %v5720, 64
      %v5803 = vpop.permute.xlu0 %5802
      %5804 = vrot.lane.b32.xlu0 %v5721, 64
      %v5805 = vpop.permute.xlu0 %5804
      %5806 = vrot.lane.b32.xlu0 %v5723, 64
      %v5807 = vpop.permute.xlu0 %5806
      %5808 = vrot.lane.b32.xlu0 %v5724, 64
      %v5809 = vpop.permute.xlu0 %5808
      %5810 = vrot.lane.b32.xlu0 %v5726, 64
      %v5811 = vpop.permute.xlu0 %5810
      %5812 = vrot.lane.b32.xlu0 %v5727, 64
      %v5813 = vpop.permute.xlu0 %5812
      %5814 = vrot.lane.b32.xlu0 %v5729, 64
      %v5815 = vpop.permute.xlu0 %5814
      %5816 = vrot.lane.b32.xlu0 %v5730, 64
      %v5817 = vpop.permute.xlu0 %5816
      %5818 = vrot.lane.b32.xlu0 %v5732, 64
      %v5819 = vpop.permute.xlu0 %5818
      %5820 = vrot.lane.b32.xlu0 %v5733, 64
      %v5821 = vpop.permute.xlu0 %5820
      %5822 = vrot.lane.b32.xlu0 %v5735, 64
      %v5823 = vpop.permute.xlu0 %5822
      %5824 = vrot.lane.b32.xlu0 %v5736, 64
      %v5825 = vpop.permute.xlu0 %5824
      %5826 = vrot.lane.b32.xlu0 %v5738, 64
      %v5827 = vpop.permute.xlu0 %5826
      %5828 = vrot.lane.b32.xlu0 %v5739, 64
      %v5829 = vpop.permute.xlu0 %5828
      %5830 = vrot.lane.b32.xlu0 %v5741, 64
      %v5831 = vpop.permute.xlu0 %5830
      %5832 = vrot.lane.b32.xlu0 %v5742, 64
      %v5833 = vpop.permute.xlu0 %5832
      %5834 = vrot.lane.b32.xlu0 %v5744, 64
      %v5835 = vpop.permute.xlu0 %5834
      %5836 = vrot.lane.b32.xlu0 %v5745, 64
      %v5837 = vpop.permute.xlu0 %5836
      %5838 = vrot.lane.b32.xlu0 %v5747, 64
      %v5839 = vpop.permute.xlu0 %5838
      %5840 = vrot.lane.b32.xlu0 %v5748, 64
      %v5841 = vpop.permute.xlu0 %5840
      %5842 = vrot.lane.b32.xlu0 %v5750, 64
      %v5843 = vpop.permute.xlu0 %5842
      %5844 = vrot.lane.b32.xlu0 %v5751, 64
      %v5845 = vpop.permute.xlu0 %5844
      %5846 = vrot.lane.b32.xlu0 %v5753, 64
      %v5847 = vpop.permute.xlu0 %5846
      %5848 = vrot.lane.b32.xlu0 %v5754, 64
      %v5849 = vpop.permute.xlu0 %5848
      %5850 = vrot.lane.b32.xlu0 %v5756, 64
      %v5851 = vpop.permute.xlu0 %5850
      %5852 = vrot.lane.b32.xlu0 %v5757, 64
      %v5853 = vpop.permute.xlu0 %5852
      %5854 = vrot.lane.b32.xlu0 %v5759, 64
      %v5855 = vpop.permute.xlu0 %5854
      %5856 = vrot.lane.b32.xlu0 %v5760, 64
      %v5857 = vpop.permute.xlu0 %5856
      %5890 = vst.msk [vmem:[#allocation3 + $0x1c] sm:$0xf] %vm2085, %v5795
      %5891 = vst.msk [vmem:[#allocation3 + $0x50] sm:$0xf] %vm2085, %v5797
      %5892 = vst.msk [vmem:[#allocation3 + $0x84] sm:$0xf] %vm2085, %v5799
      %5893 = vst.msk [vmem:[#allocation3 + $0xb8] sm:$0xf] %vm2085, %v5801
      %5894 = vst.msk [vmem:[#allocation3 + $0xec] sm:$0xf] %vm2085, %v5803
      %5895 = vst.msk [vmem:[#allocation3 + $0x120] sm:$0xf] %vm2085, %v5805
      %5896 = vst.msk [vmem:[#allocation3 + $0x154] sm:$0xf] %vm2085, %v5807
      %5897 = vst.msk [vmem:[#allocation3 + $0x188] sm:$0xf] %vm2085, %v5809
      %5898 = vst.msk [vmem:[#allocation3 + $0x1bc] sm:$0xf] %vm2085, %v5811
      %5899 = vst.msk [vmem:[#allocation3 + $0x1f0] sm:$0xf] %vm2085, %v5813
      %5900 = vst.msk [vmem:[#allocation3 + $0x224] sm:$0xf] %vm2085, %v5815
      %5901 = vst.msk [vmem:[#allocation3 + $0x258] sm:$0xf] %vm2085, %v5817
      %5902 = vst.msk [vmem:[#allocation3 + $0x28c] sm:$0xf] %vm2085, %v5819
      %5903 = vst.msk [vmem:[#allocation3 + $0x2c0] sm:$0xf] %vm2085, %v5821
      %5904 = vst.msk [vmem:[#allocation3 + $0x2f4] sm:$0xf] %vm2085, %v5823
      %5905 = vst.msk [vmem:[#allocation3 + $0x328] sm:$0xf] %vm2085, %v5825
      %5906 = vst.msk [vmem:[#allocation3 + $0x35c] sm:$0xf] %vm2085, %v5827
      %5907 = vst.msk [vmem:[#allocation3 + $0x390] sm:$0xf] %vm2085, %v5829
      %5908 = vst.msk [vmem:[#allocation3 + $0x3c4] sm:$0xf] %vm2085, %v5831
      %5909 = vst.msk [vmem:[#allocation3 + $0x3f8] sm:$0xf] %vm2085, %v5833
      %5910 = vst.msk [vmem:[#allocation3 + $0x42c] sm:$0xf] %vm2085, %v5835
      %5911 = vst.msk [vmem:[#allocation3 + $0x460] sm:$0xf] %vm2085, %v5837
      %5912 = vst.msk [vmem:[#allocation3 + $0x494] sm:$0xf] %vm2085, %v5839
      %5913 = vst.msk [vmem:[#allocation3 + $0x4c8] sm:$0xf] %vm2085, %v5841
      %5914 = vst.msk [vmem:[#allocation3 + $0x4fc] sm:$0xf] %vm2085, %v5843
      %5915 = vst.msk [vmem:[#allocation3 + $0x530] sm:$0xf] %vm2085, %v5845
      %5916 = vst.msk [vmem:[#allocation3 + $0x564] sm:$0xf] %vm2085, %v5847
      %5917 = vst.msk [vmem:[#allocation3 + $0x598] sm:$0xf] %vm2085, %v5849
      %5918 = vst.msk [vmem:[#allocation3 + $0x5cc] sm:$0xf] %vm2085, %v5851
      %5919 = vst.msk [vmem:[#allocation3 + $0x600] sm:$0xf] %vm2085, %v5853
      %5920 = vst.msk [vmem:[#allocation3 + $0x634] sm:$0xf] %vm2085, %v5855
      %5921 = vst.msk [vmem:[#allocation3 + $0x668] sm:$0xf] %vm2085, %v5857
      %v5923 = vshrl.u32 %v5714, 16
      %v5925 = vrot.slane %v5923, 4
      %v5926 = vshll.u32 %v5714, 16
      %v5928 = vrot.slane %v5926, 5
      %v5929 = vor.u32 %v5925, %v5928
      %v5930 = vrot.slane %v5929, 4
      %v5932 = vshll.u32 %v5715, 16
      %v5934 = vrot.slane %v5932, 5
      %v5935 = vsel %vm1604, %v5930, %v5934
      %v5936 = vshrl.u32 %v5715, 16
      %v5938 = vrot.slane %v5936, 4
      %v5939 = vor.u32 %v5938, %v5934
      %v5940 = vrot.slane %v5939, 4
      %v5942 = vshll.u32 %v5716, 16
      %v5944 = vrot.slane %v5942, 5
      %v5945 = vsel %vm1604, %v5940, %v5944
      %v5947 = vshrl.u32 %v5717, 16
      %v5949 = vrot.slane %v5947, 4
      %v5950 = vshll.u32 %v5717, 16
      %v5952 = vrot.slane %v5950, 5
      %v5953 = vor.u32 %v5949, %v5952
      %v5954 = vrot.slane %v5953, 4
      %v5956 = vshll.u32 %v5718, 16
      %v5958 = vrot.slane %v5956, 5
      %v5959 = vsel %vm1604, %v5954, %v5958
      %v5960 = vshrl.u32 %v5718, 16
      %v5962 = vrot.slane %v5960, 4
      %v5963 = vor.u32 %v5962, %v5958
      %v5964 = vrot.slane %v5963, 4
      %v5966 = vshll.u32 %v5719, 16
      %v5968 = vrot.slane %v5966, 5
      %v5969 = vsel %vm1604, %v5964, %v5968
      %v5971 = vshrl.u32 %v5720, 16
      %v5973 = vrot.slane %v5971, 4
      %v5974 = vshll.u32 %v5720, 16
      %v5976 = vrot.slane %v5974, 5
      %v5977 = vor.u32 %v5973, %v5976
      %v5978 = vrot.slane %v5977, 4
      %v5980 = vshll.u32 %v5721, 16
      %v5982 = vrot.slane %v5980, 5
      %v5983 = vsel %vm1604, %v5978, %v5982
      %v5984 = vshrl.u32 %v5721, 16
      %v5986 = vrot.slane %v5984, 4
      %v5987 = vor.u32 %v5986, %v5982
      %v5988 = vrot.slane %v5987, 4
      %v5990 = vshll.u32 %v5722, 16
      %v5992 = vrot.slane %v5990, 5
      %v5993 = vsel %vm1604, %v5988, %v5992
      %v5995 = vshrl.u32 %v5723, 16
      %v5997 = vrot.slane %v5995, 4
      %v5998 = vshll.u32 %v5723, 16
      %v6000 = vrot.slane %v5998, 5
      %v6001 = vor.u32 %v5997, %v6000
      %v6002 = vrot.slane %v6001, 4
      %v6004 = vshll.u32 %v5724, 16
      %v6006 = vrot.slane %v6004, 5
      %v6007 = vsel %vm1604, %v6002, %v6006
      %v6008 = vshrl.u32 %v5724, 16
      %v6010 = vrot.slane %v6008, 4
      %v6011 = vor.u32 %v6010, %v6006
      %v6012 = vrot.slane %v6011, 4
      %v6014 = vshll.u32 %v5725, 16
      %v6016 = vrot.slane %v6014, 5
      %v6017 = vsel %vm1604, %v6012, %v6016
      %v6019 = vshrl.u32 %v5726, 16
      %v6021 = vrot.slane %v6019, 4
      %v6022 = vshll.u32 %v5726, 16
      %v6024 = vrot.slane %v6022, 5
      %v6025 = vor.u32 %v6021, %v6024
      %v6026 = vrot.slane %v6025, 4
      %v6028 = vshll.u32 %v5727, 16
      %v6030 = vrot.slane %v6028, 5
      %v6031 = vsel %vm1604, %v6026, %v6030
      %v6032 = vshrl.u32 %v5727, 16
      %v6034 = vrot.slane %v6032, 4
      %v6035 = vor.u32 %v6034, %v6030
      %v6036 = vrot.slane %v6035, 4
      %v6038 = vshll.u32 %v5728, 16
      %v6040 = vrot.slane %v6038, 5
      %v6041 = vsel %vm1604, %v6036, %v6040
      %v6043 = vshrl.u32 %v5729, 16
      %v6045 = vrot.slane %v6043, 4
      %v6046 = vshll.u32 %v5729, 16
      %v6048 = vrot.slane %v6046, 5
      %v6049 = vor.u32 %v6045, %v6048
      %v6050 = vrot.slane %v6049, 4
      %v6052 = vshll.u32 %v5730, 16
      %v6054 = vrot.slane %v6052, 5
      %v6055 = vsel %vm1604, %v6050, %v6054
      %v6056 = vshrl.u32 %v5730, 16
      %v6058 = vrot.slane %v6056, 4
      %v6059 = vor.u32 %v6058, %v6054
      %v6060 = vrot.slane %v6059, 4
      %v6062 = vshll.u32 %v5731, 16
      %v6064 = vrot.slane %v6062, 5
      %v6065 = vsel %vm1604, %v6060, %v6064
      %v6067 = vshrl.u32 %v5732, 16
      %v6069 = vrot.slane %v6067, 4
      %v6070 = vshll.u32 %v5732, 16
      %v6072 = vrot.slane %v6070, 5
      %v6073 = vor.u32 %v6069, %v6072
      %v6074 = vrot.slane %v6073, 4
      %v6076 = vshll.u32 %v5733, 16
      %v6078 = vrot.slane %v6076, 5
      %v6079 = vsel %vm1604, %v6074, %v6078
      %v6080 = vshrl.u32 %v5733, 16
      %v6082 = vrot.slane %v6080, 4
      %v6083 = vor.u32 %v6082, %v6078
      %v6084 = vrot.slane %v6083, 4
      %v6086 = vshll.u32 %v5734, 16
      %v6088 = vrot.slane %v6086, 5
      %v6089 = vsel %vm1604, %v6084, %v6088
      %v6091 = vshrl.u32 %v5735, 16
      %v6093 = vrot.slane %v6091, 4
      %v6094 = vshll.u32 %v5735, 16
      %v6096 = vrot.slane %v6094, 5
      %v6097 = vor.u32 %v6093, %v6096
      %v6098 = vrot.slane %v6097, 4
      %v6100 = vshll.u32 %v5736, 16
      %v6102 = vrot.slane %v6100, 5
      %v6103 = vsel %vm1604, %v6098, %v6102
      %v6104 = vshrl.u32 %v5736, 16
      %v6106 = vrot.slane %v6104, 4
      %v6107 = vor.u32 %v6106, %v6102
      %v6108 = vrot.slane %v6107, 4
      %v6110 = vshll.u32 %v5737, 16
      %v6112 = vrot.slane %v6110, 5
      %v6113 = vsel %vm1604, %v6108, %v6112
      %v6115 = vshrl.u32 %v5738, 16
      %v6117 = vrot.slane %v6115, 4
      %v6118 = vshll.u32 %v5738, 16
      %v6120 = vrot.slane %v6118, 5
      %v6121 = vor.u32 %v6117, %v6120
      %v6122 = vrot.slane %v6121, 4
      %v6124 = vshll.u32 %v5739, 16
      %v6126 = vrot.slane %v6124, 5
      %v6127 = vsel %vm1604, %v6122, %v6126
      %v6128 = vshrl.u32 %v5739, 16
      %v6130 = vrot.slane %v6128, 4
      %v6131 = vor.u32 %v6130, %v6126
      %v6132 = vrot.slane %v6131, 4
      %v6134 = vshll.u32 %v5740, 16
      %v6136 = vrot.slane %v6134, 5
      %v6137 = vsel %vm1604, %v6132, %v6136
      %v6139 = vshrl.u32 %v5741, 16
      %v6141 = vrot.slane %v6139, 4
      %v6142 = vshll.u32 %v5741, 16
      %v6144 = vrot.slane %v6142, 5
      %v6145 = vor.u32 %v6141, %v6144
      %v6146 = vrot.slane %v6145, 4
      %v6148 = vshll.u32 %v5742, 16
      %v6150 = vrot.slane %v6148, 5
      %v6151 = vsel %vm1604, %v6146, %v6150
      %v6152 = vshrl.u32 %v5742, 16
      %v6154 = vrot.slane %v6152, 4
      %v6155 = vor.u32 %v6154, %v6150
      %v6156 = vrot.slane %v6155, 4
      %v6158 = vshll.u32 %v5743, 16
      %v6160 = vrot.slane %v6158, 5
      %v6161 = vsel %vm1604, %v6156, %v6160
      %v6163 = vshrl.u32 %v5744, 16
      %v6165 = vrot.slane %v6163, 4
      %v6166 = vshll.u32 %v5744, 16
      %v6168 = vrot.slane %v6166, 5
      %v6169 = vor.u32 %v6165, %v6168
      %v6170 = vrot.slane %v6169, 4
      %v6172 = vshll.u32 %v5745, 16
      %v6174 = vrot.slane %v6172, 5
      %v6175 = vsel %vm1604, %v6170, %v6174
      %v6176 = vshrl.u32 %v5745, 16
      %v6178 = vrot.slane %v6176, 4
      %v6179 = vor.u32 %v6178, %v6174
      %v6180 = vrot.slane %v6179, 4
      %v6182 = vshll.u32 %v5746, 16
      %v6184 = vrot.slane %v6182, 5
      %v6185 = vsel %vm1604, %v6180, %v6184
      %v6187 = vshrl.u32 %v5747, 16
      %v6189 = vrot.slane %v6187, 4
      %v6190 = vshll.u32 %v5747, 16
      %v6192 = vrot.slane %v6190, 5
      %v6193 = vor.u32 %v6189, %v6192
      %v6194 = vrot.slane %v6193, 4
      %v6196 = vshll.u32 %v5748, 16
      %v6198 = vrot.slane %v6196, 5
      %v6199 = vsel %vm1604, %v6194, %v6198
      %v6200 = vshrl.u32 %v5748, 16
      %v6202 = vrot.slane %v6200, 4
      %v6203 = vor.u32 %v6202, %v6198
      %v6204 = vrot.slane %v6203, 4
      %v6206 = vshll.u32 %v5749, 16
      %v6208 = vrot.slane %v6206, 5
      %v6209 = vsel %vm1604, %v6204, %v6208
      %v6211 = vshrl.u32 %v5750, 16
      %v6213 = vrot.slane %v6211, 4
      %v6214 = vshll.u32 %v5750, 16
      %v6216 = vrot.slane %v6214, 5
      %v6217 = vor.u32 %v6213, %v6216
      %v6218 = vrot.slane %v6217, 4
      %v6220 = vshll.u32 %v5751, 16
      %v6222 = vrot.slane %v6220, 5
      %v6223 = vsel %vm1604, %v6218, %v6222
      %v6224 = vshrl.u32 %v5751, 16
      %v6226 = vrot.slane %v6224, 4
      %v6227 = vor.u32 %v6226, %v6222
      %v6228 = vrot.slane %v6227, 4
      %v6230 = vshll.u32 %v5752, 16
      %v6232 = vrot.slane %v6230, 5
      %v6233 = vsel %vm1604, %v6228, %v6232
      %v6235 = vshrl.u32 %v5753, 16
      %v6237 = vrot.slane %v6235, 4
      %v6238 = vshll.u32 %v5753, 16
      %v6240 = vrot.slane %v6238, 5
      %v6241 = vor.u32 %v6237, %v6240
      %v6242 = vrot.slane %v6241, 4
      %v6244 = vshll.u32 %v5754, 16
      %v6246 = vrot.slane %v6244, 5
      %v6247 = vsel %vm1604, %v6242, %v6246
      %v6248 = vshrl.u32 %v5754, 16
      %v6250 = vrot.slane %v6248, 4
      %v6251 = vor.u32 %v6250, %v6246
      %v6252 = vrot.slane %v6251, 4
      %v6254 = vshll.u32 %v5755, 16
      %v6256 = vrot.slane %v6254, 5
      %v6257 = vsel %vm1604, %v6252, %v6256
      %v6259 = vshrl.u32 %v5756, 16
      %v6261 = vrot.slane %v6259, 4
      %v6262 = vshll.u32 %v5756, 16
      %v6264 = vrot.slane %v6262, 5
      %v6265 = vor.u32 %v6261, %v6264
      %v6266 = vrot.slane %v6265, 4
      %v6268 = vshll.u32 %v5757, 16
      %v6270 = vrot.slane %v6268, 5
      %v6271 = vsel %vm1604, %v6266, %v6270
      %v6272 = vshrl.u32 %v5757, 16
      %v6274 = vrot.slane %v6272, 4
      %v6275 = vor.u32 %v6274, %v6270
      %v6276 = vrot.slane %v6275, 4
      %v6278 = vshll.u32 %v5758, 16
      %v6280 = vrot.slane %v6278, 5
      %v6281 = vsel %vm1604, %v6276, %v6280
      %v6283 = vshrl.u32 %v5759, 16
      %v6285 = vrot.slane %v6283, 4
      %v6286 = vshll.u32 %v5759, 16
      %v6288 = vrot.slane %v6286, 5
      %v6289 = vor.u32 %v6285, %v6288
      %v6290 = vrot.slane %v6289, 4
      %v6292 = vshll.u32 %v5760, 16
      %v6294 = vrot.slane %v6292, 5
      %v6295 = vsel %vm1604, %v6290, %v6294
      %v6296 = vshrl.u32 %v5760, 16
      %v6298 = vrot.slane %v6296, 4
      %v6299 = vor.u32 %v6298, %v6294
      %v6300 = vrot.slane %v6299, 4
      %v6302 = vshll.u32 %v5761, 16
      %v6304 = vrot.slane %v6302, 5
      %v6305 = vsel %vm1604, %v6300, %v6304
      %6338 = vst.msk [vmem:[#allocation3 + $0x20] sm:$0xf] %vm1261, %v5935
      %6339 = vst.msk [vmem:[#allocation3 + $0x54] sm:$0xf] %vm1261, %v5945
      %6340 = vst.msk [vmem:[#allocation3 + $0x88] sm:$0xf] %vm1261, %v5959
      %6341 = vst.msk [vmem:[#allocation3 + $0xbc] sm:$0xf] %vm1261, %v5969
      %6342 = vst.msk [vmem:[#allocation3 + $0xf0] sm:$0xf] %vm1261, %v5983
      %6343 = vst.msk [vmem:[#allocation3 + $0x124] sm:$0xf] %vm1261, %v5993
      %6344 = vst.msk [vmem:[#allocation3 + $0x158] sm:$0xf] %vm1261, %v6007
      %6345 = vst.msk [vmem:[#allocation3 + $0x18c] sm:$0xf] %vm1261, %v6017
      %6346 = vst.msk [vmem:[#allocation3 + $0x1c0] sm:$0xf] %vm1261, %v6031
      %6347 = vst.msk [vmem:[#allocation3 + $0x1f4] sm:$0xf] %vm1261, %v6041
      %6348 = vst.msk [vmem:[#allocation3 + $0x228] sm:$0xf] %vm1261, %v6055
      %6349 = vst.msk [vmem:[#allocation3 + $0x25c] sm:$0xf] %vm1261, %v6065
      %6350 = vst.msk [vmem:[#allocation3 + $0x290] sm:$0xf] %vm1261, %v6079
      %6351 = vst.msk [vmem:[#allocation3 + $0x2c4] sm:$0xf] %vm1261, %v6089
      %6352 = vst.msk [vmem:[#allocation3 + $0x2f8] sm:$0xf] %vm1261, %v6103
      %6353 = vst.msk [vmem:[#allocation3 + $0x32c] sm:$0xf] %vm1261, %v6113
      %6354 = vst.msk [vmem:[#allocation3 + $0x360] sm:$0xf] %vm1261, %v6127
      %6355 = vst.msk [vmem:[#allocation3 + $0x394] sm:$0xf] %vm1261, %v6137
      %6356 = vst.msk [vmem:[#allocation3 + $0x3c8] sm:$0xf] %vm1261, %v6151
      %6357 = vst.msk [vmem:[#allocation3 + $0x3fc] sm:$0xf] %vm1261, %v6161
      %6358 = vst.msk [vmem:[#allocation3 + $0x430] sm:$0xf] %vm1261, %v6175
      %6359 = vst.msk [vmem:[#allocation3 + $0x464] sm:$0xf] %vm1261, %v6185
      %6360 = vst.msk [vmem:[#allocation3 + $0x498] sm:$0xf] %vm1261, %v6199
      %6361 = vst.msk [vmem:[#allocation3 + $0x4cc] sm:$0xf] %vm1261, %v6209
      %6362 = vst.msk [vmem:[#allocation3 + $0x500] sm:$0xf] %vm1261, %v6223
      %6363 = vst.msk [vmem:[#allocation3 + $0x534] sm:$0xf] %vm1261, %v6233
      %6364 = vst.msk [vmem:[#allocation3 + $0x568] sm:$0xf] %vm1261, %v6247
      %6365 = vst.msk [vmem:[#allocation3 + $0x59c] sm:$0xf] %vm1261, %v6257
      %6366 = vst.msk [vmem:[#allocation3 + $0x5d0] sm:$0xf] %vm1261, %v6271
      %6367 = vst.msk [vmem:[#allocation3 + $0x604] sm:$0xf] %vm1261, %v6281
      %6368 = vst.msk [vmem:[#allocation3 + $0x638] sm:$0xf] %vm1261, %v6295
      %6369 = vst.msk [vmem:[#allocation3 + $0x66c] sm:$0xf] %vm1261, %v6305
      %v6386 = vrot.slane %v5714, 5
      %v6387 = vrot.slane %v6386, 4
      %v6388 = vrot.slane %v5715, 5
      %v6389 = vsel %vm2168, %v6387, %v6388
      %v6390 = vrot.slane %v6388, 4
      %v6391 = vrot.slane %v5716, 5
      %v6392 = vsel %vm2168, %v6390, %v6391
      %v6393 = vrot.slane %v5717, 5
      %v6394 = vrot.slane %v6393, 4
      %v6395 = vrot.slane %v5718, 5
      %v6396 = vsel %vm2168, %v6394, %v6395
      %v6397 = vrot.slane %v6395, 4
      %v6398 = vrot.slane %v5719, 5
      %v6399 = vsel %vm2168, %v6397, %v6398
      %v6400 = vrot.slane %v5720, 5
      %v6401 = vrot.slane %v6400, 4
      %v6402 = vrot.slane %v5721, 5
      %v6403 = vsel %vm2168, %v6401, %v6402
      %v6404 = vrot.slane %v6402, 4
      %v6405 = vrot.slane %v5722, 5
      %v6406 = vsel %vm2168, %v6404, %v6405
      %v6407 = vrot.slane %v5723, 5
      %v6408 = vrot.slane %v6407, 4
      %v6409 = vrot.slane %v5724, 5
      %v6410 = vsel %vm2168, %v6408, %v6409
      %v6411 = vrot.slane %v6409, 4
      %v6412 = vrot.slane %v5725, 5
      %v6413 = vsel %vm2168, %v6411, %v6412
      %v6414 = vrot.slane %v5726, 5
      %v6415 = vrot.slane %v6414, 4
      %v6416 = vrot.slane %v5727, 5
      %v6417 = vsel %vm2168, %v6415, %v6416
      %v6418 = vrot.slane %v6416, 4
      %v6419 = vrot.slane %v5728, 5
      %v6420 = vsel %vm2168, %v6418, %v6419
      %v6421 = vrot.slane %v5729, 5
      %v6422 = vrot.slane %v6421, 4
      %v6423 = vrot.slane %v5730, 5
      %v6424 = vsel %vm2168, %v6422, %v6423
      %v6425 = vrot.slane %v6423, 4
      %v6426 = vrot.slane %v5731, 5
      %v6427 = vsel %vm2168, %v6425, %v6426
      %v6428 = vrot.slane %v5732, 5
      %v6429 = vrot.slane %v6428, 4
      %v6430 = vrot.slane %v5733, 5
      %v6431 = vsel %vm2168, %v6429, %v6430
      %v6432 = vrot.slane %v6430, 4
      %v6433 = vrot.slane %v5734, 5
      %v6434 = vsel %vm2168, %v6432, %v6433
      %v6435 = vrot.slane %v5735, 5
      %v6436 = vrot.slane %v6435, 4
      %v6437 = vrot.slane %v5736, 5
      %v6438 = vsel %vm2168, %v6436, %v6437
      %v6439 = vrot.slane %v6437, 4
      %v6440 = vrot.slane %v5737, 5
      %v6441 = vsel %vm2168, %v6439, %v6440
      %v6442 = vrot.slane %v5738, 5
      %v6443 = vrot.slane %v6442, 4
      %v6444 = vrot.slane %v5739, 5
      %v6445 = vsel %vm2168, %v6443, %v6444
      %v6446 = vrot.slane %v6444, 4
      %v6447 = vrot.slane %v5740, 5
      %v6448 = vsel %vm2168, %v6446, %v6447
      %v6449 = vrot.slane %v5741, 5
      %v6450 = vrot.slane %v6449, 4
      %v6451 = vrot.slane %v5742, 5
      %v6452 = vsel %vm2168, %v6450, %v6451
      %v6453 = vrot.slane %v6451, 4
      %v6454 = vrot.slane %v5743, 5
      %v6455 = vsel %vm2168, %v6453, %v6454
      %v6456 = vrot.slane %v5744, 5
      %v6457 = vrot.slane %v6456, 4
      %v6458 = vrot.slane %v5745, 5
      %v6459 = vsel %vm2168, %v6457, %v6458
      %v6460 = vrot.slane %v6458, 4
      %v6461 = vrot.slane %v5746, 5
      %v6462 = vsel %vm2168, %v6460, %v6461
      %v6463 = vrot.slane %v5747, 5
      %v6464 = vrot.slane %v6463, 4
      %v6465 = vrot.slane %v5748, 5
      %v6466 = vsel %vm2168, %v6464, %v6465
      %v6467 = vrot.slane %v6465, 4
      %v6468 = vrot.slane %v5749, 5
      %v6469 = vsel %vm2168, %v6467, %v6468
      %v6470 = vrot.slane %v5750, 5
      %v6471 = vrot.slane %v6470, 4
      %v6472 = vrot.slane %v5751, 5
      %v6473 = vsel %vm2168, %v6471, %v6472
      %v6474 = vrot.slane %v6472, 4
      %v6475 = vrot.slane %v5752, 5
      %v6476 = vsel %vm2168, %v6474, %v6475
      %v6477 = vrot.slane %v5753, 5
      %v6478 = vrot.slane %v6477, 4
      %v6479 = vrot.slane %v5754, 5
      %v6480 = vsel %vm2168, %v6478, %v6479
      %v6481 = vrot.slane %v6479, 4
      %v6482 = vrot.slane %v5755, 5
      %v6483 = vsel %vm2168, %v6481, %v6482
      %v6484 = vrot.slane %v5756, 5
      %v6485 = vrot.slane %v6484, 4
      %v6486 = vrot.slane %v5757, 5
      %v6487 = vsel %vm2168, %v6485, %v6486
      %v6488 = vrot.slane %v6486, 4
      %v6489 = vrot.slane %v5758, 5
      %v6490 = vsel %vm2168, %v6488, %v6489
      %v6491 = vrot.slane %v5759, 5
      %v6492 = vrot.slane %v6491, 4
      %v6493 = vrot.slane %v5760, 5
      %v6494 = vsel %vm2168, %v6492, %v6493
      %v6495 = vrot.slane %v6493, 4
      %v6496 = vrot.slane %v5761, 5
      %v6497 = vsel %vm2168, %v6495, %v6496
      %6498 = vrot.lane.b32.xlu0 %v6389, 64
      %v6499 = vpop.permute.xlu0 %6498
      %6500 = vrot.lane.b32.xlu0 %v6392, 64
      %v6501 = vpop.permute.xlu0 %6500
      %6502 = vrot.lane.b32.xlu0 %v6396, 64
      %v6503 = vpop.permute.xlu0 %6502
      %6504 = vrot.lane.b32.xlu0 %v6399, 64
      %v6505 = vpop.permute.xlu0 %6504
      %6506 = vrot.lane.b32.xlu0 %v6403, 64
      %v6507 = vpop.permute.xlu0 %6506
      %6508 = vrot.lane.b32.xlu0 %v6406, 64
      %v6509 = vpop.permute.xlu0 %6508
      %6510 = vrot.lane.b32.xlu0 %v6410, 64
      %v6511 = vpop.permute.xlu0 %6510
      %6512 = vrot.lane.b32.xlu0 %v6413, 64
      %v6513 = vpop.permute.xlu0 %6512
      %6514 = vrot.lane.b32.xlu0 %v6417, 64
      %v6515 = vpop.permute.xlu0 %6514
      %6516 = vrot.lane.b32.xlu0 %v6420, 64
      %v6517 = vpop.permute.xlu0 %6516
      %6518 = vrot.lane.b32.xlu0 %v6424, 64
      %v6519 = vpop.permute.xlu0 %6518
      %6520 = vrot.lane.b32.xlu0 %v6427, 64
      %v6521 = vpop.permute.xlu0 %6520
      %6522 = vrot.lane.b32.xlu0 %v6431, 64
      %v6523 = vpop.permute.xlu0 %6522
      %6524 = vrot.lane.b32.xlu0 %v6434, 64
      %v6525 = vpop.permute.xlu0 %6524
      %6526 = vrot.lane.b32.xlu0 %v6438, 64
      %v6527 = vpop.permute.xlu0 %6526
      %6528 = vrot.lane.b32.xlu0 %v6441, 64
      %v6529 = vpop.permute.xlu0 %6528
      %6530 = vrot.lane.b32.xlu0 %v6445, 64
      %v6531 = vpop.permute.xlu0 %6530
      %6532 = vrot.lane.b32.xlu0 %v6448, 64
      %v6533 = vpop.permute.xlu0 %6532
      %6534 = vrot.lane.b32.xlu0 %v6452, 64
      %v6535 = vpop.permute.xlu0 %6534
      %6536 = vrot.lane.b32.xlu0 %v6455, 64
      %v6537 = vpop.permute.xlu0 %6536
      %6538 = vrot.lane.b32.xlu0 %v6459, 64
      %v6539 = vpop.permute.xlu0 %6538
      %6540 = vrot.lane.b32.xlu0 %v6462, 64
      %v6541 = vpop.permute.xlu0 %6540
      %6542 = vrot.lane.b32.xlu0 %v6466, 64
      %v6543 = vpop.permute.xlu0 %6542
      %6544 = vrot.lane.b32.xlu0 %v6469, 64
      %v6545 = vpop.permute.xlu0 %6544
      %6546 = vrot.lane.b32.xlu0 %v6473, 64
      %v6547 = vpop.permute.xlu0 %6546
      %6548 = vrot.lane.b32.xlu0 %v6476, 64
      %v6549 = vpop.permute.xlu0 %6548
      %6550 = vrot.lane.b32.xlu0 %v6480, 64
      %v6551 = vpop.permute.xlu0 %6550
      %6552 = vrot.lane.b32.xlu0 %v6483, 64
      %v6553 = vpop.permute.xlu0 %6552
      %6554 = vrot.lane.b32.xlu0 %v6487, 64
      %v6555 = vpop.permute.xlu0 %6554
      %6556 = vrot.lane.b32.xlu0 %v6490, 64
      %v6557 = vpop.permute.xlu0 %6556
      %6558 = vrot.lane.b32.xlu0 %v6494, 64
      %v6559 = vpop.permute.xlu0 %6558
      %6560 = vrot.lane.b32.xlu0 %v6497, 64
      %v6561 = vpop.permute.xlu0 %6560
      %6594 = vst.msk [vmem:[#allocation3 + $0x20] sm:$0xf] %vm2085, %v6499
      %6595 = vst.msk [vmem:[#allocation3 + $0x54] sm:$0xf] %vm2085, %v6501
      %6596 = vst.msk [vmem:[#allocation3 + $0x88] sm:$0xf] %vm2085, %v6503
      %6597 = vst.msk [vmem:[#allocation3 + $0xbc] sm:$0xf] %vm2085, %v6505
      %6598 = vst.msk [vmem:[#allocation3 + $0xf0] sm:$0xf] %vm2085, %v6507
      %6599 = vst.msk [vmem:[#allocation3 + $0x124] sm:$0xf] %vm2085, %v6509
      %6600 = vst.msk [vmem:[#allocation3 + $0x158] sm:$0xf] %vm2085, %v6511
      %6601 = vst.msk [vmem:[#allocation3 + $0x18c] sm:$0xf] %vm2085, %v6513
      %6602 = vst.msk [vmem:[#allocation3 + $0x1c0] sm:$0xf] %vm2085, %v6515
      %6603 = vst.msk [vmem:[#allocation3 + $0x1f4] sm:$0xf] %vm2085, %v6517
      %6604 = vst.msk [vmem:[#allocation3 + $0x228] sm:$0xf] %vm2085, %v6519
      %6605 = vst.msk [vmem:[#allocation3 + $0x25c] sm:$0xf] %vm2085, %v6521
      %6606 = vst.msk [vmem:[#allocation3 + $0x290] sm:$0xf] %vm2085, %v6523
      %6607 = vst.msk [vmem:[#allocation3 + $0x2c4] sm:$0xf] %vm2085, %v6525
      %6608 = vst.msk [vmem:[#allocation3 + $0x2f8] sm:$0xf] %vm2085, %v6527
      %6609 = vst.msk [vmem:[#allocation3 + $0x32c] sm:$0xf] %vm2085, %v6529
      %6610 = vst.msk [vmem:[#allocation3 + $0x360] sm:$0xf] %vm2085, %v6531
      %6611 = vst.msk [vmem:[#allocation3 + $0x394] sm:$0xf] %vm2085, %v6533
      %6612 = vst.msk [vmem:[#allocation3 + $0x3c8] sm:$0xf] %vm2085, %v6535
      %6613 = vst.msk [vmem:[#allocation3 + $0x3fc] sm:$0xf] %vm2085, %v6537
      %6614 = vst.msk [vmem:[#allocation3 + $0x430] sm:$0xf] %vm2085, %v6539
      %6615 = vst.msk [vmem:[#allocation3 + $0x464] sm:$0xf] %vm2085, %v6541
      %6616 = vst.msk [vmem:[#allocation3 + $0x498] sm:$0xf] %vm2085, %v6543
      %6617 = vst.msk [vmem:[#allocation3 + $0x4cc] sm:$0xf] %vm2085, %v6545
      %6618 = vst.msk [vmem:[#allocation3 + $0x500] sm:$0xf] %vm2085, %v6547
      %6619 = vst.msk [vmem:[#allocation3 + $0x534] sm:$0xf] %vm2085, %v6549
      %6620 = vst.msk [vmem:[#allocation3 + $0x568] sm:$0xf] %vm2085, %v6551
      %6621 = vst.msk [vmem:[#allocation3 + $0x59c] sm:$0xf] %vm2085, %v6553
      %6622 = vst.msk [vmem:[#allocation3 + $0x5d0] sm:$0xf] %vm2085, %v6555
      %6623 = vst.msk [vmem:[#allocation3 + $0x604] sm:$0xf] %vm2085, %v6557
      %6624 = vst.msk [vmem:[#allocation3 + $0x638] sm:$0xf] %vm2085, %v6559
      %6625 = vst.msk [vmem:[#allocation3 + $0x66c] sm:$0xf] %vm2085, %v6561
      %v6626 = vrot.slane %v5923, 5
      %v6627 = vrot.slane %v5926, 6
      %v6628 = vor.u32 %v6626, %v6627
      %v6629 = vrot.slane %v6628, 4
      %v6630 = vrot.slane %v5936, 5
      %v6631 = vrot.slane %v5932, 6
      %v6632 = vor.u32 %v6630, %v6631
      %v6633 = vsel %vm2347, %v6629, %v6632
      %v6634 = vrot.slane %v6632, 4
      %v6635 = vshrl.u32 %v5716, 16
      %v6637 = vrot.slane %v6635, 5
      %v6638 = vrot.slane %v5942, 6
      %v6639 = vor.u32 %v6637, %v6638
      %v6640 = vsel %vm2347, %v6634, %v6639
      %v6641 = vrot.slane %v5947, 5
      %v6642 = vrot.slane %v5950, 6
      %v6643 = vor.u32 %v6641, %v6642
      %v6644 = vrot.slane %v6643, 4
      %v6645 = vrot.slane %v5960, 5
      %v6646 = vrot.slane %v5956, 6
      %v6647 = vor.u32 %v6645, %v6646
      %v6648 = vsel %vm2347, %v6644, %v6647
      %v6649 = vrot.slane %v6647, 4
      %v6650 = vshrl.u32 %v5719, 16
      %v6652 = vrot.slane %v6650, 5
      %v6653 = vrot.slane %v5966, 6
      %v6654 = vor.u32 %v6652, %v6653
      %v6655 = vsel %vm2347, %v6649, %v6654
      %v6656 = vrot.slane %v5971, 5
      %v6657 = vrot.slane %v5974, 6
      %v6658 = vor.u32 %v6656, %v6657
      %v6659 = vrot.slane %v6658, 4
      %v6660 = vrot.slane %v5984, 5
      %v6661 = vrot.slane %v5980, 6
      %v6662 = vor.u32 %v6660, %v6661
      %v6663 = vsel %vm2347, %v6659, %v6662
      %v6664 = vrot.slane %v6662, 4
      %v6665 = vshrl.u32 %v5722, 16
      %v6667 = vrot.slane %v6665, 5
      %v6668 = vrot.slane %v5990, 6
      %v6669 = vor.u32 %v6667, %v6668
      %v6670 = vsel %vm2347, %v6664, %v6669
      %v6671 = vrot.slane %v5995, 5
      %v6672 = vrot.slane %v5998, 6
      %v6673 = vor.u32 %v6671, %v6672
      %v6674 = vrot.slane %v6673, 4
      %v6675 = vrot.slane %v6008, 5
      %v6676 = vrot.slane %v6004, 6
      %v6677 = vor.u32 %v6675, %v6676
      %v6678 = vsel %vm2347, %v6674, %v6677
      %v6679 = vrot.slane %v6677, 4
      %v6680 = vshrl.u32 %v5725, 16
      %v6682 = vrot.slane %v6680, 5
      %v6683 = vrot.slane %v6014, 6
      %v6684 = vor.u32 %v6682, %v6683
      %v6685 = vsel %vm2347, %v6679, %v6684
      %v6686 = vrot.slane %v6019, 5
      %v6687 = vrot.slane %v6022, 6
      %v6688 = vor.u32 %v6686, %v6687
      %v6689 = vrot.slane %v6688, 4
      %v6690 = vrot.slane %v6032, 5
      %v6691 = vrot.slane %v6028, 6
      %v6692 = vor.u32 %v6690, %v6691
      %v6693 = vsel %vm2347, %v6689, %v6692
      %v6694 = vrot.slane %v6692, 4
      %v6695 = vshrl.u32 %v5728, 16
      %v6697 = vrot.slane %v6695, 5
      %v6698 = vrot.slane %v6038, 6
      %v6699 = vor.u32 %v6697, %v6698
      %v6700 = vsel %vm2347, %v6694, %v6699
      %v6701 = vrot.slane %v6043, 5
      %v6702 = vrot.slane %v6046, 6
      %v6703 = vor.u32 %v6701, %v6702
      %v6704 = vrot.slane %v6703, 4
      %v6705 = vrot.slane %v6056, 5
      %v6706 = vrot.slane %v6052, 6
      %v6707 = vor.u32 %v6705, %v6706
      %v6708 = vsel %vm2347, %v6704, %v6707
      %v6709 = vrot.slane %v6707, 4
      %v6710 = vshrl.u32 %v5731, 16
      %v6712 = vrot.slane %v6710, 5
      %v6713 = vrot.slane %v6062, 6
      %v6714 = vor.u32 %v6712, %v6713
      %v6715 = vsel %vm2347, %v6709, %v6714
      %v6716 = vrot.slane %v6067, 5
      %v6717 = vrot.slane %v6070, 6
      %v6718 = vor.u32 %v6716, %v6717
      %v6719 = vrot.slane %v6718, 4
      %v6720 = vrot.slane %v6080, 5
      %v6721 = vrot.slane %v6076, 6
      %v6722 = vor.u32 %v6720, %v6721
      %v6723 = vsel %vm2347, %v6719, %v6722
      %v6724 = vrot.slane %v6722, 4
      %v6725 = vshrl.u32 %v5734, 16
      %v6727 = vrot.slane %v6725, 5
      %v6728 = vrot.slane %v6086, 6
      %v6729 = vor.u32 %v6727, %v6728
      %v6730 = vsel %vm2347, %v6724, %v6729
      %v6731 = vrot.slane %v6091, 5
      %v6732 = vrot.slane %v6094, 6
      %v6733 = vor.u32 %v6731, %v6732
      %v6734 = vrot.slane %v6733, 4
      %v6735 = vrot.slane %v6104, 5
      %v6736 = vrot.slane %v6100, 6
      %v6737 = vor.u32 %v6735, %v6736
      %v6738 = vsel %vm2347, %v6734, %v6737
      %v6739 = vrot.slane %v6737, 4
      %v6740 = vshrl.u32 %v5737, 16
      %v6742 = vrot.slane %v6740, 5
      %v6743 = vrot.slane %v6110, 6
      %v6744 = vor.u32 %v6742, %v6743
      %v6745 = vsel %vm2347, %v6739, %v6744
      %v6746 = vrot.slane %v6115, 5
      %v6747 = vrot.slane %v6118, 6
      %v6748 = vor.u32 %v6746, %v6747
      %v6749 = vrot.slane %v6748, 4
      %v6750 = vrot.slane %v6128, 5
      %v6751 = vrot.slane %v6124, 6
      %v6752 = vor.u32 %v6750, %v6751
      %v6753 = vsel %vm2347, %v6749, %v6752
      %v6754 = vrot.slane %v6752, 4
      %v6755 = vshrl.u32 %v5740, 16
      %v6757 = vrot.slane %v6755, 5
      %v6758 = vrot.slane %v6134, 6
      %v6759 = vor.u32 %v6757, %v6758
      %v6760 = vsel %vm2347, %v6754, %v6759
      %v6761 = vrot.slane %v6139, 5
      %v6762 = vrot.slane %v6142, 6
      %v6763 = vor.u32 %v6761, %v6762
      %v6764 = vrot.slane %v6763, 4
      %v6765 = vrot.slane %v6152, 5
      %v6766 = vrot.slane %v6148, 6
      %v6767 = vor.u32 %v6765, %v6766
      %v6768 = vsel %vm2347, %v6764, %v6767
      %v6769 = vrot.slane %v6767, 4
      %v6770 = vshrl.u32 %v5743, 16
      %v6772 = vrot.slane %v6770, 5
      %v6773 = vrot.slane %v6158, 6
      %v6774 = vor.u32 %v6772, %v6773
      %v6775 = vsel %vm2347, %v6769, %v6774
      %v6776 = vrot.slane %v6163, 5
      %v6777 = vrot.slane %v6166, 6
      %v6778 = vor.u32 %v6776, %v6777
      %v6779 = vrot.slane %v6778, 4
      %v6780 = vrot.slane %v6176, 5
      %v6781 = vrot.slane %v6172, 6
      %v6782 = vor.u32 %v6780, %v6781
      %v6783 = vsel %vm2347, %v6779, %v6782
      %v6784 = vrot.slane %v6782, 4
      %v6785 = vshrl.u32 %v5746, 16
      %v6787 = vrot.slane %v6785, 5
      %v6788 = vrot.slane %v6182, 6
      %v6789 = vor.u32 %v6787, %v6788
      %v6790 = vsel %vm2347, %v6784, %v6789
      %v6791 = vrot.slane %v6187, 5
      %v6792 = vrot.slane %v6190, 6
      %v6793 = vor.u32 %v6791, %v6792
      %v6794 = vrot.slane %v6793, 4
      %v6795 = vrot.slane %v6200, 5
      %v6796 = vrot.slane %v6196, 6
      %v6797 = vor.u32 %v6795, %v6796
      %v6798 = vsel %vm2347, %v6794, %v6797
      %v6799 = vrot.slane %v6797, 4
      %v6800 = vshrl.u32 %v5749, 16
      %v6802 = vrot.slane %v6800, 5
      %v6803 = vrot.slane %v6206, 6
      %v6804 = vor.u32 %v6802, %v6803
      %v6805 = vsel %vm2347, %v6799, %v6804
      %v6806 = vrot.slane %v6211, 5
      %v6807 = vrot.slane %v6214, 6
      %v6808 = vor.u32 %v6806, %v6807
      %v6809 = vrot.slane %v6808, 4
      %v6810 = vrot.slane %v6224, 5
      %v6811 = vrot.slane %v6220, 6
      %v6812 = vor.u32 %v6810, %v6811
      %v6813 = vsel %vm2347, %v6809, %v6812
      %v6814 = vrot.slane %v6812, 4
      %v6815 = vshrl.u32 %v5752, 16
      %v6817 = vrot.slane %v6815, 5
      %v6818 = vrot.slane %v6230, 6
      %v6819 = vor.u32 %v6817, %v6818
      %v6820 = vsel %vm2347, %v6814, %v6819
      %v6821 = vrot.slane %v6235, 5
      %v6822 = vrot.slane %v6238, 6
      %v6823 = vor.u32 %v6821, %v6822
      %v6824 = vrot.slane %v6823, 4
      %v6825 = vrot.slane %v6248, 5
      %v6826 = vrot.slane %v6244, 6
      %v6827 = vor.u32 %v6825, %v6826
      %v6828 = vsel %vm2347, %v6824, %v6827
      %v6829 = vrot.slane %v6827, 4
      %v6830 = vshrl.u32 %v5755, 16
      %v6832 = vrot.slane %v6830, 5
      %v6833 = vrot.slane %v6254, 6
      %v6834 = vor.u32 %v6832, %v6833
      %v6835 = vsel %vm2347, %v6829, %v6834
      %v6836 = vrot.slane %v6259, 5
      %v6837 = vrot.slane %v6262, 6
      %v6838 = vor.u32 %v6836, %v6837
      %v6839 = vrot.slane %v6838, 4
      %v6840 = vrot.slane %v6272, 5
      %v6841 = vrot.slane %v6268, 6
      %v6842 = vor.u32 %v6840, %v6841
      %v6843 = vsel %vm2347, %v6839, %v6842
      %v6844 = vrot.slane %v6842, 4
      %v6845 = vshrl.u32 %v5758, 16
      %v6847 = vrot.slane %v6845, 5
      %v6848 = vrot.slane %v6278, 6
      %v6849 = vor.u32 %v6847, %v6848
      %v6850 = vsel %vm2347, %v6844, %v6849
      %v6851 = vrot.slane %v6283, 5
      %v6852 = vrot.slane %v6286, 6
      %v6853 = vor.u32 %v6851, %v6852
      %v6854 = vrot.slane %v6853, 4
      %v6855 = vrot.slane %v6296, 5
      %v6856 = vrot.slane %v6292, 6
      %v6857 = vor.u32 %v6855, %v6856
      %v6858 = vsel %vm2347, %v6854, %v6857
      %v6859 = vrot.slane %v6857, 4
      %v6860 = vshrl.u32 %v5761, 16
      %v6862 = vrot.slane %v6860, 5
      %v6863 = vrot.slane %v6302, 6
      %v6864 = vor.u32 %v6862, %v6863
      %v6865 = vsel %vm2347, %v6859, %v6864
      %6898 = vst.msk [vmem:[#allocation3 + $0x24] sm:$0xf] %vm1261, %v6633
      %6899 = vst.msk [vmem:[#allocation3 + $0x58] sm:$0xf] %vm1261, %v6640
      %6900 = vst.msk [vmem:[#allocation3 + $0x8c] sm:$0xf] %vm1261, %v6648
      %6901 = vst.msk [vmem:[#allocation3 + $0xc0] sm:$0xf] %vm1261, %v6655
      %6902 = vst.msk [vmem:[#allocation3 + $0xf4] sm:$0xf] %vm1261, %v6663
      %6903 = vst.msk [vmem:[#allocation3 + $0x128] sm:$0xf] %vm1261, %v6670
      %6904 = vst.msk [vmem:[#allocation3 + $0x15c] sm:$0xf] %vm1261, %v6678
      %6905 = vst.msk [vmem:[#allocation3 + $0x190] sm:$0xf] %vm1261, %v6685
      %6906 = vst.msk [vmem:[#allocation3 + $0x1c4] sm:$0xf] %vm1261, %v6693
      %6907 = vst.msk [vmem:[#allocation3 + $0x1f8] sm:$0xf] %vm1261, %v6700
      %6908 = vst.msk [vmem:[#allocation3 + $0x22c] sm:$0xf] %vm1261, %v6708
      %6909 = vst.msk [vmem:[#allocation3 + $0x260] sm:$0xf] %vm1261, %v6715
      %6910 = vst.msk [vmem:[#allocation3 + $0x294] sm:$0xf] %vm1261, %v6723
      %6911 = vst.msk [vmem:[#allocation3 + $0x2c8] sm:$0xf] %vm1261, %v6730
      %6912 = vst.msk [vmem:[#allocation3 + $0x2fc] sm:$0xf] %vm1261, %v6738
      %6913 = vst.msk [vmem:[#allocation3 + $0x330] sm:$0xf] %vm1261, %v6745
      %6914 = vst.msk [vmem:[#allocation3 + $0x364] sm:$0xf] %vm1261, %v6753
      %6915 = vst.msk [vmem:[#allocation3 + $0x398] sm:$0xf] %vm1261, %v6760
      %6916 = vst.msk [vmem:[#allocation3 + $0x3cc] sm:$0xf] %vm1261, %v6768
      %6917 = vst.msk [vmem:[#allocation3 + $0x400] sm:$0xf] %vm1261, %v6775
      %6918 = vst.msk [vmem:[#allocation3 + $0x434] sm:$0xf] %vm1261, %v6783
      %6919 = vst.msk [vmem:[#allocation3 + $0x468] sm:$0xf] %vm1261, %v6790
      %6920 = vst.msk [vmem:[#allocation3 + $0x49c] sm:$0xf] %vm1261, %v6798
      %6921 = vst.msk [vmem:[#allocation3 + $0x4d0] sm:$0xf] %vm1261, %v6805
      %6922 = vst.msk [vmem:[#allocation3 + $0x504] sm:$0xf] %vm1261, %v6813
      %6923 = vst.msk [vmem:[#allocation3 + $0x538] sm:$0xf] %vm1261, %v6820
      %6924 = vst.msk [vmem:[#allocation3 + $0x56c] sm:$0xf] %vm1261, %v6828
      %6925 = vst.msk [vmem:[#allocation3 + $0x5a0] sm:$0xf] %vm1261, %v6835
      %6926 = vst.msk [vmem:[#allocation3 + $0x5d4] sm:$0xf] %vm1261, %v6843
      %6927 = vst.msk [vmem:[#allocation3 + $0x608] sm:$0xf] %vm1261, %v6850
      %6928 = vst.msk [vmem:[#allocation3 + $0x63c] sm:$0xf] %vm1261, %v6858
      %6929 = vst.msk [vmem:[#allocation3 + $0x670] sm:$0xf] %vm1261, %v6865
      %v6930 = vrot.slane %v5714, 6
      %v6931 = vrot.slane %v6930, 4
      %v6932 = vrot.slane %v5715, 6
      %v6933 = vsel %vm2718, %v6931, %v6932
      %v6934 = vrot.slane %v6932, 4
      %v6935 = vrot.slane %v5716, 6
      %v6936 = vsel %vm2718, %v6934, %v6935
      %v6937 = vrot.slane %v5717, 6
      %v6938 = vrot.slane %v6937, 4
      %v6939 = vrot.slane %v5718, 6
      %v6940 = vsel %vm2718, %v6938, %v6939
      %v6941 = vrot.slane %v6939, 4
      %v6942 = vrot.slane %v5719, 6
      %v6943 = vsel %vm2718, %v6941, %v6942
      %v6944 = vrot.slane %v5720, 6
      %v6945 = vrot.slane %v6944, 4
      %v6946 = vrot.slane %v5721, 6
      %v6947 = vsel %vm2718, %v6945, %v6946
      %v6948 = vrot.slane %v6946, 4
      %v6949 = vrot.slane %v5722, 6
      %v6950 = vsel %vm2718, %v6948, %v6949
      %v6951 = vrot.slane %v5723, 6
      %v6952 = vrot.slane %v6951, 4
      %v6953 = vrot.slane %v5724, 6
      %v6954 = vsel %vm2718, %v6952, %v6953
      %v6955 = vrot.slane %v6953, 4
      %v6956 = vrot.slane %v5725, 6
      %v6957 = vsel %vm2718, %v6955, %v6956
      %v6958 = vrot.slane %v5726, 6
      %v6959 = vrot.slane %v6958, 4
      %v6960 = vrot.slane %v5727, 6
      %v6961 = vsel %vm2718, %v6959, %v6960
      %v6962 = vrot.slane %v6960, 4
      %v6963 = vrot.slane %v5728, 6
      %v6964 = vsel %vm2718, %v6962, %v6963
      %v6965 = vrot.slane %v5729, 6
      %v6966 = vrot.slane %v6965, 4
      %v6967 = vrot.slane %v5730, 6
      %v6968 = vsel %vm2718, %v6966, %v6967
      %v6969 = vrot.slane %v6967, 4
      %v6970 = vrot.slane %v5731, 6
      %v6971 = vsel %vm2718, %v6969, %v6970
      %v6972 = vrot.slane %v5732, 6
      %v6973 = vrot.slane %v6972, 4
      %v6974 = vrot.slane %v5733, 6
      %v6975 = vsel %vm2718, %v6973, %v6974
      %v6976 = vrot.slane %v6974, 4
      %v6977 = vrot.slane %v5734, 6
      %v6978 = vsel %vm2718, %v6976, %v6977
      %v6979 = vrot.slane %v5735, 6
      %v6980 = vrot.slane %v6979, 4
      %v6981 = vrot.slane %v5736, 6
      %v6982 = vsel %vm2718, %v6980, %v6981
      %v6983 = vrot.slane %v6981, 4
      %v6984 = vrot.slane %v5737, 6
      %v6985 = vsel %vm2718, %v6983, %v6984
      %v6986 = vrot.slane %v5738, 6
      %v6987 = vrot.slane %v6986, 4
      %v6988 = vrot.slane %v5739, 6
      %v6989 = vsel %vm2718, %v6987, %v6988
      %v6990 = vrot.slane %v6988, 4
      %v6991 = vrot.slane %v5740, 6
      %v6992 = vsel %vm2718, %v6990, %v6991
      %v6993 = vrot.slane %v5741, 6
      %v6994 = vrot.slane %v6993, 4
      %v6995 = vrot.slane %v5742, 6
      %v6996 = vsel %vm2718, %v6994, %v6995
      %v6997 = vrot.slane %v6995, 4
      %v6998 = vrot.slane %v5743, 6
      %v6999 = vsel %vm2718, %v6997, %v6998
      %v7000 = vrot.slane %v5744, 6
      %v7001 = vrot.slane %v7000, 4
      %v7002 = vrot.slane %v5745, 6
      %v7003 = vsel %vm2718, %v7001, %v7002
      %v7004 = vrot.slane %v7002, 4
      %v7005 = vrot.slane %v5746, 6
      %v7006 = vsel %vm2718, %v7004, %v7005
      %v7007 = vrot.slane %v5747, 6
      %v7008 = vrot.slane %v7007, 4
      %v7009 = vrot.slane %v5748, 6
      %v7010 = vsel %vm2718, %v7008, %v7009
      %v7011 = vrot.slane %v7009, 4
      %v7012 = vrot.slane %v5749, 6
      %v7013 = vsel %vm2718, %v7011, %v7012
      %v7014 = vrot.slane %v5750, 6
      %v7015 = vrot.slane %v7014, 4
      %v7016 = vrot.slane %v5751, 6
      %v7017 = vsel %vm2718, %v7015, %v7016
      %v7018 = vrot.slane %v7016, 4
      %v7019 = vrot.slane %v5752, 6
      %v7020 = vsel %vm2718, %v7018, %v7019
      %v7021 = vrot.slane %v5753, 6
      %v7022 = vrot.slane %v7021, 4
      %v7023 = vrot.slane %v5754, 6
      %v7024 = vsel %vm2718, %v7022, %v7023
      %v7025 = vrot.slane %v7023, 4
      %v7026 = vrot.slane %v5755, 6
      %v7027 = vsel %vm2718, %v7025, %v7026
      %v7028 = vrot.slane %v5756, 6
      %v7029 = vrot.slane %v7028, 4
      %v7030 = vrot.slane %v5757, 6
      %v7031 = vsel %vm2718, %v7029, %v7030
      %v7032 = vrot.slane %v7030, 4
      %v7033 = vrot.slane %v5758, 6
      %v7034 = vsel %vm2718, %v7032, %v7033
      %v7035 = vrot.slane %v5759, 6
      %v7036 = vrot.slane %v7035, 4
      %v7037 = vrot.slane %v5760, 6
      %v7038 = vsel %vm2718, %v7036, %v7037
      %v7039 = vrot.slane %v7037, 4
      %v7040 = vrot.slane %v5761, 6
      %v7041 = vsel %vm2718, %v7039, %v7040
      %7042 = vrot.lane.b32.xlu0 %v6933, 64
      %v7043 = vpop.permute.xlu0 %7042
      %7044 = vrot.lane.b32.xlu0 %v6936, 64
      %v7045 = vpop.permute.xlu0 %7044
      %7046 = vrot.lane.b32.xlu0 %v6940, 64
      %v7047 = vpop.permute.xlu0 %7046
      %7048 = vrot.lane.b32.xlu0 %v6943, 64
      %v7049 = vpop.permute.xlu0 %7048
      %7050 = vrot.lane.b32.xlu0 %v6947, 64
      %v7051 = vpop.permute.xlu0 %7050
      %7052 = vrot.lane.b32.xlu0 %v6950, 64
      %v7053 = vpop.permute.xlu0 %7052
      %7054 = vrot.lane.b32.xlu0 %v6954, 64
      %v7055 = vpop.permute.xlu0 %7054
      %7056 = vrot.lane.b32.xlu0 %v6957, 64
      %v7057 = vpop.permute.xlu0 %7056
      %7058 = vrot.lane.b32.xlu0 %v6961, 64
      %v7059 = vpop.permute.xlu0 %7058
      %7060 = vrot.lane.b32.xlu0 %v6964, 64
      %v7061 = vpop.permute.xlu0 %7060
      %7062 = vrot.lane.b32.xlu0 %v6968, 64
      %v7063 = vpop.permute.xlu0 %7062
      %7064 = vrot.lane.b32.xlu0 %v6971, 64
      %v7065 = vpop.permute.xlu0 %7064
      %7066 = vrot.lane.b32.xlu0 %v6975, 64
      %v7067 = vpop.permute.xlu0 %7066
      %7068 = vrot.lane.b32.xlu0 %v6978, 64
      %v7069 = vpop.permute.xlu0 %7068
      %7070 = vrot.lane.b32.xlu0 %v6982, 64
      %v7071 = vpop.permute.xlu0 %7070
      %7072 = vrot.lane.b32.xlu0 %v6985, 64
      %v7073 = vpop.permute.xlu0 %7072
      %7074 = vrot.lane.b32.xlu0 %v6989, 64
      %v7075 = vpop.permute.xlu0 %7074
      %7076 = vrot.lane.b32.xlu0 %v6992, 64
      %v7077 = vpop.permute.xlu0 %7076
      %7078 = vrot.lane.b32.xlu0 %v6996, 64
      %v7079 = vpop.permute.xlu0 %7078
      %7080 = vrot.lane.b32.xlu0 %v6999, 64
      %v7081 = vpop.permute.xlu0 %7080
      %7082 = vrot.lane.b32.xlu0 %v7003, 64
      %v7083 = vpop.permute.xlu0 %7082
      %7084 = vrot.lane.b32.xlu0 %v7006, 64
      %v7085 = vpop.permute.xlu0 %7084
      %7086 = vrot.lane.b32.xlu0 %v7010, 64
      %v7087 = vpop.permute.xlu0 %7086
      %7088 = vrot.lane.b32.xlu0 %v7013, 64
      %v7089 = vpop.permute.xlu0 %7088
      %7090 = vrot.lane.b32.xlu0 %v7017, 64
      %v7091 = vpop.permute.xlu0 %7090
      %7092 = vrot.lane.b32.xlu0 %v7020, 64
      %v7093 = vpop.permute.xlu0 %7092
      %7094 = vrot.lane.b32.xlu0 %v7024, 64
      %v7095 = vpop.permute.xlu0 %7094
      %7096 = vrot.lane.b32.xlu0 %v7027, 64
      %v7097 = vpop.permute.xlu0 %7096
      %7098 = vrot.lane.b32.xlu0 %v7031, 64
      %v7099 = vpop.permute.xlu0 %7098
      %7100 = vrot.lane.b32.xlu0 %v7034, 64
      %v7101 = vpop.permute.xlu0 %7100
      %7102 = vrot.lane.b32.xlu0 %v7038, 64
      %v7103 = vpop.permute.xlu0 %7102
      %7104 = vrot.lane.b32.xlu0 %v7041, 64
      %v7105 = vpop.permute.xlu0 %7104
      %7138 = vst.msk [vmem:[#allocation3 + $0x24] sm:$0xf] %vm2085, %v7043
      %7139 = vst.msk [vmem:[#allocation3 + $0x58] sm:$0xf] %vm2085, %v7045
      %7140 = vst.msk [vmem:[#allocation3 + $0x8c] sm:$0xf] %vm2085, %v7047
      %7141 = vst.msk [vmem:[#allocation3 + $0xc0] sm:$0xf] %vm2085, %v7049
      %7142 = vst.msk [vmem:[#allocation3 + $0xf4] sm:$0xf] %vm2085, %v7051
      %7143 = vst.msk [vmem:[#allocation3 + $0x128] sm:$0xf] %vm2085, %v7053
      %7144 = vst.msk [vmem:[#allocation3 + $0x15c] sm:$0xf] %vm2085, %v7055
      %7145 = vst.msk [vmem:[#allocation3 + $0x190] sm:$0xf] %vm2085, %v7057
      %7146 = vst.msk [vmem:[#allocation3 + $0x1c4] sm:$0xf] %vm2085, %v7059
      %7147 = vst.msk [vmem:[#allocation3 + $0x1f8] sm:$0xf] %vm2085, %v7061
      %7148 = vst.msk [vmem:[#allocation3 + $0x22c] sm:$0xf] %vm2085, %v7063
      %7149 = vst.msk [vmem:[#allocation3 + $0x260] sm:$0xf] %vm2085, %v7065
      %7150 = vst.msk [vmem:[#allocation3 + $0x294] sm:$0xf] %vm2085, %v7067
      %7151 = vst.msk [vmem:[#allocation3 + $0x2c8] sm:$0xf] %vm2085, %v7069
      %7152 = vst.msk [vmem:[#allocation3 + $0x2fc] sm:$0xf] %vm2085, %v7071
      %7153 = vst.msk [vmem:[#allocation3 + $0x330] sm:$0xf] %vm2085, %v7073
      %7154 = vst.msk [vmem:[#allocation3 + $0x364] sm:$0xf] %vm2085, %v7075
      %7155 = vst.msk [vmem:[#allocation3 + $0x398] sm:$0xf] %vm2085, %v7077
      %7156 = vst.msk [vmem:[#allocation3 + $0x3cc] sm:$0xf] %vm2085, %v7079
      %7157 = vst.msk [vmem:[#allocation3 + $0x400] sm:$0xf] %vm2085, %v7081
      %7158 = vst.msk [vmem:[#allocation3 + $0x434] sm:$0xf] %vm2085, %v7083
      %7159 = vst.msk [vmem:[#allocation3 + $0x468] sm:$0xf] %vm2085, %v7085
      %7160 = vst.msk [vmem:[#allocation3 + $0x49c] sm:$0xf] %vm2085, %v7087
      %7161 = vst.msk [vmem:[#allocation3 + $0x4d0] sm:$0xf] %vm2085, %v7089
      %7162 = vst.msk [vmem:[#allocation3 + $0x504] sm:$0xf] %vm2085, %v7091
      %7163 = vst.msk [vmem:[#allocation3 + $0x538] sm:$0xf] %vm2085, %v7093
      %7164 = vst.msk [vmem:[#allocation3 + $0x56c] sm:$0xf] %vm2085, %v7095
      %7165 = vst.msk [vmem:[#allocation3 + $0x5a0] sm:$0xf] %vm2085, %v7097
      %7166 = vst.msk [vmem:[#allocation3 + $0x5d4] sm:$0xf] %vm2085, %v7099
      %7167 = vst.msk [vmem:[#allocation3 + $0x608] sm:$0xf] %vm2085, %v7101
      %7168 = vst.msk [vmem:[#allocation3 + $0x63c] sm:$0xf] %vm2085, %v7103
      %7169 = vst.msk [vmem:[#allocation3 + $0x670] sm:$0xf] %vm2085, %v7105
      %v7170 = vld [vmem:[%s1258] sm:$0xf]
      %v7171 = vld [vmem:[%s1258 + $0x4] sm:$0xf]
      %v7172 = vld [vmem:[%s1258 + $0x8] sm:$0x3]
      %v7173 = vld [vmem:[%s1258 + $0xc] sm:$0xf]
      %v7174 = vld [vmem:[%s1258 + $0x10] sm:$0xf]
      %v7175 = vld [vmem:[%s1258 + $0x14] sm:$0x3]
      %v7176 = vld [vmem:[%s1258 + $0x18] sm:$0xf]
      %v7177 = vld [vmem:[%s1258 + $0x1c] sm:$0xf]
      %v7178 = vld [vmem:[%s1258 + $0x20] sm:$0x3]
      %v7179 = vld [vmem:[%s1258 + $0x24] sm:$0xf]
      %v7180 = vld [vmem:[%s1258 + $0x28] sm:$0xf]
      %v7181 = vld [vmem:[%s1258 + $0x2c] sm:$0x3]
      %v7182 = vld [vmem:[%s1258 + $0x30] sm:$0xf]
      %v7183 = vld [vmem:[%s1258 + $0x34] sm:$0xf]
      %v7184 = vld [vmem:[%s1258 + $0x38] sm:$0x3]
      %v7185 = vld [vmem:[%s1258 + $0x3c] sm:$0xf]
      %v7186 = vld [vmem:[%s1258 + $0x40] sm:$0xf]
      %v7187 = vld [vmem:[%s1258 + $0x44] sm:$0x3]
      %v7188 = vld [vmem:[%s1258 + $0x48] sm:$0xf]
      %v7189 = vld [vmem:[%s1258 + $0x4c] sm:$0xf]
      %v7190 = vld [vmem:[%s1258 + $0x50] sm:$0x3]
      %v7191 = vld [vmem:[%s1258 + $0x54] sm:$0xf]
      %v7192 = vld [vmem:[%s1258 + $0x58] sm:$0xf]
      %v7193 = vld [vmem:[%s1258 + $0x5c] sm:$0x3]
      %v7194 = vld [vmem:[%s1258 + $0x60] sm:$0xf]
      %v7195 = vld [vmem:[%s1258 + $0x64] sm:$0xf]
      %v7196 = vld [vmem:[%s1258 + $0x68] sm:$0x3]
      %v7197 = vld [vmem:[%s1258 + $0x6c] sm:$0xf]
      %v7198 = vld [vmem:[%s1258 + $0x70] sm:$0xf]
      %v7199 = vld [vmem:[%s1258 + $0x74] sm:$0x3]
      %v7200 = vld [vmem:[%s1258 + $0x78] sm:$0xf]
      %v7201 = vld [vmem:[%s1258 + $0x7c] sm:$0xf]
      %v7202 = vld [vmem:[%s1258 + $0x80] sm:$0x3]
      %v7203 = vld [vmem:[%s1258 + $0x84] sm:$0xf]
      %v7204 = vld [vmem:[%s1258 + $0x88] sm:$0xf]
      %v7205 = vld [vmem:[%s1258 + $0x8c] sm:$0x3]
      %v7206 = vld [vmem:[%s1258 + $0x90] sm:$0xf]
      %v7207 = vld [vmem:[%s1258 + $0x94] sm:$0xf]
      %v7208 = vld [vmem:[%s1258 + $0x98] sm:$0x3]
      %v7209 = vld [vmem:[%s1258 + $0x9c] sm:$0xf]
      %v7210 = vld [vmem:[%s1258 + $0xa0] sm:$0xf]
      %v7211 = vld [vmem:[%s1258 + $0xa4] sm:$0x3]
      %v7212 = vld [vmem:[%s1258 + $0xa8] sm:$0xf]
      %v7213 = vld [vmem:[%s1258 + $0xac] sm:$0xf]
      %v7214 = vld [vmem:[%s1258 + $0xb0] sm:$0x3]
      %v7215 = vld [vmem:[%s1258 + $0xb4] sm:$0xf]
      %v7216 = vld [vmem:[%s1258 + $0xb8] sm:$0xf]
      %v7217 = vld [vmem:[%s1258 + $0xbc] sm:$0x3]
      %7218 = vst.msk [vmem:[#allocation3 + $0x28] sm:$0xf] %vm1261, %v7170
      %7219 = vst.msk [vmem:[#allocation3 + $0x5c] sm:$0xf] %vm1261, %v7171
      %7220 = vst.msk [vmem:[#allocation3 + $0x90] sm:$0xf] %vm1261, %v7173
      %7221 = vst.msk [vmem:[#allocation3 + $0xc4] sm:$0xf] %vm1261, %v7174
      %7222 = vst.msk [vmem:[#allocation3 + $0xf8] sm:$0xf] %vm1261, %v7176
      %7223 = vst.msk [vmem:[#allocation3 + $0x12c] sm:$0xf] %vm1261, %v7177
      %7224 = vst.msk [vmem:[#allocation3 + $0x160] sm:$0xf] %vm1261, %v7179
      %7225 = vst.msk [vmem:[#allocation3 + $0x194] sm:$0xf] %vm1261, %v7180
      %7226 = vst.msk [vmem:[#allocation3 + $0x1c8] sm:$0xf] %vm1261, %v7182
      %7227 = vst.msk [vmem:[#allocation3 + $0x1fc] sm:$0xf] %vm1261, %v7183
      %7228 = vst.msk [vmem:[#allocation3 + $0x230] sm:$0xf] %vm1261, %v7185
      %7229 = vst.msk [vmem:[#allocation3 + $0x264] sm:$0xf] %vm1261, %v7186
      %7230 = vst.msk [vmem:[#allocation3 + $0x298] sm:$0xf] %vm1261, %v7188
      %7231 = vst.msk [vmem:[#allocation3 + $0x2cc] sm:$0xf] %vm1261, %v7189
      %7232 = vst.msk [vmem:[#allocation3 + $0x300] sm:$0xf] %vm1261, %v7191
      %7233 = vst.msk [vmem:[#allocation3 + $0x334] sm:$0xf] %vm1261, %v7192
      %7234 = vst.msk [vmem:[#allocation3 + $0x368] sm:$0xf] %vm1261, %v7194
      %7235 = vst.msk [vmem:[#allocation3 + $0x39c] sm:$0xf] %vm1261, %v7195
      %7236 = vst.msk [vmem:[#allocation3 + $0x3d0] sm:$0xf] %vm1261, %v7197
      %7237 = vst.msk [vmem:[#allocation3 + $0x404] sm:$0xf] %vm1261, %v7198
      %7238 = vst.msk [vmem:[#allocation3 + $0x438] sm:$0xf] %vm1261, %v7200
      %7239 = vst.msk [vmem:[#allocation3 + $0x46c] sm:$0xf] %vm1261, %v7201
      %7240 = vst.msk [vmem:[#allocation3 + $0x4a0] sm:$0xf] %vm1261, %v7203
      %7241 = vst.msk [vmem:[#allocation3 + $0x4d4] sm:$0xf] %vm1261, %v7204
      %7242 = vst.msk [vmem:[#allocation3 + $0x508] sm:$0xf] %vm1261, %v7206
      %7243 = vst.msk [vmem:[#allocation3 + $0x53c] sm:$0xf] %vm1261, %v7207
      %7244 = vst.msk [vmem:[#allocation3 + $0x570] sm:$0xf] %vm1261, %v7209
      %7245 = vst.msk [vmem:[#allocation3 + $0x5a4] sm:$0xf] %vm1261, %v7210
      %7246 = vst.msk [vmem:[#allocation3 + $0x5d8] sm:$0xf] %vm1261, %v7212
      %7247 = vst.msk [vmem:[#allocation3 + $0x60c] sm:$0xf] %vm1261, %v7213
      %7248 = vst.msk [vmem:[#allocation3 + $0x640] sm:$0xf] %vm1261, %v7215
      %7249 = vst.msk [vmem:[#allocation3 + $0x674] sm:$0xf] %vm1261, %v7216
      %v7251 = vshrl.u32 %v7170, 16
      %v7253 = vrot.slane %v7251, 4
      %v7254 = vshll.u32 %v7170, 16
      %v7256 = vrot.slane %v7254, 5
      %v7257 = vor.u32 %v7253, %v7256
      %v7258 = vrot.slane %v7257, 4
      %v7260 = vshll.u32 %v7171, 16
      %v7262 = vrot.slane %v7260, 5
      %v7263 = vsel %vm1604, %v7258, %v7262
      %v7264 = vshrl.u32 %v7171, 16
      %v7266 = vrot.slane %v7264, 4
      %v7267 = vor.u32 %v7266, %v7262
      %v7268 = vrot.slane %v7267, 4
      %v7270 = vshll.u32 %v7172, 16
      %v7272 = vrot.slane %v7270, 5
      %v7273 = vsel %vm1604, %v7268, %v7272
      %v7275 = vshrl.u32 %v7173, 16
      %v7277 = vrot.slane %v7275, 4
      %v7278 = vshll.u32 %v7173, 16
      %v7280 = vrot.slane %v7278, 5
      %v7281 = vor.u32 %v7277, %v7280
      %v7282 = vrot.slane %v7281, 4
      %v7284 = vshll.u32 %v7174, 16
      %v7286 = vrot.slane %v7284, 5
      %v7287 = vsel %vm1604, %v7282, %v7286
      %v7288 = vshrl.u32 %v7174, 16
      %v7290 = vrot.slane %v7288, 4
      %v7291 = vor.u32 %v7290, %v7286
      %v7292 = vrot.slane %v7291, 4
      %v7294 = vshll.u32 %v7175, 16
      %v7296 = vrot.slane %v7294, 5
      %v7297 = vsel %vm1604, %v7292, %v7296
      %v7299 = vshrl.u32 %v7176, 16
      %v7301 = vrot.slane %v7299, 4
      %v7302 = vshll.u32 %v7176, 16
      %v7304 = vrot.slane %v7302, 5
      %v7305 = vor.u32 %v7301, %v7304
      %v7306 = vrot.slane %v7305, 4
      %v7308 = vshll.u32 %v7177, 16
      %v7310 = vrot.slane %v7308, 5
      %v7311 = vsel %vm1604, %v7306, %v7310
      %v7312 = vshrl.u32 %v7177, 16
      %v7314 = vrot.slane %v7312, 4
      %v7315 = vor.u32 %v7314, %v7310
      %v7316 = vrot.slane %v7315, 4
      %v7318 = vshll.u32 %v7178, 16
      %v7320 = vrot.slane %v7318, 5
      %v7321 = vsel %vm1604, %v7316, %v7320
      %v7323 = vshrl.u32 %v7179, 16
      %v7325 = vrot.slane %v7323, 4
      %v7326 = vshll.u32 %v7179, 16
      %v7328 = vrot.slane %v7326, 5
      %v7329 = vor.u32 %v7325, %v7328
      %v7330 = vrot.slane %v7329, 4
      %v7332 = vshll.u32 %v7180, 16
      %v7334 = vrot.slane %v7332, 5
      %v7335 = vsel %vm1604, %v7330, %v7334
      %v7336 = vshrl.u32 %v7180, 16
      %v7338 = vrot.slane %v7336, 4
      %v7339 = vor.u32 %v7338, %v7334
      %v7340 = vrot.slane %v7339, 4
      %v7342 = vshll.u32 %v7181, 16
      %v7344 = vrot.slane %v7342, 5
      %v7345 = vsel %vm1604, %v7340, %v7344
      %v7347 = vshrl.u32 %v7182, 16
      %v7349 = vrot.slane %v7347, 4
      %v7350 = vshll.u32 %v7182, 16
      %v7352 = vrot.slane %v7350, 5
      %v7353 = vor.u32 %v7349, %v7352
      %v7354 = vrot.slane %v7353, 4
      %v7356 = vshll.u32 %v7183, 16
      %v7358 = vrot.slane %v7356, 5
      %v7359 = vsel %vm1604, %v7354, %v7358
      %v7360 = vshrl.u32 %v7183, 16
      %v7362 = vrot.slane %v7360, 4
      %v7363 = vor.u32 %v7362, %v7358
      %v7364 = vrot.slane %v7363, 4
      %v7366 = vshll.u32 %v7184, 16
      %v7368 = vrot.slane %v7366, 5
      %v7369 = vsel %vm1604, %v7364, %v7368
      %v7371 = vshrl.u32 %v7185, 16
      %v7373 = vrot.slane %v7371, 4
      %v7374 = vshll.u32 %v7185, 16
      %v7376 = vrot.slane %v7374, 5
      %v7377 = vor.u32 %v7373, %v7376
      %v7378 = vrot.slane %v7377, 4
      %v7380 = vshll.u32 %v7186, 16
      %v7382 = vrot.slane %v7380, 5
      %v7383 = vsel %vm1604, %v7378, %v7382
      %v7384 = vshrl.u32 %v7186, 16
      %v7386 = vrot.slane %v7384, 4
      %v7387 = vor.u32 %v7386, %v7382
      %v7388 = vrot.slane %v7387, 4
      %v7390 = vshll.u32 %v7187, 16
      %v7392 = vrot.slane %v7390, 5
      %v7393 = vsel %vm1604, %v7388, %v7392
      %v7395 = vshrl.u32 %v7188, 16
      %v7397 = vrot.slane %v7395, 4
      %v7398 = vshll.u32 %v7188, 16
      %v7400 = vrot.slane %v7398, 5
      %v7401 = vor.u32 %v7397, %v7400
      %v7402 = vrot.slane %v7401, 4
      %v7404 = vshll.u32 %v7189, 16
      %v7406 = vrot.slane %v7404, 5
      %v7407 = vsel %vm1604, %v7402, %v7406
      %v7408 = vshrl.u32 %v7189, 16
      %v7410 = vrot.slane %v7408, 4
      %v7411 = vor.u32 %v7410, %v7406
      %v7412 = vrot.slane %v7411, 4
      %v7414 = vshll.u32 %v7190, 16
      %v7416 = vrot.slane %v7414, 5
      %v7417 = vsel %vm1604, %v7412, %v7416
      %v7419 = vshrl.u32 %v7191, 16
      %v7421 = vrot.slane %v7419, 4
      %v7422 = vshll.u32 %v7191, 16
      %v7424 = vrot.slane %v7422, 5
      %v7425 = vor.u32 %v7421, %v7424
      %v7426 = vrot.slane %v7425, 4
      %v7428 = vshll.u32 %v7192, 16
      %v7430 = vrot.slane %v7428, 5
      %v7431 = vsel %vm1604, %v7426, %v7430
      %v7432 = vshrl.u32 %v7192, 16
      %v7434 = vrot.slane %v7432, 4
      %v7435 = vor.u32 %v7434, %v7430
      %v7436 = vrot.slane %v7435, 4
      %v7438 = vshll.u32 %v7193, 16
      %v7440 = vrot.slane %v7438, 5
      %v7441 = vsel %vm1604, %v7436, %v7440
      %v7443 = vshrl.u32 %v7194, 16
      %v7445 = vrot.slane %v7443, 4
      %v7446 = vshll.u32 %v7194, 16
      %v7448 = vrot.slane %v7446, 5
      %v7449 = vor.u32 %v7445, %v7448
      %v7450 = vrot.slane %v7449, 4
      %v7452 = vshll.u32 %v7195, 16
      %v7454 = vrot.slane %v7452, 5
      %v7455 = vsel %vm1604, %v7450, %v7454
      %v7456 = vshrl.u32 %v7195, 16
      %v7458 = vrot.slane %v7456, 4
      %v7459 = vor.u32 %v7458, %v7454
      %v7460 = vrot.slane %v7459, 4
      %v7462 = vshll.u32 %v7196, 16
      %v7464 = vrot.slane %v7462, 5
      %v7465 = vsel %vm1604, %v7460, %v7464
      %v7467 = vshrl.u32 %v7197, 16
      %v7469 = vrot.slane %v7467, 4
      %v7470 = vshll.u32 %v7197, 16
      %v7472 = vrot.slane %v7470, 5
      %v7473 = vor.u32 %v7469, %v7472
      %v7474 = vrot.slane %v7473, 4
      %v7476 = vshll.u32 %v7198, 16
      %v7478 = vrot.slane %v7476, 5
      %v7479 = vsel %vm1604, %v7474, %v7478
      %v7480 = vshrl.u32 %v7198, 16
      %v7482 = vrot.slane %v7480, 4
      %v7483 = vor.u32 %v7482, %v7478
      %v7484 = vrot.slane %v7483, 4
      %v7486 = vshll.u32 %v7199, 16
      %v7488 = vrot.slane %v7486, 5
      %v7489 = vsel %vm1604, %v7484, %v7488
      %v7491 = vshrl.u32 %v7200, 16
      %v7493 = vrot.slane %v7491, 4
      %v7494 = vshll.u32 %v7200, 16
      %v7496 = vrot.slane %v7494, 5
      %v7497 = vor.u32 %v7493, %v7496
      %v7498 = vrot.slane %v7497, 4
      %v7500 = vshll.u32 %v7201, 16
      %v7502 = vrot.slane %v7500, 5
      %v7503 = vsel %vm1604, %v7498, %v7502
      %v7504 = vshrl.u32 %v7201, 16
      %v7506 = vrot.slane %v7504, 4
      %v7507 = vor.u32 %v7506, %v7502
      %v7508 = vrot.slane %v7507, 4
      %v7510 = vshll.u32 %v7202, 16
      %v7512 = vrot.slane %v7510, 5
      %v7513 = vsel %vm1604, %v7508, %v7512
      %v7515 = vshrl.u32 %v7203, 16
      %v7517 = vrot.slane %v7515, 4
      %v7518 = vshll.u32 %v7203, 16
      %v7520 = vrot.slane %v7518, 5
      %v7521 = vor.u32 %v7517, %v7520
      %v7522 = vrot.slane %v7521, 4
      %v7524 = vshll.u32 %v7204, 16
      %v7526 = vrot.slane %v7524, 5
      %v7527 = vsel %vm1604, %v7522, %v7526
      %v7528 = vshrl.u32 %v7204, 16
      %v7530 = vrot.slane %v7528, 4
      %v7531 = vor.u32 %v7530, %v7526
      %v7532 = vrot.slane %v7531, 4
      %v7534 = vshll.u32 %v7205, 16
      %v7536 = vrot.slane %v7534, 5
      %v7537 = vsel %vm1604, %v7532, %v7536
      %v7539 = vshrl.u32 %v7206, 16
      %v7541 = vrot.slane %v7539, 4
      %v7542 = vshll.u32 %v7206, 16
      %v7544 = vrot.slane %v7542, 5
      %v7545 = vor.u32 %v7541, %v7544
      %v7546 = vrot.slane %v7545, 4
      %v7548 = vshll.u32 %v7207, 16
      %v7550 = vrot.slane %v7548, 5
      %v7551 = vsel %vm1604, %v7546, %v7550
      %v7552 = vshrl.u32 %v7207, 16
      %v7554 = vrot.slane %v7552, 4
      %v7555 = vor.u32 %v7554, %v7550
      %v7556 = vrot.slane %v7555, 4
      %v7558 = vshll.u32 %v7208, 16
      %v7560 = vrot.slane %v7558, 5
      %v7561 = vsel %vm1604, %v7556, %v7560
      %v7563 = vshrl.u32 %v7209, 16
      %v7565 = vrot.slane %v7563, 4
      %v7566 = vshll.u32 %v7209, 16
      %v7568 = vrot.slane %v7566, 5
      %v7569 = vor.u32 %v7565, %v7568
      %v7570 = vrot.slane %v7569, 4
      %v7572 = vshll.u32 %v7210, 16
      %v7574 = vrot.slane %v7572, 5
      %v7575 = vsel %vm1604, %v7570, %v7574
      %v7576 = vshrl.u32 %v7210, 16
      %v7578 = vrot.slane %v7576, 4
      %v7579 = vor.u32 %v7578, %v7574
      %v7580 = vrot.slane %v7579, 4
      %v7582 = vshll.u32 %v7211, 16
      %v7584 = vrot.slane %v7582, 5
      %v7585 = vsel %vm1604, %v7580, %v7584
      %v7587 = vshrl.u32 %v7212, 16
      %v7589 = vrot.slane %v7587, 4
      %v7590 = vshll.u32 %v7212, 16
      %v7592 = vrot.slane %v7590, 5
      %v7593 = vor.u32 %v7589, %v7592
      %v7594 = vrot.slane %v7593, 4
      %v7596 = vshll.u32 %v7213, 16
      %v7598 = vrot.slane %v7596, 5
      %v7599 = vsel %vm1604, %v7594, %v7598
      %v7600 = vshrl.u32 %v7213, 16
      %v7602 = vrot.slane %v7600, 4
      %v7603 = vor.u32 %v7602, %v7598
      %v7604 = vrot.slane %v7603, 4
      %v7606 = vshll.u32 %v7214, 16
      %v7608 = vrot.slane %v7606, 5
      %v7609 = vsel %vm1604, %v7604, %v7608
      %v7611 = vshrl.u32 %v7215, 16
      %v7613 = vrot.slane %v7611, 4
      %v7614 = vshll.u32 %v7215, 16
      %v7616 = vrot.slane %v7614, 5
      %v7617 = vor.u32 %v7613, %v7616
      %v7618 = vrot.slane %v7617, 4
      %v7620 = vshll.u32 %v7216, 16
      %v7622 = vrot.slane %v7620, 5
      %v7623 = vsel %vm1604, %v7618, %v7622
      %v7624 = vshrl.u32 %v7216, 16
      %v7626 = vrot.slane %v7624, 4
      %v7627 = vor.u32 %v7626, %v7622
      %v7628 = vrot.slane %v7627, 4
      %v7630 = vshll.u32 %v7217, 16
      %v7632 = vrot.slane %v7630, 5
      %v7633 = vsel %vm1604, %v7628, %v7632
      %7634 = vrot.lane.b32.xlu0 %v7263, 64
      %v7635 = vpop.permute.xlu0 %7634
      %7636 = vrot.lane.b32.xlu0 %v7273, 64
      %v7637 = vpop.permute.xlu0 %7636
      %7638 = vrot.lane.b32.xlu0 %v7287, 64
      %v7639 = vpop.permute.xlu0 %7638
      %7640 = vrot.lane.b32.xlu0 %v7297, 64
      %v7641 = vpop.permute.xlu0 %7640
      %7642 = vrot.lane.b32.xlu0 %v7311, 64
      %v7643 = vpop.permute.xlu0 %7642
      %7644 = vrot.lane.b32.xlu0 %v7321, 64
      %v7645 = vpop.permute.xlu0 %7644
      %7646 = vrot.lane.b32.xlu0 %v7335, 64
      %v7647 = vpop.permute.xlu0 %7646
      %7648 = vrot.lane.b32.xlu0 %v7345, 64
      %v7649 = vpop.permute.xlu0 %7648
      %7650 = vrot.lane.b32.xlu0 %v7359, 64
      %v7651 = vpop.permute.xlu0 %7650
      %7652 = vrot.lane.b32.xlu0 %v7369, 64
      %v7653 = vpop.permute.xlu0 %7652
      %7654 = vrot.lane.b32.xlu0 %v7383, 64
      %v7655 = vpop.permute.xlu0 %7654
      %7656 = vrot.lane.b32.xlu0 %v7393, 64
      %v7657 = vpop.permute.xlu0 %7656
      %7658 = vrot.lane.b32.xlu0 %v7407, 64
      %v7659 = vpop.permute.xlu0 %7658
      %7660 = vrot.lane.b32.xlu0 %v7417, 64
      %v7661 = vpop.permute.xlu0 %7660
      %7662 = vrot.lane.b32.xlu0 %v7431, 64
      %v7663 = vpop.permute.xlu0 %7662
      %7664 = vrot.lane.b32.xlu0 %v7441, 64
      %v7665 = vpop.permute.xlu0 %7664
      %7666 = vrot.lane.b32.xlu0 %v7455, 64
      %v7667 = vpop.permute.xlu0 %7666
      %7668 = vrot.lane.b32.xlu0 %v7465, 64
      %v7669 = vpop.permute.xlu0 %7668
      %7670 = vrot.lane.b32.xlu0 %v7479, 64
      %v7671 = vpop.permute.xlu0 %7670
      %7672 = vrot.lane.b32.xlu0 %v7489, 64
      %v7673 = vpop.permute.xlu0 %7672
      %7674 = vrot.lane.b32.xlu0 %v7503, 64
      %v7675 = vpop.permute.xlu0 %7674
      %7676 = vrot.lane.b32.xlu0 %v7513, 64
      %v7677 = vpop.permute.xlu0 %7676
      %7678 = vrot.lane.b32.xlu0 %v7527, 64
      %v7679 = vpop.permute.xlu0 %7678
      %7680 = vrot.lane.b32.xlu0 %v7537, 64
      %v7681 = vpop.permute.xlu0 %7680
      %7682 = vrot.lane.b32.xlu0 %v7551, 64
      %v7683 = vpop.permute.xlu0 %7682
      %7684 = vrot.lane.b32.xlu0 %v7561, 64
      %v7685 = vpop.permute.xlu0 %7684
      %7686 = vrot.lane.b32.xlu0 %v7575, 64
      %v7687 = vpop.permute.xlu0 %7686
      %7688 = vrot.lane.b32.xlu0 %v7585, 64
      %v7689 = vpop.permute.xlu0 %7688
      %7690 = vrot.lane.b32.xlu0 %v7599, 64
      %v7691 = vpop.permute.xlu0 %7690
      %7692 = vrot.lane.b32.xlu0 %v7609, 64
      %v7693 = vpop.permute.xlu0 %7692
      %7694 = vrot.lane.b32.xlu0 %v7623, 64
      %v7695 = vpop.permute.xlu0 %7694
      %7696 = vrot.lane.b32.xlu0 %v7633, 64
      %v7697 = vpop.permute.xlu0 %7696
      %7730 = vst.msk [vmem:[#allocation3 + $0x28] sm:$0xf] %vm2085, %v7635
      %7731 = vst.msk [vmem:[#allocation3 + $0x5c] sm:$0xf] %vm2085, %v7637
      %7732 = vst.msk [vmem:[#allocation3 + $0x90] sm:$0xf] %vm2085, %v7639
      %7733 = vst.msk [vmem:[#allocation3 + $0xc4] sm:$0xf] %vm2085, %v7641
      %7734 = vst.msk [vmem:[#allocation3 + $0xf8] sm:$0xf] %vm2085, %v7643
      %7735 = vst.msk [vmem:[#allocation3 + $0x12c] sm:$0xf] %vm2085, %v7645
      %7736 = vst.msk [vmem:[#allocation3 + $0x160] sm:$0xf] %vm2085, %v7647
      %7737 = vst.msk [vmem:[#allocation3 + $0x194] sm:$0xf] %vm2085, %v7649
      %7738 = vst.msk [vmem:[#allocation3 + $0x1c8] sm:$0xf] %vm2085, %v7651
      %7739 = vst.msk [vmem:[#allocation3 + $0x1fc] sm:$0xf] %vm2085, %v7653
      %7740 = vst.msk [vmem:[#allocation3 + $0x230] sm:$0xf] %vm2085, %v7655
      %7741 = vst.msk [vmem:[#allocation3 + $0x264] sm:$0xf] %vm2085, %v7657
      %7742 = vst.msk [vmem:[#allocation3 + $0x298] sm:$0xf] %vm2085, %v7659
      %7743 = vst.msk [vmem:[#allocation3 + $0x2cc] sm:$0xf] %vm2085, %v7661
      %7744 = vst.msk [vmem:[#allocation3 + $0x300] sm:$0xf] %vm2085, %v7663
      %7745 = vst.msk [vmem:[#allocation3 + $0x334] sm:$0xf] %vm2085, %v7665
      %7746 = vst.msk [vmem:[#allocation3 + $0x368] sm:$0xf] %vm2085, %v7667
      %7747 = vst.msk [vmem:[#allocation3 + $0x39c] sm:$0xf] %vm2085, %v7669
      %7748 = vst.msk [vmem:[#allocation3 + $0x3d0] sm:$0xf] %vm2085, %v7671
      %7749 = vst.msk [vmem:[#allocation3 + $0x404] sm:$0xf] %vm2085, %v7673
      %7750 = vst.msk [vmem:[#allocation3 + $0x438] sm:$0xf] %vm2085, %v7675
      %7751 = vst.msk [vmem:[#allocation3 + $0x46c] sm:$0xf] %vm2085, %v7677
      %7752 = vst.msk [vmem:[#allocation3 + $0x4a0] sm:$0xf] %vm2085, %v7679
      %7753 = vst.msk [vmem:[#allocation3 + $0x4d4] sm:$0xf] %vm2085, %v7681
      %7754 = vst.msk [vmem:[#allocation3 + $0x508] sm:$0xf] %vm2085, %v7683
      %7755 = vst.msk [vmem:[#allocation3 + $0x53c] sm:$0xf] %vm2085, %v7685
      %7756 = vst.msk [vmem:[#allocation3 + $0x570] sm:$0xf] %vm2085, %v7687
      %7757 = vst.msk [vmem:[#allocation3 + $0x5a4] sm:$0xf] %vm2085, %v7689
      %7758 = vst.msk [vmem:[#allocation3 + $0x5d8] sm:$0xf] %vm2085, %v7691
      %7759 = vst.msk [vmem:[#allocation3 + $0x60c] sm:$0xf] %vm2085, %v7693
      %7760 = vst.msk [vmem:[#allocation3 + $0x640] sm:$0xf] %vm2085, %v7695
      %7761 = vst.msk [vmem:[#allocation3 + $0x674] sm:$0xf] %vm2085, %v7697
      %v7810 = vrot.slane %v7170, 5
      %v7811 = vrot.slane %v7810, 4
      %v7812 = vrot.slane %v7171, 5
      %v7813 = vsel %vm2168, %v7811, %v7812
      %v7814 = vrot.slane %v7812, 4
      %v7815 = vrot.slane %v7172, 5
      %v7816 = vsel %vm2168, %v7814, %v7815
      %v7817 = vrot.slane %v7173, 5
      %v7818 = vrot.slane %v7817, 4
      %v7819 = vrot.slane %v7174, 5
      %v7820 = vsel %vm2168, %v7818, %v7819
      %v7821 = vrot.slane %v7819, 4
      %v7822 = vrot.slane %v7175, 5
      %v7823 = vsel %vm2168, %v7821, %v7822
      %v7824 = vrot.slane %v7176, 5
      %v7825 = vrot.slane %v7824, 4
      %v7826 = vrot.slane %v7177, 5
      %v7827 = vsel %vm2168, %v7825, %v7826
      %v7828 = vrot.slane %v7826, 4
      %v7829 = vrot.slane %v7178, 5
      %v7830 = vsel %vm2168, %v7828, %v7829
      %v7831 = vrot.slane %v7179, 5
      %v7832 = vrot.slane %v7831, 4
      %v7833 = vrot.slane %v7180, 5
      %v7834 = vsel %vm2168, %v7832, %v7833
      %v7835 = vrot.slane %v7833, 4
      %v7836 = vrot.slane %v7181, 5
      %v7837 = vsel %vm2168, %v7835, %v7836
      %v7838 = vrot.slane %v7182, 5
      %v7839 = vrot.slane %v7838, 4
      %v7840 = vrot.slane %v7183, 5
      %v7841 = vsel %vm2168, %v7839, %v7840
      %v7842 = vrot.slane %v7840, 4
      %v7843 = vrot.slane %v7184, 5
      %v7844 = vsel %vm2168, %v7842, %v7843
      %v7845 = vrot.slane %v7185, 5
      %v7846 = vrot.slane %v7845, 4
      %v7847 = vrot.slane %v7186, 5
      %v7848 = vsel %vm2168, %v7846, %v7847
      %v7849 = vrot.slane %v7847, 4
      %v7850 = vrot.slane %v7187, 5
      %v7851 = vsel %vm2168, %v7849, %v7850
      %v7852 = vrot.slane %v7188, 5
      %v7853 = vrot.slane %v7852, 4
      %v7854 = vrot.slane %v7189, 5
      %v7855 = vsel %vm2168, %v7853, %v7854
      %v7856 = vrot.slane %v7854, 4
      %v7857 = vrot.slane %v7190, 5
      %v7858 = vsel %vm2168, %v7856, %v7857
      %v7859 = vrot.slane %v7191, 5
      %v7860 = vrot.slane %v7859, 4
      %v7861 = vrot.slane %v7192, 5
      %v7862 = vsel %vm2168, %v7860, %v7861
      %v7863 = vrot.slane %v7861, 4
      %v7864 = vrot.slane %v7193, 5
      %v7865 = vsel %vm2168, %v7863, %v7864
      %v7866 = vrot.slane %v7194, 5
      %v7867 = vrot.slane %v7866, 4
      %v7868 = vrot.slane %v7195, 5
      %v7869 = vsel %vm2168, %v7867, %v7868
      %v7870 = vrot.slane %v7868, 4
      %v7871 = vrot.slane %v7196, 5
      %v7872 = vsel %vm2168, %v7870, %v7871
      %v7873 = vrot.slane %v7197, 5
      %v7874 = vrot.slane %v7873, 4
      %v7875 = vrot.slane %v7198, 5
      %v7876 = vsel %vm2168, %v7874, %v7875
      %v7877 = vrot.slane %v7875, 4
      %v7878 = vrot.slane %v7199, 5
      %v7879 = vsel %vm2168, %v7877, %v7878
      %v7880 = vrot.slane %v7200, 5
      %v7881 = vrot.slane %v7880, 4
      %v7882 = vrot.slane %v7201, 5
      %v7883 = vsel %vm2168, %v7881, %v7882
      %v7884 = vrot.slane %v7882, 4
      %v7885 = vrot.slane %v7202, 5
      %v7886 = vsel %vm2168, %v7884, %v7885
      %v7887 = vrot.slane %v7203, 5
      %v7888 = vrot.slane %v7887, 4
      %v7889 = vrot.slane %v7204, 5
      %v7890 = vsel %vm2168, %v7888, %v7889
      %v7891 = vrot.slane %v7889, 4
      %v7892 = vrot.slane %v7205, 5
      %v7893 = vsel %vm2168, %v7891, %v7892
      %v7894 = vrot.slane %v7206, 5
      %v7895 = vrot.slane %v7894, 4
      %v7896 = vrot.slane %v7207, 5
      %v7897 = vsel %vm2168, %v7895, %v7896
      %v7898 = vrot.slane %v7896, 4
      %v7899 = vrot.slane %v7208, 5
      %v7900 = vsel %vm2168, %v7898, %v7899
      %v7901 = vrot.slane %v7209, 5
      %v7902 = vrot.slane %v7901, 4
      %v7903 = vrot.slane %v7210, 5
      %v7904 = vsel %vm2168, %v7902, %v7903
      %v7905 = vrot.slane %v7903, 4
      %v7906 = vrot.slane %v7211, 5
      %v7907 = vsel %vm2168, %v7905, %v7906
      %v7908 = vrot.slane %v7212, 5
      %v7909 = vrot.slane %v7908, 4
      %v7910 = vrot.slane %v7213, 5
      %v7911 = vsel %vm2168, %v7909, %v7910
      %v7912 = vrot.slane %v7910, 4
      %v7913 = vrot.slane %v7214, 5
      %v7914 = vsel %vm2168, %v7912, %v7913
      %v7915 = vrot.slane %v7215, 5
      %v7916 = vrot.slane %v7915, 4
      %v7917 = vrot.slane %v7216, 5
      %v7918 = vsel %vm2168, %v7916, %v7917
      %v7919 = vrot.slane %v7917, 4
      %v7920 = vrot.slane %v7217, 5
      %v7921 = vsel %vm2168, %v7919, %v7920
      %7954 = vst.msk [vmem:[#allocation3 + $0x2c] sm:$0xf] %vm1261, %v7813
      %7955 = vst.msk [vmem:[#allocation3 + $0x60] sm:$0xf] %vm1261, %v7816
      %7956 = vst.msk [vmem:[#allocation3 + $0x94] sm:$0xf] %vm1261, %v7820
      %7957 = vst.msk [vmem:[#allocation3 + $0xc8] sm:$0xf] %vm1261, %v7823
      %7958 = vst.msk [vmem:[#allocation3 + $0xfc] sm:$0xf] %vm1261, %v7827
      %7959 = vst.msk [vmem:[#allocation3 + $0x130] sm:$0xf] %vm1261, %v7830
      %7960 = vst.msk [vmem:[#allocation3 + $0x164] sm:$0xf] %vm1261, %v7834
      %7961 = vst.msk [vmem:[#allocation3 + $0x198] sm:$0xf] %vm1261, %v7837
      %7962 = vst.msk [vmem:[#allocation3 + $0x1cc] sm:$0xf] %vm1261, %v7841
      %7963 = vst.msk [vmem:[#allocation3 + $0x200] sm:$0xf] %vm1261, %v7844
      %7964 = vst.msk [vmem:[#allocation3 + $0x234] sm:$0xf] %vm1261, %v7848
      %7965 = vst.msk [vmem:[#allocation3 + $0x268] sm:$0xf] %vm1261, %v7851
      %7966 = vst.msk [vmem:[#allocation3 + $0x29c] sm:$0xf] %vm1261, %v7855
      %7967 = vst.msk [vmem:[#allocation3 + $0x2d0] sm:$0xf] %vm1261, %v7858
      %7968 = vst.msk [vmem:[#allocation3 + $0x304] sm:$0xf] %vm1261, %v7862
      %7969 = vst.msk [vmem:[#allocation3 + $0x338] sm:$0xf] %vm1261, %v7865
      %7970 = vst.msk [vmem:[#allocation3 + $0x36c] sm:$0xf] %vm1261, %v7869
      %7971 = vst.msk [vmem:[#allocation3 + $0x3a0] sm:$0xf] %vm1261, %v7872
      %7972 = vst.msk [vmem:[#allocation3 + $0x3d4] sm:$0xf] %vm1261, %v7876
      %7973 = vst.msk [vmem:[#allocation3 + $0x408] sm:$0xf] %vm1261, %v7879
      %7974 = vst.msk [vmem:[#allocation3 + $0x43c] sm:$0xf] %vm1261, %v7883
      %7975 = vst.msk [vmem:[#allocation3 + $0x470] sm:$0xf] %vm1261, %v7886
      %7976 = vst.msk [vmem:[#allocation3 + $0x4a4] sm:$0xf] %vm1261, %v7890
      %7977 = vst.msk [vmem:[#allocation3 + $0x4d8] sm:$0xf] %vm1261, %v7893
      %7978 = vst.msk [vmem:[#allocation3 + $0x50c] sm:$0xf] %vm1261, %v7897
      %7979 = vst.msk [vmem:[#allocation3 + $0x540] sm:$0xf] %vm1261, %v7900
      %7980 = vst.msk [vmem:[#allocation3 + $0x574] sm:$0xf] %vm1261, %v7904
      %7981 = vst.msk [vmem:[#allocation3 + $0x5a8] sm:$0xf] %vm1261, %v7907
      %7982 = vst.msk [vmem:[#allocation3 + $0x5dc] sm:$0xf] %vm1261, %v7911
      %7983 = vst.msk [vmem:[#allocation3 + $0x610] sm:$0xf] %vm1261, %v7914
      %7984 = vst.msk [vmem:[#allocation3 + $0x644] sm:$0xf] %vm1261, %v7918
      %7985 = vst.msk [vmem:[#allocation3 + $0x678] sm:$0xf] %vm1261, %v7921
      %v7986 = vrot.slane %v7251, 5
      %v7987 = vrot.slane %v7254, 6
      %v7988 = vor.u32 %v7986, %v7987
      %v7989 = vrot.slane %v7988, 4
      %v7990 = vrot.slane %v7264, 5
      %v7991 = vrot.slane %v7260, 6
      %v7992 = vor.u32 %v7990, %v7991
      %v7993 = vsel %vm2347, %v7989, %v7992
      %v7994 = vrot.slane %v7992, 4
      %v7995 = vshrl.u32 %v7172, 16
      %v7997 = vrot.slane %v7995, 5
      %v7998 = vrot.slane %v7270, 6
      %v7999 = vor.u32 %v7997, %v7998
      %v8000 = vsel %vm2347, %v7994, %v7999
      %v8001 = vrot.slane %v7275, 5
      %v8002 = vrot.slane %v7278, 6
      %v8003 = vor.u32 %v8001, %v8002
      %v8004 = vrot.slane %v8003, 4
      %v8005 = vrot.slane %v7288, 5
      %v8006 = vrot.slane %v7284, 6
      %v8007 = vor.u32 %v8005, %v8006
      %v8008 = vsel %vm2347, %v8004, %v8007
      %v8009 = vrot.slane %v8007, 4
      %v8010 = vshrl.u32 %v7175, 16
      %v8012 = vrot.slane %v8010, 5
      %v8013 = vrot.slane %v7294, 6
      %v8014 = vor.u32 %v8012, %v8013
      %v8015 = vsel %vm2347, %v8009, %v8014
      %v8016 = vrot.slane %v7299, 5
      %v8017 = vrot.slane %v7302, 6
      %v8018 = vor.u32 %v8016, %v8017
      %v8019 = vrot.slane %v8018, 4
      %v8020 = vrot.slane %v7312, 5
      %v8021 = vrot.slane %v7308, 6
      %v8022 = vor.u32 %v8020, %v8021
      %v8023 = vsel %vm2347, %v8019, %v8022
      %v8024 = vrot.slane %v8022, 4
      %v8025 = vshrl.u32 %v7178, 16
      %v8027 = vrot.slane %v8025, 5
      %v8028 = vrot.slane %v7318, 6
      %v8029 = vor.u32 %v8027, %v8028
      %v8030 = vsel %vm2347, %v8024, %v8029
      %v8031 = vrot.slane %v7323, 5
      %v8032 = vrot.slane %v7326, 6
      %v8033 = vor.u32 %v8031, %v8032
      %v8034 = vrot.slane %v8033, 4
      %v8035 = vrot.slane %v7336, 5
      %v8036 = vrot.slane %v7332, 6
      %v8037 = vor.u32 %v8035, %v8036
      %v8038 = vsel %vm2347, %v8034, %v8037
      %v8039 = vrot.slane %v8037, 4
      %v8040 = vshrl.u32 %v7181, 16
      %v8042 = vrot.slane %v8040, 5
      %v8043 = vrot.slane %v7342, 6
      %v8044 = vor.u32 %v8042, %v8043
      %v8045 = vsel %vm2347, %v8039, %v8044
      %v8046 = vrot.slane %v7347, 5
      %v8047 = vrot.slane %v7350, 6
      %v8048 = vor.u32 %v8046, %v8047
      %v8049 = vrot.slane %v8048, 4
      %v8050 = vrot.slane %v7360, 5
      %v8051 = vrot.slane %v7356, 6
      %v8052 = vor.u32 %v8050, %v8051
      %v8053 = vsel %vm2347, %v8049, %v8052
      %v8054 = vrot.slane %v8052, 4
      %v8055 = vshrl.u32 %v7184, 16
      %v8057 = vrot.slane %v8055, 5
      %v8058 = vrot.slane %v7366, 6
      %v8059 = vor.u32 %v8057, %v8058
      %v8060 = vsel %vm2347, %v8054, %v8059
      %v8061 = vrot.slane %v7371, 5
      %v8062 = vrot.slane %v7374, 6
      %v8063 = vor.u32 %v8061, %v8062
      %v8064 = vrot.slane %v8063, 4
      %v8065 = vrot.slane %v7384, 5
      %v8066 = vrot.slane %v7380, 6
      %v8067 = vor.u32 %v8065, %v8066
      %v8068 = vsel %vm2347, %v8064, %v8067
      %v8069 = vrot.slane %v8067, 4
      %v8070 = vshrl.u32 %v7187, 16
      %v8072 = vrot.slane %v8070, 5
      %v8073 = vrot.slane %v7390, 6
      %v8074 = vor.u32 %v8072, %v8073
      %v8075 = vsel %vm2347, %v8069, %v8074
      %v8076 = vrot.slane %v7395, 5
      %v8077 = vrot.slane %v7398, 6
      %v8078 = vor.u32 %v8076, %v8077
      %v8079 = vrot.slane %v8078, 4
      %v8080 = vrot.slane %v7408, 5
      %v8081 = vrot.slane %v7404, 6
      %v8082 = vor.u32 %v8080, %v8081
      %v8083 = vsel %vm2347, %v8079, %v8082
      %v8084 = vrot.slane %v8082, 4
      %v8085 = vshrl.u32 %v7190, 16
      %v8087 = vrot.slane %v8085, 5
      %v8088 = vrot.slane %v7414, 6
      %v8089 = vor.u32 %v8087, %v8088
      %v8090 = vsel %vm2347, %v8084, %v8089
      %v8091 = vrot.slane %v7419, 5
      %v8092 = vrot.slane %v7422, 6
      %v8093 = vor.u32 %v8091, %v8092
      %v8094 = vrot.slane %v8093, 4
      %v8095 = vrot.slane %v7432, 5
      %v8096 = vrot.slane %v7428, 6
      %v8097 = vor.u32 %v8095, %v8096
      %v8098 = vsel %vm2347, %v8094, %v8097
      %v8099 = vrot.slane %v8097, 4
      %v8100 = vshrl.u32 %v7193, 16
      %v8102 = vrot.slane %v8100, 5
      %v8103 = vrot.slane %v7438, 6
      %v8104 = vor.u32 %v8102, %v8103
      %v8105 = vsel %vm2347, %v8099, %v8104
      %v8106 = vrot.slane %v7443, 5
      %v8107 = vrot.slane %v7446, 6
      %v8108 = vor.u32 %v8106, %v8107
      %v8109 = vrot.slane %v8108, 4
      %v8110 = vrot.slane %v7456, 5
      %v8111 = vrot.slane %v7452, 6
      %v8112 = vor.u32 %v8110, %v8111
      %v8113 = vsel %vm2347, %v8109, %v8112
      %v8114 = vrot.slane %v8112, 4
      %v8115 = vshrl.u32 %v7196, 16
      %v8117 = vrot.slane %v8115, 5
      %v8118 = vrot.slane %v7462, 6
      %v8119 = vor.u32 %v8117, %v8118
      %v8120 = vsel %vm2347, %v8114, %v8119
      %v8121 = vrot.slane %v7467, 5
      %v8122 = vrot.slane %v7470, 6
      %v8123 = vor.u32 %v8121, %v8122
      %v8124 = vrot.slane %v8123, 4
      %v8125 = vrot.slane %v7480, 5
      %v8126 = vrot.slane %v7476, 6
      %v8127 = vor.u32 %v8125, %v8126
      %v8128 = vsel %vm2347, %v8124, %v8127
      %v8129 = vrot.slane %v8127, 4
      %v8130 = vshrl.u32 %v7199, 16
      %v8132 = vrot.slane %v8130, 5
      %v8133 = vrot.slane %v7486, 6
      %v8134 = vor.u32 %v8132, %v8133
      %v8135 = vsel %vm2347, %v8129, %v8134
      %v8136 = vrot.slane %v7491, 5
      %v8137 = vrot.slane %v7494, 6
      %v8138 = vor.u32 %v8136, %v8137
      %v8139 = vrot.slane %v8138, 4
      %v8140 = vrot.slane %v7504, 5
      %v8141 = vrot.slane %v7500, 6
      %v8142 = vor.u32 %v8140, %v8141
      %v8143 = vsel %vm2347, %v8139, %v8142
      %v8144 = vrot.slane %v8142, 4
      %v8145 = vshrl.u32 %v7202, 16
      %v8147 = vrot.slane %v8145, 5
      %v8148 = vrot.slane %v7510, 6
      %v8149 = vor.u32 %v8147, %v8148
      %v8150 = vsel %vm2347, %v8144, %v8149
      %v8151 = vrot.slane %v7515, 5
      %v8152 = vrot.slane %v7518, 6
      %v8153 = vor.u32 %v8151, %v8152
      %v8154 = vrot.slane %v8153, 4
      %v8155 = vrot.slane %v7528, 5
      %v8156 = vrot.slane %v7524, 6
      %v8157 = vor.u32 %v8155, %v8156
      %v8158 = vsel %vm2347, %v8154, %v8157
      %v8159 = vrot.slane %v8157, 4
      %v8160 = vshrl.u32 %v7205, 16
      %v8162 = vrot.slane %v8160, 5
      %v8163 = vrot.slane %v7534, 6
      %v8164 = vor.u32 %v8162, %v8163
      %v8165 = vsel %vm2347, %v8159, %v8164
      %v8166 = vrot.slane %v7539, 5
      %v8167 = vrot.slane %v7542, 6
      %v8168 = vor.u32 %v8166, %v8167
      %v8169 = vrot.slane %v8168, 4
      %v8170 = vrot.slane %v7552, 5
      %v8171 = vrot.slane %v7548, 6
      %v8172 = vor.u32 %v8170, %v8171
      %v8173 = vsel %vm2347, %v8169, %v8172
      %v8174 = vrot.slane %v8172, 4
      %v8175 = vshrl.u32 %v7208, 16
      %v8177 = vrot.slane %v8175, 5
      %v8178 = vrot.slane %v7558, 6
      %v8179 = vor.u32 %v8177, %v8178
      %v8180 = vsel %vm2347, %v8174, %v8179
      %v8181 = vrot.slane %v7563, 5
      %v8182 = vrot.slane %v7566, 6
      %v8183 = vor.u32 %v8181, %v8182
      %v8184 = vrot.slane %v8183, 4
      %v8185 = vrot.slane %v7576, 5
      %v8186 = vrot.slane %v7572, 6
      %v8187 = vor.u32 %v8185, %v8186
      %v8188 = vsel %vm2347, %v8184, %v8187
      %v8189 = vrot.slane %v8187, 4
      %v8190 = vshrl.u32 %v7211, 16
      %v8192 = vrot.slane %v8190, 5
      %v8193 = vrot.slane %v7582, 6
      %v8194 = vor.u32 %v8192, %v8193
      %v8195 = vsel %vm2347, %v8189, %v8194
      %v8196 = vrot.slane %v7587, 5
      %v8197 = vrot.slane %v7590, 6
      %v8198 = vor.u32 %v8196, %v8197
      %v8199 = vrot.slane %v8198, 4
      %v8200 = vrot.slane %v7600, 5
      %v8201 = vrot.slane %v7596, 6
      %v8202 = vor.u32 %v8200, %v8201
      %v8203 = vsel %vm2347, %v8199, %v8202
      %v8204 = vrot.slane %v8202, 4
      %v8205 = vshrl.u32 %v7214, 16
      %v8207 = vrot.slane %v8205, 5
      %v8208 = vrot.slane %v7606, 6
      %v8209 = vor.u32 %v8207, %v8208
      %v8210 = vsel %vm2347, %v8204, %v8209
      %v8211 = vrot.slane %v7611, 5
      %v8212 = vrot.slane %v7614, 6
      %v8213 = vor.u32 %v8211, %v8212
      %v8214 = vrot.slane %v8213, 4
      %v8215 = vrot.slane %v7624, 5
      %v8216 = vrot.slane %v7620, 6
      %v8217 = vor.u32 %v8215, %v8216
      %v8218 = vsel %vm2347, %v8214, %v8217
      %v8219 = vrot.slane %v8217, 4
      %v8220 = vshrl.u32 %v7217, 16
      %v8222 = vrot.slane %v8220, 5
      %v8223 = vrot.slane %v7630, 6
      %v8224 = vor.u32 %v8222, %v8223
      %v8225 = vsel %vm2347, %v8219, %v8224
      %8226 = vrot.lane.b32.xlu0 %v7993, 64
      %v8227 = vpop.permute.xlu0 %8226
      %8228 = vrot.lane.b32.xlu0 %v8000, 64
      %v8229 = vpop.permute.xlu0 %8228
      %8230 = vrot.lane.b32.xlu0 %v8008, 64
      %v8231 = vpop.permute.xlu0 %8230
      %8232 = vrot.lane.b32.xlu0 %v8015, 64
      %v8233 = vpop.permute.xlu0 %8232
      %8234 = vrot.lane.b32.xlu0 %v8023, 64
      %v8235 = vpop.permute.xlu0 %8234
      %8236 = vrot.lane.b32.xlu0 %v8030, 64
      %v8237 = vpop.permute.xlu0 %8236
      %8238 = vrot.lane.b32.xlu0 %v8038, 64
      %v8239 = vpop.permute.xlu0 %8238
      %8240 = vrot.lane.b32.xlu0 %v8045, 64
      %v8241 = vpop.permute.xlu0 %8240
      %8242 = vrot.lane.b32.xlu0 %v8053, 64
      %v8243 = vpop.permute.xlu0 %8242
      %8244 = vrot.lane.b32.xlu0 %v8060, 64
      %v8245 = vpop.permute.xlu0 %8244
      %8246 = vrot.lane.b32.xlu0 %v8068, 64
      %v8247 = vpop.permute.xlu0 %8246
      %8248 = vrot.lane.b32.xlu0 %v8075, 64
      %v8249 = vpop.permute.xlu0 %8248
      %8250 = vrot.lane.b32.xlu0 %v8083, 64
      %v8251 = vpop.permute.xlu0 %8250
      %8252 = vrot.lane.b32.xlu0 %v8090, 64
      %v8253 = vpop.permute.xlu0 %8252
      %8254 = vrot.lane.b32.xlu0 %v8098, 64
      %v8255 = vpop.permute.xlu0 %8254
      %8256 = vrot.lane.b32.xlu0 %v8105, 64
      %v8257 = vpop.permute.xlu0 %8256
      %8258 = vrot.lane.b32.xlu0 %v8113, 64
      %v8259 = vpop.permute.xlu0 %8258
      %8260 = vrot.lane.b32.xlu0 %v8120, 64
      %v8261 = vpop.permute.xlu0 %8260
      %8262 = vrot.lane.b32.xlu0 %v8128, 64
      %v8263 = vpop.permute.xlu0 %8262
      %8264 = vrot.lane.b32.xlu0 %v8135, 64
      %v8265 = vpop.permute.xlu0 %8264
      %8266 = vrot.lane.b32.xlu0 %v8143, 64
      %v8267 = vpop.permute.xlu0 %8266
      %8268 = vrot.lane.b32.xlu0 %v8150, 64
      %v8269 = vpop.permute.xlu0 %8268
      %8270 = vrot.lane.b32.xlu0 %v8158, 64
      %v8271 = vpop.permute.xlu0 %8270
      %8272 = vrot.lane.b32.xlu0 %v8165, 64
      %v8273 = vpop.permute.xlu0 %8272
      %8274 = vrot.lane.b32.xlu0 %v8173, 64
      %v8275 = vpop.permute.xlu0 %8274
      %8276 = vrot.lane.b32.xlu0 %v8180, 64
      %v8277 = vpop.permute.xlu0 %8276
      %8278 = vrot.lane.b32.xlu0 %v8188, 64
      %v8279 = vpop.permute.xlu0 %8278
      %8280 = vrot.lane.b32.xlu0 %v8195, 64
      %v8281 = vpop.permute.xlu0 %8280
      %8282 = vrot.lane.b32.xlu0 %v8203, 64
      %v8283 = vpop.permute.xlu0 %8282
      %8284 = vrot.lane.b32.xlu0 %v8210, 64
      %v8285 = vpop.permute.xlu0 %8284
      %8286 = vrot.lane.b32.xlu0 %v8218, 64
      %v8287 = vpop.permute.xlu0 %8286
      %8288 = vrot.lane.b32.xlu0 %v8225, 64
      %v8289 = vpop.permute.xlu0 %8288
      %8322 = vst.msk [vmem:[#allocation3 + $0x2c] sm:$0xf] %vm2085, %v8227
      %8323 = vst.msk [vmem:[#allocation3 + $0x60] sm:$0xf] %vm2085, %v8229
      %8324 = vst.msk [vmem:[#allocation3 + $0x94] sm:$0xf] %vm2085, %v8231
      %8325 = vst.msk [vmem:[#allocation3 + $0xc8] sm:$0xf] %vm2085, %v8233
      %8326 = vst.msk [vmem:[#allocation3 + $0xfc] sm:$0xf] %vm2085, %v8235
      %8327 = vst.msk [vmem:[#allocation3 + $0x130] sm:$0xf] %vm2085, %v8237
      %8328 = vst.msk [vmem:[#allocation3 + $0x164] sm:$0xf] %vm2085, %v8239
      %8329 = vst.msk [vmem:[#allocation3 + $0x198] sm:$0xf] %vm2085, %v8241
      %8330 = vst.msk [vmem:[#allocation3 + $0x1cc] sm:$0xf] %vm2085, %v8243
      %8331 = vst.msk [vmem:[#allocation3 + $0x200] sm:$0xf] %vm2085, %v8245
      %8332 = vst.msk [vmem:[#allocation3 + $0x234] sm:$0xf] %vm2085, %v8247
      %8333 = vst.msk [vmem:[#allocation3 + $0x268] sm:$0xf] %vm2085, %v8249
      %8334 = vst.msk [vmem:[#allocation3 + $0x29c] sm:$0xf] %vm2085, %v8251
      %8335 = vst.msk [vmem:[#allocation3 + $0x2d0] sm:$0xf] %vm2085, %v8253
      %8336 = vst.msk [vmem:[#allocation3 + $0x304] sm:$0xf] %vm2085, %v8255
      %8337 = vst.msk [vmem:[#allocation3 + $0x338] sm:$0xf] %vm2085, %v8257
      %8338 = vst.msk [vmem:[#allocation3 + $0x36c] sm:$0xf] %vm2085, %v8259
      %8339 = vst.msk [vmem:[#allocation3 + $0x3a0] sm:$0xf] %vm2085, %v8261
      %8340 = vst.msk [vmem:[#allocation3 + $0x3d4] sm:$0xf] %vm2085, %v8263
      %8341 = vst.msk [vmem:[#allocation3 + $0x408] sm:$0xf] %vm2085, %v8265
      %8342 = vst.msk [vmem:[#allocation3 + $0x43c] sm:$0xf] %vm2085, %v8267
      %8343 = vst.msk [vmem:[#allocation3 + $0x470] sm:$0xf] %vm2085, %v8269
      %8344 = vst.msk [vmem:[#allocation3 + $0x4a4] sm:$0xf] %vm2085, %v8271
      %8345 = vst.msk [vmem:[#allocation3 + $0x4d8] sm:$0xf] %vm2085, %v8273
      %8346 = vst.msk [vmem:[#allocation3 + $0x50c] sm:$0xf] %vm2085, %v8275
      %8347 = vst.msk [vmem:[#allocation3 + $0x540] sm:$0xf] %vm2085, %v8277
      %8348 = vst.msk [vmem:[#allocation3 + $0x574] sm:$0xf] %vm2085, %v8279
      %8349 = vst.msk [vmem:[#allocation3 + $0x5a8] sm:$0xf] %vm2085, %v8281
      %8350 = vst.msk [vmem:[#allocation3 + $0x5dc] sm:$0xf] %vm2085, %v8283
      %8351 = vst.msk [vmem:[#allocation3 + $0x610] sm:$0xf] %vm2085, %v8285
      %8352 = vst.msk [vmem:[#allocation3 + $0x644] sm:$0xf] %vm2085, %v8287
      %8353 = vst.msk [vmem:[#allocation3 + $0x678] sm:$0xf] %vm2085, %v8289
      %v8354 = vrot.slane %v7170, 6
      %v8355 = vrot.slane %v8354, 4
      %v8356 = vrot.slane %v7171, 6
      %v8357 = vsel %vm2718, %v8355, %v8356
      %v8358 = vrot.slane %v8356, 4
      %v8359 = vrot.slane %v7172, 6
      %v8360 = vsel %vm2718, %v8358, %v8359
      %v8361 = vrot.slane %v7173, 6
      %v8362 = vrot.slane %v8361, 4
      %v8363 = vrot.slane %v7174, 6
      %v8364 = vsel %vm2718, %v8362, %v8363
      %v8365 = vrot.slane %v8363, 4
      %v8366 = vrot.slane %v7175, 6
      %v8367 = vsel %vm2718, %v8365, %v8366
      %v8368 = vrot.slane %v7176, 6
      %v8369 = vrot.slane %v8368, 4
      %v8370 = vrot.slane %v7177, 6
      %v8371 = vsel %vm2718, %v8369, %v8370
      %v8372 = vrot.slane %v8370, 4
      %v8373 = vrot.slane %v7178, 6
      %v8374 = vsel %vm2718, %v8372, %v8373
      %v8375 = vrot.slane %v7179, 6
      %v8376 = vrot.slane %v8375, 4
      %v8377 = vrot.slane %v7180, 6
      %v8378 = vsel %vm2718, %v8376, %v8377
      %v8379 = vrot.slane %v8377, 4
      %v8380 = vrot.slane %v7181, 6
      %v8381 = vsel %vm2718, %v8379, %v8380
      %v8382 = vrot.slane %v7182, 6
      %v8383 = vrot.slane %v8382, 4
      %v8384 = vrot.slane %v7183, 6
      %v8385 = vsel %vm2718, %v8383, %v8384
      %v8386 = vrot.slane %v8384, 4
      %v8387 = vrot.slane %v7184, 6
      %v8388 = vsel %vm2718, %v8386, %v8387
      %v8389 = vrot.slane %v7185, 6
      %v8390 = vrot.slane %v8389, 4
      %v8391 = vrot.slane %v7186, 6
      %v8392 = vsel %vm2718, %v8390, %v8391
      %v8393 = vrot.slane %v8391, 4
      %v8394 = vrot.slane %v7187, 6
      %v8395 = vsel %vm2718, %v8393, %v8394
      %v8396 = vrot.slane %v7188, 6
      %v8397 = vrot.slane %v8396, 4
      %v8398 = vrot.slane %v7189, 6
      %v8399 = vsel %vm2718, %v8397, %v8398
      %v8400 = vrot.slane %v8398, 4
      %v8401 = vrot.slane %v7190, 6
      %v8402 = vsel %vm2718, %v8400, %v8401
      %v8403 = vrot.slane %v7191, 6
      %v8404 = vrot.slane %v8403, 4
      %v8405 = vrot.slane %v7192, 6
      %v8406 = vsel %vm2718, %v8404, %v8405
      %v8407 = vrot.slane %v8405, 4
      %v8408 = vrot.slane %v7193, 6
      %v8409 = vsel %vm2718, %v8407, %v8408
      %v8410 = vrot.slane %v7194, 6
      %v8411 = vrot.slane %v8410, 4
      %v8412 = vrot.slane %v7195, 6
      %v8413 = vsel %vm2718, %v8411, %v8412
      %v8414 = vrot.slane %v8412, 4
      %v8415 = vrot.slane %v7196, 6
      %v8416 = vsel %vm2718, %v8414, %v8415
      %v8417 = vrot.slane %v7197, 6
      %v8418 = vrot.slane %v8417, 4
      %v8419 = vrot.slane %v7198, 6
      %v8420 = vsel %vm2718, %v8418, %v8419
      %v8421 = vrot.slane %v8419, 4
      %v8422 = vrot.slane %v7199, 6
      %v8423 = vsel %vm2718, %v8421, %v8422
      %v8424 = vrot.slane %v7200, 6
      %v8425 = vrot.slane %v8424, 4
      %v8426 = vrot.slane %v7201, 6
      %v8427 = vsel %vm2718, %v8425, %v8426
      %v8428 = vrot.slane %v8426, 4
      %v8429 = vrot.slane %v7202, 6
      %v8430 = vsel %vm2718, %v8428, %v8429
      %v8431 = vrot.slane %v7203, 6
      %v8432 = vrot.slane %v8431, 4
      %v8433 = vrot.slane %v7204, 6
      %v8434 = vsel %vm2718, %v8432, %v8433
      %v8435 = vrot.slane %v8433, 4
      %v8436 = vrot.slane %v7205, 6
      %v8437 = vsel %vm2718, %v8435, %v8436
      %v8438 = vrot.slane %v7206, 6
      %v8439 = vrot.slane %v8438, 4
      %v8440 = vrot.slane %v7207, 6
      %v8441 = vsel %vm2718, %v8439, %v8440
      %v8442 = vrot.slane %v8440, 4
      %v8443 = vrot.slane %v7208, 6
      %v8444 = vsel %vm2718, %v8442, %v8443
      %v8445 = vrot.slane %v7209, 6
      %v8446 = vrot.slane %v8445, 4
      %v8447 = vrot.slane %v7210, 6
      %v8448 = vsel %vm2718, %v8446, %v8447
      %v8449 = vrot.slane %v8447, 4
      %v8450 = vrot.slane %v7211, 6
      %v8451 = vsel %vm2718, %v8449, %v8450
      %v8452 = vrot.slane %v7212, 6
      %v8453 = vrot.slane %v8452, 4
      %v8454 = vrot.slane %v7213, 6
      %v8455 = vsel %vm2718, %v8453, %v8454
      %v8456 = vrot.slane %v8454, 4
      %v8457 = vrot.slane %v7214, 6
      %v8458 = vsel %vm2718, %v8456, %v8457
      %v8459 = vrot.slane %v7215, 6
      %v8460 = vrot.slane %v8459, 4
      %v8461 = vrot.slane %v7216, 6
      %v8462 = vsel %vm2718, %v8460, %v8461
      %v8463 = vrot.slane %v8461, 4
      %v8464 = vrot.slane %v7217, 6
      %v8465 = vsel %vm2718, %v8463, %v8464
      %8498 = vst.msk [vmem:[#allocation3 + $0x30] sm:$0xf] %vm1261, %v8357
      %8499 = vst.msk [vmem:[#allocation3 + $0x64] sm:$0xf] %vm1261, %v8360
      %8500 = vst.msk [vmem:[#allocation3 + $0x98] sm:$0xf] %vm1261, %v8364
      %8501 = vst.msk [vmem:[#allocation3 + $0xcc] sm:$0xf] %vm1261, %v8367
      %8502 = vst.msk [vmem:[#allocation3 + $0x100] sm:$0xf] %vm1261, %v8371
      %8503 = vst.msk [vmem:[#allocation3 + $0x134] sm:$0xf] %vm1261, %v8374
      %8504 = vst.msk [vmem:[#allocation3 + $0x168] sm:$0xf] %vm1261, %v8378
      %8505 = vst.msk [vmem:[#allocation3 + $0x19c] sm:$0xf] %vm1261, %v8381
      %8506 = vst.msk [vmem:[#allocation3 + $0x1d0] sm:$0xf] %vm1261, %v8385
      %8507 = vst.msk [vmem:[#allocation3 + $0x204] sm:$0xf] %vm1261, %v8388
      %8508 = vst.msk [vmem:[#allocation3 + $0x238] sm:$0xf] %vm1261, %v8392
      %8509 = vst.msk [vmem:[#allocation3 + $0x26c] sm:$0xf] %vm1261, %v8395
      %8510 = vst.msk [vmem:[#allocation3 + $0x2a0] sm:$0xf] %vm1261, %v8399
      %8511 = vst.msk [vmem:[#allocation3 + $0x2d4] sm:$0xf] %vm1261, %v8402
      %8512 = vst.msk [vmem:[#allocation3 + $0x308] sm:$0xf] %vm1261, %v8406
      %8513 = vst.msk [vmem:[#allocation3 + $0x33c] sm:$0xf] %vm1261, %v8409
      %8514 = vst.msk [vmem:[#allocation3 + $0x370] sm:$0xf] %vm1261, %v8413
      %8515 = vst.msk [vmem:[#allocation3 + $0x3a4] sm:$0xf] %vm1261, %v8416
      %8516 = vst.msk [vmem:[#allocation3 + $0x3d8] sm:$0xf] %vm1261, %v8420
      %8517 = vst.msk [vmem:[#allocation3 + $0x40c] sm:$0xf] %vm1261, %v8423
      %8518 = vst.msk [vmem:[#allocation3 + $0x440] sm:$0xf] %vm1261, %v8427
      %8519 = vst.msk [vmem:[#allocation3 + $0x474] sm:$0xf] %vm1261, %v8430
      %8520 = vst.msk [vmem:[#allocation3 + $0x4a8] sm:$0xf] %vm1261, %v8434
      %8521 = vst.msk [vmem:[#allocation3 + $0x4dc] sm:$0xf] %vm1261, %v8437
      %8522 = vst.msk [vmem:[#allocation3 + $0x510] sm:$0xf] %vm1261, %v8441
      %8523 = vst.msk [vmem:[#allocation3 + $0x544] sm:$0xf] %vm1261, %v8444
      %8524 = vst.msk [vmem:[#allocation3 + $0x578] sm:$0xf] %vm1261, %v8448
      %8525 = vst.msk [vmem:[#allocation3 + $0x5ac] sm:$0xf] %vm1261, %v8451
      %8526 = vst.msk [vmem:[#allocation3 + $0x5e0] sm:$0xf] %vm1261, %v8455
      %8527 = vst.msk [vmem:[#allocation3 + $0x614] sm:$0xf] %vm1261, %v8458
      %8528 = vst.msk [vmem:[#allocation3 + $0x648] sm:$0xf] %vm1261, %v8462
      %8529 = vst.msk [vmem:[#allocation3 + $0x67c] sm:$0xf] %vm1261, %v8465
      %v8530 = vld [vmem:[#allocation3] sm:$0xff]
      %v8531 = vld [vmem:[#allocation3 + $0x8] sm:$0xff]
      %v8532 = vld [vmem:[#allocation3 + $0x10] sm:$0xff]
      %v8533 = vld [vmem:[#allocation3 + $0x18] sm:$0xff]
      %v8534 = vld [vmem:[#allocation3 + $0x20] sm:$0xff]
      %v8535 = vld [vmem:[#allocation3 + $0x28] sm:$0xff]
      %v8536 = vld [vmem:[#allocation3 + $0x30] sm:$0xf]
      %v8537 = vld [vmem:[#allocation3 + $0x34] sm:$0xff]
      %v8538 = vld [vmem:[#allocation3 + $0x3c] sm:$0xff]
      %v8539 = vld [vmem:[#allocation3 + $0x44] sm:$0xff]
      %v8540 = vld [vmem:[#allocation3 + $0x4c] sm:$0xff]
      %v8541 = vld [vmem:[#allocation3 + $0x54] sm:$0xff]
      %v8542 = vld [vmem:[#allocation3 + $0x5c] sm:$0xff]
      %v8543 = vld [vmem:[#allocation3 + $0x64] sm:$0xf]
      %v8544 = vld [vmem:[#allocation3 + $0x68] sm:$0xff]
      %v8545 = vld [vmem:[#allocation3 + $0x70] sm:$0xff]
      %v8546 = vld [vmem:[#allocation3 + $0x78] sm:$0xff]
      %v8547 = vld [vmem:[#allocation3 + $0x80] sm:$0xff]
      %v8548 = vld [vmem:[#allocation3 + $0x88] sm:$0xff]
      %v8549 = vld [vmem:[#allocation3 + $0x90] sm:$0xff]
      %v8550 = vld [vmem:[#allocation3 + $0x98] sm:$0xf]
      %v8551 = vld [vmem:[#allocation3 + $0x9c] sm:$0xff]
      %v8552 = vld [vmem:[#allocation3 + $0xa4] sm:$0xff]
      %v8553 = vld [vmem:[#allocation3 + $0xac] sm:$0xff]
      %v8554 = vld [vmem:[#allocation3 + $0xb4] sm:$0xff]
      %v8555 = vld [vmem:[#allocation3 + $0xbc] sm:$0xff]
      %v8556 = vld [vmem:[#allocation3 + $0xc4] sm:$0xff]
      %v8557 = vld [vmem:[#allocation3 + $0xcc] sm:$0xf]
      %v8558 = vld [vmem:[#allocation3 + $0xd0] sm:$0xff]
      %v8559 = vld [vmem:[#allocation3 + $0xd8] sm:$0xff]
      %v8560 = vld [vmem:[#allocation3 + $0xe0] sm:$0xff]
      %v8561 = vld [vmem:[#allocation3 + $0xe8] sm:$0xff]
      %v8562 = vld [vmem:[#allocation3 + $0xf0] sm:$0xff]
      %v8563 = vld [vmem:[#allocation3 + $0xf8] sm:$0xff]
      %v8564 = vld [vmem:[#allocation3 + $0x100] sm:$0xf]
      %v8565 = vld [vmem:[#allocation3 + $0x104] sm:$0xff]
      %v8566 = vld [vmem:[#allocation3 + $0x10c] sm:$0xff]
      %v8567 = vld [vmem:[#allocation3 + $0x114] sm:$0xff]
      %v8568 = vld [vmem:[#allocation3 + $0x11c] sm:$0xff]
      %v8569 = vld [vmem:[#allocation3 + $0x124] sm:$0xff]
      %v8570 = vld [vmem:[#allocation3 + $0x12c] sm:$0xff]
      %v8571 = vld [vmem:[#allocation3 + $0x134] sm:$0xf]
      %v8572 = vld [vmem:[#allocation3 + $0x138] sm:$0xff]
      %v8573 = vld [vmem:[#allocation3 + $0x140] sm:$0xff]
      %v8574 = vld [vmem:[#allocation3 + $0x148] sm:$0xff]
      %v8575 = vld [vmem:[#allocation3 + $0x150] sm:$0xff]
      %v8576 = vld [vmem:[#allocation3 + $0x158] sm:$0xff]
      %v8577 = vld [vmem:[#allocation3 + $0x160] sm:$0xff]
      %v8578 = vld [vmem:[#allocation3 + $0x168] sm:$0xf]
      %v8579 = vld [vmem:[#allocation3 + $0x16c] sm:$0xff]
      %v8580 = vld [vmem:[#allocation3 + $0x174] sm:$0xff]
      %v8581 = vld [vmem:[#allocation3 + $0x17c] sm:$0xff]
      %v8582 = vld [vmem:[#allocation3 + $0x184] sm:$0xff]
      %v8583 = vld [vmem:[#allocation3 + $0x18c] sm:$0xff]
      %v8584 = vld [vmem:[#allocation3 + $0x194] sm:$0xff]
      %v8585 = vld [vmem:[#allocation3 + $0x19c] sm:$0xf]
      %v8586 = vld [vmem:[#allocation3 + $0x1a0] sm:$0xff]
      %v8587 = vld [vmem:[#allocation3 + $0x1a8] sm:$0xff]
      %v8588 = vld [vmem:[#allocation3 + $0x1b0] sm:$0xff]
      %v8589 = vld [vmem:[#allocation3 + $0x1b8] sm:$0xff]
      %v8590 = vld [vmem:[#allocation3 + $0x1c0] sm:$0xff]
      %v8591 = vld [vmem:[#allocation3 + $0x1c8] sm:$0xff]
      %v8592 = vld [vmem:[#allocation3 + $0x1d0] sm:$0xf]
      %v8593 = vld [vmem:[#allocation3 + $0x1d4] sm:$0xff]
      %v8594 = vld [vmem:[#allocation3 + $0x1dc] sm:$0xff]
      %v8595 = vld [vmem:[#allocation3 + $0x1e4] sm:$0xff]
      %v8596 = vld [vmem:[#allocation3 + $0x1ec] sm:$0xff]
      %v8597 = vld [vmem:[#allocation3 + $0x1f4] sm:$0xff]
      %v8598 = vld [vmem:[#allocation3 + $0x1fc] sm:$0xff]
      %v8599 = vld [vmem:[#allocation3 + $0x204] sm:$0xf]
      %v8600 = vld [vmem:[#allocation3 + $0x208] sm:$0xff]
      %v8601 = vld [vmem:[#allocation3 + $0x210] sm:$0xff]
      %v8602 = vld [vmem:[#allocation3 + $0x218] sm:$0xff]
      %v8603 = vld [vmem:[#allocation3 + $0x220] sm:$0xff]
      %v8604 = vld [vmem:[#allocation3 + $0x228] sm:$0xff]
      %v8605 = vld [vmem:[#allocation3 + $0x230] sm:$0xff]
      %v8606 = vld [vmem:[#allocation3 + $0x238] sm:$0xf]
      %v8607 = vld [vmem:[#allocation3 + $0x23c] sm:$0xff]
      %v8608 = vld [vmem:[#allocation3 + $0x244] sm:$0xff]
      %v8609 = vld [vmem:[#allocation3 + $0x24c] sm:$0xff]
      %v8610 = vld [vmem:[#allocation3 + $0x254] sm:$0xff]
      %v8611 = vld [vmem:[#allocation3 + $0x25c] sm:$0xff]
      %v8612 = vld [vmem:[#allocation3 + $0x264] sm:$0xff]
      %v8613 = vld [vmem:[#allocation3 + $0x26c] sm:$0xf]
      %v8614 = vld [vmem:[#allocation3 + $0x270] sm:$0xff]
      %v8615 = vld [vmem:[#allocation3 + $0x278] sm:$0xff]
      %v8616 = vld [vmem:[#allocation3 + $0x280] sm:$0xff]
      %v8617 = vld [vmem:[#allocation3 + $0x288] sm:$0xff]
      %v8618 = vld [vmem:[#allocation3 + $0x290] sm:$0xff]
      %v8619 = vld [vmem:[#allocation3 + $0x298] sm:$0xff]
      %v8620 = vld [vmem:[#allocation3 + $0x2a0] sm:$0xf]
      %v8621 = vld [vmem:[#allocation3 + $0x2a4] sm:$0xff]
      %v8622 = vld [vmem:[#allocation3 + $0x2ac] sm:$0xff]
      %v8623 = vld [vmem:[#allocation3 + $0x2b4] sm:$0xff]
      %v8624 = vld [vmem:[#allocation3 + $0x2bc] sm:$0xff]
      %v8625 = vld [vmem:[#allocation3 + $0x2c4] sm:$0xff]
      %v8626 = vld [vmem:[#allocation3 + $0x2cc] sm:$0xff]
      %v8627 = vld [vmem:[#allocation3 + $0x2d4] sm:$0xf]
      %v8628 = vld [vmem:[#allocation3 + $0x2d8] sm:$0xff]
      %v8629 = vld [vmem:[#allocation3 + $0x2e0] sm:$0xff]
      %v8630 = vld [vmem:[#allocation3 + $0x2e8] sm:$0xff]
      %v8631 = vld [vmem:[#allocation3 + $0x2f0] sm:$0xff]
      %v8632 = vld [vmem:[#allocation3 + $0x2f8] sm:$0xff]
      %v8633 = vld [vmem:[#allocation3 + $0x300] sm:$0xff]
      %v8634 = vld [vmem:[#allocation3 + $0x308] sm:$0xf]
      %v8635 = vld [vmem:[#allocation3 + $0x30c] sm:$0xff]
      %v8636 = vld [vmem:[#allocation3 + $0x314] sm:$0xff]
      %v8637 = vld [vmem:[#allocation3 + $0x31c] sm:$0xff]
      %v8638 = vld [vmem:[#allocation3 + $0x324] sm:$0xff]
      %v8639 = vld [vmem:[#allocation3 + $0x32c] sm:$0xff]
      %v8640 = vld [vmem:[#allocation3 + $0x334] sm:$0xff]
      %v8641 = vld [vmem:[#allocation3 + $0x33c] sm:$0xf]
      %v8642 = vld [vmem:[#allocation3 + $0x340] sm:$0xff]
      %v8643 = vld [vmem:[#allocation3 + $0x348] sm:$0xff]
      %v8644 = vld [vmem:[#allocation3 + $0x350] sm:$0xff]
      %v8645 = vld [vmem:[#allocation3 + $0x358] sm:$0xff]
      %v8646 = vld [vmem:[#allocation3 + $0x360] sm:$0xff]
      %v8647 = vld [vmem:[#allocation3 + $0x368] sm:$0xff]
      %v8648 = vld [vmem:[#allocation3 + $0x370] sm:$0xf]
      %v8649 = vld [vmem:[#allocation3 + $0x374] sm:$0xff]
      %v8650 = vld [vmem:[#allocation3 + $0x37c] sm:$0xff]
      %v8651 = vld [vmem:[#allocation3 + $0x384] sm:$0xff]
      %v8652 = vld [vmem:[#allocation3 + $0x38c] sm:$0xff]
      %v8653 = vld [vmem:[#allocation3 + $0x394] sm:$0xff]
      %v8654 = vld [vmem:[#allocation3 + $0x39c] sm:$0xff]
      %v8655 = vld [vmem:[#allocation3 + $0x3a4] sm:$0xf]
      %v8656 = vld [vmem:[#allocation3 + $0x3a8] sm:$0xff]
      %v8657 = vld [vmem:[#allocation3 + $0x3b0] sm:$0xff]
      %v8658 = vld [vmem:[#allocation3 + $0x3b8] sm:$0xff]
      %v8659 = vld [vmem:[#allocation3 + $0x3c0] sm:$0xff]
      %v8660 = vld [vmem:[#allocation3 + $0x3c8] sm:$0xff]
      %v8661 = vld [vmem:[#allocation3 + $0x3d0] sm:$0xff]
      %v8662 = vld [vmem:[#allocation3 + $0x3d8] sm:$0xf]
      %v8663 = vld [vmem:[#allocation3 + $0x3dc] sm:$0xff]
      %v8664 = vld [vmem:[#allocation3 + $0x3e4] sm:$0xff]
      %v8665 = vld [vmem:[#allocation3 + $0x3ec] sm:$0xff]
      %v8666 = vld [vmem:[#allocation3 + $0x3f4] sm:$0xff]
      %v8667 = vld [vmem:[#allocation3 + $0x3fc] sm:$0xff]
      %v8668 = vld [vmem:[#allocation3 + $0x404] sm:$0xff]
      %v8669 = vld [vmem:[#allocation3 + $0x40c] sm:$0xf]
      %v8670 = vld [vmem:[#allocation3 + $0x410] sm:$0xff]
      %v8671 = vld [vmem:[#allocation3 + $0x418] sm:$0xff]
      %v8672 = vld [vmem:[#allocation3 + $0x420] sm:$0xff]
      %v8673 = vld [vmem:[#allocation3 + $0x428] sm:$0xff]
      %v8674 = vld [vmem:[#allocation3 + $0x430] sm:$0xff]
      %v8675 = vld [vmem:[#allocation3 + $0x438] sm:$0xff]
      %v8676 = vld [vmem:[#allocation3 + $0x440] sm:$0xf]
      %v8677 = vld [vmem:[#allocation3 + $0x444] sm:$0xff]
      %v8678 = vld [vmem:[#allocation3 + $0x44c] sm:$0xff]
      %v8679 = vld [vmem:[#allocation3 + $0x454] sm:$0xff]
      %v8680 = vld [vmem:[#allocation3 + $0x45c] sm:$0xff]
      %v8681 = vld [vmem:[#allocation3 + $0x464] sm:$0xff]
      %v8682 = vld [vmem:[#allocation3 + $0x46c] sm:$0xff]
      %v8683 = vld [vmem:[#allocation3 + $0x474] sm:$0xf]
      %v8684 = vld [vmem:[#allocation3 + $0x478] sm:$0xff]
      %v8685 = vld [vmem:[#allocation3 + $0x480] sm:$0xff]
      %v8686 = vld [vmem:[#allocation3 + $0x488] sm:$0xff]
      %v8687 = vld [vmem:[#allocation3 + $0x490] sm:$0xff]
      %v8688 = vld [vmem:[#allocation3 + $0x498] sm:$0xff]
      %v8689 = vld [vmem:[#allocation3 + $0x4a0] sm:$0xff]
      %v8690 = vld [vmem:[#allocation3 + $0x4a8] sm:$0xf]
      %v8691 = vld [vmem:[#allocation3 + $0x4ac] sm:$0xff]
      %v8692 = vld [vmem:[#allocation3 + $0x4b4] sm:$0xff]
      %v8693 = vld [vmem:[#allocation3 + $0x4bc] sm:$0xff]
      %v8694 = vld [vmem:[#allocation3 + $0x4c4] sm:$0xff]
      %v8695 = vld [vmem:[#allocation3 + $0x4cc] sm:$0xff]
      %v8696 = vld [vmem:[#allocation3 + $0x4d4] sm:$0xff]
      %v8697 = vld [vmem:[#allocation3 + $0x4dc] sm:$0xf]
      %v8698 = vld [vmem:[#allocation3 + $0x4e0] sm:$0xff]
      %v8699 = vld [vmem:[#allocation3 + $0x4e8] sm:$0xff]
      %v8700 = vld [vmem:[#allocation3 + $0x4f0] sm:$0xff]
      %v8701 = vld [vmem:[#allocation3 + $0x4f8] sm:$0xff]
      %v8702 = vld [vmem:[#allocation3 + $0x500] sm:$0xff]
      %v8703 = vld [vmem:[#allocation3 + $0x508] sm:$0xff]
      %v8704 = vld [vmem:[#allocation3 + $0x510] sm:$0xf]
      %v8705 = vld [vmem:[#allocation3 + $0x514] sm:$0xff]
      %v8706 = vld [vmem:[#allocation3 + $0x51c] sm:$0xff]
      %v8707 = vld [vmem:[#allocation3 + $0x524] sm:$0xff]
      %v8708 = vld [vmem:[#allocation3 + $0x52c] sm:$0xff]
      %v8709 = vld [vmem:[#allocation3 + $0x534] sm:$0xff]
      %v8710 = vld [vmem:[#allocation3 + $0x53c] sm:$0xff]
      %v8711 = vld [vmem:[#allocation3 + $0x544] sm:$0xf]
      %v8712 = vld [vmem:[#allocation3 + $0x548] sm:$0xff]
      %v8713 = vld [vmem:[#allocation3 + $0x550] sm:$0xff]
      %v8714 = vld [vmem:[#allocation3 + $0x558] sm:$0xff]
      %v8715 = vld [vmem:[#allocation3 + $0x560] sm:$0xff]
      %v8716 = vld [vmem:[#allocation3 + $0x568] sm:$0xff]
      %v8717 = vld [vmem:[#allocation3 + $0x570] sm:$0xff]
      %v8718 = vld [vmem:[#allocation3 + $0x578] sm:$0xf]
      %v8719 = vld [vmem:[#allocation3 + $0x57c] sm:$0xff]
      %v8720 = vld [vmem:[#allocation3 + $0x584] sm:$0xff]
      %v8721 = vld [vmem:[#allocation3 + $0x58c] sm:$0xff]
      %v8722 = vld [vmem:[#allocation3 + $0x594] sm:$0xff]
      %v8723 = vld [vmem:[#allocation3 + $0x59c] sm:$0xff]
      %v8724 = vld [vmem:[#allocation3 + $0x5a4] sm:$0xff]
      %v8725 = vld [vmem:[#allocation3 + $0x5ac] sm:$0xf]
      %v8726 = vld [vmem:[#allocation3 + $0x5b0] sm:$0xff]
      %v8727 = vld [vmem:[#allocation3 + $0x5b8] sm:$0xff]
      %v8728 = vld [vmem:[#allocation3 + $0x5c0] sm:$0xff]
      %v8729 = vld [vmem:[#allocation3 + $0x5c8] sm:$0xff]
      %v8730 = vld [vmem:[#allocation3 + $0x5d0] sm:$0xff]
      %v8731 = vld [vmem:[#allocation3 + $0x5d8] sm:$0xff]
      %v8732 = vld [vmem:[#allocation3 + $0x5e0] sm:$0xf]
      %v8733 = vld [vmem:[#allocation3 + $0x5e4] sm:$0xff]
      %v8734 = vld [vmem:[#allocation3 + $0x5ec] sm:$0xff]
      %v8735 = vld [vmem:[#allocation3 + $0x5f4] sm:$0xff]
      %v8736 = vld [vmem:[#allocation3 + $0x5fc] sm:$0xff]
      %v8737 = vld [vmem:[#allocation3 + $0x604] sm:$0xff]
      %v8738 = vld [vmem:[#allocation3 + $0x60c] sm:$0xff]
      %v8739 = vld [vmem:[#allocation3 + $0x614] sm:$0xf]
      %v8740 = vld [vmem:[#allocation3 + $0x618] sm:$0xff]
      %v8741 = vld [vmem:[#allocation3 + $0x620] sm:$0xff]
      %v8742 = vld [vmem:[#allocation3 + $0x628] sm:$0xff]
      %v8743 = vld [vmem:[#allocation3 + $0x630] sm:$0xff]
      %v8744 = vld [vmem:[#allocation3 + $0x638] sm:$0xff]
      %v8745 = vld [vmem:[#allocation3 + $0x640] sm:$0xff]
      %v8746 = vld [vmem:[#allocation3 + $0x648] sm:$0xf]
      %v8747 = vld [vmem:[#allocation3 + $0x64c] sm:$0xff]
      %v8748 = vld [vmem:[#allocation3 + $0x654] sm:$0xff]
      %v8749 = vld [vmem:[#allocation3 + $0x65c] sm:$0xff]
      %v8750 = vld [vmem:[#allocation3 + $0x664] sm:$0xff]
      %v8751 = vld [vmem:[#allocation3 + $0x66c] sm:$0xff]
      %v8752 = vld [vmem:[#allocation3 + $0x674] sm:$0xff]
      %v8753 = vld [vmem:[#allocation3 + $0x67c] sm:$0xf]
      %v8754 = vld [vmem:[%s5] sm:$0xf]
      %v8755 = vld [vmem:[%s5 + $0x4] sm:$0xf]
      %v8756 = vld [vmem:[%s5 + $0x8] sm:$0xf]
      %v8757 = vld [vmem:[%s5 + $0xc] sm:$0xf]
      %v8758 = vld [vmem:[%s5 + $0x10] sm:$0xf]
      %v8759 = vld [vmem:[%s5 + $0x14] sm:$0xf]
      %v8760 = vld [vmem:[%s5 + $0x18] sm:$0xf]
      %v8761 = vld [vmem:[%s5 + $0x1c] sm:$0xf]
      %v8762 = vld [vmem:[%s5 + $0x20] sm:$0xf]
      %v8763 = vld [vmem:[%s5 + $0x24] sm:$0xf]
      %v8764 = vld [vmem:[%s5 + $0x28] sm:$0xf]
      %v8765 = vld [vmem:[%s5 + $0x2c] sm:$0xf]
      %v8766 = vld [vmem:[%s5 + $0x30] sm:$0xf]
      %v8767 = vld [vmem:[%s5 + $0x34] sm:$0xf]
      %v8768 = vld [vmem:[%s5 + $0x38] sm:$0xf]
      %v8769 = vld [vmem:[%s5 + $0x3c] sm:$0xf]
      %v8770 = vld [vmem:[%s5 + $0x40] sm:$0xf]
      %v8771 = vld [vmem:[%s5 + $0x44] sm:$0xf]
      %v8772 = vld [vmem:[%s5 + $0x48] sm:$0xf]
      %v8773 = vld [vmem:[%s5 + $0x4c] sm:$0xf]
      %v8774 = vld [vmem:[%s5 + $0x50] sm:$0xf]
      %v8775 = vld [vmem:[%s5 + $0x54] sm:$0xf]
      %v8776 = vld [vmem:[%s5 + $0x58] sm:$0xf]
      %v8777 = vld [vmem:[%s5 + $0x5c] sm:$0xf]
      %v8778 = vld [vmem:[%s5 + $0x60] sm:$0xf]
      %v8779 = vld [vmem:[%s5 + $0x64] sm:$0xf]
      %v8780 = vld [vmem:[%s5 + $0x68] sm:$0xf]
      %v8781 = vld [vmem:[%s5 + $0x6c] sm:$0xf]
      %v8782 = vld [vmem:[%s5 + $0x70] sm:$0xf]
      %v8783 = vld [vmem:[%s5 + $0x74] sm:$0xf]
      %v8784 = vld [vmem:[%s5 + $0x78] sm:$0xf]
      %v8785 = vld [vmem:[%s5 + $0x7c] sm:$0xf]
      %v8786 = vld [vmem:[%s5 + $0x80] sm:$0xf]
      %v8787 = vld [vmem:[%s5 + $0x84] sm:$0xf]
      %v8788 = vld [vmem:[%s5 + $0x88] sm:$0xf]
      %v8789 = vld [vmem:[%s5 + $0x8c] sm:$0xf]
      %v8790 = vld [vmem:[%s5 + $0x90] sm:$0xf]
      %v8791 = vld [vmem:[%s5 + $0x94] sm:$0xf]
      %v8792 = vld [vmem:[%s5 + $0x98] sm:$0xf]
      %v8793 = vld [vmem:[%s5 + $0x9c] sm:$0xf]
      %v8794 = vld [vmem:[%s5 + $0xa0] sm:$0xf]
      %v8795 = vld [vmem:[%s5 + $0xa4] sm:$0xf]
      %v8796 = vld [vmem:[%s5 + $0xa8] sm:$0xf]
      %v8797 = vld [vmem:[%s5 + $0xac] sm:$0xf]
      %v8798 = vld [vmem:[%s5 + $0xb0] sm:$0xf]
      %v8799 = vld [vmem:[%s5 + $0xb4] sm:$0xf]
      %v8800 = vld [vmem:[%s5 + $0xb8] sm:$0xf]
      %v8801 = vld [vmem:[%s5 + $0xbc] sm:$0xf]
      %v8802 = vld [vmem:[%s5 + $0xc0] sm:$0xf]
      %v8803 = vld [vmem:[%s5 + $0xc4] sm:$0xf]
      %v8804 = vld [vmem:[%s5 + $0xc8] sm:$0xf]
      %v8805 = vld [vmem:[%s5 + $0xcc] sm:$0xf]
      %v8806 = vld [vmem:[%s5 + $0xd0] sm:$0xf]
      %v8807 = vld [vmem:[%s5 + $0xd4] sm:$0xf]
      %v8808 = vld [vmem:[%s5 + $0xd8] sm:$0xf]
      %v8809 = vld [vmem:[%s5 + $0xdc] sm:$0xf]
      %v8810 = vld [vmem:[%s5 + $0xe0] sm:$0xf]
      %v8811 = vld [vmem:[%s5 + $0xe4] sm:$0xf]
      %v8812 = vld [vmem:[%s5 + $0xe8] sm:$0xf]
      %v8813 = vld [vmem:[%s5 + $0xec] sm:$0xf]
      %v8814 = vld [vmem:[%s5 + $0xf0] sm:$0xf]
      %v8815 = vld [vmem:[%s5 + $0xf4] sm:$0xf]
      %v8816 = vld [vmem:[%s5 + $0xf8] sm:$0xf]
      %v8817 = vld [vmem:[%s5 + $0xfc] sm:$0xf]
      %v8818 = vld [vmem:[%s5 + $0x100] sm:$0xf]
      %v8819 = vld [vmem:[%s5 + $0x104] sm:$0xf]
      %v8820 = vld [vmem:[%s5 + $0x108] sm:$0xf]
      %v8821 = vld [vmem:[%s5 + $0x10c] sm:$0xf]
      %v8822 = vld [vmem:[%s5 + $0x110] sm:$0xf]
      %v8823 = vld [vmem:[%s5 + $0x114] sm:$0xf]
      %v8824 = vld [vmem:[%s5 + $0x118] sm:$0xf]
      %v8825 = vld [vmem:[%s5 + $0x11c] sm:$0xf]
      %v8826 = vld [vmem:[%s5 + $0x120] sm:$0xf]
      %v8827 = vld [vmem:[%s5 + $0x124] sm:$0xf]
      %v8828 = vld [vmem:[%s5 + $0x128] sm:$0xf]
      %v8829 = vld [vmem:[%s5 + $0x12c] sm:$0xf]
      %v8830 = vld [vmem:[%s5 + $0x130] sm:$0xf]
      %v8831 = vld [vmem:[%s5 + $0x134] sm:$0xf]
      %v8832 = vld [vmem:[%s5 + $0x138] sm:$0xf]
      %v8833 = vld [vmem:[%s5 + $0x13c] sm:$0xf]
      %v8834 = vld [vmem:[%s5 + $0x140] sm:$0xf]
      %v8835 = vld [vmem:[%s5 + $0x144] sm:$0xf]
      %v8836 = vld [vmem:[%s5 + $0x148] sm:$0xf]
      %v8837 = vld [vmem:[%s5 + $0x14c] sm:$0xf]
      %v8838 = vld [vmem:[%s5 + $0x150] sm:$0xf]
      %v8839 = vld [vmem:[%s5 + $0x154] sm:$0xf]
      %v8840 = vld [vmem:[%s5 + $0x158] sm:$0xf]
      %v8841 = vld [vmem:[%s5 + $0x15c] sm:$0xf]
      %v8842 = vld [vmem:[%s5 + $0x160] sm:$0xf]
      %v8843 = vld [vmem:[%s5 + $0x164] sm:$0xf]
      %v8844 = vld [vmem:[%s5 + $0x168] sm:$0xf]
      %v8845 = vld [vmem:[%s5 + $0x16c] sm:$0xf]
      %v8846 = vld [vmem:[%s5 + $0x170] sm:$0xf]
      %v8847 = vld [vmem:[%s5 + $0x174] sm:$0xf]
      %v8848 = vld [vmem:[%s5 + $0x178] sm:$0xf]
      %v8849 = vld [vmem:[%s5 + $0x17c] sm:$0xf]
      %v8850 = vld [vmem:[%s5 + $0x180] sm:$0xf]
      %v8851 = vld [vmem:[%s5 + $0x184] sm:$0xf]
      %v8852 = vld [vmem:[%s5 + $0x188] sm:$0xf]
      %v8853 = vld [vmem:[%s5 + $0x18c] sm:$0xf]
      %v8854 = vld [vmem:[%s5 + $0x190] sm:$0xf]
      %v8855 = vld [vmem:[%s5 + $0x194] sm:$0xf]
      %v8856 = vld [vmem:[%s5 + $0x198] sm:$0xf]
      %v8857 = vld [vmem:[%s5 + $0x19c] sm:$0xf]
      %v8858 = vld [vmem:[%s5 + $0x1a0] sm:$0xf]
      %v8859 = vld [vmem:[%s5 + $0x1a4] sm:$0xf]
      %v8860 = vld [vmem:[%s5 + $0x1a8] sm:$0xf]
      %v8861 = vld [vmem:[%s5 + $0x1ac] sm:$0xf]
      %v8862 = vld [vmem:[%s5 + $0x1b0] sm:$0xf]
      %v8863 = vld [vmem:[%s5 + $0x1b4] sm:$0xf]
      %v8864 = vld [vmem:[%s5 + $0x1b8] sm:$0xf]
      %v8865 = vld [vmem:[%s5 + $0x1bc] sm:$0xf]
      %v8866 = vld [vmem:[%s5 + $0x1c0] sm:$0xf]
      %v8867 = vld [vmem:[%s5 + $0x1c4] sm:$0xf]
      %v8868 = vld [vmem:[%s5 + $0x1c8] sm:$0xf]
      %v8869 = vld [vmem:[%s5 + $0x1cc] sm:$0xf]
      %v8870 = vld [vmem:[%s5 + $0x1d0] sm:$0xf]
      %v8871 = vld [vmem:[%s5 + $0x1d4] sm:$0xf]
      %v8872 = vld [vmem:[%s5 + $0x1d8] sm:$0xf]
      %v8873 = vld [vmem:[%s5 + $0x1dc] sm:$0xf]
      %v8874 = vld [vmem:[%s5 + $0x1e0] sm:$0xf]
      %v8875 = vld [vmem:[%s5 + $0x1e4] sm:$0xf]
      %v8876 = vld [vmem:[%s5 + $0x1e8] sm:$0xf]
      %v8877 = vld [vmem:[%s5 + $0x1ec] sm:$0xf]
      %v8878 = vld [vmem:[%s5 + $0x1f0] sm:$0xf]
      %v8879 = vld [vmem:[%s5 + $0x1f4] sm:$0xf]
      %v8880 = vld [vmem:[%s5 + $0x1f8] sm:$0xf]
      %v8881 = vld [vmem:[%s5 + $0x1fc] sm:$0xf]
      %v8882 = vld [vmem:[%s5 + $0x200] sm:$0xf]
      %v8883 = vld [vmem:[%s5 + $0x204] sm:$0xf]
      %v8884 = vld [vmem:[%s5 + $0x208] sm:$0xf]
      %v8885 = vld [vmem:[%s5 + $0x20c] sm:$0xf]
      %v8886 = vld [vmem:[%s5 + $0x210] sm:$0xf]
      %v8887 = vld [vmem:[%s5 + $0x214] sm:$0xf]
      %v8888 = vld [vmem:[%s5 + $0x218] sm:$0xf]
      %v8889 = vld [vmem:[%s5 + $0x21c] sm:$0xf]
      %v8890 = vld [vmem:[%s5 + $0x220] sm:$0xf]
      %v8891 = vld [vmem:[%s5 + $0x224] sm:$0xf]
      %v8892 = vld [vmem:[%s5 + $0x228] sm:$0xf]
      %v8893 = vld [vmem:[%s5 + $0x22c] sm:$0xf]
      %v8894 = vld [vmem:[%s5 + $0x230] sm:$0xf]
      %v8895 = vld [vmem:[%s5 + $0x234] sm:$0xf]
      %v8896 = vld [vmem:[%s5 + $0x238] sm:$0xf]
      %v8897 = vld [vmem:[%s5 + $0x23c] sm:$0xf]
      %v8898 = vld [vmem:[%s5 + $0x240] sm:$0xf]
      %v8899 = vld [vmem:[%s5 + $0x244] sm:$0xf]
      %v8900 = vld [vmem:[%s5 + $0x248] sm:$0xf]
      %v8901 = vld [vmem:[%s5 + $0x24c] sm:$0xf]
      %v8902 = vld [vmem:[%s5 + $0x250] sm:$0xf]
      %v8903 = vld [vmem:[%s5 + $0x254] sm:$0xf]
      %v8904 = vld [vmem:[%s5 + $0x258] sm:$0xf]
      %v8905 = vld [vmem:[%s5 + $0x25c] sm:$0xf]
      %v8906 = vld [vmem:[%s5 + $0x260] sm:$0xf]
      %v8907 = vld [vmem:[%s5 + $0x264] sm:$0xf]
      %v8908 = vld [vmem:[%s5 + $0x268] sm:$0xf]
      %v8909 = vld [vmem:[%s5 + $0x26c] sm:$0xf]
      %v8910 = vld [vmem:[%s5 + $0x270] sm:$0xf]
      %v8911 = vld [vmem:[%s5 + $0x274] sm:$0xf]
      %v8912 = vld [vmem:[%s5 + $0x278] sm:$0xf]
      %v8913 = vld [vmem:[%s5 + $0x27c] sm:$0xf]
      %v8914 = vld [vmem:[%s5 + $0x280] sm:$0xf]
      %v8915 = vld [vmem:[%s5 + $0x284] sm:$0xf]
      %v8916 = vld [vmem:[%s5 + $0x288] sm:$0xf]
      %v8917 = vld [vmem:[%s5 + $0x28c] sm:$0xf]
      %v8918 = vld [vmem:[%s5 + $0x290] sm:$0xf]
      %v8919 = vld [vmem:[%s5 + $0x294] sm:$0xf]
      %v8920 = vld [vmem:[%s5 + $0x298] sm:$0xf]
      %v8921 = vld [vmem:[%s5 + $0x29c] sm:$0xf]
      %v8922 = vld [vmem:[%s5 + $0x2a0] sm:$0xf]
      %v8923 = vld [vmem:[%s5 + $0x2a4] sm:$0xf]
      %v8924 = vld [vmem:[%s5 + $0x2a8] sm:$0xf]
      %v8925 = vld [vmem:[%s5 + $0x2ac] sm:$0xf]
      %v8926 = vld [vmem:[%s5 + $0x2b0] sm:$0xf]
      %v8927 = vld [vmem:[%s5 + $0x2b4] sm:$0xf]
      %v8928 = vld [vmem:[%s5 + $0x2b8] sm:$0xf]
      %v8929 = vld [vmem:[%s5 + $0x2bc] sm:$0xf]
      %v8930 = vld [vmem:[%s5 + $0x2c0] sm:$0xf]
      %v8931 = vld [vmem:[%s5 + $0x2c4] sm:$0xf]
      %v8932 = vld [vmem:[%s5 + $0x2c8] sm:$0xf]
      %v8933 = vld [vmem:[%s5 + $0x2cc] sm:$0xf]
      %v8934 = vld [vmem:[%s5 + $0x2d0] sm:$0xf]
      %v8935 = vld [vmem:[%s5 + $0x2d4] sm:$0xf]
      %v8936 = vld [vmem:[%s5 + $0x2d8] sm:$0xf]
      %v8937 = vld [vmem:[%s5 + $0x2dc] sm:$0xf]
      %v8938 = vld [vmem:[%s5 + $0x2e0] sm:$0xf]
      %v8939 = vld [vmem:[%s5 + $0x2e4] sm:$0xf]
      %v8940 = vld [vmem:[%s5 + $0x2e8] sm:$0xf]
      %v8941 = vld [vmem:[%s5 + $0x2ec] sm:$0xf]
      %v8942 = vld [vmem:[%s5 + $0x2f0] sm:$0xf]
      %v8943 = vld [vmem:[%s5 + $0x2f4] sm:$0xf]
      %v8944 = vld [vmem:[%s5 + $0x2f8] sm:$0xf]
      %v8945 = vld [vmem:[%s5 + $0x2fc] sm:$0xf]
      %v8946 = vld [vmem:[%s5 + $0x300] sm:$0xf]
      %v8947 = vld [vmem:[%s5 + $0x304] sm:$0xf]
      %v8948 = vld [vmem:[%s5 + $0x308] sm:$0xf]
      %v8949 = vld [vmem:[%s5 + $0x30c] sm:$0xf]
      %v8950 = vld [vmem:[%s5 + $0x310] sm:$0xf]
      %v8951 = vld [vmem:[%s5 + $0x314] sm:$0xf]
      %v8952 = vld [vmem:[%s5 + $0x318] sm:$0xf]
      %v8953 = vld [vmem:[%s5 + $0x31c] sm:$0xf]
      %v8954 = vld [vmem:[%s6] sm:$0x1]
      %v8956 = vlaneseq
      %v8957 = vshrl.u32 %v8956, 7
      %v8958 = vsub.s32 0, %v8957
      %v8959 = vrot.slane %v8954, %v8958
      %v9185 = vunpack.c.l.b16 %v8530
      %v9186 = vunpack.c.h.b16 %v8530
      %v9187 = vunpack.c.l.b16 %v8531
      %v9188 = vunpack.c.h.b16 %v8531
      %v9189 = vunpack.c.l.b16 %v8532
      %v9190 = vunpack.c.h.b16 %v8532
      %v9191 = vunpack.c.l.b16 %v8533
      %v9192 = vunpack.c.h.b16 %v8533
      %v9193 = vunpack.c.l.b16 %v8534
      %v9194 = vunpack.c.h.b16 %v8534
      %v9195 = vunpack.c.l.b16 %v8535
      %v9196 = vunpack.c.h.b16 %v8535
      %v9197 = vunpack.c.l.b16 %v8536
      %v9198 = vunpack.c.l.b16 %v8537
      %v9199 = vunpack.c.h.b16 %v8537
      %v9200 = vunpack.c.l.b16 %v8538
      %v9201 = vunpack.c.h.b16 %v8538
      %v9202 = vunpack.c.l.b16 %v8539
      %v9203 = vunpack.c.h.b16 %v8539
      %v9204 = vunpack.c.l.b16 %v8540
      %v9205 = vunpack.c.h.b16 %v8540
      %v9206 = vunpack.c.l.b16 %v8541
      %v9207 = vunpack.c.h.b16 %v8541
      %v9208 = vunpack.c.l.b16 %v8542
      %v9209 = vunpack.c.h.b16 %v8542
      %v9210 = vunpack.c.l.b16 %v8543
      %v9211 = vunpack.c.l.b16 %v8544
      %v9212 = vunpack.c.h.b16 %v8544
      %v9213 = vunpack.c.l.b16 %v8545
      %v9214 = vunpack.c.h.b16 %v8545
      %v9215 = vunpack.c.l.b16 %v8546
      %v9216 = vunpack.c.h.b16 %v8546
      %v9217 = vunpack.c.l.b16 %v8547
      %v9218 = vunpack.c.h.b16 %v8547
      %v9219 = vunpack.c.l.b16 %v8548
      %v9220 = vunpack.c.h.b16 %v8548
      %v9221 = vunpack.c.l.b16 %v8549
      %v9222 = vunpack.c.h.b16 %v8549
      %v9223 = vunpack.c.l.b16 %v8550
      %v9224 = vunpack.c.l.b16 %v8551
      %v9225 = vunpack.c.h.b16 %v8551
      %v9226 = vunpack.c.l.b16 %v8552
      %v9227 = vunpack.c.h.b16 %v8552
      %v9228 = vunpack.c.l.b16 %v8553
      %v9229 = vunpack.c.h.b16 %v8553
      %v9230 = vunpack.c.l.b16 %v8554
      %v9231 = vunpack.c.h.b16 %v8554
      %v9232 = vunpack.c.l.b16 %v8555
      %v9233 = vunpack.c.h.b16 %v8555
      %v9234 = vunpack.c.l.b16 %v8556
      %v9235 = vunpack.c.h.b16 %v8556
      %v9236 = vunpack.c.l.b16 %v8557
      %v9237 = vunpack.c.l.b16 %v8558
      %v9238 = vunpack.c.h.b16 %v8558
      %v9239 = vunpack.c.l.b16 %v8559
      %v9240 = vunpack.c.h.b16 %v8559
      %v9241 = vunpack.c.l.b16 %v8560
      %v9242 = vunpack.c.h.b16 %v8560
      %v9243 = vunpack.c.l.b16 %v8561
      %v9244 = vunpack.c.h.b16 %v8561
      %v9245 = vunpack.c.l.b16 %v8562
      %v9246 = vunpack.c.h.b16 %v8562
      %v9247 = vunpack.c.l.b16 %v8563
      %v9248 = vunpack.c.h.b16 %v8563
      %v9249 = vunpack.c.l.b16 %v8564
      %v9250 = vunpack.c.l.b16 %v8565
      %v9251 = vunpack.c.h.b16 %v8565
      %v9252 = vunpack.c.l.b16 %v8566
      %v9253 = vunpack.c.h.b16 %v8566
      %v9254 = vunpack.c.l.b16 %v8567
      %v9255 = vunpack.c.h.b16 %v8567
      %v9256 = vunpack.c.l.b16 %v8568
      %v9257 = vunpack.c.h.b16 %v8568
      %v9258 = vunpack.c.l.b16 %v8569
      %v9259 = vunpack.c.h.b16 %v8569
      %v9260 = vunpack.c.l.b16 %v8570
      %v9261 = vunpack.c.h.b16 %v8570
      %v9262 = vunpack.c.l.b16 %v8571
      %v9263 = vunpack.c.l.b16 %v8572
      %v9264 = vunpack.c.h.b16 %v8572
      %v9265 = vunpack.c.l.b16 %v8573
      %v9266 = vunpack.c.h.b16 %v8573
      %v9267 = vunpack.c.l.b16 %v8574
      %v9268 = vunpack.c.h.b16 %v8574
      %v9269 = vunpack.c.l.b16 %v8575
      %v9270 = vunpack.c.h.b16 %v8575
      %v9271 = vunpack.c.l.b16 %v8576
      %v9272 = vunpack.c.h.b16 %v8576
      %v9273 = vunpack.c.l.b16 %v8577
      %v9274 = vunpack.c.h.b16 %v8577
      %v9275 = vunpack.c.l.b16 %v8578
      %v9276 = vunpack.c.l.b16 %v8579
      %v9277 = vunpack.c.h.b16 %v8579
      %v9278 = vunpack.c.l.b16 %v8580
      %v9279 = vunpack.c.h.b16 %v8580
      %v9280 = vunpack.c.l.b16 %v8581
      %v9281 = vunpack.c.h.b16 %v8581
      %v9282 = vunpack.c.l.b16 %v8582
      %v9283 = vunpack.c.h.b16 %v8582
      %v9284 = vunpack.c.l.b16 %v8583
      %v9285 = vunpack.c.h.b16 %v8583
      %v9286 = vunpack.c.l.b16 %v8584
      %v9287 = vunpack.c.h.b16 %v8584
      %v9288 = vunpack.c.l.b16 %v8585
      %v9289 = vunpack.c.l.b16 %v8586
      %v9290 = vunpack.c.h.b16 %v8586
      %v9291 = vunpack.c.l.b16 %v8587
      %v9292 = vunpack.c.h.b16 %v8587
      %v9293 = vunpack.c.l.b16 %v8588
      %v9294 = vunpack.c.h.b16 %v8588
      %v9295 = vunpack.c.l.b16 %v8589
      %v9296 = vunpack.c.h.b16 %v8589
      %v9297 = vunpack.c.l.b16 %v8590
      %v9298 = vunpack.c.h.b16 %v8590
      %v9299 = vunpack.c.l.b16 %v8591
      %v9300 = vunpack.c.h.b16 %v8591
      %v9301 = vunpack.c.l.b16 %v8592
      %v9302 = vunpack.c.l.b16 %v8593
      %v9303 = vunpack.c.h.b16 %v8593
      %v9304 = vunpack.c.l.b16 %v8594
      %v9305 = vunpack.c.h.b16 %v8594
      %v9306 = vunpack.c.l.b16 %v8595
      %v9307 = vunpack.c.h.b16 %v8595
      %v9308 = vunpack.c.l.b16 %v8596
      %v9309 = vunpack.c.h.b16 %v8596
      %v9310 = vunpack.c.l.b16 %v8597
      %v9311 = vunpack.c.h.b16 %v8597
      %v9312 = vunpack.c.l.b16 %v8598
      %v9313 = vunpack.c.h.b16 %v8598
      %v9314 = vunpack.c.l.b16 %v8599
      %v9315 = vunpack.c.l.b16 %v8600
      %v9316 = vunpack.c.h.b16 %v8600
      %v9317 = vunpack.c.l.b16 %v8601
      %v9318 = vunpack.c.h.b16 %v8601
      %v9319 = vunpack.c.l.b16 %v8602
      %v9320 = vunpack.c.h.b16 %v8602
      %v9321 = vunpack.c.l.b16 %v8603
      %v9322 = vunpack.c.h.b16 %v8603
      %v9323 = vunpack.c.l.b16 %v8604
      %v9324 = vunpack.c.h.b16 %v8604
      %v9325 = vunpack.c.l.b16 %v8605
      %v9326 = vunpack.c.h.b16 %v8605
      %v9327 = vunpack.c.l.b16 %v8606
      %v9328 = vunpack.c.l.b16 %v8607
      %v9329 = vunpack.c.h.b16 %v8607
      %v9330 = vunpack.c.l.b16 %v8608
      %v9331 = vunpack.c.h.b16 %v8608
      %v9332 = vunpack.c.l.b16 %v8609
      %v9333 = vunpack.c.h.b16 %v8609
      %v9334 = vunpack.c.l.b16 %v8610
      %v9335 = vunpack.c.h.b16 %v8610
      %v9336 = vunpack.c.l.b16 %v8611
      %v9337 = vunpack.c.h.b16 %v8611
      %v9338 = vunpack.c.l.b16 %v8612
      %v9339 = vunpack.c.h.b16 %v8612
      %v9340 = vunpack.c.l.b16 %v8613
      %v9341 = vunpack.c.l.b16 %v8614
      %v9342 = vunpack.c.h.b16 %v8614
      %v9343 = vunpack.c.l.b16 %v8615
      %v9344 = vunpack.c.h.b16 %v8615
      %v9345 = vunpack.c.l.b16 %v8616
      %v9346 = vunpack.c.h.b16 %v8616
      %v9347 = vunpack.c.l.b16 %v8617
      %v9348 = vunpack.c.h.b16 %v8617
      %v9349 = vunpack.c.l.b16 %v8618
      %v9350 = vunpack.c.h.b16 %v8618
      %v9351 = vunpack.c.l.b16 %v8619
      %v9352 = vunpack.c.h.b16 %v8619
      %v9353 = vunpack.c.l.b16 %v8620
      %v9354 = vunpack.c.l.b16 %v8621
      %v9355 = vunpack.c.h.b16 %v8621
      %v9356 = vunpack.c.l.b16 %v8622
      %v9357 = vunpack.c.h.b16 %v8622
      %v9358 = vunpack.c.l.b16 %v8623
      %v9359 = vunpack.c.h.b16 %v8623
      %v9360 = vunpack.c.l.b16 %v8624
      %v9361 = vunpack.c.h.b16 %v8624
      %v9362 = vunpack.c.l.b16 %v8625
      %v9363 = vunpack.c.h.b16 %v8625
      %v9364 = vunpack.c.l.b16 %v8626
      %v9365 = vunpack.c.h.b16 %v8626
      %v9366 = vunpack.c.l.b16 %v8627
      %v9367 = vunpack.c.l.b16 %v8628
      %v9368 = vunpack.c.h.b16 %v8628
      %v9369 = vunpack.c.l.b16 %v8629
      %v9370 = vunpack.c.h.b16 %v8629
      %v9371 = vunpack.c.l.b16 %v8630
      %v9372 = vunpack.c.h.b16 %v8630
      %v9373 = vunpack.c.l.b16 %v8631
      %v9374 = vunpack.c.h.b16 %v8631
      %v9375 = vunpack.c.l.b16 %v8632
      %v9376 = vunpack.c.h.b16 %v8632
      %v9377 = vunpack.c.l.b16 %v8633
      %v9378 = vunpack.c.h.b16 %v8633
      %v9379 = vunpack.c.l.b16 %v8634
      %v9380 = vunpack.c.l.b16 %v8635
      %v9381 = vunpack.c.h.b16 %v8635
      %v9382 = vunpack.c.l.b16 %v8636
      %v9383 = vunpack.c.h.b16 %v8636
      %v9384 = vunpack.c.l.b16 %v8637
      %v9385 = vunpack.c.h.b16 %v8637
      %v9386 = vunpack.c.l.b16 %v8638
      %v9387 = vunpack.c.h.b16 %v8638
      %v9388 = vunpack.c.l.b16 %v8639
      %v9389 = vunpack.c.h.b16 %v8639
      %v9390 = vunpack.c.l.b16 %v8640
      %v9391 = vunpack.c.h.b16 %v8640
      %v9392 = vunpack.c.l.b16 %v8641
      %v9393 = vunpack.c.l.b16 %v8642
      %v9394 = vunpack.c.h.b16 %v8642
      %v9395 = vunpack.c.l.b16 %v8643
      %v9396 = vunpack.c.h.b16 %v8643
      %v9397 = vunpack.c.l.b16 %v8644
      %v9398 = vunpack.c.h.b16 %v8644
      %v9399 = vunpack.c.l.b16 %v8645
      %v9400 = vunpack.c.h.b16 %v8645
      %v9401 = vunpack.c.l.b16 %v8646
      %v9402 = vunpack.c.h.b16 %v8646
      %v9403 = vunpack.c.l.b16 %v8647
      %v9404 = vunpack.c.h.b16 %v8647
      %v9405 = vunpack.c.l.b16 %v8648
      %v9406 = vunpack.c.l.b16 %v8649
      %v9407 = vunpack.c.h.b16 %v8649
      %v9408 = vunpack.c.l.b16 %v8650
      %v9409 = vunpack.c.h.b16 %v8650
      %v9410 = vunpack.c.l.b16 %v8651
      %v9411 = vunpack.c.h.b16 %v8651
      %v9412 = vunpack.c.l.b16 %v8652
      %v9413 = vunpack.c.h.b16 %v8652
      %v9414 = vunpack.c.l.b16 %v8653
      %v9415 = vunpack.c.h.b16 %v8653
      %v9416 = vunpack.c.l.b16 %v8654
      %v9417 = vunpack.c.h.b16 %v8654
      %v9418 = vunpack.c.l.b16 %v8655
      %v9419 = vunpack.c.l.b16 %v8656
      %v9420 = vunpack.c.h.b16 %v8656
      %v9421 = vunpack.c.l.b16 %v8657
      %v9422 = vunpack.c.h.b16 %v8657
      %v9423 = vunpack.c.l.b16 %v8658
      %v9424 = vunpack.c.h.b16 %v8658
      %v9425 = vunpack.c.l.b16 %v8659
      %v9426 = vunpack.c.h.b16 %v8659
      %v9427 = vunpack.c.l.b16 %v8660
      %v9428 = vunpack.c.h.b16 %v8660
      %v9429 = vunpack.c.l.b16 %v8661
      %v9430 = vunpack.c.h.b16 %v8661
      %v9431 = vunpack.c.l.b16 %v8662
      %v9432 = vunpack.c.l.b16 %v8663
      %v9433 = vunpack.c.h.b16 %v8663
      %v9434 = vunpack.c.l.b16 %v8664
      %v9435 = vunpack.c.h.b16 %v8664
      %v9436 = vunpack.c.l.b16 %v8665
      %v9437 = vunpack.c.h.b16 %v8665
      %v9438 = vunpack.c.l.b16 %v8666
      %v9439 = vunpack.c.h.b16 %v8666
      %v9440 = vunpack.c.l.b16 %v8667
      %v9441 = vunpack.c.h.b16 %v8667
      %v9442 = vunpack.c.l.b16 %v8668
      %v9443 = vunpack.c.h.b16 %v8668
      %v9444 = vunpack.c.l.b16 %v8669
      %v9445 = vunpack.c.l.b16 %v8670
      %v9446 = vunpack.c.h.b16 %v8670
      %v9447 = vunpack.c.l.b16 %v8671
      %v9448 = vunpack.c.h.b16 %v8671
      %v9449 = vunpack.c.l.b16 %v8672
      %v9450 = vunpack.c.h.b16 %v8672
      %v9451 = vunpack.c.l.b16 %v8673
      %v9452 = vunpack.c.h.b16 %v8673
      %v9453 = vunpack.c.l.b16 %v8674
      %v9454 = vunpack.c.h.b16 %v8674
      %v9455 = vunpack.c.l.b16 %v8675
      %v9456 = vunpack.c.h.b16 %v8675
      %v9457 = vunpack.c.l.b16 %v8676
      %v9458 = vunpack.c.l.b16 %v8677
      %v9459 = vunpack.c.h.b16 %v8677
      %v9460 = vunpack.c.l.b16 %v8678
      %v9461 = vunpack.c.h.b16 %v8678
      %v9462 = vunpack.c.l.b16 %v8679
      %v9463 = vunpack.c.h.b16 %v8679
      %v9464 = vunpack.c.l.b16 %v8680
      %v9465 = vunpack.c.h.b16 %v8680
      %v9466 = vunpack.c.l.b16 %v8681
      %v9467 = vunpack.c.h.b16 %v8681
      %v9468 = vunpack.c.l.b16 %v8682
      %v9469 = vunpack.c.h.b16 %v8682
      %v9470 = vunpack.c.l.b16 %v8683
      %v9471 = vunpack.c.l.b16 %v8684
      %v9472 = vunpack.c.h.b16 %v8684
      %v9473 = vunpack.c.l.b16 %v8685
      %v9474 = vunpack.c.h.b16 %v8685
      %v9475 = vunpack.c.l.b16 %v8686
      %v9476 = vunpack.c.h.b16 %v8686
      %v9477 = vunpack.c.l.b16 %v8687
      %v9478 = vunpack.c.h.b16 %v8687
      %v9479 = vunpack.c.l.b16 %v8688
      %v9480 = vunpack.c.h.b16 %v8688
      %v9481 = vunpack.c.l.b16 %v8689
      %v9482 = vunpack.c.h.b16 %v8689
      %v9483 = vunpack.c.l.b16 %v8690
      %v9484 = vunpack.c.l.b16 %v8691
      %v9485 = vunpack.c.h.b16 %v8691
      %v9486 = vunpack.c.l.b16 %v8692
      %v9487 = vunpack.c.h.b16 %v8692
      %v9488 = vunpack.c.l.b16 %v8693
      %v9489 = vunpack.c.h.b16 %v8693
      %v9490 = vunpack.c.l.b16 %v8694
      %v9491 = vunpack.c.h.b16 %v8694
      %v9492 = vunpack.c.l.b16 %v8695
      %v9493 = vunpack.c.h.b16 %v8695
      %v9494 = vunpack.c.l.b16 %v8696
      %v9495 = vunpack.c.h.b16 %v8696
      %v9496 = vunpack.c.l.b16 %v8697
      %v9497 = vunpack.c.l.b16 %v8698
      %v9498 = vunpack.c.h.b16 %v8698
      %v9499 = vunpack.c.l.b16 %v8699
      %v9500 = vunpack.c.h.b16 %v8699
      %v9501 = vunpack.c.l.b16 %v8700
      %v9502 = vunpack.c.h.b16 %v8700
      %v9503 = vunpack.c.l.b16 %v8701
      %v9504 = vunpack.c.h.b16 %v8701
      %v9505 = vunpack.c.l.b16 %v8702
      %v9506 = vunpack.c.h.b16 %v8702
      %v9507 = vunpack.c.l.b16 %v8703
      %v9508 = vunpack.c.h.b16 %v8703
      %v9509 = vunpack.c.l.b16 %v8704
      %v9510 = vunpack.c.l.b16 %v8705
      %v9511 = vunpack.c.h.b16 %v8705
      %v9512 = vunpack.c.l.b16 %v8706
      %v9513 = vunpack.c.h.b16 %v8706
      %v9514 = vunpack.c.l.b16 %v8707
      %v9515 = vunpack.c.h.b16 %v8707
      %v9516 = vunpack.c.l.b16 %v8708
      %v9517 = vunpack.c.h.b16 %v8708
      %v9518 = vunpack.c.l.b16 %v8709
      %v9519 = vunpack.c.h.b16 %v8709
      %v9520 = vunpack.c.l.b16 %v8710
      %v9521 = vunpack.c.h.b16 %v8710
      %v9522 = vunpack.c.l.b16 %v8711
      %v9523 = vunpack.c.l.b16 %v8712
      %v9524 = vunpack.c.h.b16 %v8712
      %v9525 = vunpack.c.l.b16 %v8713
      %v9526 = vunpack.c.h.b16 %v8713
      %v9527 = vunpack.c.l.b16 %v8714
      %v9528 = vunpack.c.h.b16 %v8714
      %v9529 = vunpack.c.l.b16 %v8715
      %v9530 = vunpack.c.h.b16 %v8715
      %v9531 = vunpack.c.l.b16 %v8716
      %v9532 = vunpack.c.h.b16 %v8716
      %v9533 = vunpack.c.l.b16 %v8717
      %v9534 = vunpack.c.h.b16 %v8717
      %v9535 = vunpack.c.l.b16 %v8718
      %v9536 = vunpack.c.l.b16 %v8719
      %v9537 = vunpack.c.h.b16 %v8719
      %v9538 = vunpack.c.l.b16 %v8720
      %v9539 = vunpack.c.h.b16 %v8720
      %v9540 = vunpack.c.l.b16 %v8721
      %v9541 = vunpack.c.h.b16 %v8721
      %v9542 = vunpack.c.l.b16 %v8722
      %v9543 = vunpack.c.h.b16 %v8722
      %v9544 = vunpack.c.l.b16 %v8723
      %v9545 = vunpack.c.h.b16 %v8723
      %v9546 = vunpack.c.l.b16 %v8724
      %v9547 = vunpack.c.h.b16 %v8724
      %v9548 = vunpack.c.l.b16 %v8725
      %v9549 = vunpack.c.l.b16 %v8726
      %v9550 = vunpack.c.h.b16 %v8726
      %v9551 = vunpack.c.l.b16 %v8727
      %v9552 = vunpack.c.h.b16 %v8727
      %v9553 = vunpack.c.l.b16 %v8728
      %v9554 = vunpack.c.h.b16 %v8728
      %v9555 = vunpack.c.l.b16 %v8729
      %v9556 = vunpack.c.h.b16 %v8729
      %v9557 = vunpack.c.l.b16 %v8730
      %v9558 = vunpack.c.h.b16 %v8730
      %v9559 = vunpack.c.l.b16 %v8731
      %v9560 = vunpack.c.h.b16 %v8731
      %v9561 = vunpack.c.l.b16 %v8732
      %v9562 = vunpack.c.l.b16 %v8733
      %v9563 = vunpack.c.h.b16 %v8733
      %v9564 = vunpack.c.l.b16 %v8734
      %v9565 = vunpack.c.h.b16 %v8734
      %v9566 = vunpack.c.l.b16 %v8735
      %v9567 = vunpack.c.h.b16 %v8735
      %v9568 = vunpack.c.l.b16 %v8736
      %v9569 = vunpack.c.h.b16 %v8736
      %v9570 = vunpack.c.l.b16 %v8737
      %v9571 = vunpack.c.h.b16 %v8737
      %v9572 = vunpack.c.l.b16 %v8738
      %v9573 = vunpack.c.h.b16 %v8738
      %v9574 = vunpack.c.l.b16 %v8739
      %v9575 = vunpack.c.l.b16 %v8740
      %v9576 = vunpack.c.h.b16 %v8740
      %v9577 = vunpack.c.l.b16 %v8741
      %v9578 = vunpack.c.h.b16 %v8741
      %v9579 = vunpack.c.l.b16 %v8742
      %v9580 = vunpack.c.h.b16 %v8742
      %v9581 = vunpack.c.l.b16 %v8743
      %v9582 = vunpack.c.h.b16 %v8743
      %v9583 = vunpack.c.l.b16 %v8744
      %v9584 = vunpack.c.h.b16 %v8744
      %v9585 = vunpack.c.l.b16 %v8745
      %v9586 = vunpack.c.h.b16 %v8745
      %v9587 = vunpack.c.l.b16 %v8746
      %v9588 = vunpack.c.l.b16 %v8747
      %v9589 = vunpack.c.h.b16 %v8747
      %v9590 = vunpack.c.l.b16 %v8748
      %v9591 = vunpack.c.h.b16 %v8748
      %v9592 = vunpack.c.l.b16 %v8749
      %v9593 = vunpack.c.h.b16 %v8749
      %v9594 = vunpack.c.l.b16 %v8750
      %v9595 = vunpack.c.h.b16 %v8750
      %v9596 = vunpack.c.l.b16 %v8751
      %v9597 = vunpack.c.h.b16 %v8751
      %v9598 = vunpack.c.l.b16 %v8752
      %v9599 = vunpack.c.h.b16 %v8752
      %v9600 = vunpack.c.l.b16 %v8753
      %v9601 = vpack.c.b16 %v9198, %v9185
      %v9602 = vpack.c.b16 %v9199, %v9186
      %v9603 = vpack.c.b16 %v9200, %v9187
      %v9604 = vpack.c.b16 %v9201, %v9188
      %v9605 = vpack.c.b16 %v9202, %v9189
      %v9606 = vpack.c.b16 %v9203, %v9190
      %v9607 = vpack.c.b16 %v9204, %v9191
      %v9608 = vpack.c.b16 %v9205, %v9192
      %v9609 = vpack.c.b16 %v9206, %v9193
      %v9610 = vpack.c.b16 %v9207, %v9194
      %v9611 = vpack.c.b16 %v9208, %v9195
      %v9612 = vpack.c.b16 %v9209, %v9196
      %v9613 = vpack.c.b16 %v9210, %v9197
      %v9614 = vpack.c.b16 %v9224, %v9211
      %v9615 = vpack.c.b16 %v9225, %v9212
      %v9616 = vpack.c.b16 %v9226, %v9213
      %v9617 = vpack.c.b16 %v9227, %v9214
      %v9618 = vpack.c.b16 %v9228, %v9215
      %v9619 = vpack.c.b16 %v9229, %v9216
      %v9620 = vpack.c.b16 %v9230, %v9217
      %v9621 = vpack.c.b16 %v9231, %v9218
      %v9622 = vpack.c.b16 %v9232, %v9219
      %v9623 = vpack.c.b16 %v9233, %v9220
      %v9624 = vpack.c.b16 %v9234, %v9221
      %v9625 = vpack.c.b16 %v9235, %v9222
      %v9626 = vpack.c.b16 %v9236, %v9223
      %v9627 = vpack.c.b16 %v9250, %v9237
      %v9628 = vpack.c.b16 %v9251, %v9238
      %v9629 = vpack.c.b16 %v9252, %v9239
      %v9630 = vpack.c.b16 %v9253, %v9240
      %v9631 = vpack.c.b16 %v9254, %v9241
      %v9632 = vpack.c.b16 %v9255, %v9242
      %v9633 = vpack.c.b16 %v9256, %v9243
      %v9634 = vpack.c.b16 %v9257, %v9244
      %v9635 = vpack.c.b16 %v9258, %v9245
      %v9636 = vpack.c.b16 %v9259, %v9246
      %v9637 = vpack.c.b16 %v9260, %v9247
      %v9638 = vpack.c.b16 %v9261, %v9248
      %v9639 = vpack.c.b16 %v9262, %v9249
      %v9640 = vpack.c.b16 %v9276, %v9263
      %v9641 = vpack.c.b16 %v9277, %v9264
      %v9642 = vpack.c.b16 %v9278, %v9265
      %v9643 = vpack.c.b16 %v9279, %v9266
      %v9644 = vpack.c.b16 %v9280, %v9267
      %v9645 = vpack.c.b16 %v9281, %v9268
      %v9646 = vpack.c.b16 %v9282, %v9269
      %v9647 = vpack.c.b16 %v9283, %v9270
      %v9648 = vpack.c.b16 %v9284, %v9271
      %v9649 = vpack.c.b16 %v9285, %v9272
      %v9650 = vpack.c.b16 %v9286, %v9273
      %v9651 = vpack.c.b16 %v9287, %v9274
      %v9652 = vpack.c.b16 %v9288, %v9275
      %v9653 = vpack.c.b16 %v9302, %v9289
      %v9654 = vpack.c.b16 %v9303, %v9290
      %v9655 = vpack.c.b16 %v9304, %v9291
      %v9656 = vpack.c.b16 %v9305, %v9292
      %v9657 = vpack.c.b16 %v9306, %v9293
      %v9658 = vpack.c.b16 %v9307, %v9294
      %v9659 = vpack.c.b16 %v9308, %v9295
      %v9660 = vpack.c.b16 %v9309, %v9296
      %v9661 = vpack.c.b16 %v9310, %v9297
      %v9662 = vpack.c.b16 %v9311, %v9298
      %v9663 = vpack.c.b16 %v9312, %v9299
      %v9664 = vpack.c.b16 %v9313, %v9300
      %v9665 = vpack.c.b16 %v9314, %v9301
      %v9666 = vpack.c.b16 %v9328, %v9315
      %v9667 = vpack.c.b16 %v9329, %v9316
      %v9668 = vpack.c.b16 %v9330, %v9317
      %v9669 = vpack.c.b16 %v9331, %v9318
      %v9670 = vpack.c.b16 %v9332, %v9319
      %v9671 = vpack.c.b16 %v9333, %v9320
      %v9672 = vpack.c.b16 %v9334, %v9321
      %v9673 = vpack.c.b16 %v9335, %v9322
      %v9674 = vpack.c.b16 %v9336, %v9323
      %v9675 = vpack.c.b16 %v9337, %v9324
      %v9676 = vpack.c.b16 %v9338, %v9325
      %v9677 = vpack.c.b16 %v9339, %v9326
      %v9678 = vpack.c.b16 %v9340, %v9327
      %v9679 = vpack.c.b16 %v9354, %v9341
      %v9680 = vpack.c.b16 %v9355, %v9342
      %v9681 = vpack.c.b16 %v9356, %v9343
      %v9682 = vpack.c.b16 %v9357, %v9344
      %v9683 = vpack.c.b16 %v9358, %v9345
      %v9684 = vpack.c.b16 %v9359, %v9346
      %v9685 = vpack.c.b16 %v9360, %v9347
      %v9686 = vpack.c.b16 %v9361, %v9348
      %v9687 = vpack.c.b16 %v9362, %v9349
      %v9688 = vpack.c.b16 %v9363, %v9350
      %v9689 = vpack.c.b16 %v9364, %v9351
      %v9690 = vpack.c.b16 %v9365, %v9352
      %v9691 = vpack.c.b16 %v9366, %v9353
      %v9692 = vpack.c.b16 %v9380, %v9367
      %v9693 = vpack.c.b16 %v9381, %v9368
      %v9694 = vpack.c.b16 %v9382, %v9369
      %v9695 = vpack.c.b16 %v9383, %v9370
      %v9696 = vpack.c.b16 %v9384, %v9371
      %v9697 = vpack.c.b16 %v9385, %v9372
      %v9698 = vpack.c.b16 %v9386, %v9373
      %v9699 = vpack.c.b16 %v9387, %v9374
      %v9700 = vpack.c.b16 %v9388, %v9375
      %v9701 = vpack.c.b16 %v9389, %v9376
      %v9702 = vpack.c.b16 %v9390, %v9377
      %v9703 = vpack.c.b16 %v9391, %v9378
      %v9704 = vpack.c.b16 %v9392, %v9379
      %v9705 = vpack.c.b16 %v9406, %v9393
      %v9706 = vpack.c.b16 %v9407, %v9394
      %v9707 = vpack.c.b16 %v9408, %v9395
      %v9708 = vpack.c.b16 %v9409, %v9396
      %v9709 = vpack.c.b16 %v9410, %v9397
      %v9710 = vpack.c.b16 %v9411, %v9398
      %v9711 = vpack.c.b16 %v9412, %v9399
      %v9712 = vpack.c.b16 %v9413, %v9400
      %v9713 = vpack.c.b16 %v9414, %v9401
      %v9714 = vpack.c.b16 %v9415, %v9402
      %v9715 = vpack.c.b16 %v9416, %v9403
      %v9716 = vpack.c.b16 %v9417, %v9404
      %v9717 = vpack.c.b16 %v9418, %v9405
      %v9718 = vpack.c.b16 %v9432, %v9419
      %v9719 = vpack.c.b16 %v9433, %v9420
      %v9720 = vpack.c.b16 %v9434, %v9421
      %v9721 = vpack.c.b16 %v9435, %v9422
      %v9722 = vpack.c.b16 %v9436, %v9423
      %v9723 = vpack.c.b16 %v9437, %v9424
      %v9724 = vpack.c.b16 %v9438, %v9425
      %v9725 = vpack.c.b16 %v9439, %v9426
      %v9726 = vpack.c.b16 %v9440, %v9427
      %v9727 = vpack.c.b16 %v9441, %v9428
      %v9728 = vpack.c.b16 %v9442, %v9429
      %v9729 = vpack.c.b16 %v9443, %v9430
      %v9730 = vpack.c.b16 %v9444, %v9431
      %v9731 = vpack.c.b16 %v9458, %v9445
      %v9732 = vpack.c.b16 %v9459, %v9446
      %v9733 = vpack.c.b16 %v9460, %v9447
      %v9734 = vpack.c.b16 %v9461, %v9448
      %v9735 = vpack.c.b16 %v9462, %v9449
      %v9736 = vpack.c.b16 %v9463, %v9450
      %v9737 = vpack.c.b16 %v9464, %v9451
      %v9738 = vpack.c.b16 %v9465, %v9452
      %v9739 = vpack.c.b16 %v9466, %v9453
      %v9740 = vpack.c.b16 %v9467, %v9454
      %v9741 = vpack.c.b16 %v9468, %v9455
      %v9742 = vpack.c.b16 %v9469, %v9456
      %v9743 = vpack.c.b16 %v9470, %v9457
      %v9744 = vpack.c.b16 %v9484, %v9471
      %v9745 = vpack.c.b16 %v9485, %v9472
      %v9746 = vpack.c.b16 %v9486, %v9473
      %v9747 = vpack.c.b16 %v9487, %v9474
      %v9748 = vpack.c.b16 %v9488, %v9475
      %v9749 = vpack.c.b16 %v9489, %v9476
      %v9750 = vpack.c.b16 %v9490, %v9477
      %v9751 = vpack.c.b16 %v9491, %v9478
      %v9752 = vpack.c.b16 %v9492, %v9479
      %v9753 = vpack.c.b16 %v9493, %v9480
      %v9754 = vpack.c.b16 %v9494, %v9481
      %v9755 = vpack.c.b16 %v9495, %v9482
      %v9756 = vpack.c.b16 %v9496, %v9483
      %v9757 = vpack.c.b16 %v9510, %v9497
      %v9758 = vpack.c.b16 %v9511, %v9498
      %v9759 = vpack.c.b16 %v9512, %v9499
      %v9760 = vpack.c.b16 %v9513, %v9500
      %v9761 = vpack.c.b16 %v9514, %v9501
      %v9762 = vpack.c.b16 %v9515, %v9502
      %v9763 = vpack.c.b16 %v9516, %v9503
      %v9764 = vpack.c.b16 %v9517, %v9504
      %v9765 = vpack.c.b16 %v9518, %v9505
      %v9766 = vpack.c.b16 %v9519, %v9506
      %v9767 = vpack.c.b16 %v9520, %v9507
      %v9768 = vpack.c.b16 %v9521, %v9508
      %v9769 = vpack.c.b16 %v9522, %v9509
      %v9770 = vpack.c.b16 %v9536, %v9523
      %v9771 = vpack.c.b16 %v9537, %v9524
      %v9772 = vpack.c.b16 %v9538, %v9525
      %v9773 = vpack.c.b16 %v9539, %v9526
      %v9774 = vpack.c.b16 %v9540, %v9527
      %v9775 = vpack.c.b16 %v9541, %v9528
      %v9776 = vpack.c.b16 %v9542, %v9529
      %v9777 = vpack.c.b16 %v9543, %v9530
      %v9778 = vpack.c.b16 %v9544, %v9531
      %v9779 = vpack.c.b16 %v9545, %v9532
      %v9780 = vpack.c.b16 %v9546, %v9533
      %v9781 = vpack.c.b16 %v9547, %v9534
      %v9782 = vpack.c.b16 %v9548, %v9535
      %v9783 = vpack.c.b16 %v9562, %v9549
      %v9784 = vpack.c.b16 %v9563, %v9550
      %v9785 = vpack.c.b16 %v9564, %v9551
      %v9786 = vpack.c.b16 %v9565, %v9552
      %v9787 = vpack.c.b16 %v9566, %v9553
      %v9788 = vpack.c.b16 %v9567, %v9554
      %v9789 = vpack.c.b16 %v9568, %v9555
      %v9790 = vpack.c.b16 %v9569, %v9556
      %v9791 = vpack.c.b16 %v9570, %v9557
      %v9792 = vpack.c.b16 %v9571, %v9558
      %v9793 = vpack.c.b16 %v9572, %v9559
      %v9794 = vpack.c.b16 %v9573, %v9560
      %v9795 = vpack.c.b16 %v9574, %v9561
      %v9796 = vpack.c.b16 %v9588, %v9575
      %v9797 = vpack.c.b16 %v9589, %v9576
      %v9798 = vpack.c.b16 %v9590, %v9577
      %v9799 = vpack.c.b16 %v9591, %v9578
      %v9800 = vpack.c.b16 %v9592, %v9579
      %v9801 = vpack.c.b16 %v9593, %v9580
      %v9802 = vpack.c.b16 %v9594, %v9581
      %v9803 = vpack.c.b16 %v9595, %v9582
      %v9804 = vpack.c.b16 %v9596, %v9583
      %v9805 = vpack.c.b16 %v9597, %v9584
      %v9806 = vpack.c.b16 %v9598, %v9585
      %v9807 = vpack.c.b16 %v9599, %v9586
      %v9808 = vpack.c.b16 %v9600, %v9587
      %v10201 = vunpack.c.l.b16 %v8754
      %v10202 = vunpack.c.l.b16 %v8755
      %v10203 = vunpack.c.l.b16 %v8756
      %v10204 = vunpack.c.l.b16 %v8757
      %v10205 = vunpack.c.l.b16 %v8758
      %v10206 = vunpack.c.l.b16 %v8759
      %v10207 = vunpack.c.l.b16 %v8760
      %v10208 = vunpack.c.l.b16 %v8761
      %v10209 = vunpack.c.l.b16 %v8762
      %v10210 = vunpack.c.l.b16 %v8763
      %v10211 = vunpack.c.l.b16 %v8764
      %v10212 = vunpack.c.l.b16 %v8765
      %v10213 = vunpack.c.l.b16 %v8766
      %v10214 = vunpack.c.l.b16 %v8767
      %v10215 = vunpack.c.l.b16 %v8768
      %v10216 = vunpack.c.l.b16 %v8769
      %v10217 = vunpack.c.l.b16 %v8770
      %v10218 = vunpack.c.l.b16 %v8771
      %v10219 = vunpack.c.l.b16 %v8772
      %v10220 = vunpack.c.l.b16 %v8773
      %v10221 = vunpack.c.l.b16 %v8774
      %v10222 = vunpack.c.l.b16 %v8775
      %v10223 = vunpack.c.l.b16 %v8776
      %v10224 = vunpack.c.l.b16 %v8777
      %v10225 = vunpack.c.l.b16 %v8778
      %v10226 = vunpack.c.l.b16 %v8779
      %v10227 = vunpack.c.l.b16 %v8780
      %v10228 = vunpack.c.l.b16 %v8781
      %v10229 = vunpack.c.l.b16 %v8782
      %v10230 = vunpack.c.l.b16 %v8783
      %v10231 = vunpack.c.l.b16 %v8784
      %v10232 = vunpack.c.l.b16 %v8785
      %v10233 = vunpack.c.l.b16 %v8786
      %v10234 = vunpack.c.l.b16 %v8787
      %v10235 = vunpack.c.l.b16 %v8788
      %v10236 = vunpack.c.l.b16 %v8789
      %v10237 = vunpack.c.l.b16 %v8790
      %v10238 = vunpack.c.l.b16 %v8791
      %v10239 = vunpack.c.l.b16 %v8792
      %v10240 = vunpack.c.l.b16 %v8793
      %v10241 = vunpack.c.l.b16 %v8794
      %v10242 = vunpack.c.l.b16 %v8795
      %v10243 = vunpack.c.l.b16 %v8796
      %v10244 = vunpack.c.l.b16 %v8797
      %v10245 = vunpack.c.l.b16 %v8798
      %v10246 = vunpack.c.l.b16 %v8799
      %v10247 = vunpack.c.l.b16 %v8800
      %v10248 = vunpack.c.l.b16 %v8801
      %v10249 = vunpack.c.l.b16 %v8802
      %v10250 = vunpack.c.l.b16 %v8803
      %v10251 = vunpack.c.l.b16 %v8804
      %v10252 = vunpack.c.l.b16 %v8805
      %v10253 = vunpack.c.l.b16 %v8806
      %v10254 = vunpack.c.l.b16 %v8807
      %v10255 = vunpack.c.l.b16 %v8808
      %v10256 = vunpack.c.l.b16 %v8809
      %v10257 = vunpack.c.l.b16 %v8810
      %v10258 = vunpack.c.l.b16 %v8811
      %v10259 = vunpack.c.l.b16 %v8812
      %v10260 = vunpack.c.l.b16 %v8813
      %v10261 = vunpack.c.l.b16 %v8814
      %v10262 = vunpack.c.l.b16 %v8815
      %v10263 = vunpack.c.l.b16 %v8816
      %v10264 = vunpack.c.l.b16 %v8817
      %v10265 = vunpack.c.l.b16 %v8818
      %v10266 = vunpack.c.l.b16 %v8819
      %v10267 = vunpack.c.l.b16 %v8820
      %v10268 = vunpack.c.l.b16 %v8821
      %v10269 = vunpack.c.l.b16 %v8822
      %v10270 = vunpack.c.l.b16 %v8823
      %v10271 = vunpack.c.l.b16 %v8824
      %v10272 = vunpack.c.l.b16 %v8825
      %v10273 = vunpack.c.l.b16 %v8826
      %v10274 = vunpack.c.l.b16 %v8827
      %v10275 = vunpack.c.l.b16 %v8828
      %v10276 = vunpack.c.l.b16 %v8829
      %v10277 = vunpack.c.l.b16 %v8830
      %v10278 = vunpack.c.l.b16 %v8831
      %v10279 = vunpack.c.l.b16 %v8832
      %v10280 = vunpack.c.l.b16 %v8833
      %v10281 = vunpack.c.l.b16 %v8834
      %v10282 = vunpack.c.l.b16 %v8835
      %v10283 = vunpack.c.l.b16 %v8836
      %v10284 = vunpack.c.l.b16 %v8837
      %v10285 = vunpack.c.l.b16 %v8838
      %v10286 = vunpack.c.l.b16 %v8839
      %v10287 = vunpack.c.l.b16 %v8840
      %v10288 = vunpack.c.l.b16 %v8841
      %v10289 = vunpack.c.l.b16 %v8842
      %v10290 = vunpack.c.l.b16 %v8843
      %v10291 = vunpack.c.l.b16 %v8844
      %v10292 = vunpack.c.l.b16 %v8845
      %v10293 = vunpack.c.l.b16 %v8846
      %v10294 = vunpack.c.l.b16 %v8847
      %v10295 = vunpack.c.l.b16 %v8848
      %v10296 = vunpack.c.l.b16 %v8849
      %v10297 = vunpack.c.l.b16 %v8850
      %v10298 = vunpack.c.l.b16 %v8851
      %v10299 = vunpack.c.l.b16 %v8852
      %v10300 = vunpack.c.l.b16 %v8853
      %v10301 = vunpack.c.l.b16 %v8854
      %v10302 = vunpack.c.l.b16 %v8855
      %v10303 = vunpack.c.l.b16 %v8856
      %v10304 = vunpack.c.l.b16 %v8857
      %v10305 = vunpack.c.l.b16 %v8858
      %v10306 = vunpack.c.l.b16 %v8859
      %v10307 = vunpack.c.l.b16 %v8860
      %v10308 = vunpack.c.l.b16 %v8861
      %v10309 = vunpack.c.l.b16 %v8862
      %v10310 = vunpack.c.l.b16 %v8863
      %v10311 = vunpack.c.l.b16 %v8864
      %v10312 = vunpack.c.l.b16 %v8865
      %v10313 = vunpack.c.l.b16 %v8866
      %v10314 = vunpack.c.l.b16 %v8867
      %v10315 = vunpack.c.l.b16 %v8868
      %v10316 = vunpack.c.l.b16 %v8869
      %v10317 = vunpack.c.l.b16 %v8870
      %v10318 = vunpack.c.l.b16 %v8871
      %v10319 = vunpack.c.l.b16 %v8872
      %v10320 = vunpack.c.l.b16 %v8873
      %v10321 = vunpack.c.l.b16 %v8874
      %v10322 = vunpack.c.l.b16 %v8875
      %v10323 = vunpack.c.l.b16 %v8876
      %v10324 = vunpack.c.l.b16 %v8877
      %v10325 = vunpack.c.l.b16 %v8878
      %v10326 = vunpack.c.l.b16 %v8879
      %v10327 = vunpack.c.l.b16 %v8880
      %v10328 = vunpack.c.l.b16 %v8881
      %v10329 = vunpack.c.l.b16 %v8882
      %v10330 = vunpack.c.l.b16 %v8883
      %v10331 = vunpack.c.l.b16 %v8884
      %v10332 = vunpack.c.l.b16 %v8885
      %v10333 = vunpack.c.l.b16 %v8886
      %v10334 = vunpack.c.l.b16 %v8887
      %v10335 = vunpack.c.l.b16 %v8888
      %v10336 = vunpack.c.l.b16 %v8889
      %v10337 = vunpack.c.l.b16 %v8890
      %v10338 = vunpack.c.l.b16 %v8891
      %v10339 = vunpack.c.l.b16 %v8892
      %v10340 = vunpack.c.l.b16 %v8893
      %v10341 = vunpack.c.l.b16 %v8894
      %v10342 = vunpack.c.l.b16 %v8895
      %v10343 = vunpack.c.l.b16 %v8896
      %v10344 = vunpack.c.l.b16 %v8897
      %v10345 = vunpack.c.l.b16 %v8898
      %v10346 = vunpack.c.l.b16 %v8899
      %v10347 = vunpack.c.l.b16 %v8900
      %v10348 = vunpack.c.l.b16 %v8901
      %v10349 = vunpack.c.l.b16 %v8902
      %v10350 = vunpack.c.l.b16 %v8903
      %v10351 = vunpack.c.l.b16 %v8904
      %v10352 = vunpack.c.l.b16 %v8905
      %v10353 = vunpack.c.l.b16 %v8906
      %v10354 = vunpack.c.l.b16 %v8907
      %v10355 = vunpack.c.l.b16 %v8908
      %v10356 = vunpack.c.l.b16 %v8909
      %v10357 = vunpack.c.l.b16 %v8910
      %v10358 = vunpack.c.l.b16 %v8911
      %v10359 = vunpack.c.l.b16 %v8912
      %v10360 = vunpack.c.l.b16 %v8913
      %v10361 = vunpack.c.l.b16 %v8914
      %v10362 = vunpack.c.l.b16 %v8915
      %v10363 = vunpack.c.l.b16 %v8916
      %v10364 = vunpack.c.l.b16 %v8917
      %v10365 = vunpack.c.l.b16 %v8918
      %v10366 = vunpack.c.l.b16 %v8919
      %v10367 = vunpack.c.l.b16 %v8920
      %v10368 = vunpack.c.l.b16 %v8921
      %v10369 = vunpack.c.l.b16 %v8922
      %v10370 = vunpack.c.l.b16 %v8923
      %v10371 = vunpack.c.l.b16 %v8924
      %v10372 = vunpack.c.l.b16 %v8925
      %v10373 = vunpack.c.l.b16 %v8926
      %v10374 = vunpack.c.l.b16 %v8927
      %v10375 = vunpack.c.l.b16 %v8928
      %v10376 = vunpack.c.l.b16 %v8929
      %v10377 = vunpack.c.l.b16 %v8930
      %v10378 = vunpack.c.l.b16 %v8931
      %v10379 = vunpack.c.l.b16 %v8932
      %v10380 = vunpack.c.l.b16 %v8933
      %v10381 = vunpack.c.l.b16 %v8934
      %v10382 = vunpack.c.l.b16 %v8935
      %v10383 = vunpack.c.l.b16 %v8936
      %v10384 = vunpack.c.l.b16 %v8937
      %v10385 = vunpack.c.l.b16 %v8938
      %v10386 = vunpack.c.l.b16 %v8939
      %v10387 = vunpack.c.l.b16 %v8940
      %v10388 = vunpack.c.l.b16 %v8941
      %v10389 = vunpack.c.l.b16 %v8942
      %v10390 = vunpack.c.l.b16 %v8943
      %v10391 = vunpack.c.l.b16 %v8944
      %v10392 = vunpack.c.l.b16 %v8945
      %v10393 = vunpack.c.l.b16 %v8946
      %v10394 = vunpack.c.l.b16 %v8947
      %v10395 = vunpack.c.l.b16 %v8948
      %v10396 = vunpack.c.l.b16 %v8949
      %v10397 = vunpack.c.l.b16 %v8950
      %v10398 = vunpack.c.l.b16 %v8951
      %v10399 = vunpack.c.l.b16 %v8952
      %v10400 = vunpack.c.l.b16 %v8953
      %v10401 = vpack.c.b16 %v10202, %v10201
      %v10402 = vpack.c.b16 %v10204, %v10203
      %v10403 = vpack.c.b16 %v10206, %v10205
      %v10404 = vpack.c.b16 %v10208, %v10207
      %v10405 = vpack.c.b16 %v10210, %v10209
      %v10406 = vpack.c.b16 %v10212, %v10211
      %v10407 = vpack.c.b16 %v10214, %v10213
      %v10408 = vpack.c.b16 %v10216, %v10215
      %v10409 = vpack.c.b16 %v10218, %v10217
      %v10410 = vpack.c.b16 %v10220, %v10219
      %v10411 = vpack.c.b16 %v10222, %v10221
      %v10412 = vpack.c.b16 %v10224, %v10223
      %v10413 = vpack.c.b16 %v10226, %v10225
      %v10414 = vpack.c.b16 %v10228, %v10227
      %v10415 = vpack.c.b16 %v10230, %v10229
      %v10416 = vpack.c.b16 %v10232, %v10231
      %v10417 = vpack.c.b16 %v10234, %v10233
      %v10418 = vpack.c.b16 %v10236, %v10235
      %v10419 = vpack.c.b16 %v10238, %v10237
      %v10420 = vpack.c.b16 %v10240, %v10239
      %v10421 = vpack.c.b16 %v10242, %v10241
      %v10422 = vpack.c.b16 %v10244, %v10243
      %v10423 = vpack.c.b16 %v10246, %v10245
      %v10424 = vpack.c.b16 %v10248, %v10247
      %v10425 = vpack.c.b16 %v10250, %v10249
      %v10426 = vpack.c.b16 %v10252, %v10251
      %v10427 = vpack.c.b16 %v10254, %v10253
      %v10428 = vpack.c.b16 %v10256, %v10255
      %v10429 = vpack.c.b16 %v10258, %v10257
      %v10430 = vpack.c.b16 %v10260, %v10259
      %v10431 = vpack.c.b16 %v10262, %v10261
      %v10432 = vpack.c.b16 %v10264, %v10263
      %v10433 = vpack.c.b16 %v10266, %v10265
      %v10434 = vpack.c.b16 %v10268, %v10267
      %v10435 = vpack.c.b16 %v10270, %v10269
      %v10436 = vpack.c.b16 %v10272, %v10271
      %v10437 = vpack.c.b16 %v10274, %v10273
      %v10438 = vpack.c.b16 %v10276, %v10275
      %v10439 = vpack.c.b16 %v10278, %v10277
      %v10440 = vpack.c.b16 %v10280, %v10279
      %v10441 = vpack.c.b16 %v10282, %v10281
      %v10442 = vpack.c.b16 %v10284, %v10283
      %v10443 = vpack.c.b16 %v10286, %v10285
      %v10444 = vpack.c.b16 %v10288, %v10287
      %v10445 = vpack.c.b16 %v10290, %v10289
      %v10446 = vpack.c.b16 %v10292, %v10291
      %v10447 = vpack.c.b16 %v10294, %v10293
      %v10448 = vpack.c.b16 %v10296, %v10295
      %v10449 = vpack.c.b16 %v10298, %v10297
      %v10450 = vpack.c.b16 %v10300, %v10299
      %v10451 = vpack.c.b16 %v10302, %v10301
      %v10452 = vpack.c.b16 %v10304, %v10303
      %v10453 = vpack.c.b16 %v10306, %v10305
      %v10454 = vpack.c.b16 %v10308, %v10307
      %v10455 = vpack.c.b16 %v10310, %v10309
      %v10456 = vpack.c.b16 %v10312, %v10311
      %v10457 = vpack.c.b16 %v10314, %v10313
      %v10458 = vpack.c.b16 %v10316, %v10315
      %v10459 = vpack.c.b16 %v10318, %v10317
      %v10460 = vpack.c.b16 %v10320, %v10319
      %v10461 = vpack.c.b16 %v10322, %v10321
      %v10462 = vpack.c.b16 %v10324, %v10323
      %v10463 = vpack.c.b16 %v10326, %v10325
      %v10464 = vpack.c.b16 %v10328, %v10327
      %v10465 = vpack.c.b16 %v10330, %v10329
      %v10466 = vpack.c.b16 %v10332, %v10331
      %v10467 = vpack.c.b16 %v10334, %v10333
      %v10468 = vpack.c.b16 %v10336, %v10335
      %v10469 = vpack.c.b16 %v10338, %v10337
      %v10470 = vpack.c.b16 %v10340, %v10339
      %v10471 = vpack.c.b16 %v10342, %v10341
      %v10472 = vpack.c.b16 %v10344, %v10343
      %v10473 = vpack.c.b16 %v10346, %v10345
      %v10474 = vpack.c.b16 %v10348, %v10347
      %v10475 = vpack.c.b16 %v10350, %v10349
      %v10476 = vpack.c.b16 %v10352, %v10351
      %v10477 = vpack.c.b16 %v10354, %v10353
      %v10478 = vpack.c.b16 %v10356, %v10355
      %v10479 = vpack.c.b16 %v10358, %v10357
      %v10480 = vpack.c.b16 %v10360, %v10359
      %v10481 = vpack.c.b16 %v10362, %v10361
      %v10482 = vpack.c.b16 %v10364, %v10363
      %v10483 = vpack.c.b16 %v10366, %v10365
      %v10484 = vpack.c.b16 %v10368, %v10367
      %v10485 = vpack.c.b16 %v10370, %v10369
      %v10486 = vpack.c.b16 %v10372, %v10371
      %v10487 = vpack.c.b16 %v10374, %v10373
      %v10488 = vpack.c.b16 %v10376, %v10375
      %v10489 = vpack.c.b16 %v10378, %v10377
      %v10490 = vpack.c.b16 %v10380, %v10379
      %v10491 = vpack.c.b16 %v10382, %v10381
      %v10492 = vpack.c.b16 %v10384, %v10383
      %v10493 = vpack.c.b16 %v10386, %v10385
      %v10494 = vpack.c.b16 %v10388, %v10387
      %v10495 = vpack.c.b16 %v10390, %v10389
      %v10496 = vpack.c.b16 %v10392, %v10391
      %v10497 = vpack.c.b16 %v10394, %v10393
      %v10498 = vpack.c.b16 %v10396, %v10395
      %v10499 = vpack.c.b16 %v10398, %v10397
      %v10500 = vpack.c.b16 %v10400, %v10399
      %vm10601 = vcmask 523264
      %v10603 = vsel %vm10601, %v9613, 0
      %v10606 = vsel %vm10601, %v9626, 0
      %v10609 = vsel %vm10601, %v9639, 0
      %v10612 = vsel %vm10601, %v9652, 0
      %v10615 = vsel %vm10601, %v9665, 0
      %v10618 = vsel %vm10601, %v9678, 0
      %v10621 = vsel %vm10601, %v9691, 0
      %v10624 = vsel %vm10601, %v9704, 0
      %v10627 = vsel %vm10601, %v9717, 0
      %v10630 = vsel %vm10601, %v9730, 0
      %v10633 = vsel %vm10601, %v9743, 0
      %v10636 = vsel %vm10601, %v9756, 0
      %v10639 = vsel %vm10601, %v9769, 0
      %v10642 = vsel %vm10601, %v9782, 0
      %v10645 = vsel %vm10601, %v9795, 0
      %v10648 = vsel %vm10601, %v9808, 0
      %10650 = vmatprep.subr.bf16.mxu0 0
      %10651 = vmatpush1.bf16.msra.mxu0 %v10408
      %10652 = vmatprep.subr.bf16.mxu0 0
      %10653 = vmatpush1.bf16.msra.mxu0 %v10407
      %10654 = vmatprep.subr.bf16.mxu0 0
      %10655 = vmatpush1.bf16.msra.mxu0 %v10406
      %10656 = vmatprep.subr.bf16.mxu0 0
      %10657 = vmatpush1.bf16.msra.mxu0 %v10405
      %10658 = vmatprep.subr.bf16.mxu0 0
      %10659 = vmatpush1.bf16.msra.mxu0 %v10404
      %10660 = vmatprep.subr.bf16.mxu0 0
      %10661 = vmatpush1.bf16.msra.mxu0 %v10403
      %10662 = vmatprep.subr.bf16.mxu0 0
      %10663 = vmatpush1.bf16.msra.mxu0 %v10402
      %10664 = vmatprep.subr.bf16.mxu0 0
      %10665 = vmatpush1.bf16.msra.mxu0 %v10401
      %10666 = vmatprep.subr.bf16.mxu0 0
      %10667 = vmatpush2.bf16.msra.mxu0 %v10416
      %10668 = vmatprep.subr.bf16.mxu0 0
      %10669 = vmatpush2.bf16.msra.mxu0 %v10415
      %10670 = vmatprep.subr.bf16.mxu0 0
      %10671 = vmatpush2.bf16.msra.mxu0 %v10414
      %10672 = vmatprep.subr.bf16.mxu0 0
      %10673 = vmatpush2.bf16.msra.mxu0 %v10413
      %10674 = vmatprep.subr.bf16.mxu0 0
      %10675 = vmatpush2.bf16.msra.mxu0 %v10412
      %10676 = vmatprep.subr.bf16.mxu0 0
      %10677 = vmatpush2.bf16.msra.mxu0 %v10411
      %10678 = vmatprep.subr.bf16.mxu0 0
      %10679 = vmatpush2.bf16.msra.mxu0 %v10410
      %10680 = vmatprep.subr.bf16.mxu0 0
      %10681 = vmatpush2.bf16.msra.mxu0 %v10409
      %10682 = vmatprep.mubr.bf16.mxu0 %v9602
      %10683 = vmatmul.mubr.bf16.gmra.mxu0 %v9601
      %v10684 = vpop.f32.mrf.mxu0
      %v10685 = vadd.f32 %v8959, %v10684
      %v10686 = vpop.f32.mrf.mxu0
      %v10687 = vpop.f32.mrf.mxu0
      %v10688 = vadd.f32 %v8959, %v10687
      %v10689 = vpop.f32.mrf.mxu0
      %10690 = vmatprep.mubr.bf16.mxu0 %v9615
      %10691 = vmatmul.mubr.bf16.gmra.mxu0 %v9614
      %v10692 = vpop.f32.mrf.mxu0
      %v10693 = vadd.f32 %v8959, %v10692
      %v10694 = vpop.f32.mrf.mxu0
      %v10695 = vpop.f32.mrf.mxu0
      %v10696 = vadd.f32 %v8959, %v10695
      %v10697 = vpop.f32.mrf.mxu0
      %10698 = vmatprep.mubr.bf16.mxu0 %v9628
      %10699 = vmatmul.mubr.bf16.gmra.mxu0 %v9627
      %v10700 = vpop.f32.mrf.mxu0
      %v10701 = vadd.f32 %v8959, %v10700
      %v10702 = vpop.f32.mrf.mxu0
      %v10703 = vpop.f32.mrf.mxu0
      %v10704 = vadd.f32 %v8959, %v10703
      %v10705 = vpop.f32.mrf.mxu0
      %10706 = vmatprep.mubr.bf16.mxu0 %v9641
      %10707 = vmatmul.mubr.bf16.gmra.mxu0 %v9640
      %v10708 = vpop.f32.mrf.mxu0
      %v10709 = vadd.f32 %v8959, %v10708
      %v10710 = vpop.f32.mrf.mxu0
      %v10711 = vpop.f32.mrf.mxu0
      %v10712 = vadd.f32 %v8959, %v10711
      %v10713 = vpop.f32.mrf.mxu0
      %10714 = vmatprep.mubr.bf16.mxu0 %v9654
      %10715 = vmatmul.mubr.bf16.gmra.mxu0 %v9653
      %v10716 = vpop.f32.mrf.mxu0
      %v10717 = vadd.f32 %v8959, %v10716
      %v10718 = vpop.f32.mrf.mxu0
      %v10719 = vpop.f32.mrf.mxu0
      %v10720 = vadd.f32 %v8959, %v10719
      %v10721 = vpop.f32.mrf.mxu0
      %10722 = vmatprep.mubr.bf16.mxu0 %v9667
      %10723 = vmatmul.mubr.bf16.gmra.mxu0 %v9666
      %v10724 = vpop.f32.mrf.mxu0
      %v10725 = vadd.f32 %v8959, %v10724
      %v10726 = vpop.f32.mrf.mxu0
      %v10727 = vpop.f32.mrf.mxu0
      %v10728 = vadd.f32 %v8959, %v10727
      %v10729 = vpop.f32.mrf.mxu0
      %10730 = vmatprep.mubr.bf16.mxu0 %v9680
      %10731 = vmatmul.mubr.bf16.gmra.mxu0 %v9679
      %v10732 = vpop.f32.mrf.mxu0
      %v10733 = vadd.f32 %v8959, %v10732
      %v10734 = vpop.f32.mrf.mxu0
      %v10735 = vpop.f32.mrf.mxu0
      %v10736 = vadd.f32 %v8959, %v10735
      %v10737 = vpop.f32.mrf.mxu0
      %10738 = vmatprep.mubr.bf16.mxu0 %v9693
      %10739 = vmatmul.mubr.bf16.gmra.mxu0 %v9692
      %v10740 = vpop.f32.mrf.mxu0
      %v10741 = vadd.f32 %v8959, %v10740
      %v10742 = vpop.f32.mrf.mxu0
      %v10743 = vpop.f32.mrf.mxu0
      %v10744 = vadd.f32 %v8959, %v10743
      %v10745 = vpop.f32.mrf.mxu0
      %10746 = vmatprep.mubr.bf16.mxu0 %v9706
      %10747 = vmatmul.mubr.bf16.gmra.mxu0 %v9705
      %v10748 = vpop.f32.mrf.mxu0
      %v10749 = vadd.f32 %v8959, %v10748
      %v10750 = vpop.f32.mrf.mxu0
      %v10751 = vpop.f32.mrf.mxu0
      %v10752 = vadd.f32 %v8959, %v10751
      %v10753 = vpop.f32.mrf.mxu0
      %10754 = vmatprep.mubr.bf16.mxu0 %v9719
      %10755 = vmatmul.mubr.bf16.gmra.mxu0 %v9718
      %v10756 = vpop.f32.mrf.mxu0
      %v10757 = vadd.f32 %v8959, %v10756
      %v10758 = vpop.f32.mrf.mxu0
      %v10759 = vpop.f32.mrf.mxu0
      %v10760 = vadd.f32 %v8959, %v10759
      %v10761 = vpop.f32.mrf.mxu0
      %10762 = vmatprep.mubr.bf16.mxu0 %v9732
      %10763 = vmatmul.mubr.bf16.gmra.mxu0 %v9731
      %v10764 = vpop.f32.mrf.mxu0
      %v10765 = vadd.f32 %v8959, %v10764
      %v10766 = vpop.f32.mrf.mxu0
      %v10767 = vpop.f32.mrf.mxu0
      %v10768 = vadd.f32 %v8959, %v10767
      %v10769 = vpop.f32.mrf.mxu0
      %10770 = vmatprep.mubr.bf16.mxu0 %v9745
      %10771 = vmatmul.mubr.bf16.gmra.mxu0 %v9744
      %v10772 = vpop.f32.mrf.mxu0
      %v10773 = vadd.f32 %v8959, %v10772
      %v10774 = vpop.f32.mrf.mxu0
      %v10775 = vpop.f32.mrf.mxu0
      %v10776 = vadd.f32 %v8959, %v10775
      %v10777 = vpop.f32.mrf.mxu0
      %10778 = vmatprep.mubr.bf16.mxu0 %v9758
      %10779 = vmatmul.mubr.bf16.gmra.mxu0 %v9757
      %v10780 = vpop.f32.mrf.mxu0
      %v10781 = vadd.f32 %v8959, %v10780
      %v10782 = vpop.f32.mrf.mxu0
      %v10783 = vpop.f32.mrf.mxu0
      %v10784 = vadd.f32 %v8959, %v10783
      %v10785 = vpop.f32.mrf.mxu0
      %10786 = vmatprep.mubr.bf16.mxu0 %v9771
      %10787 = vmatmul.mubr.bf16.gmra.mxu0 %v9770
      %v10788 = vpop.f32.mrf.mxu0
      %v10789 = vadd.f32 %v8959, %v10788
      %v10790 = vpop.f32.mrf.mxu0
      %v10791 = vpop.f32.mrf.mxu0
      %v10792 = vadd.f32 %v8959, %v10791
      %v10793 = vpop.f32.mrf.mxu0
      %10794 = vmatprep.mubr.bf16.mxu0 %v9784
      %10795 = vmatmul.mubr.bf16.gmra.mxu0 %v9783
      %v10796 = vpop.f32.mrf.mxu0
      %v10797 = vadd.f32 %v8959, %v10796
      %v10798 = vpop.f32.mrf.mxu0
      %v10799 = vpop.f32.mrf.mxu0
      %v10800 = vadd.f32 %v8959, %v10799
      %v10801 = vpop.f32.mrf.mxu0
      %10802 = vmatprep.mubr.bf16.mxu0 %v9797
      %10803 = vmatmul.mubr.bf16.gmra.mxu0 %v9796
      %v10804 = vpop.f32.mrf.mxu0
      %v10805 = vadd.f32 %v8959, %v10804
      %v10806 = vpop.f32.mrf.mxu0
      %v10807 = vpop.f32.mrf.mxu0
      %v10808 = vadd.f32 %v8959, %v10807
      %v10809 = vpop.f32.mrf.mxu0
      %10810 = vdwg.mxu0
      %10811 = vmatprep.subr.bf16.mxu0 0
      %10812 = vmatpush1.bf16.msra.mxu0 %v10424
      %10813 = vmatprep.subr.bf16.mxu0 0
      %10814 = vmatpush1.bf16.msra.mxu0 %v10423
      %10815 = vmatprep.subr.bf16.mxu0 0
      %10816 = vmatpush1.bf16.msra.mxu0 %v10422
      %10817 = vmatprep.subr.bf16.mxu0 0
      %10818 = vmatpush1.bf16.msra.mxu0 %v10421
      %10819 = vmatprep.subr.bf16.mxu0 0
      %10820 = vmatpush1.bf16.msra.mxu0 %v10420
      %10821 = vmatprep.subr.bf16.mxu0 0
      %10822 = vmatpush1.bf16.msra.mxu0 %v10419
      %10823 = vmatprep.subr.bf16.mxu0 0
      %10824 = vmatpush1.bf16.msra.mxu0 %v10418
      %10825 = vmatprep.subr.bf16.mxu0 0
      %10826 = vmatpush1.bf16.msra.mxu0 %v10417
      %10827 = vmatprep.subr.bf16.mxu0 0
      %10828 = vmatpush2.bf16.msra.mxu0 %v10432
      %10829 = vmatprep.subr.bf16.mxu0 0
      %10830 = vmatpush2.bf16.msra.mxu0 %v10431
      %10831 = vmatprep.subr.bf16.mxu0 0
      %10832 = vmatpush2.bf16.msra.mxu0 %v10430
      %10833 = vmatprep.subr.bf16.mxu0 0
      %10834 = vmatpush2.bf16.msra.mxu0 %v10429
      %10835 = vmatprep.subr.bf16.mxu0 0
      %10836 = vmatpush2.bf16.msra.mxu0 %v10428
      %10837 = vmatprep.subr.bf16.mxu0 0
      %10838 = vmatpush2.bf16.msra.mxu0 %v10427
      %10839 = vmatprep.subr.bf16.mxu0 0
      %10840 = vmatpush2.bf16.msra.mxu0 %v10426
      %10841 = vmatprep.subr.bf16.mxu0 0
      %10842 = vmatpush2.bf16.msra.mxu0 %v10425
      %10843 = vmatprep.mubr.bf16.mxu0 %v9604
      %10844 = vmatmul.mubr.bf16.gmra.mxu0 %v9603
      %v10845 = vpop.f32.mrf.mxu0
      %v10846 = vadd.f32 %v10685, %v10845
      %v10847 = vpop.f32.mrf.mxu0
      %v10848 = vpop.f32.mrf.mxu0
      %v10849 = vadd.f32 %v10688, %v10848
      %v10850 = vpop.f32.mrf.mxu0
      %10851 = vmatprep.mubr.bf16.mxu0 %v9617
      %10852 = vmatmul.mubr.bf16.gmra.mxu0 %v9616
      %v10853 = vpop.f32.mrf.mxu0
      %v10854 = vadd.f32 %v10693, %v10853
      %v10855 = vpop.f32.mrf.mxu0
      %v10856 = vpop.f32.mrf.mxu0
      %v10857 = vadd.f32 %v10696, %v10856
      %v10858 = vpop.f32.mrf.mxu0
      %10859 = vmatprep.mubr.bf16.mxu0 %v9630
      %10860 = vmatmul.mubr.bf16.gmra.mxu0 %v9629
      %v10861 = vpop.f32.mrf.mxu0
      %v10862 = vadd.f32 %v10701, %v10861
      %v10863 = vpop.f32.mrf.mxu0
      %v10864 = vpop.f32.mrf.mxu0
      %v10865 = vadd.f32 %v10704, %v10864
      %v10866 = vpop.f32.mrf.mxu0
      %10867 = vmatprep.mubr.bf16.mxu0 %v9643
      %10868 = vmatmul.mubr.bf16.gmra.mxu0 %v9642
      %v10869 = vpop.f32.mrf.mxu0
      %v10870 = vadd.f32 %v10709, %v10869
      %v10871 = vpop.f32.mrf.mxu0
      %v10872 = vpop.f32.mrf.mxu0
      %v10873 = vadd.f32 %v10712, %v10872
      %v10874 = vpop.f32.mrf.mxu0
      %10875 = vmatprep.mubr.bf16.mxu0 %v9656
      %10876 = vmatmul.mubr.bf16.gmra.mxu0 %v9655
      %v10877 = vpop.f32.mrf.mxu0
      %v10878 = vadd.f32 %v10717, %v10877
      %v10879 = vpop.f32.mrf.mxu0
      %v10880 = vpop.f32.mrf.mxu0
      %v10881 = vadd.f32 %v10720, %v10880
      %v10882 = vpop.f32.mrf.mxu0
      %10883 = vmatprep.mubr.bf16.mxu0 %v9669
      %10884 = vmatmul.mubr.bf16.gmra.mxu0 %v9668
      %v10885 = vpop.f32.mrf.mxu0
      %v10886 = vadd.f32 %v10725, %v10885
      %v10887 = vpop.f32.mrf.mxu0
      %v10888 = vpop.f32.mrf.mxu0
      %v10889 = vadd.f32 %v10728, %v10888
      %v10890 = vpop.f32.mrf.mxu0
      %10891 = vmatprep.mubr.bf16.mxu0 %v9682
      %10892 = vmatmul.mubr.bf16.gmra.mxu0 %v9681
      %v10893 = vpop.f32.mrf.mxu0
      %v10894 = vadd.f32 %v10733, %v10893
      %v10895 = vpop.f32.mrf.mxu0
      %v10896 = vpop.f32.mrf.mxu0
      %v10897 = vadd.f32 %v10736, %v10896
      %v10898 = vpop.f32.mrf.mxu0
      %10899 = vmatprep.mubr.bf16.mxu0 %v9695
      %10900 = vmatmul.mubr.bf16.gmra.mxu0 %v9694
      %v10901 = vpop.f32.mrf.mxu0
      %v10902 = vadd.f32 %v10741, %v10901
      %v10903 = vpop.f32.mrf.mxu0
      %v10904 = vpop.f32.mrf.mxu0
      %v10905 = vadd.f32 %v10744, %v10904
      %v10906 = vpop.f32.mrf.mxu0
      %10907 = vmatprep.mubr.bf16.mxu0 %v9708
      %10908 = vmatmul.mubr.bf16.gmra.mxu0 %v9707
      %v10909 = vpop.f32.mrf.mxu0
      %v10910 = vadd.f32 %v10749, %v10909
      %v10911 = vpop.f32.mrf.mxu0
      %v10912 = vpop.f32.mrf.mxu0
      %v10913 = vadd.f32 %v10752, %v10912
      %v10914 = vpop.f32.mrf.mxu0
      %10915 = vmatprep.mubr.bf16.mxu0 %v9721
      %10916 = vmatmul.mubr.bf16.gmra.mxu0 %v9720
      %v10917 = vpop.f32.mrf.mxu0
      %v10918 = vadd.f32 %v10757, %v10917
      %v10919 = vpop.f32.mrf.mxu0
      %v10920 = vpop.f32.mrf.mxu0
      %v10921 = vadd.f32 %v10760, %v10920
      %v10922 = vpop.f32.mrf.mxu0
      %10923 = vmatprep.mubr.bf16.mxu0 %v9734
      %10924 = vmatmul.mubr.bf16.gmra.mxu0 %v9733
      %v10925 = vpop.f32.mrf.mxu0
      %v10926 = vadd.f32 %v10765, %v10925
      %v10927 = vpop.f32.mrf.mxu0
      %v10928 = vpop.f32.mrf.mxu0
      %v10929 = vadd.f32 %v10768, %v10928
      %v10930 = vpop.f32.mrf.mxu0
      %10931 = vmatprep.mubr.bf16.mxu0 %v9747
      %10932 = vmatmul.mubr.bf16.gmra.mxu0 %v9746
      %v10933 = vpop.f32.mrf.mxu0
      %v10934 = vadd.f32 %v10773, %v10933
      %v10935 = vpop.f32.mrf.mxu0
      %v10936 = vpop.f32.mrf.mxu0
      %v10937 = vadd.f32 %v10776, %v10936
      %v10938 = vpop.f32.mrf.mxu0
      %10939 = vmatprep.mubr.bf16.mxu0 %v9760
      %10940 = vmatmul.mubr.bf16.gmra.mxu0 %v9759
      %v10941 = vpop.f32.mrf.mxu0
      %v10942 = vadd.f32 %v10781, %v10941
      %v10943 = vpop.f32.mrf.mxu0
      %v10944 = vpop.f32.mrf.mxu0
      %v10945 = vadd.f32 %v10784, %v10944
      %v10946 = vpop.f32.mrf.mxu0
      %10947 = vmatprep.mubr.bf16.mxu0 %v9773
      %10948 = vmatmul.mubr.bf16.gmra.mxu0 %v9772
      %v10949 = vpop.f32.mrf.mxu0
      %v10950 = vadd.f32 %v10789, %v10949
      %v10951 = vpop.f32.mrf.mxu0
      %v10952 = vpop.f32.mrf.mxu0
      %v10953 = vadd.f32 %v10792, %v10952
      %v10954 = vpop.f32.mrf.mxu0
      %10955 = vmatprep.mubr.bf16.mxu0 %v9786
      %10956 = vmatmul.mubr.bf16.gmra.mxu0 %v9785
      %v10957 = vpop.f32.mrf.mxu0
      %v10958 = vadd.f32 %v10797, %v10957
      %v10959 = vpop.f32.mrf.mxu0
      %v10960 = vpop.f32.mrf.mxu0
      %v10961 = vadd.f32 %v10800, %v10960
      %v10962 = vpop.f32.mrf.mxu0
      %10963 = vmatprep.mubr.bf16.mxu0 %v9799
      %10964 = vmatmul.mubr.bf16.gmra.mxu0 %v9798
      %v10965 = vpop.f32.mrf.mxu0
      %v10966 = vadd.f32 %v10805, %v10965
      %v10967 = vpop.f32.mrf.mxu0
      %v10968 = vpop.f32.mrf.mxu0
      %v10969 = vadd.f32 %v10808, %v10968
      %v10970 = vpop.f32.mrf.mxu0
      %10971 = vdwg.mxu0
      %10972 = vmatprep.subr.bf16.mxu0 0
      %10973 = vmatpush1.bf16.msra.mxu0 %v10440
      %10974 = vmatprep.subr.bf16.mxu0 0
      %10975 = vmatpush1.bf16.msra.mxu0 %v10439
      %10976 = vmatprep.subr.bf16.mxu0 0
      %10977 = vmatpush1.bf16.msra.mxu0 %v10438
      %10978 = vmatprep.subr.bf16.mxu0 0
      %10979 = vmatpush1.bf16.msra.mxu0 %v10437
      %10980 = vmatprep.subr.bf16.mxu0 0
      %10981 = vmatpush1.bf16.msra.mxu0 %v10436
      %10982 = vmatprep.subr.bf16.mxu0 0
      %10983 = vmatpush1.bf16.msra.mxu0 %v10435
      %10984 = vmatprep.subr.bf16.mxu0 0
      %10985 = vmatpush1.bf16.msra.mxu0 %v10434
      %10986 = vmatprep.subr.bf16.mxu0 0
      %10987 = vmatpush1.bf16.msra.mxu0 %v10433
      %10988 = vmatprep.subr.bf16.mxu0 0
      %10989 = vmatpush2.bf16.msra.mxu0 %v10448
      %10990 = vmatprep.subr.bf16.mxu0 0
      %10991 = vmatpush2.bf16.msra.mxu0 %v10447
      %10992 = vmatprep.subr.bf16.mxu0 0
      %10993 = vmatpush2.bf16.msra.mxu0 %v10446
      %10994 = vmatprep.subr.bf16.mxu0 0
      %10995 = vmatpush2.bf16.msra.mxu0 %v10445
      %10996 = vmatprep.subr.bf16.mxu0 0
      %10997 = vmatpush2.bf16.msra.mxu0 %v10444
      %10998 = vmatprep.subr.bf16.mxu0 0
      %10999 = vmatpush2.bf16.msra.mxu0 %v10443
      %11000 = vmatprep.subr.bf16.mxu0 0
      %11001 = vmatpush2.bf16.msra.mxu0 %v10442
      %11002 = vmatprep.subr.bf16.mxu0 0
      %11003 = vmatpush2.bf16.msra.mxu0 %v10441
      %11004 = vmatprep.mubr.bf16.mxu0 %v9606
      %11005 = vmatmul.mubr.bf16.gmra.mxu0 %v9605
      %v11006 = vpop.f32.mrf.mxu0
      %v11007 = vadd.f32 %v10846, %v11006
      %v11008 = vpop.f32.mrf.mxu0
      %v11009 = vpop.f32.mrf.mxu0
      %v11010 = vadd.f32 %v10849, %v11009
      %v11011 = vpop.f32.mrf.mxu0
      %11012 = vmatprep.mubr.bf16.mxu0 %v9619
      %11013 = vmatmul.mubr.bf16.gmra.mxu0 %v9618
      %v11014 = vpop.f32.mrf.mxu0
      %v11015 = vadd.f32 %v10854, %v11014
      %v11016 = vpop.f32.mrf.mxu0
      %v11017 = vpop.f32.mrf.mxu0
      %v11018 = vadd.f32 %v10857, %v11017
      %v11019 = vpop.f32.mrf.mxu0
      %11020 = vmatprep.mubr.bf16.mxu0 %v9632
      %11021 = vmatmul.mubr.bf16.gmra.mxu0 %v9631
      %v11022 = vpop.f32.mrf.mxu0
      %v11023 = vadd.f32 %v10862, %v11022
      %v11024 = vpop.f32.mrf.mxu0
      %v11025 = vpop.f32.mrf.mxu0
      %v11026 = vadd.f32 %v10865, %v11025
      %v11027 = vpop.f32.mrf.mxu0
      %11028 = vmatprep.mubr.bf16.mxu0 %v9645
      %11029 = vmatmul.mubr.bf16.gmra.mxu0 %v9644
      %v11030 = vpop.f32.mrf.mxu0
      %v11031 = vadd.f32 %v10870, %v11030
      %v11032 = vpop.f32.mrf.mxu0
      %v11033 = vpop.f32.mrf.mxu0
      %v11034 = vadd.f32 %v10873, %v11033
      %v11035 = vpop.f32.mrf.mxu0
      %11036 = vmatprep.mubr.bf16.mxu0 %v9658
      %11037 = vmatmul.mubr.bf16.gmra.mxu0 %v9657
      %v11038 = vpop.f32.mrf.mxu0
      %v11039 = vadd.f32 %v10878, %v11038
      %v11040 = vpop.f32.mrf.mxu0
      %v11041 = vpop.f32.mrf.mxu0
      %v11042 = vadd.f32 %v10881, %v11041
      %v11043 = vpop.f32.mrf.mxu0
      %11044 = vmatprep.mubr.bf16.mxu0 %v9671
      %11045 = vmatmul.mubr.bf16.gmra.mxu0 %v9670
      %v11046 = vpop.f32.mrf.mxu0
      %v11047 = vadd.f32 %v10886, %v11046
      %v11048 = vpop.f32.mrf.mxu0
      %v11049 = vpop.f32.mrf.mxu0
      %v11050 = vadd.f32 %v10889, %v11049
      %v11051 = vpop.f32.mrf.mxu0
      %11052 = vmatprep.mubr.bf16.mxu0 %v9684
      %11053 = vmatmul.mubr.bf16.gmra.mxu0 %v9683
      %v11054 = vpop.f32.mrf.mxu0
      %v11055 = vadd.f32 %v10894, %v11054
      %v11056 = vpop.f32.mrf.mxu0
      %v11057 = vpop.f32.mrf.mxu0
      %v11058 = vadd.f32 %v10897, %v11057
      %v11059 = vpop.f32.mrf.mxu0
      %11060 = vmatprep.mubr.bf16.mxu0 %v9697
      %11061 = vmatmul.mubr.bf16.gmra.mxu0 %v9696
      %v11062 = vpop.f32.mrf.mxu0
      %v11063 = vadd.f32 %v10902, %v11062
      %v11064 = vpop.f32.mrf.mxu0
      %v11065 = vpop.f32.mrf.mxu0
      %v11066 = vadd.f32 %v10905, %v11065
      %v11067 = vpop.f32.mrf.mxu0
      %11068 = vmatprep.mubr.bf16.mxu0 %v9710
      %11069 = vmatmul.mubr.bf16.gmra.mxu0 %v9709
      %v11070 = vpop.f32.mrf.mxu0
      %v11071 = vadd.f32 %v10910, %v11070
      %v11072 = vpop.f32.mrf.mxu0
      %v11073 = vpop.f32.mrf.mxu0
      %v11074 = vadd.f32 %v10913, %v11073
      %v11075 = vpop.f32.mrf.mxu0
      %11076 = vmatprep.mubr.bf16.mxu0 %v9723
      %11077 = vmatmul.mubr.bf16.gmra.mxu0 %v9722
      %v11078 = vpop.f32.mrf.mxu0
      %v11079 = vadd.f32 %v10918, %v11078
      %v11080 = vpop.f32.mrf.mxu0
      %v11081 = vpop.f32.mrf.mxu0
      %v11082 = vadd.f32 %v10921, %v11081
      %v11083 = vpop.f32.mrf.mxu0
      %11084 = vmatprep.mubr.bf16.mxu0 %v9736
      %11085 = vmatmul.mubr.bf16.gmra.mxu0 %v9735
      %v11086 = vpop.f32.mrf.mxu0
      %v11087 = vadd.f32 %v10926, %v11086
      %v11088 = vpop.f32.mrf.mxu0
      %v11089 = vpop.f32.mrf.mxu0
      %v11090 = vadd.f32 %v10929, %v11089
      %v11091 = vpop.f32.mrf.mxu0
      %11092 = vmatprep.mubr.bf16.mxu0 %v9749
      %11093 = vmatmul.mubr.bf16.gmra.mxu0 %v9748
      %v11094 = vpop.f32.mrf.mxu0
      %v11095 = vadd.f32 %v10934, %v11094
      %v11096 = vpop.f32.mrf.mxu0
      %v11097 = vpop.f32.mrf.mxu0
      %v11098 = vadd.f32 %v10937, %v11097
      %v11099 = vpop.f32.mrf.mxu0
      %11100 = vmatprep.mubr.bf16.mxu0 %v9762
      %11101 = vmatmul.mubr.bf16.gmra.mxu0 %v9761
      %v11102 = vpop.f32.mrf.mxu0
      %v11103 = vadd.f32 %v10942, %v11102
      %v11104 = vpop.f32.mrf.mxu0
      %v11105 = vpop.f32.mrf.mxu0
      %v11106 = vadd.f32 %v10945, %v11105
      %v11107 = vpop.f32.mrf.mxu0
      %11108 = vmatprep.mubr.bf16.mxu0 %v9775
      %11109 = vmatmul.mubr.bf16.gmra.mxu0 %v9774
      %v11110 = vpop.f32.mrf.mxu0
      %v11111 = vadd.f32 %v10950, %v11110
      %v11112 = vpop.f32.mrf.mxu0
      %v11113 = vpop.f32.mrf.mxu0
      %v11114 = vadd.f32 %v10953, %v11113
      %v11115 = vpop.f32.mrf.mxu0
      %11116 = vmatprep.mubr.bf16.mxu0 %v9788
      %11117 = vmatmul.mubr.bf16.gmra.mxu0 %v9787
      %v11118 = vpop.f32.mrf.mxu0
      %v11119 = vadd.f32 %v10958, %v11118
      %v11120 = vpop.f32.mrf.mxu0
      %v11121 = vpop.f32.mrf.mxu0
      %v11122 = vadd.f32 %v10961, %v11121
      %v11123 = vpop.f32.mrf.mxu0
      %11124 = vmatprep.mubr.bf16.mxu0 %v9801
      %11125 = vmatmul.mubr.bf16.gmra.mxu0 %v9800
      %v11126 = vpop.f32.mrf.mxu0
      %v11127 = vadd.f32 %v10966, %v11126
      %v11128 = vpop.f32.mrf.mxu0
      %v11129 = vpop.f32.mrf.mxu0
      %v11130 = vadd.f32 %v10969, %v11129
      %v11131 = vpop.f32.mrf.mxu0
      %11132 = vdwg.mxu0
      %11133 = vmatprep.subr.bf16.mxu0 0
      %11134 = vmatpush1.bf16.msra.mxu0 %v10456
      %11135 = vmatprep.subr.bf16.mxu0 0
      %11136 = vmatpush1.bf16.msra.mxu0 %v10455
      %11137 = vmatprep.subr.bf16.mxu0 0
      %11138 = vmatpush1.bf16.msra.mxu0 %v10454
      %11139 = vmatprep.subr.bf16.mxu0 0
      %11140 = vmatpush1.bf16.msra.mxu0 %v10453
      %11141 = vmatprep.subr.bf16.mxu0 0
      %11142 = vmatpush1.bf16.msra.mxu0 %v10452
      %11143 = vmatprep.subr.bf16.mxu0 0
      %11144 = vmatpush1.bf16.msra.mxu0 %v10451
      %11145 = vmatprep.subr.bf16.mxu0 0
      %11146 = vmatpush1.bf16.msra.mxu0 %v10450
      %11147 = vmatprep.subr.bf16.mxu0 0
      %11148 = vmatpush1.bf16.msra.mxu0 %v10449
      %11149 = vmatprep.subr.bf16.mxu0 0
      %11150 = vmatpush2.bf16.msra.mxu0 %v10464
      %11151 = vmatprep.subr.bf16.mxu0 0
      %11152 = vmatpush2.bf16.msra.mxu0 %v10463
      %11153 = vmatprep.subr.bf16.mxu0 0
      %11154 = vmatpush2.bf16.msra.mxu0 %v10462
      %11155 = vmatprep.subr.bf16.mxu0 0
      %11156 = vmatpush2.bf16.msra.mxu0 %v10461
      %11157 = vmatprep.subr.bf16.mxu0 0
      %11158 = vmatpush2.bf16.msra.mxu0 %v10460
      %11159 = vmatprep.subr.bf16.mxu0 0
      %11160 = vmatpush2.bf16.msra.mxu0 %v10459
      %11161 = vmatprep.subr.bf16.mxu0 0
      %11162 = vmatpush2.bf16.msra.mxu0 %v10458
      %11163 = vmatprep.subr.bf16.mxu0 0
      %11164 = vmatpush2.bf16.msra.mxu0 %v10457
      %11165 = vmatprep.mubr.bf16.mxu0 %v9608
      %11166 = vmatmul.mubr.bf16.gmra.mxu0 %v9607
      %v11167 = vpop.f32.mrf.mxu0
      %v11168 = vadd.f32 %v11007, %v11167
      %v11169 = vpop.f32.mrf.mxu0
      %v11170 = vpop.f32.mrf.mxu0
      %v11171 = vadd.f32 %v11010, %v11170
      %v11172 = vpop.f32.mrf.mxu0
      %11173 = vmatprep.mubr.bf16.mxu0 %v9621
      %11174 = vmatmul.mubr.bf16.gmra.mxu0 %v9620
      %v11175 = vpop.f32.mrf.mxu0
      %v11176 = vadd.f32 %v11015, %v11175
      %v11177 = vpop.f32.mrf.mxu0
      %v11178 = vpop.f32.mrf.mxu0
      %v11179 = vadd.f32 %v11018, %v11178
      %v11180 = vpop.f32.mrf.mxu0
      %11181 = vmatprep.mubr.bf16.mxu0 %v9634
      %11182 = vmatmul.mubr.bf16.gmra.mxu0 %v9633
      %v11183 = vpop.f32.mrf.mxu0
      %v11184 = vadd.f32 %v11023, %v11183
      %v11185 = vpop.f32.mrf.mxu0
      %v11186 = vpop.f32.mrf.mxu0
      %v11187 = vadd.f32 %v11026, %v11186
      %v11188 = vpop.f32.mrf.mxu0
      %11189 = vmatprep.mubr.bf16.mxu0 %v9647
      %11190 = vmatmul.mubr.bf16.gmra.mxu0 %v9646
      %v11191 = vpop.f32.mrf.mxu0
      %v11192 = vadd.f32 %v11031, %v11191
      %v11193 = vpop.f32.mrf.mxu0
      %v11194 = vpop.f32.mrf.mxu0
      %v11195 = vadd.f32 %v11034, %v11194
      %v11196 = vpop.f32.mrf.mxu0
      %11197 = vmatprep.mubr.bf16.mxu0 %v9660
      %11198 = vmatmul.mubr.bf16.gmra.mxu0 %v9659
      %v11199 = vpop.f32.mrf.mxu0
      %v11200 = vadd.f32 %v11039, %v11199
      %v11201 = vpop.f32.mrf.mxu0
      %v11202 = vpop.f32.mrf.mxu0
      %v11203 = vadd.f32 %v11042, %v11202
      %v11204 = vpop.f32.mrf.mxu0
      %11205 = vmatprep.mubr.bf16.mxu0 %v9673
      %11206 = vmatmul.mubr.bf16.gmra.mxu0 %v9672
      %v11207 = vpop.f32.mrf.mxu0
      %v11208 = vadd.f32 %v11047, %v11207
      %v11209 = vpop.f32.mrf.mxu0
      %v11210 = vpop.f32.mrf.mxu0
      %v11211 = vadd.f32 %v11050, %v11210
      %v11212 = vpop.f32.mrf.mxu0
      %11213 = vmatprep.mubr.bf16.mxu0 %v9686
      %11214 = vmatmul.mubr.bf16.gmra.mxu0 %v9685
      %v11215 = vpop.f32.mrf.mxu0
      %v11216 = vadd.f32 %v11055, %v11215
      %v11217 = vpop.f32.mrf.mxu0
      %v11218 = vpop.f32.mrf.mxu0
      %v11219 = vadd.f32 %v11058, %v11218
      %v11220 = vpop.f32.mrf.mxu0
      %11221 = vmatprep.mubr.bf16.mxu0 %v9699
      %11222 = vmatmul.mubr.bf16.gmra.mxu0 %v9698
      %v11223 = vpop.f32.mrf.mxu0
      %v11224 = vadd.f32 %v11063, %v11223
      %v11225 = vpop.f32.mrf.mxu0
      %v11226 = vpop.f32.mrf.mxu0
      %v11227 = vadd.f32 %v11066, %v11226
      %v11228 = vpop.f32.mrf.mxu0
      %11229 = vmatprep.mubr.bf16.mxu0 %v9712
      %11230 = vmatmul.mubr.bf16.gmra.mxu0 %v9711
      %v11231 = vpop.f32.mrf.mxu0
      %v11232 = vadd.f32 %v11071, %v11231
      %v11233 = vpop.f32.mrf.mxu0
      %v11234 = vpop.f32.mrf.mxu0
      %v11235 = vadd.f32 %v11074, %v11234
      %v11236 = vpop.f32.mrf.mxu0
      %11237 = vmatprep.mubr.bf16.mxu0 %v9725
      %11238 = vmatmul.mubr.bf16.gmra.mxu0 %v9724
      %v11239 = vpop.f32.mrf.mxu0
      %v11240 = vadd.f32 %v11079, %v11239
      %v11241 = vpop.f32.mrf.mxu0
      %v11242 = vpop.f32.mrf.mxu0
      %v11243 = vadd.f32 %v11082, %v11242
      %v11244 = vpop.f32.mrf.mxu0
      %11245 = vmatprep.mubr.bf16.mxu0 %v9738
      %11246 = vmatmul.mubr.bf16.gmra.mxu0 %v9737
      %v11247 = vpop.f32.mrf.mxu0
      %v11248 = vadd.f32 %v11087, %v11247
      %v11249 = vpop.f32.mrf.mxu0
      %v11250 = vpop.f32.mrf.mxu0
      %v11251 = vadd.f32 %v11090, %v11250
      %v11252 = vpop.f32.mrf.mxu0
      %11253 = vmatprep.mubr.bf16.mxu0 %v9751
      %11254 = vmatmul.mubr.bf16.gmra.mxu0 %v9750
      %v11255 = vpop.f32.mrf.mxu0
      %v11256 = vadd.f32 %v11095, %v11255
      %v11257 = vpop.f32.mrf.mxu0
      %v11258 = vpop.f32.mrf.mxu0
      %v11259 = vadd.f32 %v11098, %v11258
      %v11260 = vpop.f32.mrf.mxu0
      %11261 = vmatprep.mubr.bf16.mxu0 %v9764
      %11262 = vmatmul.mubr.bf16.gmra.mxu0 %v9763
      %v11263 = vpop.f32.mrf.mxu0
      %v11264 = vadd.f32 %v11103, %v11263
      %v11265 = vpop.f32.mrf.mxu0
      %v11266 = vpop.f32.mrf.mxu0
      %v11267 = vadd.f32 %v11106, %v11266
      %v11268 = vpop.f32.mrf.mxu0
      %11269 = vmatprep.mubr.bf16.mxu0 %v9777
      %11270 = vmatmul.mubr.bf16.gmra.mxu0 %v9776
      %v11271 = vpop.f32.mrf.mxu0
      %v11272 = vadd.f32 %v11111, %v11271
      %v11273 = vpop.f32.mrf.mxu0
      %v11274 = vpop.f32.mrf.mxu0
      %v11275 = vadd.f32 %v11114, %v11274
      %v11276 = vpop.f32.mrf.mxu0
      %11277 = vmatprep.mubr.bf16.mxu0 %v9790
      %11278 = vmatmul.mubr.bf16.gmra.mxu0 %v9789
      %v11279 = vpop.f32.mrf.mxu0
      %v11280 = vadd.f32 %v11119, %v11279
      %v11281 = vpop.f32.mrf.mxu0
      %v11282 = vpop.f32.mrf.mxu0
      %v11283 = vadd.f32 %v11122, %v11282
      %v11284 = vpop.f32.mrf.mxu0
      %11285 = vmatprep.mubr.bf16.mxu0 %v9803
      %11286 = vmatmul.mubr.bf16.gmra.mxu0 %v9802
      %v11287 = vpop.f32.mrf.mxu0
      %v11288 = vadd.f32 %v11127, %v11287
      %v11289 = vpop.f32.mrf.mxu0
      %v11290 = vpop.f32.mrf.mxu0
      %v11291 = vadd.f32 %v11130, %v11290
      %v11292 = vpop.f32.mrf.mxu0
      %11293 = vdwg.mxu0
      %11294 = vmatprep.subr.bf16.mxu0 0
      %11295 = vmatpush1.bf16.msra.mxu0 %v10472
      %11296 = vmatprep.subr.bf16.mxu0 0
      %11297 = vmatpush1.bf16.msra.mxu0 %v10471
      %11298 = vmatprep.subr.bf16.mxu0 0
      %11299 = vmatpush1.bf16.msra.mxu0 %v10470
      %11300 = vmatprep.subr.bf16.mxu0 0
      %11301 = vmatpush1.bf16.msra.mxu0 %v10469
      %11302 = vmatprep.subr.bf16.mxu0 0
      %11303 = vmatpush1.bf16.msra.mxu0 %v10468
      %11304 = vmatprep.subr.bf16.mxu0 0
      %11305 = vmatpush1.bf16.msra.mxu0 %v10467
      %11306 = vmatprep.subr.bf16.mxu0 0
      %11307 = vmatpush1.bf16.msra.mxu0 %v10466
      %11308 = vmatprep.subr.bf16.mxu0 0
      %11309 = vmatpush1.bf16.msra.mxu0 %v10465
      %11310 = vmatprep.subr.bf16.mxu0 0
      %11311 = vmatpush2.bf16.msra.mxu0 %v10480
      %11312 = vmatprep.subr.bf16.mxu0 0
      %11313 = vmatpush2.bf16.msra.mxu0 %v10479
      %11314 = vmatprep.subr.bf16.mxu0 0
      %11315 = vmatpush2.bf16.msra.mxu0 %v10478
      %11316 = vmatprep.subr.bf16.mxu0 0
      %11317 = vmatpush2.bf16.msra.mxu0 %v10477
      %11318 = vmatprep.subr.bf16.mxu0 0
      %11319 = vmatpush2.bf16.msra.mxu0 %v10476
      %11320 = vmatprep.subr.bf16.mxu0 0
      %11321 = vmatpush2.bf16.msra.mxu0 %v10475
      %11322 = vmatprep.subr.bf16.mxu0 0
      %11323 = vmatpush2.bf16.msra.mxu0 %v10474
      %11324 = vmatprep.subr.bf16.mxu0 0
      %11325 = vmatpush2.bf16.msra.mxu0 %v10473
      %11326 = vmatprep.mubr.bf16.mxu0 %v9610
      %11327 = vmatmul.mubr.bf16.gmra.mxu0 %v9609
      %v11328 = vpop.f32.mrf.mxu0
      %v11329 = vadd.f32 %v11168, %v11328
      %v11330 = vpop.f32.mrf.mxu0
      %v11331 = vpop.f32.mrf.mxu0
      %v11332 = vadd.f32 %v11171, %v11331
      %v11333 = vpop.f32.mrf.mxu0
      %11334 = vmatprep.mubr.bf16.mxu0 %v9623
      %11335 = vmatmul.mubr.bf16.gmra.mxu0 %v9622
      %v11336 = vpop.f32.mrf.mxu0
      %v11337 = vadd.f32 %v11176, %v11336
      %v11338 = vpop.f32.mrf.mxu0
      %v11339 = vpop.f32.mrf.mxu0
      %v11340 = vadd.f32 %v11179, %v11339
      %v11341 = vpop.f32.mrf.mxu0
      %11342 = vmatprep.mubr.bf16.mxu0 %v9636
      %11343 = vmatmul.mubr.bf16.gmra.mxu0 %v9635
      %v11344 = vpop.f32.mrf.mxu0
      %v11345 = vadd.f32 %v11184, %v11344
      %v11346 = vpop.f32.mrf.mxu0
      %v11347 = vpop.f32.mrf.mxu0
      %v11348 = vadd.f32 %v11187, %v11347
      %v11349 = vpop.f32.mrf.mxu0
      %11350 = vmatprep.mubr.bf16.mxu0 %v9649
      %11351 = vmatmul.mubr.bf16.gmra.mxu0 %v9648
      %v11352 = vpop.f32.mrf.mxu0
      %v11353 = vadd.f32 %v11192, %v11352
      %v11354 = vpop.f32.mrf.mxu0
      %v11355 = vpop.f32.mrf.mxu0
      %v11356 = vadd.f32 %v11195, %v11355
      %v11357 = vpop.f32.mrf.mxu0
      %11358 = vmatprep.mubr.bf16.mxu0 %v9662
      %11359 = vmatmul.mubr.bf16.gmra.mxu0 %v9661
      %v11360 = vpop.f32.mrf.mxu0
      %v11361 = vadd.f32 %v11200, %v11360
      %v11362 = vpop.f32.mrf.mxu0
      %v11363 = vpop.f32.mrf.mxu0
      %v11364 = vadd.f32 %v11203, %v11363
      %v11365 = vpop.f32.mrf.mxu0
      %11366 = vmatprep.mubr.bf16.mxu0 %v9675
      %11367 = vmatmul.mubr.bf16.gmra.mxu0 %v9674
      %v11368 = vpop.f32.mrf.mxu0
      %v11369 = vadd.f32 %v11208, %v11368
      %v11370 = vpop.f32.mrf.mxu0
      %v11371 = vpop.f32.mrf.mxu0
      %v11372 = vadd.f32 %v11211, %v11371
      %v11373 = vpop.f32.mrf.mxu0
      %11374 = vmatprep.mubr.bf16.mxu0 %v9688
      %11375 = vmatmul.mubr.bf16.gmra.mxu0 %v9687
      %v11376 = vpop.f32.mrf.mxu0
      %v11377 = vadd.f32 %v11216, %v11376
      %v11378 = vpop.f32.mrf.mxu0
      %v11379 = vpop.f32.mrf.mxu0
      %v11380 = vadd.f32 %v11219, %v11379
      %v11381 = vpop.f32.mrf.mxu0
      %11382 = vmatprep.mubr.bf16.mxu0 %v9701
      %11383 = vmatmul.mubr.bf16.gmra.mxu0 %v9700
      %v11384 = vpop.f32.mrf.mxu0
      %v11385 = vadd.f32 %v11224, %v11384
      %v11386 = vpop.f32.mrf.mxu0
      %v11387 = vpop.f32.mrf.mxu0
      %v11388 = vadd.f32 %v11227, %v11387
      %v11389 = vpop.f32.mrf.mxu0
      %11390 = vmatprep.mubr.bf16.mxu0 %v9714
      %11391 = vmatmul.mubr.bf16.gmra.mxu0 %v9713
      %v11392 = vpop.f32.mrf.mxu0
      %v11393 = vadd.f32 %v11232, %v11392
      %v11394 = vpop.f32.mrf.mxu0
      %v11395 = vpop.f32.mrf.mxu0
      %v11396 = vadd.f32 %v11235, %v11395
      %v11397 = vpop.f32.mrf.mxu0
      %11398 = vmatprep.mubr.bf16.mxu0 %v9727
      %11399 = vmatmul.mubr.bf16.gmra.mxu0 %v9726
      %v11400 = vpop.f32.mrf.mxu0
      %v11401 = vadd.f32 %v11240, %v11400
      %v11402 = vpop.f32.mrf.mxu0
      %v11403 = vpop.f32.mrf.mxu0
      %v11404 = vadd.f32 %v11243, %v11403
      %v11405 = vpop.f32.mrf.mxu0
      %11406 = vmatprep.mubr.bf16.mxu0 %v9740
      %11407 = vmatmul.mubr.bf16.gmra.mxu0 %v9739
      %v11408 = vpop.f32.mrf.mxu0
      %v11409 = vadd.f32 %v11248, %v11408
      %v11410 = vpop.f32.mrf.mxu0
      %v11411 = vpop.f32.mrf.mxu0
      %v11412 = vadd.f32 %v11251, %v11411
      %v11413 = vpop.f32.mrf.mxu0
      %11414 = vmatprep.mubr.bf16.mxu0 %v9753
      %11415 = vmatmul.mubr.bf16.gmra.mxu0 %v9752
      %v11416 = vpop.f32.mrf.mxu0
      %v11417 = vadd.f32 %v11256, %v11416
      %v11418 = vpop.f32.mrf.mxu0
      %v11419 = vpop.f32.mrf.mxu0
      %v11420 = vadd.f32 %v11259, %v11419
      %v11421 = vpop.f32.mrf.mxu0
      %11422 = vmatprep.mubr.bf16.mxu0 %v9766
      %11423 = vmatmul.mubr.bf16.gmra.mxu0 %v9765
      %v11424 = vpop.f32.mrf.mxu0
      %v11425 = vadd.f32 %v11264, %v11424
      %v11426 = vpop.f32.mrf.mxu0
      %v11427 = vpop.f32.mrf.mxu0
      %v11428 = vadd.f32 %v11267, %v11427
      %v11429 = vpop.f32.mrf.mxu0
      %11430 = vmatprep.mubr.bf16.mxu0 %v9779
      %11431 = vmatmul.mubr.bf16.gmra.mxu0 %v9778
      %v11432 = vpop.f32.mrf.mxu0
      %v11433 = vadd.f32 %v11272, %v11432
      %v11434 = vpop.f32.mrf.mxu0
      %v11435 = vpop.f32.mrf.mxu0
      %v11436 = vadd.f32 %v11275, %v11435
      %v11437 = vpop.f32.mrf.mxu0
      %11438 = vmatprep.mubr.bf16.mxu0 %v9792
      %11439 = vmatmul.mubr.bf16.gmra.mxu0 %v9791
      %v11440 = vpop.f32.mrf.mxu0
      %v11441 = vadd.f32 %v11280, %v11440
      %v11442 = vpop.f32.mrf.mxu0
      %v11443 = vpop.f32.mrf.mxu0
      %v11444 = vadd.f32 %v11283, %v11443
      %v11445 = vpop.f32.mrf.mxu0
      %11446 = vmatprep.mubr.bf16.mxu0 %v9805
      %11447 = vmatmul.mubr.bf16.gmra.mxu0 %v9804
      %v11448 = vpop.f32.mrf.mxu0
      %v11449 = vadd.f32 %v11288, %v11448
      %v11450 = vpop.f32.mrf.mxu0
      %v11451 = vpop.f32.mrf.mxu0
      %v11452 = vadd.f32 %v11291, %v11451
      %v11453 = vpop.f32.mrf.mxu0
      %11454 = vdwg.mxu0
      %11455 = vmatprep.subr.bf16.mxu0 0
      %11456 = vmatpush1.bf16.msra.mxu0 %v10488
      %11457 = vmatprep.subr.bf16.mxu0 0
      %11458 = vmatpush1.bf16.msra.mxu0 %v10487
      %11459 = vmatprep.subr.bf16.mxu0 0
      %11460 = vmatpush1.bf16.msra.mxu0 %v10486
      %11461 = vmatprep.subr.bf16.mxu0 0
      %11462 = vmatpush1.bf16.msra.mxu0 %v10485
      %11463 = vmatprep.subr.bf16.mxu0 0
      %11464 = vmatpush1.bf16.msra.mxu0 %v10484
      %11465 = vmatprep.subr.bf16.mxu0 0
      %11466 = vmatpush1.bf16.msra.mxu0 %v10483
      %11467 = vmatprep.subr.bf16.mxu0 0
      %11468 = vmatpush1.bf16.msra.mxu0 %v10482
      %11469 = vmatprep.subr.bf16.mxu0 0
      %11470 = vmatpush1.bf16.msra.mxu0 %v10481
      %11471 = vmatprep.subr.bf16.mxu0 0
      %11472 = vmatpush2.bf16.msra.mxu0 %v10496
      %11473 = vmatprep.subr.bf16.mxu0 0
      %11474 = vmatpush2.bf16.msra.mxu0 %v10495
      %11475 = vmatprep.subr.bf16.mxu0 0
      %11476 = vmatpush2.bf16.msra.mxu0 %v10494
      %11477 = vmatprep.subr.bf16.mxu0 0
      %11478 = vmatpush2.bf16.msra.mxu0 %v10493
      %11479 = vmatprep.subr.bf16.mxu0 0
      %11480 = vmatpush2.bf16.msra.mxu0 %v10492
      %11481 = vmatprep.subr.bf16.mxu0 0
      %11482 = vmatpush2.bf16.msra.mxu0 %v10491
      %11483 = vmatprep.subr.bf16.mxu0 0
      %11484 = vmatpush2.bf16.msra.mxu0 %v10490
      %11485 = vmatprep.subr.bf16.mxu0 0
      %11486 = vmatpush2.bf16.msra.mxu0 %v10489
      %11487 = vmatprep.mubr.bf16.mxu0 %v9612
      %11488 = vmatmul.mubr.bf16.gmra.mxu0 %v9611
      %v11489 = vpop.f32.mrf.mxu0
      %v11490 = vadd.f32 %v11329, %v11489
      %v11491 = vpop.f32.mrf.mxu0
      %v11492 = vpop.f32.mrf.mxu0
      %v11493 = vadd.f32 %v11332, %v11492
      %v11494 = vpop.f32.mrf.mxu0
      %11495 = vmatprep.mubr.bf16.mxu0 %v9625
      %11496 = vmatmul.mubr.bf16.gmra.mxu0 %v9624
      %v11497 = vpop.f32.mrf.mxu0
      %v11498 = vadd.f32 %v11337, %v11497
      %v11499 = vpop.f32.mrf.mxu0
      %v11500 = vpop.f32.mrf.mxu0
      %v11501 = vadd.f32 %v11340, %v11500
      %v11502 = vpop.f32.mrf.mxu0
      %11503 = vmatprep.mubr.bf16.mxu0 %v9638
      %11504 = vmatmul.mubr.bf16.gmra.mxu0 %v9637
      %v11505 = vpop.f32.mrf.mxu0
      %v11506 = vadd.f32 %v11345, %v11505
      %v11507 = vpop.f32.mrf.mxu0
      %v11508 = vpop.f32.mrf.mxu0
      %v11509 = vadd.f32 %v11348, %v11508
      %v11510 = vpop.f32.mrf.mxu0
      %11511 = vmatprep.mubr.bf16.mxu0 %v9651
      %11512 = vmatmul.mubr.bf16.gmra.mxu0 %v9650
      %v11513 = vpop.f32.mrf.mxu0
      %v11514 = vadd.f32 %v11353, %v11513
      %v11515 = vpop.f32.mrf.mxu0
      %v11516 = vpop.f32.mrf.mxu0
      %v11517 = vadd.f32 %v11356, %v11516
      %v11518 = vpop.f32.mrf.mxu0
      %11519 = vmatprep.mubr.bf16.mxu0 %v9664
      %11520 = vmatmul.mubr.bf16.gmra.mxu0 %v9663
      %v11521 = vpop.f32.mrf.mxu0
      %v11522 = vadd.f32 %v11361, %v11521
      %v11523 = vpop.f32.mrf.mxu0
      %v11524 = vpop.f32.mrf.mxu0
      %v11525 = vadd.f32 %v11364, %v11524
      %v11526 = vpop.f32.mrf.mxu0
      %11527 = vmatprep.mubr.bf16.mxu0 %v9677
      %11528 = vmatmul.mubr.bf16.gmra.mxu0 %v9676
      %v11529 = vpop.f32.mrf.mxu0
      %v11530 = vadd.f32 %v11369, %v11529
      %v11531 = vpop.f32.mrf.mxu0
      %v11532 = vpop.f32.mrf.mxu0
      %v11533 = vadd.f32 %v11372, %v11532
      %v11534 = vpop.f32.mrf.mxu0
      %11535 = vmatprep.mubr.bf16.mxu0 %v9690
      %11536 = vmatmul.mubr.bf16.gmra.mxu0 %v9689
      %v11537 = vpop.f32.mrf.mxu0
      %v11538 = vadd.f32 %v11377, %v11537
      %v11539 = vpop.f32.mrf.mxu0
      %v11540 = vpop.f32.mrf.mxu0
      %v11541 = vadd.f32 %v11380, %v11540
      %v11542 = vpop.f32.mrf.mxu0
      %11543 = vmatprep.mubr.bf16.mxu0 %v9703
      %11544 = vmatmul.mubr.bf16.gmra.mxu0 %v9702
      %v11545 = vpop.f32.mrf.mxu0
      %v11546 = vadd.f32 %v11385, %v11545
      %v11547 = vpop.f32.mrf.mxu0
      %v11548 = vpop.f32.mrf.mxu0
      %v11549 = vadd.f32 %v11388, %v11548
      %v11550 = vpop.f32.mrf.mxu0
      %11551 = vmatprep.mubr.bf16.mxu0 %v9716
      %11552 = vmatmul.mubr.bf16.gmra.mxu0 %v9715
      %v11553 = vpop.f32.mrf.mxu0
      %v11554 = vadd.f32 %v11393, %v11553
      %v11555 = vpop.f32.mrf.mxu0
      %v11556 = vpop.f32.mrf.mxu0
      %v11557 = vadd.f32 %v11396, %v11556
      %v11558 = vpop.f32.mrf.mxu0
      %11559 = vmatprep.mubr.bf16.mxu0 %v9729
      %11560 = vmatmul.mubr.bf16.gmra.mxu0 %v9728
      %v11561 = vpop.f32.mrf.mxu0
      %v11562 = vadd.f32 %v11401, %v11561
      %v11563 = vpop.f32.mrf.mxu0
      %v11564 = vpop.f32.mrf.mxu0
      %v11565 = vadd.f32 %v11404, %v11564
      %v11566 = vpop.f32.mrf.mxu0
      %11567 = vmatprep.mubr.bf16.mxu0 %v9742
      %11568 = vmatmul.mubr.bf16.gmra.mxu0 %v9741
      %v11569 = vpop.f32.mrf.mxu0
      %v11570 = vadd.f32 %v11409, %v11569
      %v11571 = vpop.f32.mrf.mxu0
      %v11572 = vpop.f32.mrf.mxu0
      %v11573 = vadd.f32 %v11412, %v11572
      %v11574 = vpop.f32.mrf.mxu0
      %11575 = vmatprep.mubr.bf16.mxu0 %v9755
      %11576 = vmatmul.mubr.bf16.gmra.mxu0 %v9754
      %v11577 = vpop.f32.mrf.mxu0
      %v11578 = vadd.f32 %v11417, %v11577
      %v11579 = vpop.f32.mrf.mxu0
      %v11580 = vpop.f32.mrf.mxu0
      %v11581 = vadd.f32 %v11420, %v11580
      %v11582 = vpop.f32.mrf.mxu0
      %11583 = vmatprep.mubr.bf16.mxu0 %v9768
      %11584 = vmatmul.mubr.bf16.gmra.mxu0 %v9767
      %v11585 = vpop.f32.mrf.mxu0
      %v11586 = vadd.f32 %v11425, %v11585
      %v11587 = vpop.f32.mrf.mxu0
      %v11588 = vpop.f32.mrf.mxu0
      %v11589 = vadd.f32 %v11428, %v11588
      %v11590 = vpop.f32.mrf.mxu0
      %11591 = vmatprep.mubr.bf16.mxu0 %v9781
      %11592 = vmatmul.mubr.bf16.gmra.mxu0 %v9780
      %v11593 = vpop.f32.mrf.mxu0
      %v11594 = vadd.f32 %v11433, %v11593
      %v11595 = vpop.f32.mrf.mxu0
      %v11596 = vpop.f32.mrf.mxu0
      %v11597 = vadd.f32 %v11436, %v11596
      %v11598 = vpop.f32.mrf.mxu0
      %11599 = vmatprep.mubr.bf16.mxu0 %v9794
      %11600 = vmatmul.mubr.bf16.gmra.mxu0 %v9793
      %v11601 = vpop.f32.mrf.mxu0
      %v11602 = vadd.f32 %v11441, %v11601
      %v11603 = vpop.f32.mrf.mxu0
      %v11604 = vpop.f32.mrf.mxu0
      %v11605 = vadd.f32 %v11444, %v11604
      %v11606 = vpop.f32.mrf.mxu0
      %11607 = vmatprep.mubr.bf16.mxu0 %v9807
      %11608 = vmatmul.mubr.bf16.gmra.mxu0 %v9806
      %v11609 = vpop.f32.mrf.mxu0
      %v11610 = vadd.f32 %v11449, %v11609
      %v11611 = vpop.f32.mrf.mxu0
      %v11612 = vpop.f32.mrf.mxu0
      %v11613 = vadd.f32 %v11452, %v11612
      %v11614 = vpop.f32.mrf.mxu0
      %11615 = vdwg.mxu0
      %11616 = vmatprep.subr.bf16.mxu0 0
      %11617 = vmatpush1.bf16.msra.mxu0 0
      %11618 = vmatprep.subr.bf16.mxu0 0
      %11619 = vmatpush1.bf16.msra.mxu0 0
      %11620 = vmatprep.subr.bf16.mxu0 0
      %11621 = vmatpush1.bf16.msra.mxu0 0
      %11622 = vmatprep.subr.bf16.mxu0 0
      %11623 = vmatpush1.bf16.msra.mxu0 0
      %11624 = vmatprep.subr.bf16.mxu0 0
      %11625 = vmatpush1.bf16.msra.mxu0 %v10500
      %11626 = vmatprep.subr.bf16.mxu0 0
      %11627 = vmatpush1.bf16.msra.mxu0 %v10499
      %11628 = vmatprep.subr.bf16.mxu0 0
      %11629 = vmatpush1.bf16.msra.mxu0 %v10498
      %11630 = vmatprep.subr.bf16.mxu0 0
      %11631 = vmatpush1.bf16.msra.mxu0 %v10497
      %11632 = vmatprep.subr.bf16.mxu0 0
      %11633 = vmatpush2.bf16.msra.mxu0 0
      %11634 = vmatprep.subr.bf16.mxu0 0
      %11635 = vmatpush2.bf16.msra.mxu0 0
      %11636 = vmatprep.subr.bf16.mxu0 0
      %11637 = vmatpush2.bf16.msra.mxu0 0
      %11638 = vmatprep.subr.bf16.mxu0 0
      %11639 = vmatpush2.bf16.msra.mxu0 0
      %11640 = vmatprep.subr.bf16.mxu0 0
      %11641 = vmatpush2.bf16.msra.mxu0 0
      %11642 = vmatprep.subr.bf16.mxu0 0
      %11643 = vmatpush2.bf16.msra.mxu0 0
      %11644 = vmatprep.subr.bf16.mxu0 0
      %11645 = vmatpush2.bf16.msra.mxu0 0
      %11646 = vmatprep.subr.bf16.mxu0 0
      %11647 = vmatpush2.bf16.msra.mxu0 0
      %11648 = vmatprep.mubr.bf16.mxu0 0
      %11649 = vmatmul.mubr.bf16.gmra.mxu0 %v10603
      %v11650 = vpop.f32.mrf.mxu0
      %v11651 = vadd.f32 %v11490, %v11650
      %v11652 = vpop.f32.mrf.mxu0
      %v11653 = vpop.f32.mrf.mxu0
      %v11654 = vadd.f32 %v11493, %v11653
      %v11655 = vpop.f32.mrf.mxu0
      %11656 = vmatprep.mubr.bf16.mxu0 0
      %11657 = vmatmul.mubr.bf16.gmra.mxu0 %v10606
      %v11658 = vpop.f32.mrf.mxu0
      %v11659 = vadd.f32 %v11498, %v11658
      %v11660 = vpop.f32.mrf.mxu0
      %v11661 = vpop.f32.mrf.mxu0
      %v11662 = vadd.f32 %v11501, %v11661
      %v11663 = vpop.f32.mrf.mxu0
      %11664 = vmatprep.mubr.bf16.mxu0 0
      %11665 = vmatmul.mubr.bf16.gmra.mxu0 %v10609
      %v11666 = vpop.f32.mrf.mxu0
      %v11667 = vadd.f32 %v11506, %v11666
      %v11668 = vpop.f32.mrf.mxu0
      %v11669 = vpop.f32.mrf.mxu0
      %v11670 = vadd.f32 %v11509, %v11669
      %v11671 = vpop.f32.mrf.mxu0
      %11672 = vmatprep.mubr.bf16.mxu0 0
      %11673 = vmatmul.mubr.bf16.gmra.mxu0 %v10612
      %v11674 = vpop.f32.mrf.mxu0
      %v11675 = vadd.f32 %v11514, %v11674
      %v11676 = vpop.f32.mrf.mxu0
      %v11677 = vpop.f32.mrf.mxu0
      %v11678 = vadd.f32 %v11517, %v11677
      %v11679 = vpop.f32.mrf.mxu0
      %11680 = vmatprep.mubr.bf16.mxu0 0
      %11681 = vmatmul.mubr.bf16.gmra.mxu0 %v10615
      %v11682 = vpop.f32.mrf.mxu0
      %v11683 = vadd.f32 %v11522, %v11682
      %v11684 = vpop.f32.mrf.mxu0
      %v11685 = vpop.f32.mrf.mxu0
      %v11686 = vadd.f32 %v11525, %v11685
      %v11687 = vpop.f32.mrf.mxu0
      %11688 = vmatprep.mubr.bf16.mxu0 0
      %11689 = vmatmul.mubr.bf16.gmra.mxu0 %v10618
      %v11690 = vpop.f32.mrf.mxu0
      %v11691 = vadd.f32 %v11530, %v11690
      %v11692 = vpop.f32.mrf.mxu0
      %v11693 = vpop.f32.mrf.mxu0
      %v11694 = vadd.f32 %v11533, %v11693
      %v11695 = vpop.f32.mrf.mxu0
      %11696 = vmatprep.mubr.bf16.mxu0 0
      %11697 = vmatmul.mubr.bf16.gmra.mxu0 %v10621
      %v11698 = vpop.f32.mrf.mxu0
      %v11699 = vadd.f32 %v11538, %v11698
      %v11700 = vpop.f32.mrf.mxu0
      %v11701 = vpop.f32.mrf.mxu0
      %v11702 = vadd.f32 %v11541, %v11701
      %v11703 = vpop.f32.mrf.mxu0
      %11704 = vmatprep.mubr.bf16.mxu0 0
      %11705 = vmatmul.mubr.bf16.gmra.mxu0 %v10624
      %v11706 = vpop.f32.mrf.mxu0
      %v11707 = vadd.f32 %v11546, %v11706
      %v11708 = vpop.f32.mrf.mxu0
      %v11709 = vpop.f32.mrf.mxu0
      %v11710 = vadd.f32 %v11549, %v11709
      %v11711 = vpop.f32.mrf.mxu0
      %11712 = vmatprep.mubr.bf16.mxu0 0
      %11713 = vmatmul.mubr.bf16.gmra.mxu0 %v10627
      %v11714 = vpop.f32.mrf.mxu0
      %v11715 = vadd.f32 %v11554, %v11714
      %v11716 = vpop.f32.mrf.mxu0
      %v11717 = vpop.f32.mrf.mxu0
      %v11718 = vadd.f32 %v11557, %v11717
      %v11719 = vpop.f32.mrf.mxu0
      %11720 = vmatprep.mubr.bf16.mxu0 0
      %11721 = vmatmul.mubr.bf16.gmra.mxu0 %v10630
      %v11722 = vpop.f32.mrf.mxu0
      %v11723 = vadd.f32 %v11562, %v11722
      %v11724 = vpop.f32.mrf.mxu0
      %v11725 = vpop.f32.mrf.mxu0
      %v11726 = vadd.f32 %v11565, %v11725
      %v11727 = vpop.f32.mrf.mxu0
      %11728 = vmatprep.mubr.bf16.mxu0 0
      %11729 = vmatmul.mubr.bf16.gmra.mxu0 %v10633
      %v11730 = vpop.f32.mrf.mxu0
      %v11731 = vadd.f32 %v11570, %v11730
      %v11732 = vpop.f32.mrf.mxu0
      %v11733 = vpop.f32.mrf.mxu0
      %v11734 = vadd.f32 %v11573, %v11733
      %v11735 = vpop.f32.mrf.mxu0
      %11736 = vmatprep.mubr.bf16.mxu0 0
      %11737 = vmatmul.mubr.bf16.gmra.mxu0 %v10636
      %v11738 = vpop.f32.mrf.mxu0
      %v11739 = vadd.f32 %v11578, %v11738
      %v11740 = vpop.f32.mrf.mxu0
      %v11741 = vpop.f32.mrf.mxu0
      %v11742 = vadd.f32 %v11581, %v11741
      %v11743 = vpop.f32.mrf.mxu0
      %11744 = vmatprep.mubr.bf16.mxu0 0
      %11745 = vmatmul.mubr.bf16.gmra.mxu0 %v10639
      %v11746 = vpop.f32.mrf.mxu0
      %v11747 = vadd.f32 %v11586, %v11746
      %v11748 = vpop.f32.mrf.mxu0
      %v11749 = vpop.f32.mrf.mxu0
      %v11750 = vadd.f32 %v11589, %v11749
      %v11751 = vpop.f32.mrf.mxu0
      %11752 = vmatprep.mubr.bf16.mxu0 0
      %11753 = vmatmul.mubr.bf16.gmra.mxu0 %v10642
      %v11754 = vpop.f32.mrf.mxu0
      %v11755 = vadd.f32 %v11594, %v11754
      %v11756 = vpop.f32.mrf.mxu0
      %v11757 = vpop.f32.mrf.mxu0
      %v11758 = vadd.f32 %v11597, %v11757
      %v11759 = vpop.f32.mrf.mxu0
      %11760 = vmatprep.mubr.bf16.mxu0 0
      %11761 = vmatmul.mubr.bf16.gmra.mxu0 %v10645
      %v11762 = vpop.f32.mrf.mxu0
      %v11763 = vadd.f32 %v11602, %v11762
      %v11764 = vpop.f32.mrf.mxu0
      %v11765 = vpop.f32.mrf.mxu0
      %v11766 = vadd.f32 %v11605, %v11765
      %v11767 = vpop.f32.mrf.mxu0
      %11768 = vmatprep.mubr.bf16.mxu0 0
      %11769 = vmatmul.mubr.bf16.gmra.mxu0 %v10648
      %v11770 = vpop.f32.mrf.mxu0
      %v11771 = vadd.f32 %v11610, %v11770
      %v11772 = vpop.f32.mrf.mxu0
      %v11773 = vpop.f32.mrf.mxu0
      %v11774 = vadd.f32 %v11613, %v11773
      %v11775 = vpop.f32.mrf.mxu0
      %11776 = vdwg.mxu0
      %11777 = vxpose.xlu0.b32.start [1/16] %v11651, 128
      %11778 = vxpose.xlu0.b32.cont [2/16] %v11654, 128
      %11779 = vxpose.xlu0.b32.cont [3/16] %v11659, 128
      %11780 = vxpose.xlu0.b32.cont [4/16] %v11662, 128
      %11781 = vxpose.xlu0.b32.cont [5/16] %v11667, 128
      %11782 = vxpose.xlu0.b32.cont [6/16] %v11670, 128
      %11783 = vxpose.xlu0.b32.cont [7/16] %v11675, 128
      %11784 = vxpose.xlu0.b32.cont [8/16] %v11678, 128
      %11785 = vxpose.xlu0.b32.cont [9/16] %v11683, 128
      %11786 = vxpose.xlu0.b32.cont [10/16] %v11686, 128
      %11787 = vxpose.xlu0.b32.cont [11/16] %v11691, 128
      %11788 = vxpose.xlu0.b32.cont [12/16] %v11694, 128
      %11789 = vxpose.xlu0.b32.cont [13/16] %v11699, 128
      %11790 = vxpose.xlu0.b32.cont [14/16] %v11702, 128
      %11791 = vxpose.xlu0.b32.cont [15/16] %v11707, 128
      %11792 = vxpose.xlu0.b32.end [16/16] %v11710, 128
      %v11793 = vpop.trf.xlu0
      %v11794 = vpop.trf.xlu0
      %v11795 = vpop.trf.xlu0
      %v11796 = vpop.trf.xlu0
      %v11797 = vpop.trf.xlu0
      %v11798 = vpop.trf.xlu0
      %v11799 = vpop.trf.xlu0
      %v11800 = vpop.trf.xlu0
      %v11801 = vpop.trf.xlu0
      %v11802 = vpop.trf.xlu0
      %v11803 = vpop.trf.xlu0
      %v11804 = vpop.trf.xlu0
      %v11805 = vpop.trf.xlu0
      %v11806 = vpop.trf.xlu0
      %v11807 = vpop.trf.xlu0
      %v11808 = vpop.trf.xlu0
      %11809 = vxpose.xlu0.b32.start [1/16] %v11715, 128
      %11810 = vxpose.xlu0.b32.cont [2/16] %v11718, 128
      %11811 = vxpose.xlu0.b32.cont [3/16] %v11723, 128
      %11812 = vxpose.xlu0.b32.cont [4/16] %v11726, 128
      %11813 = vxpose.xlu0.b32.cont [5/16] %v11731, 128
      %11814 = vxpose.xlu0.b32.cont [6/16] %v11734, 128
      %11815 = vxpose.xlu0.b32.cont [7/16] %v11739, 128
      %11816 = vxpose.xlu0.b32.cont [8/16] %v11742, 128
      %11817 = vxpose.xlu0.b32.cont [9/16] %v11747, 128
      %11818 = vxpose.xlu0.b32.cont [10/16] %v11750, 128
      %11819 = vxpose.xlu0.b32.cont [11/16] %v11755, 128
      %11820 = vxpose.xlu0.b32.cont [12/16] %v11758, 128
      %11821 = vxpose.xlu0.b32.cont [13/16] %v11763, 128
      %11822 = vxpose.xlu0.b32.cont [14/16] %v11766, 128
      %11823 = vxpose.xlu0.b32.cont [15/16] %v11771, 128
      %11824 = vxpose.xlu0.b32.end [16/16] %v11774, 128
      %v11825 = vpop.trf.xlu0
      %v11826 = vpop.trf.xlu0
      %v11827 = vpop.trf.xlu0
      %v11828 = vpop.trf.xlu0
      %v11829 = vpop.trf.xlu0
      %v11830 = vpop.trf.xlu0
      %v11831 = vpop.trf.xlu0
      %v11832 = vpop.trf.xlu0
      %v11833 = vpop.trf.xlu0
      %v11834 = vpop.trf.xlu0
      %v11835 = vpop.trf.xlu0
      %v11836 = vpop.trf.xlu0
      %v11837 = vpop.trf.xlu0
      %v11838 = vpop.trf.xlu0
      %v11839 = vpop.trf.xlu0
      %v11840 = vpop.trf.xlu0
      %v11843 = vcombine.low %v11793, %v11825
      %11845 = vst [vmem:[%s278] sm:$0x77] %v11843
      %p11846 = scmp.lt.s32.totalorder %s18, 1
      %s11847 = scalar_select %p11846, %s18, 1
      %s11848 = smul.addr %s11847, 2
      %s11849 = smul.addr %s11848, 4
      %s11850 = scalar_lea.vmem %s7, %s11849
      // Predicated region
      $region49: #{srcnn2_forward.1} parent=47 // pred_check
        %p11851 = pneg %p188
      $region50: #{srcnn2_forward.1} parent=47 // pred_check_branch
        %11853 = sbr.rel (%p11851) target = $region52
      $region51: #{srcnn2_forward.1} parent=47 // pred_region
        _
      $region52: #{srcnn2_forward.1} parent=47 // pred_fallthru
        _
    $region48: #{srcnn2_forward.1} parent=5 // pred_fallthru
      _
    %p11854 = scmp.le.s32.totalorder 2, %s13
    // Predicated region
    $region53: #{srcnn2_forward.1} parent=5 // pred_check
      %p11855 = pneg %p11854
    $region54: #{srcnn2_forward.1} parent=5 // pred_check_branch
      %11857 = sbr.rel (%p11855) target = $region56
    $region55: #{srcnn2_forward.1} parent=5 // pred_region
      %s11858 = ssub.s32 %s13, 2
      // Predicated region
      $region57: #{srcnn2_forward.1} parent=55 // pred_check
        %p11859 = pneg %p194
      $region58: #{srcnn2_forward.1} parent=55 // pred_check_branch
        %11861 = sbr.rel (%p11859) target = $region60
      $region59: #{srcnn2_forward.1} parent=55 // pred_region
        %p11862 = scmp.lt.s32.totalorder %s19, 1
        %s11863 = scalar_select %p11862, %s19, 1
        %s11864 = smul.addr %s11863, 2
        %s11865 = smul.addr %s11864, 4
        %s11866 = scalar_lea.vmem %s7, %s11865
      $region60: #{srcnn2_forward.1} parent=55 // pred_fallthru
        _
    $region56: #{srcnn2_forward.1} parent=5 // pred_fallthru
      _
  $region6: #{srcnn2_forward.1} parent=0 // loop_footer
    %s17 = sadd.s32 1, %s13
  $region7: #{srcnn2_forward.1} parent=0 // loop_footer_branch
    %12 = sbr.rel target = $region3
  $region8: #{srcnn2_forward.1} parent=0 // loop_exit
    _

</llo_original>
